<compile_context>
chip_gen: v7x
topology: tpu7x:2x2x1
jax: 0.10.0
libtpu: 0.0.40
codegen_flags: <defaults>
</compile_context>

<pallas_src>
import functools

import jax
import jax.numpy as jnp
from jax.experimental import pallas as pl
from jax.experimental.pallas import tpu as pltpu


def gru_kernel(x_ref, mask_ref, rowv_ref,
               wih0_ref, bih0_ref, whh0_ref, bhh0_ref,
               w1_ref, b1_ref,
               bng_ref, bnb_ref, wfc_ref, bfc_ref,
               out_ref, gi0_ref,
               *, hidden_size, seq_len, batch_pad, batch_real, eps):
    H = hidden_size
    T = seq_len
    Bp = batch_pad

    # ---- hoisted layer-0 input projection: one MXU call for the whole sequence
    gi0_ref[...] = (
        jnp.dot(x_ref[...], wih0_ref[...], preferred_element_type=jnp.float32)
        + bih0_ref[...])                                   # (T*Bp, 3H), gates r|z|n

    def step(t, carry):
        h0, h1 = carry                                     # (Bp, H) f32 each
        base = pl.multiple_of(t * Bp, Bp)
        gi = gi0_ref[pl.ds(base, Bp), :]                   # (Bp, 3H) precomputed
        m = mask_ref[t]                                    # (Bp, 1) step-t validity

        # ---- layer 0: single recurrent matmul (bf16 weights, f32 accumulate)
        gh = jnp.dot(h0.astype(jnp.bfloat16), whh0_ref[...],
                     preferred_element_type=jnp.float32) + bhh0_ref[...]
        r0 = jax.nn.sigmoid(gi[:, :H] + gh[:, :H])
        z0 = jax.nn.sigmoid(gi[:, H:2 * H] + gh[:, H:2 * H])
        n0 = jnp.tanh(gi[:, 2 * H:] + r0 * gh[:, 2 * H:])
        h0n = (1.0 - z0) * n0 + z0 * h0
        h0n = jnp.where(m > 0.0, h0n, h0)                  # freeze finished seqs

        # ---- layer 1: fused gi/gh matmul on concat([h0_new, h1])
        hc = jnp.concatenate([h0n, h1], axis=1).astype(jnp.bfloat16)   # (Bp, 2H)
        g1 = jnp.dot(hc, w1_ref[...],
                     preferred_element_type=jnp.float32) + b1_ref[...]  # (Bp, 4H)
        r1 = jax.nn.sigmoid(g1[:, :H])
        z1 = jax.nn.sigmoid(g1[:, H:2 * H])
        n1 = jnp.tanh(g1[:, 2 * H:3 * H] + r1 * g1[:, 3 * H:])
        h1n = (1.0 - z1) * n1 + z1 * h1
        h1n = jnp.where(m > 0.0, h1n, h1)
        return (h0n, h1n)

    h0 = jnp.zeros((Bp, H), jnp.float32)
    h1 = jnp.zeros((Bp, H), jnp.float32)
    _, h1 = jax.lax.fori_loop(0, T, step, (h0, h1), unroll=True)

    # ---- epilogue: BatchNorm1d (training-mode batch stats over the REAL rows),
    #      Linear(H -> 6, lane-padded to 128), Softmax.
    # TODO(synk): eval-mode BatchNorm (running mean/var) would need those stats
    #             passed in; this matches PyTorch training-mode semantics.
    v = rowv_ref[...]                                      # (Bp, 1) 1.0 for real rows
    inv_b = 1.0 / float(batch_real)
    mu = jnp.sum(h1 * v, axis=0, keepdims=True) * inv_b
    d = (h1 - mu) * v
    var = jnp.sum(d * d, axis=0, keepdims=True) * inv_b    # biased variance
    y = (h1 - mu) * jax.lax.rsqrt(var + eps) * bng_ref[...] + bnb_ref[...]

    logits = jnp.dot(y, wfc_ref[...],
                     preferred_element_type=jnp.float32) + bfc_ref[...]  # (Bp, 128)
    mx = jnp.max(logits, axis=1, keepdims=True)
    e = jnp.exp(logits - mx)                               # pad cols -> exp(-1e30)=0
    s = jnp.sum(e, axis=1, keepdims=True)
    inv = pl.reciprocal(s, approx=True)                    # EUP reciprocal
    inv = inv * (2.0 - s * inv)                            # one Newton refinement
    out_ref[...] = e * inv


def gru_forward(padded_sequence, input_lengths, params, *, hidden_size=256,
                eps=1e-5):
    T, B, D = padded_sequence.shape
    H = hidden_size
    Bp = max(8, ((B + 7) // 8) * 8)                        # pad batch to sublane tile
    OUT_W = 128                                            # lane-dense output width
    f32, bf16 = jnp.float32, jnp.bfloat16

    lens = input_lengths.astype(jnp.int32)
    x = jnp.zeros((T, Bp, D), f32).at[:, :B, :].set(padded_sequence.astype(f32))
    lens_p = jnp.zeros((Bp,), jnp.int32).at[:B].set(lens)

    x2d = x.reshape(T * Bp, D)                                            # (T*Bp, D)
    mask = (jnp.arange(T, dtype=jnp.int32)[:, None]
            < lens_p[None, :]).astype(f32)[:, :, None]                    # (T, Bp, 1)
    rowv = (jnp.arange(Bp) < B).astype(f32)[:, None]                      # (Bp, 1)

    # layer-0 weights (input proj kept f32: tiny, used once; recurrent -> bf16)
    wih0 = params["wih0"].astype(f32)
    bih0 = params["bih0"].astype(f32)
    whh0 = params["whh0"].astype(bf16)
    bhh0 = params["bhh0"].astype(f32)

    # layer-1 fused weight (2H, 4H):  [ Wih_rz | Wih_n |   0   ]
    #                                 [ Whh_rz |   0   | Whh_n ]
    wih1, whh1 = params["wih1"], params["whh1"]
    bih1, bhh1 = params["bih1"], params["bhh1"]
    zH = jnp.zeros((H, H), f32)
    w1 = jnp.concatenate(
        [jnp.concatenate([wih1[:, :2 * H], wih1[:, 2 * H:], zH], axis=1),
         jnp.concatenate([whh1[:, :2 * H], zH, whh1[:, 2 * H:]], axis=1)],
        axis=0).astype(bf16)                                              # (2H, 4H)
    b1 = jnp.concatenate([bih1[:, :2 * H] + bhh1[:, :2 * H],
                          bih1[:, 2 * H:], bhh1[:, 2 * H:]],
                         axis=1).astype(f32)                              # (1, 4H)

    # Lane-dense FC: pad the 6 output columns to 128; pad biases get -1e30 so
    # the in-kernel softmax assigns them ~0 probability.
    wfc = jnp.zeros((H, OUT_W), f32).at[:, :6].set(params["wfc"].astype(f32))
    bfc = jnp.full((1, OUT_W), -1e30, f32).at[:, :6].set(params["bfc"].astype(f32))

    bng = params["bn_g"].astype(f32)
    bnb = params["bn_b"].astype(f32)

    inputs = (x2d, mask, rowv, wih0, bih0, whh0, bhh0, w1, b1, bng, bnb, wfc, bfc)

    def full_spec(a):
        return pl.BlockSpec(a.shape, lambda i, nd=a.ndim: (0,) * nd)

    kernel = functools.partial(gru_kernel, hidden_size=H, seq_len=T,
                               batch_pad=Bp, batch_real=B, eps=eps)

    out = pl.pallas_call(
        kernel,
        out_shape=jax.ShapeDtypeStruct((Bp, OUT_W), f32),
        grid_spec=pltpu.PrefetchScalarGridSpec(
            num_scalar_prefetch=0,
            grid=(1,),
            in_specs=[full_spec(a) for a in inputs],
            out_specs=pl.BlockSpec((Bp, OUT_W), lambda i: (0, 0)),
            scratch_shapes=[pltpu.VMEM((T * Bp, 3 * H), jnp.float32)],
        ),
        compiler_params=pltpu.CompilerParams(
            dimension_semantics=("arbitrary",)),
    )(*inputs)

    return out[:B, :6]


def init_params(key, input_dim, hidden_size):
    H = hidden_size
    k = 1.0 / jnp.sqrt(H)
    keys = jax.random.split(key, 12)
    u = lambda kk, shape, bnd: jax.random.uniform(kk, shape, jnp.float32, -bnd, bnd)
    return {
        # GRU layer 0 (weights stored pre-transposed: x @ W; gate order r|z|n)
        "wih0": u(keys[0], (input_dim, 3 * H), k),
        "whh0": u(keys[1], (H, 3 * H), k),
        "bih0": u(keys[2], (1, 3 * H), k),
        "bhh0": u(keys[3], (1, 3 * H), k),
        # GRU layer 1
        "wih1": u(keys[4], (H, 3 * H), k),
        "whh1": u(keys[5], (H, 3 * H), k),
        "bih1": u(keys[6], (1, 3 * H), k),
        "bhh1": u(keys[7], (1, 3 * H), k),
        # BatchNorm1d(H)
        "bn_g": jnp.ones((1, H), jnp.float32),
        "bn_b": jnp.zeros((1, H), jnp.float32),
        # Linear(H, 6)
        "wfc": u(keys[8], (H, 6), k),
        "bfc": u(keys[9], (1, 6), k),
    }


if __name__ == "__main__":
    T, B, D, H = 8, 4, 6, 256
    key = jax.random.PRNGKey(0)
    kx, kp = jax.random.split(key)

    params = init_params(kp, D, H)

    # sorted-descending lengths (pack_padded_sequence enforce_sorted=True)
    lengths = jnp.array([8, 7, 5, 3], dtype=jnp.int32)
    x = jax.random.normal(kx, (T, B, D), jnp.float32)
    pad_mask = (jnp.arange(T)[:, None] < lengths[None, :])[:, :, None]
    x = x * pad_mask  # zero padded positions (irrelevant due to in-kernel masking)

    out = gru_forward(x, lengths, params, hidden_size=H)
    out = jax.block_until_ready(out)

    assert out.shape == (B, 6)
    assert bool(jnp.all(jnp.isfinite(out)))
    assert bool(jnp.all(jnp.abs(jnp.sum(out, axis=1) - 1.0) < 1e-4))
    print("KERNEL_OK")
</pallas_src>

<mosaic_0001>
module attributes {stable_mosaic.version = 11 : i64} {
  func.func @gru_kernel(%arg0: i32, %arg1: memref<64x6xf32, #tpu.memory_space<vmem>>, %arg2: memref<8x8x1xf32, #tpu.memory_space<vmem>>, %arg3: memref<8x1xf32, #tpu.memory_space<vmem>>, %arg4: memref<6x768xf32, #tpu.memory_space<vmem>>, %arg5: memref<1x768xf32, #tpu.memory_space<vmem>>, %arg6: memref<256x768xbf16, #tpu.memory_space<vmem>>, %arg7: memref<1x768xf32, #tpu.memory_space<vmem>>, %arg8: memref<512x1024xbf16, #tpu.memory_space<vmem>>, %arg9: memref<1x1024xf32, #tpu.memory_space<vmem>>, %arg10: memref<1x256xf32, #tpu.memory_space<vmem>>, %arg11: memref<1x256xf32, #tpu.memory_space<vmem>>, %arg12: memref<256x128xf32, #tpu.memory_space<vmem>>, %arg13: memref<1x128xf32, #tpu.memory_space<vmem>>, %arg14: memref<8x128xf32, #tpu.memory_space<vmem>>, %arg15: memref<64x768xf32, #tpu.memory_space<vmem>>) attributes {dimension_semantics = [#tpu.dimension_semantics<arbitrary>], iteration_bounds = array<i64: 1>, scalar_prefetch = 0 : i64, scratch_operands = 1 : i64, tpu.core_type = #tpu.core_type<tc>, window_params = [{pipeline_mode = #tpu.pipeline_mode<synchronous>, transform_indices = @transform_0, window_bounds = array<i64: 64, 6>}, {pipeline_mode = #tpu.pipeline_mode<synchronous>, transform_indices = @transform_1, window_bounds = array<i64: 8, 8, 1>}, {pipeline_mode = #tpu.pipeline_mode<synchronous>, transform_indices = @transform_2, window_bounds = array<i64: 8, 1>}, {pipeline_mode = #tpu.pipeline_mode<synchronous>, transform_indices = @transform_3, window_bounds = array<i64: 6, 768>}, {pipeline_mode = #tpu.pipeline_mode<synchronous>, transform_indices = @transform_4, window_bounds = array<i64: 1, 768>}, {pipeline_mode = #tpu.pipeline_mode<synchronous>, transform_indices = @transform_5, window_bounds = array<i64: 256, 768>}, {pipeline_mode = #tpu.pipeline_mode<synchronous>, transform_indices = @transform_6, window_bounds = array<i64: 1, 768>}, {pipeline_mode = #tpu.pipeline_mode<synchronous>, transform_indices = @transform_7, window_bounds = array<i64: 512, 1024>}, {pipeline_mode = #tpu.pipeline_mode<synchronous>, transform_indices = @transform_8, window_bounds = array<i64: 1, 1024>}, {pipeline_mode = #tpu.pipeline_mode<synchronous>, transform_indices = @transform_9, window_bounds = array<i64: 1, 256>}, {pipeline_mode = #tpu.pipeline_mode<synchronous>, transform_indices = @transform_10, window_bounds = array<i64: 1, 256>}, {pipeline_mode = #tpu.pipeline_mode<synchronous>, transform_indices = @transform_11, window_bounds = array<i64: 256, 128>}, {pipeline_mode = #tpu.pipeline_mode<synchronous>, transform_indices = @transform_12, window_bounds = array<i64: 1, 128>}, {pipeline_mode = #tpu.pipeline_mode<synchronous>, transform_indices = @transform_13, window_bounds = array<i64: 8, 128>}]} {
    %c0 = arith.constant 0 : index
    %c0_0 = arith.constant 0 : index
    %0 = vector.load %arg1[%c0, %c0_0] : memref<64x6xf32, #tpu.memory_space<vmem>>, vector<64x6xf32>
    %c0_1 = arith.constant 0 : index
    %c0_2 = arith.constant 0 : index
    %1 = vector.load %arg4[%c0_1, %c0_2] : memref<6x768xf32, #tpu.memory_space<vmem>>, vector<6x768xf32>
    %cst = arith.constant dense<0.000000e+00> : vector<64x768xf32>
    %2 = tpu.matmul %0, %1, %cst {dimension_numbers = #tpu.dot_dimension_numbers<[1], [0], [0], [1], [0, 0, 1, 1], [], []>} : vector<64x6xf32>, vector<6x768xf32>, vector<64x768xf32> -> vector<64x768xf32>
    %c0_3 = arith.constant 0 : index
    %c0_4 = arith.constant 0 : index
    %3 = vector.load %arg5[%c0_3, %c0_4] : memref<1x768xf32, #tpu.memory_space<vmem>>, vector<1x768xf32>
    %4 = vector.broadcast %3 : vector<1x768xf32> to vector<64x768xf32>
    %5 = arith.addf %2, %4 : vector<64x768xf32>
    %c0_5 = arith.constant 0 : index
    %c0_6 = arith.constant 0 : index
    %6 = vector.load %arg15[%c0_5, %c0_6] : memref<64x768xf32, #tpu.memory_space<vmem>>, vector<64x768xf32>
    tpu.vector_store %arg15[%c0_5, %c0_6], %5 {strides = array<i32>} : memref<64x768xf32, #tpu.memory_space<vmem>>, vector<64x768xf32>,
    %cst_7 = arith.constant 0.000000e+00 : f32
    %7 = vector.broadcast %cst_7 : f32 to vector<8x256xf32>
    %cst_8 = arith.constant 0.000000e+00 : f32
    %8 = vector.broadcast %cst_8 : f32 to vector<8x256xf32>
    %c0_i32 = arith.constant 0 : i32
    %c8_i32 = arith.constant 8 : i32
    %9 = arith.muli %c0_i32, %c8_i32 : i32
    %10 = tpu.assume_multiple %9, 8 : i32
    %11 = arith.index_cast %10 : i32 to index
    %c0_9 = arith.constant 0 : index
    %12 = vector.load %arg15[%11, %c0_9] : memref<64x768xf32, #tpu.memory_space<vmem>>, vector<8x768xf32>
    %13 = arith.index_cast %c0_i32 : i32 to index
    %c0_10 = arith.constant 0 : index
    %c0_11 = arith.constant 0 : index
    %14 = vector.load %arg2[%13, %c0_10, %c0_11] : memref<8x8x1xf32, #tpu.memory_space<vmem>>, vector<1x8x1xf32>
    %15 = vector.shape_cast %14 : vector<1x8x1xf32> to vector<8x1xf32>
    %16 = arith.truncf %7 : vector<8x256xf32> to vector<8x256xbf16>
    %c0_12 = arith.constant 0 : index
    %c0_13 = arith.constant 0 : index
    %17 = vector.load %arg6[%c0_12, %c0_13] : memref<256x768xbf16, #tpu.memory_space<vmem>>, vector<256x768xbf16>
    %cst_14 = arith.constant dense<0.000000e+00> : vector<8x768xf32>
    %18 = tpu.matmul %16, %17, %cst_14 {dimension_numbers = #tpu.dot_dimension_numbers<[1], [0], [0], [1], [0, 0, 1, 1], [], []>} : vector<8x256xbf16>, vector<256x768xbf16>, vector<8x768xf32> -> vector<8x768xf32>
    %c0_15 = arith.constant 0 : index
    %c0_16 = arith.constant 0 : index
    %19 = vector.load %arg7[%c0_15, %c0_16] : memref<1x768xf32, #tpu.memory_space<vmem>>, vector<1x768xf32>
    %20 = vector.broadcast %19 : vector<1x768xf32> to vector<8x768xf32>
    %21 = arith.addf %18, %20 : vector<8x768xf32>
    %22 = vector.extract_strided_slice %12 {offsets = [0, 0], sizes = [8, 256], strides = [1, 1]} : vector<8x768xf32> to vector<8x256xf32>
    %23 = vector.extract_strided_slice %21 {offsets = [0, 0], sizes = [8, 256], strides = [1, 1]} : vector<8x768xf32> to vector<8x256xf32>
    %24 = arith.addf %22, %23 : vector<8x256xf32>
    %25 = arith.negf %24 : vector<8x256xf32>
    %26 = math.exp %25 : vector<8x256xf32>
    %cst_17 = arith.constant 1.000000e+00 : f32
    %27 = vector.broadcast %cst_17 : f32 to vector<8x256xf32>
    %28 = arith.addf %27, %26 : vector<8x256xf32>
    %29 = arith.divf %27, %28 : vector<8x256xf32>
    %30 = vector.extract_strided_slice %12 {offsets = [0, 256], sizes = [8, 256], strides = [1, 1]} : vector<8x768xf32> to vector<8x256xf32>
    %31 = vector.extract_strided_slice %21 {offsets = [0, 256], sizes = [8, 256], strides = [1, 1]} : vector<8x768xf32> to vector<8x256xf32>
    %32 = arith.addf %30, %31 : vector<8x256xf32>
    %33 = arith.negf %32 : vector<8x256xf32>
    %34 = math.exp %33 : vector<8x256xf32>
    %cst_18 = arith.constant 1.000000e+00 : f32
    %35 = vector.broadcast %cst_18 : f32 to vector<8x256xf32>
    %36 = arith.addf %35, %34 : vector<8x256xf32>
    %37 = arith.divf %35, %36 : vector<8x256xf32>
    %38 = vector.extract_strided_slice %12 {offsets = [0, 512], sizes = [8, 256], strides = [1, 1]} : vector<8x768xf32> to vector<8x256xf32>
    %39 = vector.extract_strided_slice %21 {offsets = [0, 512], sizes = [8, 256], strides = [1, 1]} : vector<8x768xf32> to vector<8x256xf32>
    %40 = arith.mulf %29, %39 : vector<8x256xf32>
    %41 = arith.addf %38, %40 : vector<8x256xf32>
    %42 = math.tanh %41 : vector<8x256xf32>
    %cst_19 = arith.constant 1.000000e+00 : f32
    %43 = vector.broadcast %cst_19 : f32 to vector<8x256xf32>
    %44 = arith.subf %43, %37 : vector<8x256xf32>
    %45 = arith.mulf %44, %42 : vector<8x256xf32>
    %46 = arith.mulf %37, %7 : vector<8x256xf32>
    %47 = arith.addf %45, %46 : vector<8x256xf32>
    %cst_20 = arith.constant 0.000000e+00 : f32
    %48 = vector.broadcast %cst_20 : f32 to vector<8x1xf32>
    %49 = arith.cmpf ogt, %15, %48 : vector<8x1xf32>
    %50 = vector.shape_cast %49 : vector<8x1xi1> to vector<8x1xi1>
    %51 = vector.broadcast %50 : vector<8x1xi1> to vector<8x256xi1>
    %52 = arith.select %51, %47, %7 : vector<8x256xi1>, vector<8x256xf32>
    %53 = tpu.concatenate %52, %8 in 1 : vector<8x256xf32>, vector<8x256xf32> -> vector<8x512xf32>
    %54 = arith.truncf %53 : vector<8x512xf32> to vector<8x512xbf16>
    %c0_21 = arith.constant 0 : index
    %c0_22 = arith.constant 0 : index
    %55 = vector.load %arg8[%c0_21, %c0_22] : memref<512x1024xbf16, #tpu.memory_space<vmem>>, vector<512x1024xbf16>
    %cst_23 = arith.constant dense<0.000000e+00> : vector<8x1024xf32>
    %56 = tpu.matmul %54, %55, %cst_23 {dimension_numbers = #tpu.dot_dimension_numbers<[1], [0], [0], [1], [0, 0, 1, 1], [], []>} : vector<8x512xbf16>, vector<512x1024xbf16>, vector<8x1024xf32> -> vector<8x1024xf32>
    %c0_24 = arith.constant 0 : index
    %c0_25 = arith.constant 0 : index
    %57 = vector.load %arg9[%c0_24, %c0_25] : memref<1x1024xf32, #tpu.memory_space<vmem>>, vector<1x1024xf32>
    %58 = vector.broadcast %57 : vector<1x1024xf32> to vector<8x1024xf32>
    %59 = arith.addf %56, %58 : vector<8x1024xf32>
    %60 = vector.extract_strided_slice %59 {offsets = [0, 0], sizes = [8, 256], strides = [1, 1]} : vector<8x1024xf32> to vector<8x256xf32>
    %61 = arith.negf %60 : vector<8x256xf32>
    %62 = math.exp %61 : vector<8x256xf32>
    %cst_26 = arith.constant 1.000000e+00 : f32
    %63 = vector.broadcast %cst_26 : f32 to vector<8x256xf32>
    %64 = arith.addf %63, %62 : vector<8x256xf32>
    %65 = arith.divf %63, %64 : vector<8x256xf32>
    %66 = vector.extract_strided_slice %59 {offsets = [0, 256], sizes = [8, 256], strides = [1, 1]} : vector<8x1024xf32> to vector<8x256xf32>
    %67 = arith.negf %66 : vector<8x256xf32>
    %68 = math.exp %67 : vector<8x256xf32>
    %cst_27 = arith.constant 1.000000e+00 : f32
    %69 = vector.broadcast %cst_27 : f32 to vector<8x256xf32>
    %70 = arith.addf %69, %68 : vector<8x256xf32>
    %71 = arith.divf %69, %70 : vector<8x256xf32>
    %72 = vector.extract_strided_slice %59 {offsets = [0, 512], sizes = [8, 256], strides = [1, 1]} : vector<8x1024xf32> to vector<8x256xf32>
    %73 = vector.extract_strided_slice %59 {offsets = [0, 768], sizes = [8, 256], strides = [1, 1]} : vector<8x1024xf32> to vector<8x256xf32>
    %74 = arith.mulf %65, %73 : vector<8x256xf32>
    %75 = arith.addf %72, %74 : vector<8x256xf32>
    %76 = math.tanh %75 : vector<8x256xf32>
    %cst_28 = arith.constant 1.000000e+00 : f32
    %77 = vector.broadcast %cst_28 : f32 to vector<8x256xf32>
    %78 = arith.subf %77, %71 : vector<8x256xf32>
    %79 = arith.mulf %78, %76 : vector<8x256xf32>
    %80 = arith.mulf %71, %8 : vector<8x256xf32>
    %81 = arith.addf %79, %80 : vector<8x256xf32>
    %cst_29 = arith.constant 0.000000e+00 : f32
    %82 = vector.broadcast %cst_29 : f32 to vector<8x1xf32>
    %83 = arith.cmpf ogt, %15, %82 : vector<8x1xf32>
    %84 = vector.shape_cast %83 : vector<8x1xi1> to vector<8x1xi1>
    %85 = vector.broadcast %84 : vector<8x1xi1> to vector<8x256xi1>
    %86 = arith.select %85, %81, %8 : vector<8x256xi1>, vector<8x256xf32>
    %c1_i32 = arith.constant 1 : i32
    %c8_i32_30 = arith.constant 8 : i32
    %87 = arith.muli %c1_i32, %c8_i32_30 : i32
    %88 = tpu.assume_multiple %87, 8 : i32
    %89 = arith.index_cast %88 : i32 to index
    %c0_31 = arith.constant 0 : index
    %90 = vector.load %arg15[%89, %c0_31] : memref<64x768xf32, #tpu.memory_space<vmem>>, vector<8x768xf32>
    %91 = arith.index_cast %c1_i32 : i32 to index
    %c0_32 = arith.constant 0 : index
    %c0_33 = arith.constant 0 : index
    %92 = vector.load %arg2[%91, %c0_32, %c0_33] : memref<8x8x1xf32, #tpu.memory_space<vmem>>, vector<1x8x1xf32>
    %93 = vector.shape_cast %92 : vector<1x8x1xf32> to vector<8x1xf32>
    %94 = arith.truncf %52 : vector<8x256xf32> to vector<8x256xbf16>
    %c0_34 = arith.constant 0 : index
    %c0_35 = arith.constant 0 : index
    %95 = vector.load %arg6[%c0_34, %c0_35] : memref<256x768xbf16, #tpu.memory_space<vmem>>, vector<256x768xbf16>
    %cst_36 = arith.constant dense<0.000000e+00> : vector<8x768xf32>
    %96 = tpu.matmul %94, %95, %cst_36 {dimension_numbers = #tpu.dot_dimension_numbers<[1], [0], [0], [1], [0, 0, 1, 1], [], []>} : vector<8x256xbf16>, vector<256x768xbf16>, vector<8x768xf32> -> vector<8x768xf32>
    %c0_37 = arith.constant 0 : index
    %c0_38 = arith.constant 0 : index
    %97 = vector.load %arg7[%c0_37, %c0_38] : memref<1x768xf32, #tpu.memory_space<vmem>>, vector<1x768xf32>
    %98 = vector.broadcast %97 : vector<1x768xf32> to vector<8x768xf32>
    %99 = arith.addf %96, %98 : vector<8x768xf32>
    %100 = vector.extract_strided_slice %90 {offsets = [0, 0], sizes = [8, 256], strides = [1, 1]} : vector<8x768xf32> to vector<8x256xf32>
    %101 = vector.extract_strided_slice %99 {offsets = [0, 0], sizes = [8, 256], strides = [1, 1]} : vector<8x768xf32> to vector<8x256xf32>
    %102 = arith.addf %100, %101 : vector<8x256xf32>
    %103 = arith.negf %102 : vector<8x256xf32>
    %104 = math.exp %103 : vector<8x256xf32>
    %cst_39 = arith.constant 1.000000e+00 : f32
    %105 = vector.broadcast %cst_39 : f32 to vector<8x256xf32>
    %106 = arith.addf %105, %104 : vector<8x256xf32>
    %107 = arith.divf %105, %106 : vector<8x256xf32>
    %108 = vector.extract_strided_slice %90 {offsets = [0, 256], sizes = [8, 256], strides = [1, 1]} : vector<8x768xf32> to vector<8x256xf32>
    %109 = vector.extract_strided_slice %99 {offsets = [0, 256], sizes = [8, 256], strides = [1, 1]} : vector<8x768xf32> to vector<8x256xf32>
    %110 = arith.addf %108, %109 : vector<8x256xf32>
    %111 = arith.negf %110 : vector<8x256xf32>
    %112 = math.exp %111 : vector<8x256xf32>
    %cst_40 = arith.constant 1.000000e+00 : f32
    %113 = vector.broadcast %cst_40 : f32 to vector<8x256xf32>
    %114 = arith.addf %113, %112 : vector<8x256xf32>
    %115 = arith.divf %113, %114 : vector<8x256xf32>
    %116 = vector.extract_strided_slice %90 {offsets = [0, 512], sizes = [8, 256], strides = [1, 1]} : vector<8x768xf32> to vector<8x256xf32>
    %117 = vector.extract_strided_slice %99 {offsets = [0, 512], sizes = [8, 256], strides = [1, 1]} : vector<8x768xf32> to vector<8x256xf32>
    %118 = arith.mulf %107, %117 : vector<8x256xf32>
    %119 = arith.addf %116, %118 : vector<8x256xf32>
    %120 = math.tanh %119 : vector<8x256xf32>
    %cst_41 = arith.constant 1.000000e+00 : f32
    %121 = vector.broadcast %cst_41 : f32 to vector<8x256xf32>
    %122 = arith.subf %121, %115 : vector<8x256xf32>
    %123 = arith.mulf %122, %120 : vector<8x256xf32>
    %124 = arith.mulf %115, %52 : vector<8x256xf32>
    %125 = arith.addf %123, %124 : vector<8x256xf32>
    %cst_42 = arith.constant 0.000000e+00 : f32
    %126 = vector.broadcast %cst_42 : f32 to vector<8x1xf32>
    %127 = arith.cmpf ogt, %93, %126 : vector<8x1xf32>
    %128 = vector.shape_cast %127 : vector<8x1xi1> to vector<8x1xi1>
    %129 = vector.broadcast %128 : vector<8x1xi1> to vector<8x256xi1>
    %130 = arith.select %129, %125, %52 : vector<8x256xi1>, vector<8x256xf32>
    %131 = tpu.concatenate %130, %86 in 1 : vector<8x256xf32>, vector<8x256xf32> -> vector<8x512xf32>
    %132 = arith.truncf %131 : vector<8x512xf32> to vector<8x512xbf16>
    %c0_43 = arith.constant 0 : index
    %c0_44 = arith.constant 0 : index
    %133 = vector.load %arg8[%c0_43, %c0_44] : memref<512x1024xbf16, #tpu.memory_space<vmem>>, vector<512x1024xbf16>
    %cst_45 = arith.constant dense<0.000000e+00> : vector<8x1024xf32>
    %134 = tpu.matmul %132, %133, %cst_45 {dimension_numbers = #tpu.dot_dimension_numbers<[1], [0], [0], [1], [0, 0, 1, 1], [], []>} : vector<8x512xbf16>, vector<512x1024xbf16>, vector<8x1024xf32> -> vector<8x1024xf32>
    %c0_46 = arith.constant 0 : index
    %c0_47 = arith.constant 0 : index
    %135 = vector.load %arg9[%c0_46, %c0_47] : memref<1x1024xf32, #tpu.memory_space<vmem>>, vector<1x1024xf32>
    %136 = vector.broadcast %135 : vector<1x1024xf32> to vector<8x1024xf32>
    %137 = arith.addf %134, %136 : vector<8x1024xf32>
    %138 = vector.extract_strided_slice %137 {offsets = [0, 0], sizes = [8, 256], strides = [1, 1]} : vector<8x1024xf32> to vector<8x256xf32>
    %139 = arith.negf %138 : vector<8x256xf32>
    %140 = math.exp %139 : vector<8x256xf32>
    %cst_48 = arith.constant 1.000000e+00 : f32
    %141 = vector.broadcast %cst_48 : f32 to vector<8x256xf32>
    %142 = arith.addf %141, %140 : vector<8x256xf32>
    %143 = arith.divf %141, %142 : vector<8x256xf32>
    %144 = vector.extract_strided_slice %137 {offsets = [0, 256], sizes = [8, 256], strides = [1, 1]} : vector<8x1024xf32> to vector<8x256xf32>
    %145 = arith.negf %144 : vector<8x256xf32>
    %146 = math.exp %145 : vector<8x256xf32>
    %cst_49 = arith.constant 1.000000e+00 : f32
    %147 = vector.broadcast %cst_49 : f32 to vector<8x256xf32>
    %148 = arith.addf %147, %146 : vector<8x256xf32>
    %149 = arith.divf %147, %148 : vector<8x256xf32>
    %150 = vector.extract_strided_slice %137 {offsets = [0, 512], sizes = [8, 256], strides = [1, 1]} : vector<8x1024xf32> to vector<8x256xf32>
    %151 = vector.extract_strided_slice %137 {offsets = [0, 768], sizes = [8, 256], strides = [1, 1]} : vector<8x1024xf32> to vector<8x256xf32>
    %152 = arith.mulf %143, %151 : vector<8x256xf32>
    %153 = arith.addf %150, %152 : vector<8x256xf32>
    %154 = math.tanh %153 : vector<8x256xf32>
    %cst_50 = arith.constant 1.000000e+00 : f32
    %155 = vector.broadcast %cst_50 : f32 to vector<8x256xf32>
    %156 = arith.subf %155, %149 : vector<8x256xf32>
    %157 = arith.mulf %156, %154 : vector<8x256xf32>
    %158 = arith.mulf %149, %86 : vector<8x256xf32>
    %159 = arith.addf %157, %158 : vector<8x256xf32>
    %cst_51 = arith.constant 0.000000e+00 : f32
    %160 = vector.broadcast %cst_51 : f32 to vector<8x1xf32>
    %161 = arith.cmpf ogt, %93, %160 : vector<8x1xf32>
    %162 = vector.shape_cast %161 : vector<8x1xi1> to vector<8x1xi1>
    %163 = vector.broadcast %162 : vector<8x1xi1> to vector<8x256xi1>
    %164 = arith.select %163, %159, %86 : vector<8x256xi1>, vector<8x256xf32>
    %c2_i32 = arith.constant 2 : i32
    %c8_i32_52 = arith.constant 8 : i32
    %165 = arith.muli %c2_i32, %c8_i32_52 : i32
    %166 = tpu.assume_multiple %165, 8 : i32
    %167 = arith.index_cast %166 : i32 to index
    %c0_53 = arith.constant 0 : index
    %168 = vector.load %arg15[%167, %c0_53] : memref<64x768xf32, #tpu.memory_space<vmem>>, vector<8x768xf32>
    %169 = arith.index_cast %c2_i32 : i32 to index
    %c0_54 = arith.constant 0 : index
    %c0_55 = arith.constant 0 : index
    %170 = vector.load %arg2[%169, %c0_54, %c0_55] : memref<8x8x1xf32, #tpu.memory_space<vmem>>, vector<1x8x1xf32>
    %171 = vector.shape_cast %170 : vector<1x8x1xf32> to vector<8x1xf32>
    %172 = arith.truncf %130 : vector<8x256xf32> to vector<8x256xbf16>
    %c0_56 = arith.constant 0 : index
    %c0_57 = arith.constant 0 : index
    %173 = vector.load %arg6[%c0_56, %c0_57] : memref<256x768xbf16, #tpu.memory_space<vmem>>, vector<256x768xbf16>
    %cst_58 = arith.constant dense<0.000000e+00> : vector<8x768xf32>
    %174 = tpu.matmul %172, %173, %cst_58 {dimension_numbers = #tpu.dot_dimension_numbers<[1], [0], [0], [1], [0, 0, 1, 1], [], []>} : vector<8x256xbf16>, vector<256x768xbf16>, vector<8x768xf32> -> vector<8x768xf32>
    %c0_59 = arith.constant 0 : index
    %c0_60 = arith.constant 0 : index
    %175 = vector.load %arg7[%c0_59, %c0_60] : memref<1x768xf32, #tpu.memory_space<vmem>>, vector<1x768xf32>
    %176 = vector.broadcast %175 : vector<1x768xf32> to vector<8x768xf32>
    %177 = arith.addf %174, %176 : vector<8x768xf32>
    %178 = vector.extract_strided_slice %168 {offsets = [0, 0], sizes = [8, 256], strides = [1, 1]} : vector<8x768xf32> to vector<8x256xf32>
    %179 = vector.extract_strided_slice %177 {offsets = [0, 0], sizes = [8, 256], strides = [1, 1]} : vector<8x768xf32> to vector<8x256xf32>
    %180 = arith.addf %178, %179 : vector<8x256xf32>
    %181 = arith.negf %180 : vector<8x256xf32>
    %182 = math.exp %181 : vector<8x256xf32>
    %cst_61 = arith.constant 1.000000e+00 : f32
    %183 = vector.broadcast %cst_61 : f32 to vector<8x256xf32>
    %184 = arith.addf %183, %182 : vector<8x256xf32>
    %185 = arith.divf %183, %184 : vector<8x256xf32>
    %186 = vector.extract_strided_slice %168 {offsets = [0, 256], sizes = [8, 256], strides = [1, 1]} : vector<8x768xf32> to vector<8x256xf32>
    %187 = vector.extract_strided_slice %177 {offsets = [0, 256], sizes = [8, 256], strides = [1, 1]} : vector<8x768xf32> to vector<8x256xf32>
    %188 = arith.addf %186, %187 : vector<8x256xf32>
    %189 = arith.negf %188 : vector<8x256xf32>
    %190 = math.exp %189 : vector<8x256xf32>
    %cst_62 = arith.constant 1.000000e+00 : f32
    %191 = vector.broadcast %cst_62 : f32 to vector<8x256xf32>
    %192 = arith.addf %191, %190 : vector<8x256xf32>
    %193 = arith.divf %191, %192 : vector<8x256xf32>
    %194 = vector.extract_strided_slice %168 {offsets = [0, 512], sizes = [8, 256], strides = [1, 1]} : vector<8x768xf32> to vector<8x256xf32>
    %195 = vector.extract_strided_slice %177 {offsets = [0, 512], sizes = [8, 256], strides = [1, 1]} : vector<8x768xf32> to vector<8x256xf32>
    %196 = arith.mulf %185, %195 : vector<8x256xf32>
    %197 = arith.addf %194, %196 : vector<8x256xf32>
    %198 = math.tanh %197 : vector<8x256xf32>
    %cst_63 = arith.constant 1.000000e+00 : f32
    %199 = vector.broadcast %cst_63 : f32 to vector<8x256xf32>
    %200 = arith.subf %199, %193 : vector<8x256xf32>
    %201 = arith.mulf %200, %198 : vector<8x256xf32>
    %202 = arith.mulf %193, %130 : vector<8x256xf32>
    %203 = arith.addf %201, %202 : vector<8x256xf32>
    %cst_64 = arith.constant 0.000000e+00 : f32
    %204 = vector.broadcast %cst_64 : f32 to vector<8x1xf32>
    %205 = arith.cmpf ogt, %171, %204 : vector<8x1xf32>
    %206 = vector.shape_cast %205 : vector<8x1xi1> to vector<8x1xi1>
    %207 = vector.broadcast %206 : vector<8x1xi1> to vector<8x256xi1>
    %208 = arith.select %207, %203, %130 : vector<8x256xi1>, vector<8x256xf32>
    %209 = tpu.concatenate %208, %164 in 1 : vector<8x256xf32>, vector<8x256xf32> -> vector<8x512xf32>
    %210 = arith.truncf %209 : vector<8x512xf32> to vector<8x512xbf16>
    %c0_65 = arith.constant 0 : index
    %c0_66 = arith.constant 0 : index
    %211 = vector.load %arg8[%c0_65, %c0_66] : memref<512x1024xbf16, #tpu.memory_space<vmem>>, vector<512x1024xbf16>
    %cst_67 = arith.constant dense<0.000000e+00> : vector<8x1024xf32>
    %212 = tpu.matmul %210, %211, %cst_67 {dimension_numbers = #tpu.dot_dimension_numbers<[1], [0], [0], [1], [0, 0, 1, 1], [], []>} : vector<8x512xbf16>, vector<512x1024xbf16>, vector<8x1024xf32> -> vector<8x1024xf32>
    %c0_68 = arith.constant 0 : index
    %c0_69 = arith.constant 0 : index
    %213 = vector.load %arg9[%c0_68, %c0_69] : memref<1x1024xf32, #tpu.memory_space<vmem>>, vector<1x1024xf32>
    %214 = vector.broadcast %213 : vector<1x1024xf32> to vector<8x1024xf32>
    %215 = arith.addf %212, %214 : vector<8x1024xf32>
    %216 = vector.extract_strided_slice %215 {offsets = [0, 0], sizes = [8, 256], strides = [1, 1]} : vector<8x1024xf32> to vector<8x256xf32>
    %217 = arith.negf %216 : vector<8x256xf32>
    %218 = math.exp %217 : vector<8x256xf32>
    %cst_70 = arith.constant 1.000000e+00 : f32
    %219 = vector.broadcast %cst_70 : f32 to vector<8x256xf32>
    %220 = arith.addf %219, %218 : vector<8x256xf32>
    %221 = arith.divf %219, %220 : vector<8x256xf32>
    %222 = vector.extract_strided_slice %215 {offsets = [0, 256], sizes = [8, 256], strides = [1, 1]} : vector<8x1024xf32> to vector<8x256xf32>
    %223 = arith.negf %222 : vector<8x256xf32>
    %224 = math.exp %223 : vector<8x256xf32>
    %cst_71 = arith.constant 1.000000e+00 : f32
    %225 = vector.broadcast %cst_71 : f32 to vector<8x256xf32>
    %226 = arith.addf %225, %224 : vector<8x256xf32>
    %227 = arith.divf %225, %226 : vector<8x256xf32>
    %228 = vector.extract_strided_slice %215 {offsets = [0, 512], sizes = [8, 256], strides = [1, 1]} : vector<8x1024xf32> to vector<8x256xf32>
    %229 = vector.extract_strided_slice %215 {offsets = [0, 768], sizes = [8, 256], strides = [1, 1]} : vector<8x1024xf32> to vector<8x256xf32>
    %230 = arith.mulf %221, %229 : vector<8x256xf32>
    %231 = arith.addf %228, %230 : vector<8x256xf32>
    %232 = math.tanh %231 : vector<8x256xf32>
    %cst_72 = arith.constant 1.000000e+00 : f32
    %233 = vector.broadcast %cst_72 : f32 to vector<8x256xf32>
    %234 = arith.subf %233, %227 : vector<8x256xf32>
    %235 = arith.mulf %234, %232 : vector<8x256xf32>
    %236 = arith.mulf %227, %164 : vector<8x256xf32>
    %237 = arith.addf %235, %236 : vector<8x256xf32>
    %cst_73 = arith.constant 0.000000e+00 : f32
    %238 = vector.broadcast %cst_73 : f32 to vector<8x1xf32>
    %239 = arith.cmpf ogt, %171, %238 : vector<8x1xf32>
    %240 = vector.shape_cast %239 : vector<8x1xi1> to vector<8x1xi1>
    %241 = vector.broadcast %240 : vector<8x1xi1> to vector<8x256xi1>
    %242 = arith.select %241, %237, %164 : vector<8x256xi1>, vector<8x256xf32>
    %c3_i32 = arith.constant 3 : i32
    %c8_i32_74 = arith.constant 8 : i32
    %243 = arith.muli %c3_i32, %c8_i32_74 : i32
    %244 = tpu.assume_multiple %243, 8 : i32
    %245 = arith.index_cast %244 : i32 to index
    %c0_75 = arith.constant 0 : index
    %246 = vector.load %arg15[%245, %c0_75] : memref<64x768xf32, #tpu.memory_space<vmem>>, vector<8x768xf32>
    %247 = arith.index_cast %c3_i32 : i32 to index
    %c0_76 = arith.constant 0 : index
    %c0_77 = arith.constant 0 : index
    %248 = vector.load %arg2[%247, %c0_76, %c0_77] : memref<8x8x1xf32, #tpu.memory_space<vmem>>, vector<1x8x1xf32>
    %249 = vector.shape_cast %248 : vector<1x8x1xf32> to vector<8x1xf32>
    %250 = arith.truncf %208 : vector<8x256xf32> to vector<8x256xbf16>
    %c0_78 = arith.constant 0 : index
    %c0_79 = arith.constant 0 : index
    %251 = vector.load %arg6[%c0_78, %c0_79] : memref<256x768xbf16, #tpu.memory_space<vmem>>, vector<256x768xbf16>
    %cst_80 = arith.constant dense<0.000000e+00> : vector<8x768xf32>
    %252 = tpu.matmul %250, %251, %cst_80 {dimension_numbers = #tpu.dot_dimension_numbers<[1], [0], [0], [1], [0, 0, 1, 1], [], []>} : vector<8x256xbf16>, vector<256x768xbf16>, vector<8x768xf32> -> vector<8x768xf32>
    %c0_81 = arith.constant 0 : index
    %c0_82 = arith.constant 0 : index
    %253 = vector.load %arg7[%c0_81, %c0_82] : memref<1x768xf32, #tpu.memory_space<vmem>>, vector<1x768xf32>
    %254 = vector.broadcast %253 : vector<1x768xf32> to vector<8x768xf32>
    %255 = arith.addf %252, %254 : vector<8x768xf32>
    %256 = vector.extract_strided_slice %246 {offsets = [0, 0], sizes = [8, 256], strides = [1, 1]} : vector<8x768xf32> to vector<8x256xf32>
    %257 = vector.extract_strided_slice %255 {offsets = [0, 0], sizes = [8, 256], strides = [1, 1]} : vector<8x768xf32> to vector<8x256xf32>
    %258 = arith.addf %256, %257 : vector<8x256xf32>
    %259 = arith.negf %258 : vector<8x256xf32>
    %260 = math.exp %259 : vector<8x256xf32>
    %cst_83 = arith.constant 1.000000e+00 : f32
    %261 = vector.broadcast %cst_83 : f32 to vector<8x256xf32>
    %262 = arith.addf %261, %260 : vector<8x256xf32>
    %263 = arith.divf %261, %262 : vector<8x256xf32>
    %264 = vector.extract_strided_slice %246 {offsets = [0, 256], sizes = [8, 256], strides = [1, 1]} : vector<8x768xf32> to vector<8x256xf32>
    %265 = vector.extract_strided_slice %255 {offsets = [0, 256], sizes = [8, 256], strides = [1, 1]} : vector<8x768xf32> to vector<8x256xf32>
    %266 = arith.addf %264, %265 : vector<8x256xf32>
    %267 = arith.negf %266 : vector<8x256xf32>
    %268 = math.exp %267 : vector<8x256xf32>
    %cst_84 = arith.constant 1.000000e+00 : f32
    %269 = vector.broadcast %cst_84 : f32 to vector<8x256xf32>
    %270 = arith.addf %269, %268 : vector<8x256xf32>
    %271 = arith.divf %269, %270 : vector<8x256xf32>
    %272 = vector.extract_strided_slice %246 {offsets = [0, 512], sizes = [8, 256], strides = [1, 1]} : vector<8x768xf32> to vector<8x256xf32>
    %273 = vector.extract_strided_slice %255 {offsets = [0, 512], sizes = [8, 256], strides = [1, 1]} : vector<8x768xf32> to vector<8x256xf32>
    %274 = arith.mulf %263, %273 : vector<8x256xf32>
    %275 = arith.addf %272, %274 : vector<8x256xf32>
    %276 = math.tanh %275 : vector<8x256xf32>
    %cst_85 = arith.constant 1.000000e+00 : f32
    %277 = vector.broadcast %cst_85 : f32 to vector<8x256xf32>
    %278 = arith.subf %277, %271 : vector<8x256xf32>
    %279 = arith.mulf %278, %276 : vector<8x256xf32>
    %280 = arith.mulf %271, %208 : vector<8x256xf32>
    %281 = arith.addf %279, %280 : vector<8x256xf32>
    %cst_86 = arith.constant 0.000000e+00 : f32
    %282 = vector.broadcast %cst_86 : f32 to vector<8x1xf32>
    %283 = arith.cmpf ogt, %249, %282 : vector<8x1xf32>
    %284 = vector.shape_cast %283 : vector<8x1xi1> to vector<8x1xi1>
    %285 = vector.broadcast %284 : vector<8x1xi1> to vector<8x256xi1>
    %286 = arith.select %285, %281, %208 : vector<8x256xi1>, vector<8x256xf32>
    %287 = tpu.concatenate %286, %242 in 1 : vector<8x256xf32>, vector<8x256xf32> -> vector<8x512xf32>
    %288 = arith.truncf %287 : vector<8x512xf32> to vector<8x512xbf16>
    %c0_87 = arith.constant 0 : index
    %c0_88 = arith.constant 0 : index
    %289 = vector.load %arg8[%c0_87, %c0_88] : memref<512x1024xbf16, #tpu.memory_space<vmem>>, vector<512x1024xbf16>
    %cst_89 = arith.constant dense<0.000000e+00> : vector<8x1024xf32>
    %290 = tpu.matmul %288, %289, %cst_89 {dimension_numbers = #tpu.dot_dimension_numbers<[1], [0], [0], [1], [0, 0, 1, 1], [], []>} : vector<8x512xbf16>, vector<512x1024xbf16>, vector<8x1024xf32> -> vector<8x1024xf32>
    %c0_90 = arith.constant 0 : index
    %c0_91 = arith.constant 0 : index
    %291 = vector.load %arg9[%c0_90, %c0_91] : memref<1x1024xf32, #tpu.memory_space<vmem>>, vector<1x1024xf32>
    %292 = vector.broadcast %291 : vector<1x1024xf32> to vector<8x1024xf32>
    %293 = arith.addf %290, %292 : vector<8x1024xf32>
    %294 = vector.extract_strided_slice %293 {offsets = [0, 0], sizes = [8, 256], strides = [1, 1]} : vector<8x1024xf32> to vector<8x256xf32>
    %295 = arith.negf %294 : vector<8x256xf32>
    %296 = math.exp %295 : vector<8x256xf32>
    %cst_92 = arith.constant 1.000000e+00 : f32
    %297 = vector.broadcast %cst_92 : f32 to vector<8x256xf32>
    %298 = arith.addf %297, %296 : vector<8x256xf32>
    %299 = arith.divf %297, %298 : vector<8x256xf32>
    %300 = vector.extract_strided_slice %293 {offsets = [0, 256], sizes = [8, 256], strides = [1, 1]} : vector<8x1024xf32> to vector<8x256xf32>
    %301 = arith.negf %300 : vector<8x256xf32>
    %302 = math.exp %301 : vector<8x256xf32>
    %cst_93 = arith.constant 1.000000e+00 : f32
    %303 = vector.broadcast %cst_93 : f32 to vector<8x256xf32>
    %304 = arith.addf %303, %302 : vector<8x256xf32>
    %305 = arith.divf %303, %304 : vector<8x256xf32>
    %306 = vector.extract_strided_slice %293 {offsets = [0, 512], sizes = [8, 256], strides = [1, 1]} : vector<8x1024xf32> to vector<8x256xf32>
    %307 = vector.extract_strided_slice %293 {offsets = [0, 768], sizes = [8, 256], strides = [1, 1]} : vector<8x1024xf32> to vector<8x256xf32>
    %308 = arith.mulf %299, %307 : vector<8x256xf32>
    %309 = arith.addf %306, %308 : vector<8x256xf32>
    %310 = math.tanh %309 : vector<8x256xf32>
    %cst_94 = arith.constant 1.000000e+00 : f32
    %311 = vector.broadcast %cst_94 : f32 to vector<8x256xf32>
    %312 = arith.subf %311, %305 : vector<8x256xf32>
    %313 = arith.mulf %312, %310 : vector<8x256xf32>
    %314 = arith.mulf %305, %242 : vector<8x256xf32>
    %315 = arith.addf %313, %314 : vector<8x256xf32>
    %cst_95 = arith.constant 0.000000e+00 : f32
    %316 = vector.broadcast %cst_95 : f32 to vector<8x1xf32>
    %317 = arith.cmpf ogt, %249, %316 : vector<8x1xf32>
    %318 = vector.shape_cast %317 : vector<8x1xi1> to vector<8x1xi1>
    %319 = vector.broadcast %318 : vector<8x1xi1> to vector<8x256xi1>
    %320 = arith.select %319, %315, %242 : vector<8x256xi1>, vector<8x256xf32>
    %c4_i32 = arith.constant 4 : i32
    %c8_i32_96 = arith.constant 8 : i32
    %321 = arith.muli %c4_i32, %c8_i32_96 : i32
    %322 = tpu.assume_multiple %321, 8 : i32
    %323 = arith.index_cast %322 : i32 to index
    %c0_97 = arith.constant 0 : index
    %324 = vector.load %arg15[%323, %c0_97] : memref<64x768xf32, #tpu.memory_space<vmem>>, vector<8x768xf32>
    %325 = arith.index_cast %c4_i32 : i32 to index
    %c0_98 = arith.constant 0 : index
    %c0_99 = arith.constant 0 : index
    %326 = vector.load %arg2[%325, %c0_98, %c0_99] : memref<8x8x1xf32, #tpu.memory_space<vmem>>, vector<1x8x1xf32>
    %327 = vector.shape_cast %326 : vector<1x8x1xf32> to vector<8x1xf32>
    %328 = arith.truncf %286 : vector<8x256xf32> to vector<8x256xbf16>
    %c0_100 = arith.constant 0 : index
    %c0_101 = arith.constant 0 : index
    %329 = vector.load %arg6[%c0_100, %c0_101] : memref<256x768xbf16, #tpu.memory_space<vmem>>, vector<256x768xbf16>
    %cst_102 = arith.constant dense<0.000000e+00> : vector<8x768xf32>
    %330 = tpu.matmul %328, %329, %cst_102 {dimension_numbers = #tpu.dot_dimension_numbers<[1], [0], [0], [1], [0, 0, 1, 1], [], []>} : vector<8x256xbf16>, vector<256x768xbf16>, vector<8x768xf32> -> vector<8x768xf32>
    %c0_103 = arith.constant 0 : index
    %c0_104 = arith.constant 0 : index
    %331 = vector.load %arg7[%c0_103, %c0_104] : memref<1x768xf32, #tpu.memory_space<vmem>>, vector<1x768xf32>
    %332 = vector.broadcast %331 : vector<1x768xf32> to vector<8x768xf32>
    %333 = arith.addf %330, %332 : vector<8x768xf32>
    %334 = vector.extract_strided_slice %324 {offsets = [0, 0], sizes = [8, 256], strides = [1, 1]} : vector<8x768xf32> to vector<8x256xf32>
    %335 = vector.extract_strided_slice %333 {offsets = [0, 0], sizes = [8, 256], strides = [1, 1]} : vector<8x768xf32> to vector<8x256xf32>
    %336 = arith.addf %334, %335 : vector<8x256xf32>
    %337 = arith.negf %336 : vector<8x256xf32>
    %338 = math.exp %337 : vector<8x256xf32>
    %cst_105 = arith.constant 1.000000e+00 : f32
    %339 = vector.broadcast %cst_105 : f32 to vector<8x256xf32>
    %340 = arith.addf %339, %338 : vector<8x256xf32>
    %341 = arith.divf %339, %340 : vector<8x256xf32>
    %342 = vector.extract_strided_slice %324 {offsets = [0, 256], sizes = [8, 256], strides = [1, 1]} : vector<8x768xf32> to vector<8x256xf32>
    %343 = vector.extract_strided_slice %333 {offsets = [0, 256], sizes = [8, 256], strides = [1, 1]} : vector<8x768xf32> to vector<8x256xf32>
    %344 = arith.addf %342, %343 : vector<8x256xf32>
    %345 = arith.negf %344 : vector<8x256xf32>
    %346 = math.exp %345 : vector<8x256xf32>
    %cst_106 = arith.constant 1.000000e+00 : f32
    %347 = vector.broadcast %cst_106 : f32 to vector<8x256xf32>
    %348 = arith.addf %347, %346 : vector<8x256xf32>
    %349 = arith.divf %347, %348 : vector<8x256xf32>
    %350 = vector.extract_strided_slice %324 {offsets = [0, 512], sizes = [8, 256], strides = [1, 1]} : vector<8x768xf32> to vector<8x256xf32>
    %351 = vector.extract_strided_slice %333 {offsets = [0, 512], sizes = [8, 256], strides = [1, 1]} : vector<8x768xf32> to vector<8x256xf32>
    %352 = arith.mulf %341, %351 : vector<8x256xf32>
    %353 = arith.addf %350, %352 : vector<8x256xf32>
    %354 = math.tanh %353 : vector<8x256xf32>
    %cst_107 = arith.constant 1.000000e+00 : f32
    %355 = vector.broadcast %cst_107 : f32 to vector<8x256xf32>
    %356 = arith.subf %355, %349 : vector<8x256xf32>
    %357 = arith.mulf %356, %354 : vector<8x256xf32>
    %358 = arith.mulf %349, %286 : vector<8x256xf32>
    %359 = arith.addf %357, %358 : vector<8x256xf32>
    %cst_108 = arith.constant 0.000000e+00 : f32
    %360 = vector.broadcast %cst_108 : f32 to vector<8x1xf32>
    %361 = arith.cmpf ogt, %327, %360 : vector<8x1xf32>
    %362 = vector.shape_cast %361 : vector<8x1xi1> to vector<8x1xi1>
    %363 = vector.broadcast %362 : vector<8x1xi1> to vector<8x256xi1>
    %364 = arith.select %363, %359, %286 : vector<8x256xi1>, vector<8x256xf32>
    %365 = tpu.concatenate %364, %320 in 1 : vector<8x256xf32>, vector<8x256xf32> -> vector<8x512xf32>
    %366 = arith.truncf %365 : vector<8x512xf32> to vector<8x512xbf16>
    %c0_109 = arith.constant 0 : index
    %c0_110 = arith.constant 0 : index
    %367 = vector.load %arg8[%c0_109, %c0_110] : memref<512x1024xbf16, #tpu.memory_space<vmem>>, vector<512x1024xbf16>
    %cst_111 = arith.constant dense<0.000000e+00> : vector<8x1024xf32>
    %368 = tpu.matmul %366, %367, %cst_111 {dimension_numbers = #tpu.dot_dimension_numbers<[1], [0], [0], [1], [0, 0, 1, 1], [], []>} : vector<8x512xbf16>, vector<512x1024xbf16>, vector<8x1024xf32> -> vector<8x1024xf32>
    %c0_112 = arith.constant 0 : index
    %c0_113 = arith.constant 0 : index
    %369 = vector.load %arg9[%c0_112, %c0_113] : memref<1x1024xf32, #tpu.memory_space<vmem>>, vector<1x1024xf32>
    %370 = vector.broadcast %369 : vector<1x1024xf32> to vector<8x1024xf32>
    %371 = arith.addf %368, %370 : vector<8x1024xf32>
    %372 = vector.extract_strided_slice %371 {offsets = [0, 0], sizes = [8, 256], strides = [1, 1]} : vector<8x1024xf32> to vector<8x256xf32>
    %373 = arith.negf %372 : vector<8x256xf32>
    %374 = math.exp %373 : vector<8x256xf32>
    %cst_114 = arith.constant 1.000000e+00 : f32
    %375 = vector.broadcast %cst_114 : f32 to vector<8x256xf32>
    %376 = arith.addf %375, %374 : vector<8x256xf32>
    %377 = arith.divf %375, %376 : vector<8x256xf32>
    %378 = vector.extract_strided_slice %371 {offsets = [0, 256], sizes = [8, 256], strides = [1, 1]} : vector<8x1024xf32> to vector<8x256xf32>
    %379 = arith.negf %378 : vector<8x256xf32>
    %380 = math.exp %379 : vector<8x256xf32>
    %cst_115 = arith.constant 1.000000e+00 : f32
    %381 = vector.broadcast %cst_115 : f32 to vector<8x256xf32>
    %382 = arith.addf %381, %380 : vector<8x256xf32>
    %383 = arith.divf %381, %382 : vector<8x256xf32>
    %384 = vector.extract_strided_slice %371 {offsets = [0, 512], sizes = [8, 256], strides = [1, 1]} : vector<8x1024xf32> to vector<8x256xf32>
    %385 = vector.extract_strided_slice %371 {offsets = [0, 768], sizes = [8, 256], strides = [1, 1]} : vector<8x1024xf32> to vector<8x256xf32>
    %386 = arith.mulf %377, %385 : vector<8x256xf32>
    %387 = arith.addf %384, %386 : vector<8x256xf32>
    %388 = math.tanh %387 : vector<8x256xf32>
    %cst_116 = arith.constant 1.000000e+00 : f32
    %389 = vector.broadcast %cst_116 : f32 to vector<8x256xf32>
    %390 = arith.subf %389, %383 : vector<8x256xf32>
    %391 = arith.mulf %390, %388 : vector<8x256xf32>
    %392 = arith.mulf %383, %320 : vector<8x256xf32>
    %393 = arith.addf %391, %392 : vector<8x256xf32>
    %cst_117 = arith.constant 0.000000e+00 : f32
    %394 = vector.broadcast %cst_117 : f32 to vector<8x1xf32>
    %395 = arith.cmpf ogt, %327, %394 : vector<8x1xf32>
    %396 = vector.shape_cast %395 : vector<8x1xi1> to vector<8x1xi1>
    %397 = vector.broadcast %396 : vector<8x1xi1> to vector<8x256xi1>
    %398 = arith.select %397, %393, %320 : vector<8x256xi1>, vector<8x256xf32>
    %c5_i32 = arith.constant 5 : i32
    %c8_i32_118 = arith.constant 8 : i32
    %399 = arith.muli %c5_i32, %c8_i32_118 : i32
    %400 = tpu.assume_multiple %399, 8 : i32
    %401 = arith.index_cast %400 : i32 to index
    %c0_119 = arith.constant 0 : index
    %402 = vector.load %arg15[%401, %c0_119] : memref<64x768xf32, #tpu.memory_space<vmem>>, vector<8x768xf32>
    %403 = arith.index_cast %c5_i32 : i32 to index
    %c0_120 = arith.constant 0 : index
    %c0_121 = arith.constant 0 : index
    %404 = vector.load %arg2[%403, %c0_120, %c0_121] : memref<8x8x1xf32, #tpu.memory_space<vmem>>, vector<1x8x1xf32>
    %405 = vector.shape_cast %404 : vector<1x8x1xf32> to vector<8x1xf32>
    %406 = arith.truncf %364 : vector<8x256xf32> to vector<8x256xbf16>
    %c0_122 = arith.constant 0 : index
    %c0_123 = arith.constant 0 : index
    %407 = vector.load %arg6[%c0_122, %c0_123] : memref<256x768xbf16, #tpu.memory_space<vmem>>, vector<256x768xbf16>
    %cst_124 = arith.constant dense<0.000000e+00> : vector<8x768xf32>
    %408 = tpu.matmul %406, %407, %cst_124 {dimension_numbers = #tpu.dot_dimension_numbers<[1], [0], [0], [1], [0, 0, 1, 1], [], []>} : vector<8x256xbf16>, vector<256x768xbf16>, vector<8x768xf32> -> vector<8x768xf32>
    %c0_125 = arith.constant 0 : index
    %c0_126 = arith.constant 0 : index
    %409 = vector.load %arg7[%c0_125, %c0_126] : memref<1x768xf32, #tpu.memory_space<vmem>>, vector<1x768xf32>
    %410 = vector.broadcast %409 : vector<1x768xf32> to vector<8x768xf32>
    %411 = arith.addf %408, %410 : vector<8x768xf32>
    %412 = vector.extract_strided_slice %402 {offsets = [0, 0], sizes = [8, 256], strides = [1, 1]} : vector<8x768xf32> to vector<8x256xf32>
    %413 = vector.extract_strided_slice %411 {offsets = [0, 0], sizes = [8, 256], strides = [1, 1]} : vector<8x768xf32> to vector<8x256xf32>
    %414 = arith.addf %412, %413 : vector<8x256xf32>
    %415 = arith.negf %414 : vector<8x256xf32>
    %416 = math.exp %415 : vector<8x256xf32>
    %cst_127 = arith.constant 1.000000e+00 : f32
    %417 = vector.broadcast %cst_127 : f32 to vector<8x256xf32>
    %418 = arith.addf %417, %416 : vector<8x256xf32>
    %419 = arith.divf %417, %418 : vector<8x256xf32>
    %420 = vector.extract_strided_slice %402 {offsets = [0, 256], sizes = [8, 256], strides = [1, 1]} : vector<8x768xf32> to vector<8x256xf32>
    %421 = vector.extract_strided_slice %411 {offsets = [0, 256], sizes = [8, 256], strides = [1, 1]} : vector<8x768xf32> to vector<8x256xf32>
    %422 = arith.addf %420, %421 : vector<8x256xf32>
    %423 = arith.negf %422 : vector<8x256xf32>
    %424 = math.exp %423 : vector<8x256xf32>
    %cst_128 = arith.constant 1.000000e+00 : f32
    %425 = vector.broadcast %cst_128 : f32 to vector<8x256xf32>
    %426 = arith.addf %425, %424 : vector<8x256xf32>
    %427 = arith.divf %425, %426 : vector<8x256xf32>
    %428 = vector.extract_strided_slice %402 {offsets = [0, 512], sizes = [8, 256], strides = [1, 1]} : vector<8x768xf32> to vector<8x256xf32>
    %429 = vector.extract_strided_slice %411 {offsets = [0, 512], sizes = [8, 256], strides = [1, 1]} : vector<8x768xf32> to vector<8x256xf32>
    %430 = arith.mulf %419, %429 : vector<8x256xf32>
    %431 = arith.addf %428, %430 : vector<8x256xf32>
    %432 = math.tanh %431 : vector<8x256xf32>
    %cst_129 = arith.constant 1.000000e+00 : f32
    %433 = vector.broadcast %cst_129 : f32 to vector<8x256xf32>
    %434 = arith.subf %433, %427 : vector<8x256xf32>
    %435 = arith.mulf %434, %432 : vector<8x256xf32>
    %436 = arith.mulf %427, %364 : vector<8x256xf32>
    %437 = arith.addf %435, %436 : vector<8x256xf32>
    %cst_130 = arith.constant 0.000000e+00 : f32
    %438 = vector.broadcast %cst_130 : f32 to vector<8x1xf32>
    %439 = arith.cmpf ogt, %405, %438 : vector<8x1xf32>
    %440 = vector.shape_cast %439 : vector<8x1xi1> to vector<8x1xi1>
    %441 = vector.broadcast %440 : vector<8x1xi1> to vector<8x256xi1>
    %442 = arith.select %441, %437, %364 : vector<8x256xi1>, vector<8x256xf32>
    %443 = tpu.concatenate %442, %398 in 1 : vector<8x256xf32>, vector<8x256xf32> -> vector<8x512xf32>
    %444 = arith.truncf %443 : vector<8x512xf32> to vector<8x512xbf16>
    %c0_131 = arith.constant 0 : index
    %c0_132 = arith.constant 0 : index
    %445 = vector.load %arg8[%c0_131, %c0_132] : memref<512x1024xbf16, #tpu.memory_space<vmem>>, vector<512x1024xbf16>
    %cst_133 = arith.constant dense<0.000000e+00> : vector<8x1024xf32>
    %446 = tpu.matmul %444, %445, %cst_133 {dimension_numbers = #tpu.dot_dimension_numbers<[1], [0], [0], [1], [0, 0, 1, 1], [], []>} : vector<8x512xbf16>, vector<512x1024xbf16>, vector<8x1024xf32> -> vector<8x1024xf32>
    %c0_134 = arith.constant 0 : index
    %c0_135 = arith.constant 0 : index
    %447 = vector.load %arg9[%c0_134, %c0_135] : memref<1x1024xf32, #tpu.memory_space<vmem>>, vector<1x1024xf32>
    %448 = vector.broadcast %447 : vector<1x1024xf32> to vector<8x1024xf32>
    %449 = arith.addf %446, %448 : vector<8x1024xf32>
    %450 = vector.extract_strided_slice %449 {offsets = [0, 0], sizes = [8, 256], strides = [1, 1]} : vector<8x1024xf32> to vector<8x256xf32>
    %451 = arith.negf %450 : vector<8x256xf32>
    %452 = math.exp %451 : vector<8x256xf32>
    %cst_136 = arith.constant 1.000000e+00 : f32
    %453 = vector.broadcast %cst_136 : f32 to vector<8x256xf32>
    %454 = arith.addf %453, %452 : vector<8x256xf32>
    %455 = arith.divf %453, %454 : vector<8x256xf32>
    %456 = vector.extract_strided_slice %449 {offsets = [0, 256], sizes = [8, 256], strides = [1, 1]} : vector<8x1024xf32> to vector<8x256xf32>
    %457 = arith.negf %456 : vector<8x256xf32>
    %458 = math.exp %457 : vector<8x256xf32>
    %cst_137 = arith.constant 1.000000e+00 : f32
    %459 = vector.broadcast %cst_137 : f32 to vector<8x256xf32>
    %460 = arith.addf %459, %458 : vector<8x256xf32>
    %461 = arith.divf %459, %460 : vector<8x256xf32>
    %462 = vector.extract_strided_slice %449 {offsets = [0, 512], sizes = [8, 256], strides = [1, 1]} : vector<8x1024xf32> to vector<8x256xf32>
    %463 = vector.extract_strided_slice %449 {offsets = [0, 768], sizes = [8, 256], strides = [1, 1]} : vector<8x1024xf32> to vector<8x256xf32>
    %464 = arith.mulf %455, %463 : vector<8x256xf32>
    %465 = arith.addf %462, %464 : vector<8x256xf32>
    %466 = math.tanh %465 : vector<8x256xf32>
    %cst_138 = arith.constant 1.000000e+00 : f32
    %467 = vector.broadcast %cst_138 : f32 to vector<8x256xf32>
    %468 = arith.subf %467, %461 : vector<8x256xf32>
    %469 = arith.mulf %468, %466 : vector<8x256xf32>
    %470 = arith.mulf %461, %398 : vector<8x256xf32>
    %471 = arith.addf %469, %470 : vector<8x256xf32>
    %cst_139 = arith.constant 0.000000e+00 : f32
    %472 = vector.broadcast %cst_139 : f32 to vector<8x1xf32>
    %473 = arith.cmpf ogt, %405, %472 : vector<8x1xf32>
    %474 = vector.shape_cast %473 : vector<8x1xi1> to vector<8x1xi1>
    %475 = vector.broadcast %474 : vector<8x1xi1> to vector<8x256xi1>
    %476 = arith.select %475, %471, %398 : vector<8x256xi1>, vector<8x256xf32>
    %c6_i32 = arith.constant 6 : i32
    %c8_i32_140 = arith.constant 8 : i32
    %477 = arith.muli %c6_i32, %c8_i32_140 : i32
    %478 = tpu.assume_multiple %477, 8 : i32
    %479 = arith.index_cast %478 : i32 to index
    %c0_141 = arith.constant 0 : index
    %480 = vector.load %arg15[%479, %c0_141] : memref<64x768xf32, #tpu.memory_space<vmem>>, vector<8x768xf32>
    %481 = arith.index_cast %c6_i32 : i32 to index
    %c0_142 = arith.constant 0 : index
    %c0_143 = arith.constant 0 : index
    %482 = vector.load %arg2[%481, %c0_142, %c0_143] : memref<8x8x1xf32, #tpu.memory_space<vmem>>, vector<1x8x1xf32>
    %483 = vector.shape_cast %482 : vector<1x8x1xf32> to vector<8x1xf32>
    %484 = arith.truncf %442 : vector<8x256xf32> to vector<8x256xbf16>
    %c0_144 = arith.constant 0 : index
    %c0_145 = arith.constant 0 : index
    %485 = vector.load %arg6[%c0_144, %c0_145] : memref<256x768xbf16, #tpu.memory_space<vmem>>, vector<256x768xbf16>
    %cst_146 = arith.constant dense<0.000000e+00> : vector<8x768xf32>
    %486 = tpu.matmul %484, %485, %cst_146 {dimension_numbers = #tpu.dot_dimension_numbers<[1], [0], [0], [1], [0, 0, 1, 1], [], []>} : vector<8x256xbf16>, vector<256x768xbf16>, vector<8x768xf32> -> vector<8x768xf32>
    %c0_147 = arith.constant 0 : index
    %c0_148 = arith.constant 0 : index
    %487 = vector.load %arg7[%c0_147, %c0_148] : memref<1x768xf32, #tpu.memory_space<vmem>>, vector<1x768xf32>
    %488 = vector.broadcast %487 : vector<1x768xf32> to vector<8x768xf32>
    %489 = arith.addf %486, %488 : vector<8x768xf32>
    %490 = vector.extract_strided_slice %480 {offsets = [0, 0], sizes = [8, 256], strides = [1, 1]} : vector<8x768xf32> to vector<8x256xf32>
    %491 = vector.extract_strided_slice %489 {offsets = [0, 0], sizes = [8, 256], strides = [1, 1]} : vector<8x768xf32> to vector<8x256xf32>
    %492 = arith.addf %490, %491 : vector<8x256xf32>
    %493 = arith.negf %492 : vector<8x256xf32>
    %494 = math.exp %493 : vector<8x256xf32>
    %cst_149 = arith.constant 1.000000e+00 : f32
    %495 = vector.broadcast %cst_149 : f32 to vector<8x256xf32>
    %496 = arith.addf %495, %494 : vector<8x256xf32>
    %497 = arith.divf %495, %496 : vector<8x256xf32>
    %498 = vector.extract_strided_slice %480 {offsets = [0, 256], sizes = [8, 256], strides = [1, 1]} : vector<8x768xf32> to vector<8x256xf32>
    %499 = vector.extract_strided_slice %489 {offsets = [0, 256], sizes = [8, 256], strides = [1, 1]} : vector<8x768xf32> to vector<8x256xf32>
    %500 = arith.addf %498, %499 : vector<8x256xf32>
    %501 = arith.negf %500 : vector<8x256xf32>
    %502 = math.exp %501 : vector<8x256xf32>
    %cst_150 = arith.constant 1.000000e+00 : f32
    %503 = vector.broadcast %cst_150 : f32 to vector<8x256xf32>
    %504 = arith.addf %503, %502 : vector<8x256xf32>
    %505 = arith.divf %503, %504 : vector<8x256xf32>
    %506 = vector.extract_strided_slice %480 {offsets = [0, 512], sizes = [8, 256], strides = [1, 1]} : vector<8x768xf32> to vector<8x256xf32>
    %507 = vector.extract_strided_slice %489 {offsets = [0, 512], sizes = [8, 256], strides = [1, 1]} : vector<8x768xf32> to vector<8x256xf32>
    %508 = arith.mulf %497, %507 : vector<8x256xf32>
    %509 = arith.addf %506, %508 : vector<8x256xf32>
    %510 = math.tanh %509 : vector<8x256xf32>
    %cst_151 = arith.constant 1.000000e+00 : f32
    %511 = vector.broadcast %cst_151 : f32 to vector<8x256xf32>
    %512 = arith.subf %511, %505 : vector<8x256xf32>
    %513 = arith.mulf %512, %510 : vector<8x256xf32>
    %514 = arith.mulf %505, %442 : vector<8x256xf32>
    %515 = arith.addf %513, %514 : vector<8x256xf32>
    %cst_152 = arith.constant 0.000000e+00 : f32
    %516 = vector.broadcast %cst_152 : f32 to vector<8x1xf32>
    %517 = arith.cmpf ogt, %483, %516 : vector<8x1xf32>
    %518 = vector.shape_cast %517 : vector<8x1xi1> to vector<8x1xi1>
    %519 = vector.broadcast %518 : vector<8x1xi1> to vector<8x256xi1>
    %520 = arith.select %519, %515, %442 : vector<8x256xi1>, vector<8x256xf32>
    %521 = tpu.concatenate %520, %476 in 1 : vector<8x256xf32>, vector<8x256xf32> -> vector<8x512xf32>
    %522 = arith.truncf %521 : vector<8x512xf32> to vector<8x512xbf16>
    %c0_153 = arith.constant 0 : index
    %c0_154 = arith.constant 0 : index
    %523 = vector.load %arg8[%c0_153, %c0_154] : memref<512x1024xbf16, #tpu.memory_space<vmem>>, vector<512x1024xbf16>
    %cst_155 = arith.constant dense<0.000000e+00> : vector<8x1024xf32>
    %524 = tpu.matmul %522, %523, %cst_155 {dimension_numbers = #tpu.dot_dimension_numbers<[1], [0], [0], [1], [0, 0, 1, 1], [], []>} : vector<8x512xbf16>, vector<512x1024xbf16>, vector<8x1024xf32> -> vector<8x1024xf32>
    %c0_156 = arith.constant 0 : index
    %c0_157 = arith.constant 0 : index
    %525 = vector.load %arg9[%c0_156, %c0_157] : memref<1x1024xf32, #tpu.memory_space<vmem>>, vector<1x1024xf32>
    %526 = vector.broadcast %525 : vector<1x1024xf32> to vector<8x1024xf32>
    %527 = arith.addf %524, %526 : vector<8x1024xf32>
    %528 = vector.extract_strided_slice %527 {offsets = [0, 0], sizes = [8, 256], strides = [1, 1]} : vector<8x1024xf32> to vector<8x256xf32>
    %529 = arith.negf %528 : vector<8x256xf32>
    %530 = math.exp %529 : vector<8x256xf32>
    %cst_158 = arith.constant 1.000000e+00 : f32
    %531 = vector.broadcast %cst_158 : f32 to vector<8x256xf32>
    %532 = arith.addf %531, %530 : vector<8x256xf32>
    %533 = arith.divf %531, %532 : vector<8x256xf32>
    %534 = vector.extract_strided_slice %527 {offsets = [0, 256], sizes = [8, 256], strides = [1, 1]} : vector<8x1024xf32> to vector<8x256xf32>
    %535 = arith.negf %534 : vector<8x256xf32>
    %536 = math.exp %535 : vector<8x256xf32>
    %cst_159 = arith.constant 1.000000e+00 : f32
    %537 = vector.broadcast %cst_159 : f32 to vector<8x256xf32>
    %538 = arith.addf %537, %536 : vector<8x256xf32>
    %539 = arith.divf %537, %538 : vector<8x256xf32>
    %540 = vector.extract_strided_slice %527 {offsets = [0, 512], sizes = [8, 256], strides = [1, 1]} : vector<8x1024xf32> to vector<8x256xf32>
    %541 = vector.extract_strided_slice %527 {offsets = [0, 768], sizes = [8, 256], strides = [1, 1]} : vector<8x1024xf32> to vector<8x256xf32>
    %542 = arith.mulf %533, %541 : vector<8x256xf32>
    %543 = arith.addf %540, %542 : vector<8x256xf32>
    %544 = math.tanh %543 : vector<8x256xf32>
    %cst_160 = arith.constant 1.000000e+00 : f32
    %545 = vector.broadcast %cst_160 : f32 to vector<8x256xf32>
    %546 = arith.subf %545, %539 : vector<8x256xf32>
    %547 = arith.mulf %546, %544 : vector<8x256xf32>
    %548 = arith.mulf %539, %476 : vector<8x256xf32>
    %549 = arith.addf %547, %548 : vector<8x256xf32>
    %cst_161 = arith.constant 0.000000e+00 : f32
    %550 = vector.broadcast %cst_161 : f32 to vector<8x1xf32>
    %551 = arith.cmpf ogt, %483, %550 : vector<8x1xf32>
    %552 = vector.shape_cast %551 : vector<8x1xi1> to vector<8x1xi1>
    %553 = vector.broadcast %552 : vector<8x1xi1> to vector<8x256xi1>
    %554 = arith.select %553, %549, %476 : vector<8x256xi1>, vector<8x256xf32>
    %c7_i32 = arith.constant 7 : i32
    %c8_i32_162 = arith.constant 8 : i32
    %555 = arith.muli %c7_i32, %c8_i32_162 : i32
    %556 = tpu.assume_multiple %555, 8 : i32
    %557 = arith.index_cast %556 : i32 to index
    %c0_163 = arith.constant 0 : index
    %558 = vector.load %arg15[%557, %c0_163] : memref<64x768xf32, #tpu.memory_space<vmem>>, vector<8x768xf32>
    %559 = arith.index_cast %c7_i32 : i32 to index
    %c0_164 = arith.constant 0 : index
    %c0_165 = arith.constant 0 : index
    %560 = vector.load %arg2[%559, %c0_164, %c0_165] : memref<8x8x1xf32, #tpu.memory_space<vmem>>, vector<1x8x1xf32>
    %561 = vector.shape_cast %560 : vector<1x8x1xf32> to vector<8x1xf32>
    %562 = arith.truncf %520 : vector<8x256xf32> to vector<8x256xbf16>
    %c0_166 = arith.constant 0 : index
    %c0_167 = arith.constant 0 : index
    %563 = vector.load %arg6[%c0_166, %c0_167] : memref<256x768xbf16, #tpu.memory_space<vmem>>, vector<256x768xbf16>
    %cst_168 = arith.constant dense<0.000000e+00> : vector<8x768xf32>
    %564 = tpu.matmul %562, %563, %cst_168 {dimension_numbers = #tpu.dot_dimension_numbers<[1], [0], [0], [1], [0, 0, 1, 1], [], []>} : vector<8x256xbf16>, vector<256x768xbf16>, vector<8x768xf32> -> vector<8x768xf32>
    %c0_169 = arith.constant 0 : index
    %c0_170 = arith.constant 0 : index
    %565 = vector.load %arg7[%c0_169, %c0_170] : memref<1x768xf32, #tpu.memory_space<vmem>>, vector<1x768xf32>
    %566 = vector.broadcast %565 : vector<1x768xf32> to vector<8x768xf32>
    %567 = arith.addf %564, %566 : vector<8x768xf32>
    %568 = vector.extract_strided_slice %558 {offsets = [0, 0], sizes = [8, 256], strides = [1, 1]} : vector<8x768xf32> to vector<8x256xf32>
    %569 = vector.extract_strided_slice %567 {offsets = [0, 0], sizes = [8, 256], strides = [1, 1]} : vector<8x768xf32> to vector<8x256xf32>
    %570 = arith.addf %568, %569 : vector<8x256xf32>
    %571 = arith.negf %570 : vector<8x256xf32>
    %572 = math.exp %571 : vector<8x256xf32>
    %cst_171 = arith.constant 1.000000e+00 : f32
    %573 = vector.broadcast %cst_171 : f32 to vector<8x256xf32>
    %574 = arith.addf %573, %572 : vector<8x256xf32>
    %575 = arith.divf %573, %574 : vector<8x256xf32>
    %576 = vector.extract_strided_slice %558 {offsets = [0, 256], sizes = [8, 256], strides = [1, 1]} : vector<8x768xf32> to vector<8x256xf32>
    %577 = vector.extract_strided_slice %567 {offsets = [0, 256], sizes = [8, 256], strides = [1, 1]} : vector<8x768xf32> to vector<8x256xf32>
    %578 = arith.addf %576, %577 : vector<8x256xf32>
    %579 = arith.negf %578 : vector<8x256xf32>
    %580 = math.exp %579 : vector<8x256xf32>
    %cst_172 = arith.constant 1.000000e+00 : f32
    %581 = vector.broadcast %cst_172 : f32 to vector<8x256xf32>
    %582 = arith.addf %581, %580 : vector<8x256xf32>
    %583 = arith.divf %581, %582 : vector<8x256xf32>
    %584 = vector.extract_strided_slice %558 {offsets = [0, 512], sizes = [8, 256], strides = [1, 1]} : vector<8x768xf32> to vector<8x256xf32>
    %585 = vector.extract_strided_slice %567 {offsets = [0, 512], sizes = [8, 256], strides = [1, 1]} : vector<8x768xf32> to vector<8x256xf32>
    %586 = arith.mulf %575, %585 : vector<8x256xf32>
    %587 = arith.addf %584, %586 : vector<8x256xf32>
    %588 = math.tanh %587 : vector<8x256xf32>
    %cst_173 = arith.constant 1.000000e+00 : f32
    %589 = vector.broadcast %cst_173 : f32 to vector<8x256xf32>
    %590 = arith.subf %589, %583 : vector<8x256xf32>
    %591 = arith.mulf %590, %588 : vector<8x256xf32>
    %592 = arith.mulf %583, %520 : vector<8x256xf32>
    %593 = arith.addf %591, %592 : vector<8x256xf32>
    %cst_174 = arith.constant 0.000000e+00 : f32
    %594 = vector.broadcast %cst_174 : f32 to vector<8x1xf32>
    %595 = arith.cmpf ogt, %561, %594 : vector<8x1xf32>
    %596 = vector.shape_cast %595 : vector<8x1xi1> to vector<8x1xi1>
    %597 = vector.broadcast %596 : vector<8x1xi1> to vector<8x256xi1>
    %598 = arith.select %597, %593, %520 : vector<8x256xi1>, vector<8x256xf32>
    %599 = tpu.concatenate %598, %554 in 1 : vector<8x256xf32>, vector<8x256xf32> -> vector<8x512xf32>
    %600 = arith.truncf %599 : vector<8x512xf32> to vector<8x512xbf16>
    %c0_175 = arith.constant 0 : index
    %c0_176 = arith.constant 0 : index
    %601 = vector.load %arg8[%c0_175, %c0_176] : memref<512x1024xbf16, #tpu.memory_space<vmem>>, vector<512x1024xbf16>
    %cst_177 = arith.constant dense<0.000000e+00> : vector<8x1024xf32>
    %602 = tpu.matmul %600, %601, %cst_177 {dimension_numbers = #tpu.dot_dimension_numbers<[1], [0], [0], [1], [0, 0, 1, 1], [], []>} : vector<8x512xbf16>, vector<512x1024xbf16>, vector<8x1024xf32> -> vector<8x1024xf32>
    %c0_178 = arith.constant 0 : index
    %c0_179 = arith.constant 0 : index
    %603 = vector.load %arg9[%c0_178, %c0_179] : memref<1x1024xf32, #tpu.memory_space<vmem>>, vector<1x1024xf32>
    %604 = vector.broadcast %603 : vector<1x1024xf32> to vector<8x1024xf32>
    %605 = arith.addf %602, %604 : vector<8x1024xf32>
    %606 = vector.extract_strided_slice %605 {offsets = [0, 0], sizes = [8, 256], strides = [1, 1]} : vector<8x1024xf32> to vector<8x256xf32>
    %607 = arith.negf %606 : vector<8x256xf32>
    %608 = math.exp %607 : vector<8x256xf32>
    %cst_180 = arith.constant 1.000000e+00 : f32
    %609 = vector.broadcast %cst_180 : f32 to vector<8x256xf32>
    %610 = arith.addf %609, %608 : vector<8x256xf32>
    %611 = arith.divf %609, %610 : vector<8x256xf32>
    %612 = vector.extract_strided_slice %605 {offsets = [0, 256], sizes = [8, 256], strides = [1, 1]} : vector<8x1024xf32> to vector<8x256xf32>
    %613 = arith.negf %612 : vector<8x256xf32>
    %614 = math.exp %613 : vector<8x256xf32>
    %cst_181 = arith.constant 1.000000e+00 : f32
    %615 = vector.broadcast %cst_181 : f32 to vector<8x256xf32>
    %616 = arith.addf %615, %614 : vector<8x256xf32>
    %617 = arith.divf %615, %616 : vector<8x256xf32>
    %618 = vector.extract_strided_slice %605 {offsets = [0, 512], sizes = [8, 256], strides = [1, 1]} : vector<8x1024xf32> to vector<8x256xf32>
    %619 = vector.extract_strided_slice %605 {offsets = [0, 768], sizes = [8, 256], strides = [1, 1]} : vector<8x1024xf32> to vector<8x256xf32>
    %620 = arith.mulf %611, %619 : vector<8x256xf32>
    %621 = arith.addf %618, %620 : vector<8x256xf32>
    %622 = math.tanh %621 : vector<8x256xf32>
    %cst_182 = arith.constant 1.000000e+00 : f32
    %623 = vector.broadcast %cst_182 : f32 to vector<8x256xf32>
    %624 = arith.subf %623, %617 : vector<8x256xf32>
    %625 = arith.mulf %624, %622 : vector<8x256xf32>
    %626 = arith.mulf %617, %554 : vector<8x256xf32>
    %627 = arith.addf %625, %626 : vector<8x256xf32>
    %cst_183 = arith.constant 0.000000e+00 : f32
    %628 = vector.broadcast %cst_183 : f32 to vector<8x1xf32>
    %629 = arith.cmpf ogt, %561, %628 : vector<8x1xf32>
    %630 = vector.shape_cast %629 : vector<8x1xi1> to vector<8x1xi1>
    %631 = vector.broadcast %630 : vector<8x1xi1> to vector<8x256xi1>
    %632 = arith.select %631, %627, %554 : vector<8x256xi1>, vector<8x256xf32>
    %c8_i32_184 = arith.constant 8 : i32
    %c0_185 = arith.constant 0 : index
    %c0_186 = arith.constant 0 : index
    %633 = vector.load %arg3[%c0_185, %c0_186] : memref<8x1xf32, #tpu.memory_space<vmem>>, vector<8x1xf32>
    %634 = vector.broadcast %633 : vector<8x1xf32> to vector<8x256xf32>
    %635 = arith.mulf %632, %634 : vector<8x256xf32>
    %cst_187 = arith.constant dense<0.000000e+00> : vector<256xf32>
    %636 = vector.multi_reduction <add>, %635, %cst_187 [0] : vector<8x256xf32> to vector<256xf32>
    %637 = vector.shape_cast %636 : vector<256xf32> to vector<1x256xf32>
    %cst_188 = arith.constant 2.500000e-01 : f32
    %638 = vector.broadcast %cst_188 : f32 to vector<1x256xf32>
    %639 = arith.mulf %637, %638 : vector<1x256xf32>
    %640 = vector.broadcast %639 : vector<1x256xf32> to vector<8x256xf32>
    %641 = arith.subf %632, %640 : vector<8x256xf32>
    %642 = vector.broadcast %633 : vector<8x1xf32> to vector<8x256xf32>
    %643 = arith.mulf %641, %642 : vector<8x256xf32>
    %644 = arith.mulf %643, %643 : vector<8x256xf32>
    %cst_189 = arith.constant dense<0.000000e+00> : vector<256xf32>
    %645 = vector.multi_reduction <add>, %644, %cst_189 [0] : vector<8x256xf32> to vector<256xf32>
    %646 = vector.shape_cast %645 : vector<256xf32> to vector<1x256xf32>
    %cst_190 = arith.constant 2.500000e-01 : f32
    %647 = vector.broadcast %cst_190 : f32 to vector<1x256xf32>
    %648 = arith.mulf %646, %647 : vector<1x256xf32>
    %649 = vector.broadcast %639 : vector<1x256xf32> to vector<8x256xf32>
    %650 = arith.subf %632, %649 : vector<8x256xf32>
    %cst_191 = arith.constant 9.99999974E-6 : f32
    %651 = vector.broadcast %cst_191 : f32 to vector<1x256xf32>
    %652 = arith.addf %648, %651 : vector<1x256xf32>
    %653 = math.rsqrt %652 : vector<1x256xf32>
    %654 = vector.broadcast %653 : vector<1x256xf32> to vector<8x256xf32>
    %655 = arith.mulf %650, %654 : vector<8x256xf32>
    %c0_192 = arith.constant 0 : index
    %c0_193 = arith.constant 0 : index
    %656 = vector.load %arg10[%c0_192, %c0_193] : memref<1x256xf32, #tpu.memory_space<vmem>>, vector<1x256xf32>
    %657 = vector.broadcast %656 : vector<1x256xf32> to vector<8x256xf32>
    %658 = arith.mulf %655, %657 : vector<8x256xf32>
    %c0_194 = arith.constant 0 : index
    %c0_195 = arith.constant 0 : index
    %659 = vector.load %arg11[%c0_194, %c0_195] : memref<1x256xf32, #tpu.memory_space<vmem>>, vector<1x256xf32>
    %660 = vector.broadcast %659 : vector<1x256xf32> to vector<8x256xf32>
    %661 = arith.addf %658, %660 : vector<8x256xf32>
    %c0_196 = arith.constant 0 : index
    %c0_197 = arith.constant 0 : index
    %662 = vector.load %arg12[%c0_196, %c0_197] : memref<256x128xf32, #tpu.memory_space<vmem>>, vector<256x128xf32>
    %cst_198 = arith.constant dense<0.000000e+00> : vector<8x128xf32>
    %663 = tpu.matmul %661, %662, %cst_198 {dimension_numbers = #tpu.dot_dimension_numbers<[1], [0], [0], [1], [0, 0, 1, 1], [], []>} : vector<8x256xf32>, vector<256x128xf32>, vector<8x128xf32> -> vector<8x128xf32>
    %c0_199 = arith.constant 0 : index
    %c0_200 = arith.constant 0 : index
    %664 = vector.load %arg13[%c0_199, %c0_200] : memref<1x128xf32, #tpu.memory_space<vmem>>, vector<1x128xf32>
    %665 = vector.broadcast %664 : vector<1x128xf32> to vector<8x128xf32>
    %666 = arith.addf %663, %665 : vector<8x128xf32>
    %cst_201 = arith.constant dense<0xFF800000> : vector<8xf32>
    %667 = vector.multi_reduction <maximumf>, %666, %cst_201 [1] : vector<8x128xf32> to vector<8xf32>
    %668 = vector.shape_cast %667 : vector<8xf32> to vector<8x1xf32>
    %669 = vector.broadcast %668 : vector<8x1xf32> to vector<8x128xf32>
    %670 = arith.subf %666, %669 : vector<8x128xf32>
    %671 = math.exp %670 : vector<8x128xf32>
    %cst_202 = arith.constant dense<0.000000e+00> : vector<8xf32>
    %672 = vector.multi_reduction <add>, %671, %cst_202 [1] : vector<8x128xf32> to vector<8xf32>
    %673 = vector.shape_cast %672 : vector<8xf32> to vector<8x1xf32>
    %674 = tpu.reciprocal %673 {approx = true} : vector<8x1xf32> -> vector<8x1xf32>
    %675 = arith.mulf %673, %674 : vector<8x1xf32>
    %cst_203 = arith.constant 2.000000e+00 : f32
    %676 = vector.broadcast %cst_203 : f32 to vector<8x1xf32>
    %677 = arith.subf %676, %675 : vector<8x1xf32>
    %678 = arith.mulf %674, %677 : vector<8x1xf32>
    %679 = vector.broadcast %678 : vector<8x1xf32> to vector<8x128xf32>
    %680 = arith.mulf %671, %679 : vector<8x128xf32>
    %c0_204 = arith.constant 0 : index
    %c0_205 = arith.constant 0 : index
    %681 = vector.load %arg14[%c0_204, %c0_205] : memref<8x128xf32, #tpu.memory_space<vmem>>, vector<8x128xf32>
    tpu.vector_store %arg14[%c0_204, %c0_205], %680 {strides = array<i32>} : memref<8x128xf32, #tpu.memory_space<vmem>>, vector<8x128xf32>,
    return
  }
  func.func @transform_0(%arg0: i32) -> (i32, i32) {
    %c0_i32 = arith.constant 0 : i32
    %c0_i32_0 = arith.constant 0 : i32
    %c0_i32_1 = arith.constant 0 : i32
    return %c0_i32, %c0_i32_0 : i32, i32
  }
  func.func @transform_1(%arg0: i32) -> (i32, i32, i32) {
    %c0_i32 = arith.constant 0 : i32
    %c0_i32_0 = arith.constant 0 : i32
    %c0_i32_1 = arith.constant 0 : i32
    %c0_i32_2 = arith.constant 0 : i32
    return %c0_i32, %c0_i32_0, %c0_i32_1 : i32, i32, i32
  }
  func.func @transform_2(%arg0: i32) -> (i32, i32) {
    %c0_i32 = arith.constant 0 : i32
    %c0_i32_0 = arith.constant 0 : i32
    %c0_i32_1 = arith.constant 0 : i32
    return %c0_i32, %c0_i32_0 : i32, i32
  }
  func.func @transform_3(%arg0: i32) -> (i32, i32) {
    %c0_i32 = arith.constant 0 : i32
    %c0_i32_0 = arith.constant 0 : i32
    %c0_i32_1 = arith.constant 0 : i32
    return %c0_i32, %c0_i32_0 : i32, i32
  }
  func.func @transform_4(%arg0: i32) -> (i32, i32) {
    %c0_i32 = arith.constant 0 : i32
    %c0_i32_0 = arith.constant 0 : i32
    %c0_i32_1 = arith.constant 0 : i32
    return %c0_i32, %c0_i32_0 : i32, i32
  }
  func.func @transform_5(%arg0: i32) -> (i32, i32) {
    %c0_i32 = arith.constant 0 : i32
    %c0_i32_0 = arith.constant 0 : i32
    %c0_i32_1 = arith.constant 0 : i32
    return %c0_i32, %c0_i32_0 : i32, i32
  }
  func.func @transform_6(%arg0: i32) -> (i32, i32) {
    %c0_i32 = arith.constant 0 : i32
    %c0_i32_0 = arith.constant 0 : i32
    %c0_i32_1 = arith.constant 0 : i32
    return %c0_i32, %c0_i32_0 : i32, i32
  }
  func.func @transform_7(%arg0: i32) -> (i32, i32) {
    %c0_i32 = arith.constant 0 : i32
    %c0_i32_0 = arith.constant 0 : i32
    %c0_i32_1 = arith.constant 0 : i32
    return %c0_i32, %c0_i32_0 : i32, i32
  }
  func.func @transform_8(%arg0: i32) -> (i32, i32) {
    %c0_i32 = arith.constant 0 : i32
    %c0_i32_0 = arith.constant 0 : i32
    %c0_i32_1 = arith.constant 0 : i32
    return %c0_i32, %c0_i32_0 : i32, i32
  }
  func.func @transform_9(%arg0: i32) -> (i32, i32) {
    %c0_i32 = arith.constant 0 : i32
    %c0_i32_0 = arith.constant 0 : i32
    %c0_i32_1 = arith.constant 0 : i32
    return %c0_i32, %c0_i32_0 : i32, i32
  }
  func.func @transform_10(%arg0: i32) -> (i32, i32) {
    %c0_i32 = arith.constant 0 : i32
    %c0_i32_0 = arith.constant 0 : i32
    %c0_i32_1 = arith.constant 0 : i32
    return %c0_i32, %c0_i32_0 : i32, i32
  }
  func.func @transform_11(%arg0: i32) -> (i32, i32) {
    %c0_i32 = arith.constant 0 : i32
    %c0_i32_0 = arith.constant 0 : i32
    %c0_i32_1 = arith.constant 0 : i32
    return %c0_i32, %c0_i32_0 : i32, i32
  }
  func.func @transform_12(%arg0: i32) -> (i32, i32) {
    %c0_i32 = arith.constant 0 : i32
    %c0_i32_0 = arith.constant 0 : i32
    %c0_i32_1 = arith.constant 0 : i32
    return %c0_i32, %c0_i32_0 : i32, i32
  }
  func.func @transform_13(%arg0: i32) -> (i32, i32) {
    %c0_i32 = arith.constant 0 : i32
    %c0_i32_0 = arith.constant 0 : i32
    %c0_i32_1 = arith.constant 0 : i32
    return %c0_i32, %c0_i32_0 : i32, i32
  }
}

</mosaic_0001>

<llo_original>
// kernel: tpu_custom_call.1
$region0: #{tpu_custom_call.1}
  #allocation0 [shape = 'u32[]', space=smem, size = 0x4, offset = 0x4, fixed_abs, tag = 'smem constant byte address 0x4 - core index']
  #allocation1 [shape = 'u32[144,128]{1,0:T(1,128)}', space=vmem, size = 0x12000, scoped, tag = 'internal scratch']
  #allocation2 [shape = 'f32[64,768]{1,0:T(8,128)}', space=vmem, size = 0x30000, scoped, tag = 'scratch operand']
  %s0 = inlined_call_operand.vmem [shape: f32[64,6], index: 0, kind: input, shape index: {}]
  %s1 = inlined_call_operand.vmem [shape: f32[8,8,1], index: 1, kind: input, shape index: {}]
  %s2 = inlined_call_operand.vmem [shape: f32[8,1], index: 2, kind: input, shape index: {}]
  %s3 = inlined_call_operand.vmem [shape: f32[6,768], index: 3, kind: input, shape index: {}]
  %s4 = inlined_call_operand.vmem [shape: f32[1,768], index: 4, kind: input, shape index: {}]
  %s5 = inlined_call_operand.hbm [shape: bf16[256,768], index: 5, kind: input, shape index: {}]
  %s6 = inlined_call_operand.vmem [shape: f32[1,768], index: 6, kind: input, shape index: {}]
  %s7 = inlined_call_operand.hbm [shape: bf16[512,1024], index: 7, kind: input, shape index: {}]
  %s8 = inlined_call_operand.vmem [shape: f32[1,1024], index: 8, kind: input, shape index: {}]
  %s9 = inlined_call_operand.vmem [shape: f32[1,256], index: 9, kind: input, shape index: {}]
  %s10 = inlined_call_operand.vmem [shape: f32[1,256], index: 10, kind: input, shape index: {}]
  %s11 = inlined_call_operand.hbm [shape: f32[256,128], index: 11, kind: input, shape index: {}]
  %s12 = inlined_call_operand.vmem [shape: f32[1,128], index: 12, kind: input, shape index: {}]
  %s13 = inlined_call_operand.hbm [shape: f32[8,128], index: 13, kind: output, shape index: {}]
  %s14 = sld [smem:[#allocation0]]
  $region74: #{tpu_custom_call.1} parent=0
    _
  %s16 = ssub.s32 1, %s14
  %s17 = scalar_select 0, %s16, %s14
  $region1: #{tpu_custom_call.1} parent=0
    #allocation3 [shape = 'u8[393216]{0}', space=vmem, size = 0x60000, scoped, tag = 'input window, operand 5, single buffered']
    #allocation4 [shape = 's32[1]{0}', space=sflag, size = 0x4, scoped, tag = 'scoped memory for tpu_custom_call.1']
    #allocation5 [shape = 's32[1]{0}', space=sflag, size = 0x4, scoped, tag = 'scoped memory for tpu_custom_call.1']
    #allocation6 [shape = 'u8[1048576]{0}', space=vmem, size = 0x100000, scoped, tag = 'input window, operand 7, single buffered']
    #allocation7 [shape = 's32[1]{0}', space=sflag, size = 0x4, scoped, tag = 'scoped memory for tpu_custom_call.1']
    #allocation8 [shape = 'u8[131072]{0}', space=vmem, size = 0x20000, scoped, tag = 'input window, operand 11, single buffered']
    #allocation9 [shape = 'u8[4096]{0}', space=vmem, size = 0x1000, scoped, tag = 'output window, operand 0, single buffered']
    %18 = vsyncpa [#allocation4], 0
    %19 = vsyncpa [#allocation7], 0
    %20 = vsyncpa [#allocation5], 0
    // Predicated region
    $region2: #{tpu_custom_call.1} parent=1 // pred_check
      _
    $region3: #{tpu_custom_call.1} parent=1 // pred_check_branch
      %22 = sbr.rel (0) target = $region5
    $region4: #{tpu_custom_call.1} parent=1 // pred_region
      _
    $region5: #{tpu_custom_call.1} parent=1 // pred_fallthru
      _
    // Predicated region
    $region6: #{tpu_custom_call.1} parent=1 // pred_check
      _
    $region7: #{tpu_custom_call.1} parent=1 // pred_check_branch
      %24 = sbr.rel (0) target = $region9
    $region8: #{tpu_custom_call.1} parent=1 // pred_region
      _
    $region9: #{tpu_custom_call.1} parent=1 // pred_fallthru
      _
    // Predicated region
    $region10: #{tpu_custom_call.1} parent=1 // pred_check
      _
    $region11: #{tpu_custom_call.1} parent=1 // pred_check_branch
      %26 = sbr.rel (0) target = $region13
    $region12: #{tpu_custom_call.1} parent=1 // pred_region
      _
    $region13: #{tpu_custom_call.1} parent=1 // pred_fallthru
      _
    // Predicated region
    $region14: #{tpu_custom_call.1} parent=1 // pred_check
      _
    $region15: #{tpu_custom_call.1} parent=1 // pred_check_branch
      %28 = sbr.rel (0) target = $region17
    $region16: #{tpu_custom_call.1} parent=1 // pred_region
      _
    $region17: #{tpu_custom_call.1} parent=1 // pred_fallthru
      _
    // Predicated region
    $region18: #{tpu_custom_call.1} parent=1 // pred_check
      _
    $region19: #{tpu_custom_call.1} parent=1 // pred_check_branch
      %30 = sbr.rel (0) target = $region21
    $region20: #{tpu_custom_call.1} parent=1 // pred_region
      _
    $region21: #{tpu_custom_call.1} parent=1 // pred_fallthru
      _
    // Predicated region
    $region22: #{tpu_custom_call.1} parent=1 // pred_check
      _
    $region23: #{tpu_custom_call.1} parent=1 // pred_check_branch
      %32 = sbr.rel (0) target = $region25
    $region24: #{tpu_custom_call.1} parent=1 // pred_region
      %s34 = ssub.s32 12288, 12288
      %35 = vsyncadd [#allocation4], %s34
      %s36 = sshll.u32 [#allocation3], 4
      %s37 = int_to_ptr.vmem [resolvable:$true] %s36
      %42 = dma.hbm_to_vmem [thread:$0]  %s5, 12288, %s37, [#allocation4], 384, 384, 24
    $region25: #{tpu_custom_call.1} parent=1 // pred_fallthru
      _
    // Predicated region
    $region26: #{tpu_custom_call.1} parent=1 // pred_check
      _
    $region27: #{tpu_custom_call.1} parent=1 // pred_check_branch
      %44 = sbr.rel (0) target = $region29
    $region28: #{tpu_custom_call.1} parent=1 // pred_region
      _
    $region29: #{tpu_custom_call.1} parent=1 // pred_fallthru
      _
    // Predicated region
    $region30: #{tpu_custom_call.1} parent=1 // pred_check
      _
    $region31: #{tpu_custom_call.1} parent=1 // pred_check_branch
      %46 = sbr.rel (0) target = $region33
    $region32: #{tpu_custom_call.1} parent=1 // pred_region
      %s48 = ssub.s32 32768, 32768
      %49 = vsyncadd [#allocation7], %s48
      %s50 = sshll.u32 [#allocation6], 4
      %s51 = int_to_ptr.vmem [resolvable:$true] %s50
      %56 = dma.hbm_to_vmem [thread:$0]  %s7, 32768, %s51, [#allocation7], 512, 512, 32
    $region33: #{tpu_custom_call.1} parent=1 // pred_fallthru
      _
    // Predicated region
    $region34: #{tpu_custom_call.1} parent=1 // pred_check
      _
    $region35: #{tpu_custom_call.1} parent=1 // pred_check_branch
      %58 = sbr.rel (0) target = $region37
    $region36: #{tpu_custom_call.1} parent=1 // pred_region
      _
    $region37: #{tpu_custom_call.1} parent=1 // pred_fallthru
      _
    // Predicated region
    $region38: #{tpu_custom_call.1} parent=1 // pred_check
      _
    $region39: #{tpu_custom_call.1} parent=1 // pred_check_branch
      %60 = sbr.rel (0) target = $region41
    $region40: #{tpu_custom_call.1} parent=1 // pred_region
      _
    $region41: #{tpu_custom_call.1} parent=1 // pred_fallthru
      _
    // Predicated region
    $region42: #{tpu_custom_call.1} parent=1 // pred_check
      _
    $region43: #{tpu_custom_call.1} parent=1 // pred_check_branch
      %62 = sbr.rel (0) target = $region45
    $region44: #{tpu_custom_call.1} parent=1 // pred_region
      _
    $region45: #{tpu_custom_call.1} parent=1 // pred_fallthru
      _
    // Predicated region
    $region46: #{tpu_custom_call.1} parent=1 // pred_check
      _
    $region47: #{tpu_custom_call.1} parent=1 // pred_check_branch
      %64 = sbr.rel (0) target = $region49
    $region48: #{tpu_custom_call.1} parent=1 // pred_region
      %s66 = ssub.s32 4096, 4096
      %67 = vsyncadd [#allocation7], %s66
      %s68 = sshll.u32 [#allocation8], 4
      %s69 = int_to_ptr.vmem [resolvable:$true] %s68
      %74 = dma.hbm_to_vmem [thread:$0]  %s11, 4096, %s69, [#allocation7], 128, 128, 8
    $region49: #{tpu_custom_call.1} parent=1 // pred_fallthru
      _
    // Predicated region
    $region50: #{tpu_custom_call.1} parent=1 // pred_check
      _
    $region51: #{tpu_custom_call.1} parent=1 // pred_check_branch
      %76 = sbr.rel (0) target = $region53
    $region52: #{tpu_custom_call.1} parent=1 // pred_region
      _
    $region53: #{tpu_custom_call.1} parent=1 // pred_fallthru
      _
    // Predicated region
    $region54: #{tpu_custom_call.1} parent=1 // pred_check
      _
    $region55: #{tpu_custom_call.1} parent=1 // pred_check_branch
      %78 = sbr.rel (0) target = $region57
    $region56: #{tpu_custom_call.1} parent=1 // pred_region
      %79 = dma.done [#allocation4], 12288
    $region57: #{tpu_custom_call.1} parent=1 // pred_fallthru
      _
    // Predicated region
    $region58: #{tpu_custom_call.1} parent=1 // pred_check
      _
    $region59: #{tpu_custom_call.1} parent=1 // pred_check_branch
      %81 = sbr.rel (0) target = $region61
    $region60: #{tpu_custom_call.1} parent=1 // pred_region
      %82 = dma.done [#allocation7], 32768
    $region61: #{tpu_custom_call.1} parent=1 // pred_fallthru
      _
    // Predicated region
    $region62: #{tpu_custom_call.1} parent=1 // pred_check
      _
    $region63: #{tpu_custom_call.1} parent=1 // pred_check_branch
      %84 = sbr.rel (0) target = $region65
    $region64: #{tpu_custom_call.1} parent=1 // pred_region
      %85 = dma.done [#allocation7], 4096
    $region65: #{tpu_custom_call.1} parent=1 // pred_fallthru
      _
    %v87 = vld [vmem:[%s0] sm:$0xff]
    %v88 = vld [vmem:[%s0 + $0x8] sm:$0xff]
    %v89 = vld [vmem:[%s0 + $0x10] sm:$0xff]
    %v90 = vld [vmem:[%s0 + $0x18] sm:$0xff]
    %v91 = vld [vmem:[%s0 + $0x20] sm:$0xff]
    %v92 = vld [vmem:[%s0 + $0x28] sm:$0xff]
    %v93 = vld [vmem:[%s0 + $0x30] sm:$0xff]
    %v94 = vld [vmem:[%s0 + $0x38] sm:$0xff]
    %v95 = vld [vmem:[%s3] sm:$0x3f]
    %v96 = vld [vmem:[%s3 + $0x8] sm:$0x3f]
    %v97 = vld [vmem:[%s3 + $0x10] sm:$0x3f]
    %v98 = vld [vmem:[%s3 + $0x18] sm:$0x3f]
    %v99 = vld [vmem:[%s3 + $0x20] sm:$0x3f]
    %v100 = vld [vmem:[%s3 + $0x28] sm:$0x3f]
    %v101 = vld [vmem:[%s4] sm:$0x3f]
    %v103 = vlaneseq
    %v104 = vshrl.u32 %v103, 7
    %v105 = vsub.s32 0, %v104
    %v106 = vrot.slane %v101, %v105
    %v107 = vlaneseq
    %v108 = vshrl.u32 %v107, 7
    %v109 = vsub.s32 1, %v108
    %v110 = vrot.slane %v101, %v109
    %v111 = vlaneseq
    %v112 = vshrl.u32 %v111, 7
    %v113 = vsub.s32 2, %v112
    %v114 = vrot.slane %v101, %v113
    %v115 = vlaneseq
    %v116 = vshrl.u32 %v115, 7
    %v117 = vsub.s32 3, %v116
    %v118 = vrot.slane %v101, %v117
    %v119 = vlaneseq
    %v120 = vshrl.u32 %v119, 7
    %v121 = vsub.s32 4, %v120
    %v122 = vrot.slane %v101, %v121
    %v123 = vlaneseq
    %v124 = vshrl.u32 %v123, 7
    %v125 = vsub.s32 5, %v124
    %v126 = vrot.slane %v101, %v125
    %vm133 = vcmask 48128
    %v135 = vsel %vm133, %v87, 0
    %v138 = vsel %vm133, %v88, 0
    %v141 = vsel %vm133, %v89, 0
    %v144 = vsel %vm133, %v90, 0
    %v147 = vsel %vm133, %v91, 0
    %v150 = vsel %vm133, %v92, 0
    %v153 = vsel %vm133, %v93, 0
    %v156 = vsel %vm133, %v94, 0
    %vm158 = vcmask 1045504
    %v160 = vsel %vm158, %v95, 0
    %v163 = vsel %vm158, %v96, 0
    %v166 = vsel %vm158, %v97, 0
    %v169 = vsel %vm158, %v98, 0
    %v172 = vsel %vm158, %v99, 0
    %v175 = vsel %vm158, %v100, 0
    %177 = vmatprep.subr.mxu0 %v163
    %178 = vmatpush1.msra.mxu0 %v160
    %179 = vmatprep.subr.mxu0 0.0
    %180 = vmatpush1.msra.mxu0 0.0
    %181 = vmatprep.subr.mxu0 0.0
    %182 = vmatpush1.msra.mxu0 0.0
    %183 = vmatprep.subr.mxu0 0.0
    %184 = vmatpush1.msra.mxu0 0.0
    %185 = vmatprep.subr.mxu0 0.0
    %186 = vmatpush1.msra.mxu0 0.0
    %187 = vmatprep.subr.mxu0 0.0
    %188 = vmatpush1.msra.mxu0 0.0
    %189 = vmatprep.subr.mxu0 0.0
    %190 = vmatpush1.msra.mxu0 0.0
    %191 = vmatprep.subr.mxu0 0.0
    %192 = vmatpush1.msra.mxu0 0.0
    %193 = vmatprep.subr.mxu0 0.0
    %194 = vmatpush1.msra.mxu0 0.0
    %195 = vmatprep.subr.mxu0 0.0
    %196 = vmatpush1.msra.mxu0 0.0
    %197 = vmatprep.subr.mxu0 0.0
    %198 = vmatpush1.msra.mxu0 0.0
    %199 = vmatprep.subr.mxu0 0.0
    %200 = vmatpush1.msra.mxu0 0.0
    %201 = vmatprep.subr.mxu0 0.0
    %202 = vmatpush1.msra.mxu0 0.0
    %203 = vmatprep.subr.mxu0 0.0
    %204 = vmatpush1.msra.mxu0 0.0
    %205 = vmatprep.subr.mxu0 0.0
    %206 = vmatpush1.msra.mxu0 0.0
    %207 = vmatprep.subr.mxu0 0.0
    %208 = vmatpush1.msra.mxu0 0.0
    %209 = vmatprep.subr.mxu0 0.0
    %210 = vmatpush1.msra.mxu0 0.0
    %211 = vmatprep.subr.mxu0 0.0
    %212 = vmatpush1.msra.mxu0 0.0
    %213 = vmatprep.subr.mxu0 0.0
    %214 = vmatpush1.msra.mxu0 0.0
    %215 = vmatprep.subr.mxu0 0.0
    %216 = vmatpush1.msra.mxu0 0.0
    %217 = vmatprep.subr.mxu0 0.0
    %218 = vmatpush1.msra.mxu0 0.0
    %219 = vmatprep.subr.mxu0 0.0
    %220 = vmatpush1.msra.mxu0 0.0
    %221 = vmatprep.subr.mxu0 0.0
    %222 = vmatpush1.msra.mxu0 0.0
    %223 = vmatprep.subr.mxu0 0.0
    %224 = vmatpush1.msra.mxu0 0.0
    %225 = vmatprep.subr.mxu0 0.0
    %226 = vmatpush1.msra.mxu0 0.0
    %227 = vmatprep.subr.mxu0 0.0
    %228 = vmatpush1.msra.mxu0 0.0
    %229 = vmatprep.subr.mxu0 0.0
    %230 = vmatpush1.msra.mxu0 0.0
    %231 = vmatprep.subr.mxu0 0.0
    %232 = vmatpush1.msra.mxu0 0.0
    %233 = vmatprep.subr.mxu0 0.0
    %234 = vmatpush1.msra.mxu0 0.0
    %235 = vmatprep.subr.mxu0 0.0
    %236 = vmatpush1.msra.mxu0 0.0
    %237 = vmatprep.subr.mxu0 0.0
    %238 = vmatpush1.msra.mxu0 0.0
    %239 = vmatprep.subr.mxu0 0.0
    %240 = vmatpush1.msra.mxu0 0.0
    %241 = vmatprep.mubr.f32.mxu0 0.0
    %242 = vmatmul.mubr.f32.gmra.mrb[0].mxu0 %v135
    %v243 = vpop.f32.mrb[0].mxu0
    %v244 = vadd.f32 %v106, %v243
    %v245 = vpop.f32.mrb[0].mxu0
    %v246 = vadd.f32 %v110, %v245
    %247 = vmatprep.mubr.f32.mxu0 0.0
    %248 = vmatmul.mubr.f32.gmra.mrb[0].mxu0 %v138
    %v249 = vpop.f32.mrb[0].mxu0
    %v250 = vadd.f32 %v106, %v249
    %v251 = vpop.f32.mrb[0].mxu0
    %v252 = vadd.f32 %v110, %v251
    %253 = vmatprep.mubr.f32.mxu0 0.0
    %254 = vmatmul.mubr.f32.gmra.mrb[0].mxu0 %v141
    %v255 = vpop.f32.mrb[0].mxu0
    %v256 = vadd.f32 %v106, %v255
    %v257 = vpop.f32.mrb[0].mxu0
    %v258 = vadd.f32 %v110, %v257
    %259 = vmatprep.mubr.f32.mxu0 0.0
    %260 = vmatmul.mubr.f32.gmra.mrb[0].mxu0 %v144
    %v261 = vpop.f32.mrb[0].mxu0
    %v262 = vadd.f32 %v106, %v261
    %v263 = vpop.f32.mrb[0].mxu0
    %v264 = vadd.f32 %v110, %v263
    %265 = vmatprep.mubr.f32.mxu0 0.0
    %266 = vmatmul.mubr.f32.gmra.mrb[0].mxu0 %v147
    %v267 = vpop.f32.mrb[0].mxu0
    %v268 = vadd.f32 %v106, %v267
    %v269 = vpop.f32.mrb[0].mxu0
    %v270 = vadd.f32 %v110, %v269
    %271 = vmatprep.mubr.f32.mxu0 0.0
    %272 = vmatmul.mubr.f32.gmra.mrb[0].mxu0 %v150
    %v273 = vpop.f32.mrb[0].mxu0
    %v274 = vadd.f32 %v106, %v273
    %v275 = vpop.f32.mrb[0].mxu0
    %v276 = vadd.f32 %v110, %v275
    %277 = vmatprep.mubr.f32.mxu0 0.0
    %278 = vmatmul.mubr.f32.gmra.mrb[0].mxu0 %v153
    %v279 = vpop.f32.mrb[0].mxu0
    %v280 = vadd.f32 %v106, %v279
    %v281 = vpop.f32.mrb[0].mxu0
    %v282 = vadd.f32 %v110, %v281
    %283 = vmatprep.mubr.f32.mxu0 0.0
    %284 = vmatmul.mubr.f32.gmra.mrb[0].mxu0 %v156
    %v285 = vpop.f32.mrb[0].mxu0
    %v286 = vadd.f32 %v106, %v285
    %v287 = vpop.f32.mrb[0].mxu0
    %v288 = vadd.f32 %v110, %v287
    %289 = vdwg.mxu0
    %290 = vmatprep.subr.mxu0 %v169
    %291 = vmatpush1.msra.mxu0 %v166
    %292 = vmatprep.subr.mxu0 0.0
    %293 = vmatpush1.msra.mxu0 0.0
    %294 = vmatprep.subr.mxu0 0.0
    %295 = vmatpush1.msra.mxu0 0.0
    %296 = vmatprep.subr.mxu0 0.0
    %297 = vmatpush1.msra.mxu0 0.0
    %298 = vmatprep.subr.mxu0 0.0
    %299 = vmatpush1.msra.mxu0 0.0
    %300 = vmatprep.subr.mxu0 0.0
    %301 = vmatpush1.msra.mxu0 0.0
    %302 = vmatprep.subr.mxu0 0.0
    %303 = vmatpush1.msra.mxu0 0.0
    %304 = vmatprep.subr.mxu0 0.0
    %305 = vmatpush1.msra.mxu0 0.0
    %306 = vmatprep.subr.mxu0 0.0
    %307 = vmatpush1.msra.mxu0 0.0
    %308 = vmatprep.subr.mxu0 0.0
    %309 = vmatpush1.msra.mxu0 0.0
    %310 = vmatprep.subr.mxu0 0.0
    %311 = vmatpush1.msra.mxu0 0.0
    %312 = vmatprep.subr.mxu0 0.0
    %313 = vmatpush1.msra.mxu0 0.0
    %314 = vmatprep.subr.mxu0 0.0
    %315 = vmatpush1.msra.mxu0 0.0
    %316 = vmatprep.subr.mxu0 0.0
    %317 = vmatpush1.msra.mxu0 0.0
    %318 = vmatprep.subr.mxu0 0.0
    %319 = vmatpush1.msra.mxu0 0.0
    %320 = vmatprep.subr.mxu0 0.0
    %321 = vmatpush1.msra.mxu0 0.0
    %322 = vmatprep.subr.mxu0 0.0
    %323 = vmatpush1.msra.mxu0 0.0
    %324 = vmatprep.subr.mxu0 0.0
    %325 = vmatpush1.msra.mxu0 0.0
    %326 = vmatprep.subr.mxu0 0.0
    %327 = vmatpush1.msra.mxu0 0.0
    %328 = vmatprep.subr.mxu0 0.0
    %329 = vmatpush1.msra.mxu0 0.0
    %330 = vmatprep.subr.mxu0 0.0
    %331 = vmatpush1.msra.mxu0 0.0
    %332 = vmatprep.subr.mxu0 0.0
    %333 = vmatpush1.msra.mxu0 0.0
    %334 = vmatprep.subr.mxu0 0.0
    %335 = vmatpush1.msra.mxu0 0.0
    %336 = vmatprep.subr.mxu0 0.0
    %337 = vmatpush1.msra.mxu0 0.0
    %338 = vmatprep.subr.mxu0 0.0
    %339 = vmatpush1.msra.mxu0 0.0
    %340 = vmatprep.subr.mxu0 0.0
    %341 = vmatpush1.msra.mxu0 0.0
    %342 = vmatprep.subr.mxu0 0.0
    %343 = vmatpush1.msra.mxu0 0.0
    %344 = vmatprep.subr.mxu0 0.0
    %345 = vmatpush1.msra.mxu0 0.0
    %346 = vmatprep.subr.mxu0 0.0
    %347 = vmatpush1.msra.mxu0 0.0
    %348 = vmatprep.subr.mxu0 0.0
    %349 = vmatpush1.msra.mxu0 0.0
    %350 = vmatprep.subr.mxu0 0.0
    %351 = vmatpush1.msra.mxu0 0.0
    %352 = vmatprep.subr.mxu0 0.0
    %353 = vmatpush1.msra.mxu0 0.0
    %354 = vmatprep.mubr.f32.mxu0 0.0
    %355 = vmatmul.mubr.f32.gmra.mrb[0].mxu0 %v135
    %v356 = vpop.f32.mrb[0].mxu0
    %v357 = vadd.f32 %v114, %v356
    %v358 = vpop.f32.mrb[0].mxu0
    %v359 = vadd.f32 %v118, %v358
    %360 = vmatprep.mubr.f32.mxu0 0.0
    %361 = vmatmul.mubr.f32.gmra.mrb[0].mxu0 %v138
    %v362 = vpop.f32.mrb[0].mxu0
    %v363 = vadd.f32 %v114, %v362
    %v364 = vpop.f32.mrb[0].mxu0
    %v365 = vadd.f32 %v118, %v364
    %366 = vmatprep.mubr.f32.mxu0 0.0
    %367 = vmatmul.mubr.f32.gmra.mrb[0].mxu0 %v141
    %v368 = vpop.f32.mrb[0].mxu0
    %v369 = vadd.f32 %v114, %v368
    %v370 = vpop.f32.mrb[0].mxu0
    %v371 = vadd.f32 %v118, %v370
    %372 = vmatprep.mubr.f32.mxu0 0.0
    %373 = vmatmul.mubr.f32.gmra.mrb[0].mxu0 %v144
    %v374 = vpop.f32.mrb[0].mxu0
    %v375 = vadd.f32 %v114, %v374
    %v376 = vpop.f32.mrb[0].mxu0
    %v377 = vadd.f32 %v118, %v376
    %378 = vmatprep.mubr.f32.mxu0 0.0
    %379 = vmatmul.mubr.f32.gmra.mrb[0].mxu0 %v147
    %v380 = vpop.f32.mrb[0].mxu0
    %v381 = vadd.f32 %v114, %v380
    %v382 = vpop.f32.mrb[0].mxu0
    %v383 = vadd.f32 %v118, %v382
    %384 = vmatprep.mubr.f32.mxu0 0.0
    %385 = vmatmul.mubr.f32.gmra.mrb[0].mxu0 %v150
    %v386 = vpop.f32.mrb[0].mxu0
    %v387 = vadd.f32 %v114, %v386
    %v388 = vpop.f32.mrb[0].mxu0
    %v389 = vadd.f32 %v118, %v388
    %390 = vmatprep.mubr.f32.mxu0 0.0
    %391 = vmatmul.mubr.f32.gmra.mrb[0].mxu0 %v153
    %v392 = vpop.f32.mrb[0].mxu0
    %v393 = vadd.f32 %v114, %v392
    %v394 = vpop.f32.mrb[0].mxu0
    %v395 = vadd.f32 %v118, %v394
    %396 = vmatprep.mubr.f32.mxu0 0.0
    %397 = vmatmul.mubr.f32.gmra.mrb[0].mxu0 %v156
    %v398 = vpop.f32.mrb[0].mxu0
    %v399 = vadd.f32 %v114, %v398
    %v400 = vpop.f32.mrb[0].mxu0
    %v401 = vadd.f32 %v118, %v400
    %402 = vdwg.mxu0
    %403 = vmatprep.subr.mxu0 %v175
    %404 = vmatpush1.msra.mxu0 %v172
    %405 = vmatprep.subr.mxu0 0.0
    %406 = vmatpush1.msra.mxu0 0.0
    %407 = vmatprep.subr.mxu0 0.0
    %408 = vmatpush1.msra.mxu0 0.0
    %409 = vmatprep.subr.mxu0 0.0
    %410 = vmatpush1.msra.mxu0 0.0
    %411 = vmatprep.subr.mxu0 0.0
    %412 = vmatpush1.msra.mxu0 0.0
    %413 = vmatprep.subr.mxu0 0.0
    %414 = vmatpush1.msra.mxu0 0.0
    %415 = vmatprep.subr.mxu0 0.0
    %416 = vmatpush1.msra.mxu0 0.0
    %417 = vmatprep.subr.mxu0 0.0
    %418 = vmatpush1.msra.mxu0 0.0
    %419 = vmatprep.subr.mxu0 0.0
    %420 = vmatpush1.msra.mxu0 0.0
    %421 = vmatprep.subr.mxu0 0.0
    %422 = vmatpush1.msra.mxu0 0.0
    %423 = vmatprep.subr.mxu0 0.0
    %424 = vmatpush1.msra.mxu0 0.0
    %425 = vmatprep.subr.mxu0 0.0
    %426 = vmatpush1.msra.mxu0 0.0
    %427 = vmatprep.subr.mxu0 0.0
    %428 = vmatpush1.msra.mxu0 0.0
    %429 = vmatprep.subr.mxu0 0.0
    %430 = vmatpush1.msra.mxu0 0.0
    %431 = vmatprep.subr.mxu0 0.0
    %432 = vmatpush1.msra.mxu0 0.0
    %433 = vmatprep.subr.mxu0 0.0
    %434 = vmatpush1.msra.mxu0 0.0
    %435 = vmatprep.subr.mxu0 0.0
    %436 = vmatpush1.msra.mxu0 0.0
    %437 = vmatprep.subr.mxu0 0.0
    %438 = vmatpush1.msra.mxu0 0.0
    %439 = vmatprep.subr.mxu0 0.0
    %440 = vmatpush1.msra.mxu0 0.0
    %441 = vmatprep.subr.mxu0 0.0
    %442 = vmatpush1.msra.mxu0 0.0
    %443 = vmatprep.subr.mxu0 0.0
    %444 = vmatpush1.msra.mxu0 0.0
    %445 = vmatprep.subr.mxu0 0.0
    %446 = vmatpush1.msra.mxu0 0.0
    %447 = vmatprep.subr.mxu0 0.0
    %448 = vmatpush1.msra.mxu0 0.0
    %449 = vmatprep.subr.mxu0 0.0
    %450 = vmatpush1.msra.mxu0 0.0
    %451 = vmatprep.subr.mxu0 0.0
    %452 = vmatpush1.msra.mxu0 0.0
    %453 = vmatprep.subr.mxu0 0.0
    %454 = vmatpush1.msra.mxu0 0.0
    %455 = vmatprep.subr.mxu0 0.0
    %456 = vmatpush1.msra.mxu0 0.0
    %457 = vmatprep.subr.mxu0 0.0
    %458 = vmatpush1.msra.mxu0 0.0
    %459 = vmatprep.subr.mxu0 0.0
    %460 = vmatpush1.msra.mxu0 0.0
    %461 = vmatprep.subr.mxu0 0.0
    %462 = vmatpush1.msra.mxu0 0.0
    %463 = vmatprep.subr.mxu0 0.0
    %464 = vmatpush1.msra.mxu0 0.0
    %465 = vmatprep.subr.mxu0 0.0
    %466 = vmatpush1.msra.mxu0 0.0
    %467 = vmatprep.mubr.f32.mxu0 0.0
    %468 = vmatmul.mubr.f32.gmra.mrb[0].mxu0 %v135
    %v469 = vpop.f32.mrb[0].mxu0
    %v470 = vadd.f32 %v122, %v469
    %v471 = vpop.f32.mrb[0].mxu0
    %v472 = vadd.f32 %v126, %v471
    %473 = vmatprep.mubr.f32.mxu0 0.0
    %474 = vmatmul.mubr.f32.gmra.mrb[0].mxu0 %v138
    %v475 = vpop.f32.mrb[0].mxu0
    %v476 = vadd.f32 %v122, %v475
    %v477 = vpop.f32.mrb[0].mxu0
    %v478 = vadd.f32 %v126, %v477
    %479 = vmatprep.mubr.f32.mxu0 0.0
    %480 = vmatmul.mubr.f32.gmra.mrb[0].mxu0 %v141
    %v481 = vpop.f32.mrb[0].mxu0
    %v482 = vadd.f32 %v122, %v481
    %v483 = vpop.f32.mrb[0].mxu0
    %v484 = vadd.f32 %v126, %v483
    %485 = vmatprep.mubr.f32.mxu0 0.0
    %486 = vmatmul.mubr.f32.gmra.mrb[0].mxu0 %v144
    %v487 = vpop.f32.mrb[0].mxu0
    %v488 = vadd.f32 %v122, %v487
    %v489 = vpop.f32.mrb[0].mxu0
    %v490 = vadd.f32 %v126, %v489
    %491 = vmatprep.mubr.f32.mxu0 0.0
    %492 = vmatmul.mubr.f32.gmra.mrb[0].mxu0 %v147
    %v493 = vpop.f32.mrb[0].mxu0
    %v494 = vadd.f32 %v122, %v493
    %v495 = vpop.f32.mrb[0].mxu0
    %v496 = vadd.f32 %v126, %v495
    %497 = vmatprep.mubr.f32.mxu0 0.0
    %498 = vmatmul.mubr.f32.gmra.mrb[0].mxu0 %v150
    %v499 = vpop.f32.mrb[0].mxu0
    %v500 = vadd.f32 %v122, %v499
    %v501 = vpop.f32.mrb[0].mxu0
    %v502 = vadd.f32 %v126, %v501
    %503 = vmatprep.mubr.f32.mxu0 0.0
    %504 = vmatmul.mubr.f32.gmra.mrb[0].mxu0 %v153
    %v505 = vpop.f32.mrb[0].mxu0
    %v506 = vadd.f32 %v122, %v505
    %v507 = vpop.f32.mrb[0].mxu0
    %v508 = vadd.f32 %v126, %v507
    %509 = vmatprep.mubr.f32.mxu0 0.0
    %510 = vmatmul.mubr.f32.gmra.mrb[0].mxu0 %v156
    %v511 = vpop.f32.mrb[0].mxu0
    %v512 = vadd.f32 %v122, %v511
    %v513 = vpop.f32.mrb[0].mxu0
    %v514 = vadd.f32 %v126, %v513
    %515 = vdwg.mxu0
    %516 = vst [vmem:[#allocation2] sm:$0xff] %v244
    %517 = vst [vmem:[#allocation2 + $0x8] sm:$0xff] %v246
    %518 = vst [vmem:[#allocation2 + $0x10] sm:$0xff] %v357
    %519 = vst [vmem:[#allocation2 + $0x18] sm:$0xff] %v359
    %520 = vst [vmem:[#allocation2 + $0x20] sm:$0xff] %v470
    %521 = vst [vmem:[#allocation2 + $0x28] sm:$0xff] %v472
    %522 = vst [vmem:[#allocation2 + $0x30] sm:$0xff] %v250
    %523 = vst [vmem:[#allocation2 + $0x38] sm:$0xff] %v252
    %524 = vst [vmem:[#allocation2 + $0x40] sm:$0xff] %v363
    %525 = vst [vmem:[#allocation2 + $0x48] sm:$0xff] %v365
    %526 = vst [vmem:[#allocation2 + $0x50] sm:$0xff] %v476
    %527 = vst [vmem:[#allocation2 + $0x58] sm:$0xff] %v478
    %528 = vst [vmem:[#allocation2 + $0x60] sm:$0xff] %v256
    %529 = vst [vmem:[#allocation2 + $0x68] sm:$0xff] %v258
    %530 = vst [vmem:[#allocation2 + $0x70] sm:$0xff] %v369
    %531 = vst [vmem:[#allocation2 + $0x78] sm:$0xff] %v371
    %532 = vst [vmem:[#allocation2 + $0x80] sm:$0xff] %v482
    %533 = vst [vmem:[#allocation2 + $0x88] sm:$0xff] %v484
    %534 = vst [vmem:[#allocation2 + $0x90] sm:$0xff] %v262
    %535 = vst [vmem:[#allocation2 + $0x98] sm:$0xff] %v264
    %536 = vst [vmem:[#allocation2 + $0xa0] sm:$0xff] %v375
    %537 = vst [vmem:[#allocation2 + $0xa8] sm:$0xff] %v377
    %538 = vst [vmem:[#allocation2 + $0xb0] sm:$0xff] %v488
    %539 = vst [vmem:[#allocation2 + $0xb8] sm:$0xff] %v490
    %540 = vst [vmem:[#allocation2 + $0xc0] sm:$0xff] %v268
    %541 = vst [vmem:[#allocation2 + $0xc8] sm:$0xff] %v270
    %542 = vst [vmem:[#allocation2 + $0xd0] sm:$0xff] %v381
    %543 = vst [vmem:[#allocation2 + $0xd8] sm:$0xff] %v383
    %544 = vst [vmem:[#allocation2 + $0xe0] sm:$0xff] %v494
    %545 = vst [vmem:[#allocation2 + $0xe8] sm:$0xff] %v496
    %546 = vst [vmem:[#allocation2 + $0xf0] sm:$0xff] %v274
    %547 = vst [vmem:[#allocation2 + $0xf8] sm:$0xff] %v276
    %548 = vst [vmem:[#allocation2 + $0x100] sm:$0xff] %v387
    %549 = vst [vmem:[#allocation2 + $0x108] sm:$0xff] %v389
    %550 = vst [vmem:[#allocation2 + $0x110] sm:$0xff] %v500
    %551 = vst [vmem:[#allocation2 + $0x118] sm:$0xff] %v502
    %552 = vst [vmem:[#allocation2 + $0x120] sm:$0xff] %v280
    %553 = vst [vmem:[#allocation2 + $0x128] sm:$0xff] %v282
    %554 = vst [vmem:[#allocation2 + $0x130] sm:$0xff] %v393
    %555 = vst [vmem:[#allocation2 + $0x138] sm:$0xff] %v395
    %556 = vst [vmem:[#allocation2 + $0x140] sm:$0xff] %v506
    %557 = vst [vmem:[#allocation2 + $0x148] sm:$0xff] %v508
    %558 = vst [vmem:[#allocation2 + $0x150] sm:$0xff] %v286
    %559 = vst [vmem:[#allocation2 + $0x158] sm:$0xff] %v288
    %560 = vst [vmem:[#allocation2 + $0x160] sm:$0xff] %v399
    %561 = vst [vmem:[#allocation2 + $0x168] sm:$0xff] %v401
    %562 = vst [vmem:[#allocation2 + $0x170] sm:$0xff] %v512
    %563 = vst [vmem:[#allocation2 + $0x178] sm:$0xff] %v514
    %s564 = smul.u32 0, 6
    %s565 = smul.addr %s564, 8
    %s566 = scalar_lea.vmem [#allocation2], %s565
    %v567 = vld [vmem:[%s566] sm:$0xff]
    %v568 = vld [vmem:[%s566 + $0x8] sm:$0xff]
    %v569 = vld [vmem:[%s566 + $0x10] sm:$0xff]
    %v570 = vld [vmem:[%s566 + $0x18] sm:$0xff]
    %v571 = vld [vmem:[%s566 + $0x20] sm:$0xff]
    %v572 = vld [vmem:[%s566 + $0x28] sm:$0xff]
    %v573 = vld [vmem:[%s1] sm:$0xff]
    %v574 = vld [vmem:[#allocation3] sm:$0xff]
    %v575 = vld [vmem:[#allocation3 + $0x8] sm:$0xff]
    %v576 = vld [vmem:[#allocation3 + $0x10] sm:$0xff]
    %v577 = vld [vmem:[#allocation3 + $0x18] sm:$0xff]
    %v578 = vld [vmem:[#allocation3 + $0x20] sm:$0xff]
    %v579 = vld [vmem:[#allocation3 + $0x28] sm:$0xff]
    %v580 = vld [vmem:[#allocation3 + $0x30] sm:$0xff]
    %v581 = vld [vmem:[#allocation3 + $0x38] sm:$0xff]
    %v582 = vld [vmem:[#allocation3 + $0x40] sm:$0xff]
    %v583 = vld [vmem:[#allocation3 + $0x48] sm:$0xff]
    %v584 = vld [vmem:[#allocation3 + $0x50] sm:$0xff]
    %v585 = vld [vmem:[#allocation3 + $0x58] sm:$0xff]
    %v586 = vld [vmem:[#allocation3 + $0x60] sm:$0xff]
    %v587 = vld [vmem:[#allocation3 + $0x68] sm:$0xff]
    %v588 = vld [vmem:[#allocation3 + $0x70] sm:$0xff]
    %v589 = vld [vmem:[#allocation3 + $0x78] sm:$0xff]
    %v590 = vld [vmem:[#allocation3 + $0x80] sm:$0xff]
    %v591 = vld [vmem:[#allocation3 + $0x88] sm:$0xff]
    %v592 = vld [vmem:[#allocation3 + $0x90] sm:$0xff]
    %v593 = vld [vmem:[#allocation3 + $0x98] sm:$0xff]
    %v594 = vld [vmem:[#allocation3 + $0xa0] sm:$0xff]
    %v595 = vld [vmem:[#allocation3 + $0xa8] sm:$0xff]
    %v596 = vld [vmem:[#allocation3 + $0xb0] sm:$0xff]
    %v597 = vld [vmem:[#allocation3 + $0xb8] sm:$0xff]
    %v598 = vld [vmem:[#allocation3 + $0xc0] sm:$0xff]
    %v599 = vld [vmem:[#allocation3 + $0xc8] sm:$0xff]
    %v600 = vld [vmem:[#allocation3 + $0xd0] sm:$0xff]
    %v601 = vld [vmem:[#allocation3 + $0xd8] sm:$0xff]
    %v602 = vld [vmem:[#allocation3 + $0xe0] sm:$0xff]
    %v603 = vld [vmem:[#allocation3 + $0xe8] sm:$0xff]
    %v604 = vld [vmem:[#allocation3 + $0xf0] sm:$0xff]
    %v605 = vld [vmem:[#allocation3 + $0xf8] sm:$0xff]
    %v606 = vld [vmem:[#allocation3 + $0x100] sm:$0xff]
    %v607 = vld [vmem:[#allocation3 + $0x108] sm:$0xff]
    %v608 = vld [vmem:[#allocation3 + $0x110] sm:$0xff]
    %v609 = vld [vmem:[#allocation3 + $0x118] sm:$0xff]
    %v610 = vld [vmem:[#allocation3 + $0x120] sm:$0xff]
    %v611 = vld [vmem:[#allocation3 + $0x128] sm:$0xff]
    %v612 = vld [vmem:[#allocation3 + $0x130] sm:$0xff]
    %v613 = vld [vmem:[#allocation3 + $0x138] sm:$0xff]
    %v614 = vld [vmem:[#allocation3 + $0x140] sm:$0xff]
    %v615 = vld [vmem:[#allocation3 + $0x148] sm:$0xff]
    %v616 = vld [vmem:[#allocation3 + $0x150] sm:$0xff]
    %v617 = vld [vmem:[#allocation3 + $0x158] sm:$0xff]
    %v618 = vld [vmem:[#allocation3 + $0x160] sm:$0xff]
    %v619 = vld [vmem:[#allocation3 + $0x168] sm:$0xff]
    %v620 = vld [vmem:[#allocation3 + $0x170] sm:$0xff]
    %v621 = vld [vmem:[#allocation3 + $0x178] sm:$0xff]
    %v622 = vld [vmem:[#allocation3 + $0x180] sm:$0xff]
    %v623 = vld [vmem:[#allocation3 + $0x188] sm:$0xff]
    %v624 = vld [vmem:[#allocation3 + $0x190] sm:$0xff]
    %v625 = vld [vmem:[#allocation3 + $0x198] sm:$0xff]
    %v626 = vld [vmem:[#allocation3 + $0x1a0] sm:$0xff]
    %v627 = vld [vmem:[#allocation3 + $0x1a8] sm:$0xff]
    %v628 = vld [vmem:[#allocation3 + $0x1b0] sm:$0xff]
    %v629 = vld [vmem:[#allocation3 + $0x1b8] sm:$0xff]
    %v630 = vld [vmem:[#allocation3 + $0x1c0] sm:$0xff]
    %v631 = vld [vmem:[#allocation3 + $0x1c8] sm:$0xff]
    %v632 = vld [vmem:[#allocation3 + $0x1d0] sm:$0xff]
    %v633 = vld [vmem:[#allocation3 + $0x1d8] sm:$0xff]
    %v634 = vld [vmem:[#allocation3 + $0x1e0] sm:$0xff]
    %v635 = vld [vmem:[#allocation3 + $0x1e8] sm:$0xff]
    %v636 = vld [vmem:[#allocation3 + $0x1f0] sm:$0xff]
    %v637 = vld [vmem:[#allocation3 + $0x1f8] sm:$0xff]
    %v638 = vld [vmem:[#allocation3 + $0x200] sm:$0xff]
    %v639 = vld [vmem:[#allocation3 + $0x208] sm:$0xff]
    %v640 = vld [vmem:[#allocation3 + $0x210] sm:$0xff]
    %v641 = vld [vmem:[#allocation3 + $0x218] sm:$0xff]
    %v642 = vld [vmem:[#allocation3 + $0x220] sm:$0xff]
    %v643 = vld [vmem:[#allocation3 + $0x228] sm:$0xff]
    %v644 = vld [vmem:[#allocation3 + $0x230] sm:$0xff]
    %v645 = vld [vmem:[#allocation3 + $0x238] sm:$0xff]
    %v646 = vld [vmem:[#allocation3 + $0x240] sm:$0xff]
    %v647 = vld [vmem:[#allocation3 + $0x248] sm:$0xff]
    %v648 = vld [vmem:[#allocation3 + $0x250] sm:$0xff]
    %v649 = vld [vmem:[#allocation3 + $0x258] sm:$0xff]
    %v650 = vld [vmem:[#allocation3 + $0x260] sm:$0xff]
    %v651 = vld [vmem:[#allocation3 + $0x268] sm:$0xff]
    %v652 = vld [vmem:[#allocation3 + $0x270] sm:$0xff]
    %v653 = vld [vmem:[#allocation3 + $0x278] sm:$0xff]
    %v654 = vld [vmem:[#allocation3 + $0x280] sm:$0xff]
    %v655 = vld [vmem:[#allocation3 + $0x288] sm:$0xff]
    %v656 = vld [vmem:[#allocation3 + $0x290] sm:$0xff]
    %v657 = vld [vmem:[#allocation3 + $0x298] sm:$0xff]
    %v658 = vld [vmem:[#allocation3 + $0x2a0] sm:$0xff]
    %v659 = vld [vmem:[#allocation3 + $0x2a8] sm:$0xff]
    %v660 = vld [vmem:[#allocation3 + $0x2b0] sm:$0xff]
    %v661 = vld [vmem:[#allocation3 + $0x2b8] sm:$0xff]
    %v662 = vld [vmem:[#allocation3 + $0x2c0] sm:$0xff]
    %v663 = vld [vmem:[#allocation3 + $0x2c8] sm:$0xff]
    %v664 = vld [vmem:[#allocation3 + $0x2d0] sm:$0xff]
    %v665 = vld [vmem:[#allocation3 + $0x2d8] sm:$0xff]
    %v666 = vld [vmem:[#allocation3 + $0x2e0] sm:$0xff]
    %v667 = vld [vmem:[#allocation3 + $0x2e8] sm:$0xff]
    %v668 = vld [vmem:[#allocation3 + $0x2f0] sm:$0xff]
    %v669 = vld [vmem:[#allocation3 + $0x2f8] sm:$0xff]
    %v670 = vld [vmem:[%s6] sm:$0x3f]
    %v672 = vlaneseq
    %v673 = vshrl.u32 %v672, 7
    %v674 = vsub.s32 0, %v673
    %v675 = vrot.slane %v670, %v674
    %v676 = vlaneseq
    %v677 = vshrl.u32 %v676, 7
    %v678 = vsub.s32 1, %v677
    %v679 = vrot.slane %v670, %v678
    %v680 = vlaneseq
    %v681 = vshrl.u32 %v680, 7
    %v682 = vsub.s32 2, %v681
    %v683 = vrot.slane %v670, %v682
    %v684 = vlaneseq
    %v685 = vshrl.u32 %v684, 7
    %v686 = vsub.s32 3, %v685
    %v687 = vrot.slane %v670, %v686
    %v688 = vlaneseq
    %v689 = vshrl.u32 %v688, 7
    %v690 = vsub.s32 4, %v689
    %v691 = vrot.slane %v670, %v690
    %v692 = vlaneseq
    %v693 = vshrl.u32 %v692, 7
    %v694 = vsub.s32 5, %v693
    %v695 = vrot.slane %v670, %v694
    %v798 = vunpack.c.l.b16 %v574
    %v799 = vunpack.c.h.b16 %v574
    %v800 = vunpack.c.l.b16 %v575
    %v801 = vunpack.c.h.b16 %v575
    %v802 = vunpack.c.l.b16 %v576
    %v803 = vunpack.c.h.b16 %v576
    %v804 = vunpack.c.l.b16 %v577
    %v805 = vunpack.c.h.b16 %v577
    %v806 = vunpack.c.l.b16 %v578
    %v807 = vunpack.c.h.b16 %v578
    %v808 = vunpack.c.l.b16 %v579
    %v809 = vunpack.c.h.b16 %v579
    %v810 = vunpack.c.l.b16 %v580
    %v811 = vunpack.c.h.b16 %v580
    %v812 = vunpack.c.l.b16 %v581
    %v813 = vunpack.c.h.b16 %v581
    %v814 = vunpack.c.l.b16 %v582
    %v815 = vunpack.c.h.b16 %v582
    %v816 = vunpack.c.l.b16 %v583
    %v817 = vunpack.c.h.b16 %v583
    %v818 = vunpack.c.l.b16 %v584
    %v819 = vunpack.c.h.b16 %v584
    %v820 = vunpack.c.l.b16 %v585
    %v821 = vunpack.c.h.b16 %v585
    %v822 = vunpack.c.l.b16 %v586
    %v823 = vunpack.c.h.b16 %v586
    %v824 = vunpack.c.l.b16 %v587
    %v825 = vunpack.c.h.b16 %v587
    %v826 = vunpack.c.l.b16 %v588
    %v827 = vunpack.c.h.b16 %v588
    %v828 = vunpack.c.l.b16 %v589
    %v829 = vunpack.c.h.b16 %v589
    %v830 = vunpack.c.l.b16 %v590
    %v831 = vunpack.c.h.b16 %v590
    %v832 = vunpack.c.l.b16 %v591
    %v833 = vunpack.c.h.b16 %v591
    %v834 = vunpack.c.l.b16 %v592
    %v835 = vunpack.c.h.b16 %v592
    %v836 = vunpack.c.l.b16 %v593
    %v837 = vunpack.c.h.b16 %v593
    %v838 = vunpack.c.l.b16 %v594
    %v839 = vunpack.c.h.b16 %v594
    %v840 = vunpack.c.l.b16 %v595
    %v841 = vunpack.c.h.b16 %v595
    %v842 = vunpack.c.l.b16 %v596
    %v843 = vunpack.c.h.b16 %v596
    %v844 = vunpack.c.l.b16 %v597
    %v845 = vunpack.c.h.b16 %v597
    %v846 = vunpack.c.l.b16 %v598
    %v847 = vunpack.c.h.b16 %v598
    %v848 = vunpack.c.l.b16 %v599
    %v849 = vunpack.c.h.b16 %v599
    %v850 = vunpack.c.l.b16 %v600
    %v851 = vunpack.c.h.b16 %v600
    %v852 = vunpack.c.l.b16 %v601
    %v853 = vunpack.c.h.b16 %v601
    %v854 = vunpack.c.l.b16 %v602
    %v855 = vunpack.c.h.b16 %v602
    %v856 = vunpack.c.l.b16 %v603
    %v857 = vunpack.c.h.b16 %v603
    %v858 = vunpack.c.l.b16 %v604
    %v859 = vunpack.c.h.b16 %v604
    %v860 = vunpack.c.l.b16 %v605
    %v861 = vunpack.c.h.b16 %v605
    %v862 = vunpack.c.l.b16 %v606
    %v863 = vunpack.c.h.b16 %v606
    %v864 = vunpack.c.l.b16 %v607
    %v865 = vunpack.c.h.b16 %v607
    %v866 = vunpack.c.l.b16 %v608
    %v867 = vunpack.c.h.b16 %v608
    %v868 = vunpack.c.l.b16 %v609
    %v869 = vunpack.c.h.b16 %v609
    %v870 = vunpack.c.l.b16 %v610
    %v871 = vunpack.c.h.b16 %v610
    %v872 = vunpack.c.l.b16 %v611
    %v873 = vunpack.c.h.b16 %v611
    %v874 = vunpack.c.l.b16 %v612
    %v875 = vunpack.c.h.b16 %v612
    %v876 = vunpack.c.l.b16 %v613
    %v877 = vunpack.c.h.b16 %v613
    %v878 = vunpack.c.l.b16 %v614
    %v879 = vunpack.c.h.b16 %v614
    %v880 = vunpack.c.l.b16 %v615
    %v881 = vunpack.c.h.b16 %v615
    %v882 = vunpack.c.l.b16 %v616
    %v883 = vunpack.c.h.b16 %v616
    %v884 = vunpack.c.l.b16 %v617
    %v885 = vunpack.c.h.b16 %v617
    %v886 = vunpack.c.l.b16 %v618
    %v887 = vunpack.c.h.b16 %v618
    %v888 = vunpack.c.l.b16 %v619
    %v889 = vunpack.c.h.b16 %v619
    %v890 = vunpack.c.l.b16 %v620
    %v891 = vunpack.c.h.b16 %v620
    %v892 = vunpack.c.l.b16 %v621
    %v893 = vunpack.c.h.b16 %v621
    %v894 = vunpack.c.l.b16 %v622
    %v895 = vunpack.c.h.b16 %v622
    %v896 = vunpack.c.l.b16 %v623
    %v897 = vunpack.c.h.b16 %v623
    %v898 = vunpack.c.l.b16 %v624
    %v899 = vunpack.c.h.b16 %v624
    %v900 = vunpack.c.l.b16 %v625
    %v901 = vunpack.c.h.b16 %v625
    %v902 = vunpack.c.l.b16 %v626
    %v903 = vunpack.c.h.b16 %v626
    %v904 = vunpack.c.l.b16 %v627
    %v905 = vunpack.c.h.b16 %v627
    %v906 = vunpack.c.l.b16 %v628
    %v907 = vunpack.c.h.b16 %v628
    %v908 = vunpack.c.l.b16 %v629
    %v909 = vunpack.c.h.b16 %v629
    %v910 = vunpack.c.l.b16 %v630
    %v911 = vunpack.c.h.b16 %v630
    %v912 = vunpack.c.l.b16 %v631
    %v913 = vunpack.c.h.b16 %v631
    %v914 = vunpack.c.l.b16 %v632
    %v915 = vunpack.c.h.b16 %v632
    %v916 = vunpack.c.l.b16 %v633
    %v917 = vunpack.c.h.b16 %v633
    %v918 = vunpack.c.l.b16 %v634
    %v919 = vunpack.c.h.b16 %v634
    %v920 = vunpack.c.l.b16 %v635
    %v921 = vunpack.c.h.b16 %v635
    %v922 = vunpack.c.l.b16 %v636
    %v923 = vunpack.c.h.b16 %v636
    %v924 = vunpack.c.l.b16 %v637
    %v925 = vunpack.c.h.b16 %v637
    %v926 = vunpack.c.l.b16 %v638
    %v927 = vunpack.c.h.b16 %v638
    %v928 = vunpack.c.l.b16 %v639
    %v929 = vunpack.c.h.b16 %v639
    %v930 = vunpack.c.l.b16 %v640
    %v931 = vunpack.c.h.b16 %v640
    %v932 = vunpack.c.l.b16 %v641
    %v933 = vunpack.c.h.b16 %v641
    %v934 = vunpack.c.l.b16 %v642
    %v935 = vunpack.c.h.b16 %v642
    %v936 = vunpack.c.l.b16 %v643
    %v937 = vunpack.c.h.b16 %v643
    %v938 = vunpack.c.l.b16 %v644
    %v939 = vunpack.c.h.b16 %v644
    %v940 = vunpack.c.l.b16 %v645
    %v941 = vunpack.c.h.b16 %v645
    %v942 = vunpack.c.l.b16 %v646
    %v943 = vunpack.c.h.b16 %v646
    %v944 = vunpack.c.l.b16 %v647
    %v945 = vunpack.c.h.b16 %v647
    %v946 = vunpack.c.l.b16 %v648
    %v947 = vunpack.c.h.b16 %v648
    %v948 = vunpack.c.l.b16 %v649
    %v949 = vunpack.c.h.b16 %v649
    %v950 = vunpack.c.l.b16 %v650
    %v951 = vunpack.c.h.b16 %v650
    %v952 = vunpack.c.l.b16 %v651
    %v953 = vunpack.c.h.b16 %v651
    %v954 = vunpack.c.l.b16 %v652
    %v955 = vunpack.c.h.b16 %v652
    %v956 = vunpack.c.l.b16 %v653
    %v957 = vunpack.c.h.b16 %v653
    %v958 = vunpack.c.l.b16 %v654
    %v959 = vunpack.c.h.b16 %v654
    %v960 = vunpack.c.l.b16 %v655
    %v961 = vunpack.c.h.b16 %v655
    %v962 = vunpack.c.l.b16 %v656
    %v963 = vunpack.c.h.b16 %v656
    %v964 = vunpack.c.l.b16 %v657
    %v965 = vunpack.c.h.b16 %v657
    %v966 = vunpack.c.l.b16 %v658
    %v967 = vunpack.c.h.b16 %v658
    %v968 = vunpack.c.l.b16 %v659
    %v969 = vunpack.c.h.b16 %v659
    %v970 = vunpack.c.l.b16 %v660
    %v971 = vunpack.c.h.b16 %v660
    %v972 = vunpack.c.l.b16 %v661
    %v973 = vunpack.c.h.b16 %v661
    %v974 = vunpack.c.l.b16 %v662
    %v975 = vunpack.c.h.b16 %v662
    %v976 = vunpack.c.l.b16 %v663
    %v977 = vunpack.c.h.b16 %v663
    %v978 = vunpack.c.l.b16 %v664
    %v979 = vunpack.c.h.b16 %v664
    %v980 = vunpack.c.l.b16 %v665
    %v981 = vunpack.c.h.b16 %v665
    %v982 = vunpack.c.l.b16 %v666
    %v983 = vunpack.c.h.b16 %v666
    %v984 = vunpack.c.l.b16 %v667
    %v985 = vunpack.c.h.b16 %v667
    %v986 = vunpack.c.l.b16 %v668
    %v987 = vunpack.c.h.b16 %v668
    %v988 = vunpack.c.l.b16 %v669
    %v989 = vunpack.c.h.b16 %v669
    %v990 = vpack.c.b16 %v804, %v798
    %v991 = vpack.c.b16 %v805, %v799
    %v992 = vpack.c.b16 %v806, %v800
    %v993 = vpack.c.b16 %v807, %v801
    %v994 = vpack.c.b16 %v808, %v802
    %v995 = vpack.c.b16 %v809, %v803
    %v996 = vpack.c.b16 %v816, %v810
    %v997 = vpack.c.b16 %v817, %v811
    %v998 = vpack.c.b16 %v818, %v812
    %v999 = vpack.c.b16 %v819, %v813
    %v1000 = vpack.c.b16 %v820, %v814
    %v1001 = vpack.c.b16 %v821, %v815
    %v1002 = vpack.c.b16 %v828, %v822
    %v1003 = vpack.c.b16 %v829, %v823
    %v1004 = vpack.c.b16 %v830, %v824
    %v1005 = vpack.c.b16 %v831, %v825
    %v1006 = vpack.c.b16 %v832, %v826
    %v1007 = vpack.c.b16 %v833, %v827
    %v1008 = vpack.c.b16 %v840, %v834
    %v1009 = vpack.c.b16 %v841, %v835
    %v1010 = vpack.c.b16 %v842, %v836
    %v1011 = vpack.c.b16 %v843, %v837
    %v1012 = vpack.c.b16 %v844, %v838
    %v1013 = vpack.c.b16 %v845, %v839
    %v1014 = vpack.c.b16 %v852, %v846
    %v1015 = vpack.c.b16 %v853, %v847
    %v1016 = vpack.c.b16 %v854, %v848
    %v1017 = vpack.c.b16 %v855, %v849
    %v1018 = vpack.c.b16 %v856, %v850
    %v1019 = vpack.c.b16 %v857, %v851
    %v1020 = vpack.c.b16 %v864, %v858
    %v1021 = vpack.c.b16 %v865, %v859
    %v1022 = vpack.c.b16 %v866, %v860
    %v1023 = vpack.c.b16 %v867, %v861
    %v1024 = vpack.c.b16 %v868, %v862
    %v1025 = vpack.c.b16 %v869, %v863
    %v1026 = vpack.c.b16 %v876, %v870
    %v1027 = vpack.c.b16 %v877, %v871
    %v1028 = vpack.c.b16 %v878, %v872
    %v1029 = vpack.c.b16 %v879, %v873
    %v1030 = vpack.c.b16 %v880, %v874
    %v1031 = vpack.c.b16 %v881, %v875
    %v1032 = vpack.c.b16 %v888, %v882
    %v1033 = vpack.c.b16 %v889, %v883
    %v1034 = vpack.c.b16 %v890, %v884
    %v1035 = vpack.c.b16 %v891, %v885
    %v1036 = vpack.c.b16 %v892, %v886
    %v1037 = vpack.c.b16 %v893, %v887
    %v1038 = vpack.c.b16 %v900, %v894
    %v1039 = vpack.c.b16 %v901, %v895
    %v1040 = vpack.c.b16 %v902, %v896
    %v1041 = vpack.c.b16 %v903, %v897
    %v1042 = vpack.c.b16 %v904, %v898
    %v1043 = vpack.c.b16 %v905, %v899
    %v1044 = vpack.c.b16 %v912, %v906
    %v1045 = vpack.c.b16 %v913, %v907
    %v1046 = vpack.c.b16 %v914, %v908
    %v1047 = vpack.c.b16 %v915, %v909
    %v1048 = vpack.c.b16 %v916, %v910
    %v1049 = vpack.c.b16 %v917, %v911
    %v1050 = vpack.c.b16 %v924, %v918
    %v1051 = vpack.c.b16 %v925, %v919
    %v1052 = vpack.c.b16 %v926, %v920
    %v1053 = vpack.c.b16 %v927, %v921
    %v1054 = vpack.c.b16 %v928, %v922
    %v1055 = vpack.c.b16 %v929, %v923
    %v1056 = vpack.c.b16 %v936, %v930
    %v1057 = vpack.c.b16 %v937, %v931
    %v1058 = vpack.c.b16 %v938, %v932
    %v1059 = vpack.c.b16 %v939, %v933
    %v1060 = vpack.c.b16 %v940, %v934
    %v1061 = vpack.c.b16 %v941, %v935
    %v1062 = vpack.c.b16 %v948, %v942
    %v1063 = vpack.c.b16 %v949, %v943
    %v1064 = vpack.c.b16 %v950, %v944
    %v1065 = vpack.c.b16 %v951, %v945
    %v1066 = vpack.c.b16 %v952, %v946
    %v1067 = vpack.c.b16 %v953, %v947
    %v1068 = vpack.c.b16 %v960, %v954
    %v1069 = vpack.c.b16 %v961, %v955
    %v1070 = vpack.c.b16 %v962, %v956
    %v1071 = vpack.c.b16 %v963, %v957
    %v1072 = vpack.c.b16 %v964, %v958
    %v1073 = vpack.c.b16 %v965, %v959
    %v1074 = vpack.c.b16 %v972, %v966
    %v1075 = vpack.c.b16 %v973, %v967
    %v1076 = vpack.c.b16 %v974, %v968
    %v1077 = vpack.c.b16 %v975, %v969
    %v1078 = vpack.c.b16 %v976, %v970
    %v1079 = vpack.c.b16 %v977, %v971
    %v1080 = vpack.c.b16 %v984, %v978
    %v1081 = vpack.c.b16 %v985, %v979
    %v1082 = vpack.c.b16 %v986, %v980
    %v1083 = vpack.c.b16 %v987, %v981
    %v1084 = vpack.c.b16 %v988, %v982
    %v1085 = vpack.c.b16 %v989, %v983
    %1182 = vmatprep.subr.bf16.mxu0 %v991
    %1183 = vmatpush1.bf16.msra.mxu0 %v990
    %1184 = vmatprep.subr.bf16.mxu0 %v997
    %1185 = vmatpush1.bf16.msra.mxu0 %v996
    %1186 = vmatprep.subr.bf16.mxu0 %v1003
    %1187 = vmatpush1.bf16.msra.mxu0 %v1002
    %1188 = vmatprep.subr.bf16.mxu0 %v1009
    %1189 = vmatpush1.bf16.msra.mxu0 %v1008
    %1190 = vmatprep.subr.bf16.mxu0 %v1015
    %1191 = vmatpush1.bf16.msra.mxu0 %v1014
    %1192 = vmatprep.subr.bf16.mxu0 %v1021
    %1193 = vmatpush1.bf16.msra.mxu0 %v1020
    %1194 = vmatprep.subr.bf16.mxu0 %v1027
    %1195 = vmatpush1.bf16.msra.mxu0 %v1026
    %1196 = vmatprep.subr.bf16.mxu0 %v1033
    %1197 = vmatpush1.bf16.msra.mxu0 %v1032
    %1198 = vmatprep.subr.bf16.mxu0 %v1039
    %1199 = vmatpush1.bf16.msra.mxu0 %v1038
    %1200 = vmatprep.subr.bf16.mxu0 %v1045
    %1201 = vmatpush1.bf16.msra.mxu0 %v1044
    %1202 = vmatprep.subr.bf16.mxu0 %v1051
    %1203 = vmatpush1.bf16.msra.mxu0 %v1050
    %1204 = vmatprep.subr.bf16.mxu0 %v1057
    %1205 = vmatpush1.bf16.msra.mxu0 %v1056
    %1206 = vmatprep.subr.bf16.mxu0 %v1063
    %1207 = vmatpush1.bf16.msra.mxu0 %v1062
    %1208 = vmatprep.subr.bf16.mxu0 %v1069
    %1209 = vmatpush1.bf16.msra.mxu0 %v1068
    %1210 = vmatprep.subr.bf16.mxu0 %v1075
    %1211 = vmatpush1.bf16.msra.mxu0 %v1074
    %1212 = vmatprep.subr.bf16.mxu0 %v1081
    %1213 = vmatpush1.bf16.msra.mxu0 %v1080
    %1214 = vmatprep.mubr.bf16.mxu0 0
    %1215 = vmatmul.mubr.bf16.gmra.mrb[0].mxu0 0
    %v1216 = vpop.f32.mrb[0].mxu0
    %v1217 = vadd.f32 %v675, %v1216
    %v1218 = vpop.f32.mrb[0].mxu0
    %v1219 = vadd.f32 %v679, %v1218
    %v1220 = vpop.f32.mrb[0].mxu0
    %v1221 = vpop.f32.mrb[0].mxu0
    %1222 = vdwg.mxu0
    %1223 = vmatprep.subr.bf16.mxu0 %v993
    %1224 = vmatpush1.bf16.msra.mxu0 %v992
    %1225 = vmatprep.subr.bf16.mxu0 %v999
    %1226 = vmatpush1.bf16.msra.mxu0 %v998
    %1227 = vmatprep.subr.bf16.mxu0 %v1005
    %1228 = vmatpush1.bf16.msra.mxu0 %v1004
    %1229 = vmatprep.subr.bf16.mxu0 %v1011
    %1230 = vmatpush1.bf16.msra.mxu0 %v1010
    %1231 = vmatprep.subr.bf16.mxu0 %v1017
    %1232 = vmatpush1.bf16.msra.mxu0 %v1016
    %1233 = vmatprep.subr.bf16.mxu0 %v1023
    %1234 = vmatpush1.bf16.msra.mxu0 %v1022
    %1235 = vmatprep.subr.bf16.mxu0 %v1029
    %1236 = vmatpush1.bf16.msra.mxu0 %v1028
    %1237 = vmatprep.subr.bf16.mxu0 %v1035
    %1238 = vmatpush1.bf16.msra.mxu0 %v1034
    %1239 = vmatprep.subr.bf16.mxu0 %v1041
    %1240 = vmatpush1.bf16.msra.mxu0 %v1040
    %1241 = vmatprep.subr.bf16.mxu0 %v1047
    %1242 = vmatpush1.bf16.msra.mxu0 %v1046
    %1243 = vmatprep.subr.bf16.mxu0 %v1053
    %1244 = vmatpush1.bf16.msra.mxu0 %v1052
    %1245 = vmatprep.subr.bf16.mxu0 %v1059
    %1246 = vmatpush1.bf16.msra.mxu0 %v1058
    %1247 = vmatprep.subr.bf16.mxu0 %v1065
    %1248 = vmatpush1.bf16.msra.mxu0 %v1064
    %1249 = vmatprep.subr.bf16.mxu0 %v1071
    %1250 = vmatpush1.bf16.msra.mxu0 %v1070
    %1251 = vmatprep.subr.bf16.mxu0 %v1077
    %1252 = vmatpush1.bf16.msra.mxu0 %v1076
    %1253 = vmatprep.subr.bf16.mxu0 %v1083
    %1254 = vmatpush1.bf16.msra.mxu0 %v1082
    %1255 = vmatprep.mubr.bf16.mxu0 0
    %1256 = vmatmul.mubr.bf16.gmra.mrb[0].mxu0 0
    %v1257 = vpop.f32.mrb[0].mxu0
    %v1258 = vadd.f32 %v683, %v1257
    %v1259 = vpop.f32.mrb[0].mxu0
    %v1260 = vadd.f32 %v687, %v1259
    %v1261 = vpop.f32.mrb[0].mxu0
    %v1262 = vpop.f32.mrb[0].mxu0
    %1263 = vdwg.mxu0
    %1264 = vmatprep.subr.bf16.mxu0 %v995
    %1265 = vmatpush1.bf16.msra.mxu0 %v994
    %1266 = vmatprep.subr.bf16.mxu0 %v1001
    %1267 = vmatpush1.bf16.msra.mxu0 %v1000
    %1268 = vmatprep.subr.bf16.mxu0 %v1007
    %1269 = vmatpush1.bf16.msra.mxu0 %v1006
    %1270 = vmatprep.subr.bf16.mxu0 %v1013
    %1271 = vmatpush1.bf16.msra.mxu0 %v1012
    %1272 = vmatprep.subr.bf16.mxu0 %v1019
    %1273 = vmatpush1.bf16.msra.mxu0 %v1018
    %1274 = vmatprep.subr.bf16.mxu0 %v1025
    %1275 = vmatpush1.bf16.msra.mxu0 %v1024
    %1276 = vmatprep.subr.bf16.mxu0 %v1031
    %1277 = vmatpush1.bf16.msra.mxu0 %v1030
    %1278 = vmatprep.subr.bf16.mxu0 %v1037
    %1279 = vmatpush1.bf16.msra.mxu0 %v1036
    %1280 = vmatprep.subr.bf16.mxu0 %v1043
    %1281 = vmatpush1.bf16.msra.mxu0 %v1042
    %1282 = vmatprep.subr.bf16.mxu0 %v1049
    %1283 = vmatpush1.bf16.msra.mxu0 %v1048
    %1284 = vmatprep.subr.bf16.mxu0 %v1055
    %1285 = vmatpush1.bf16.msra.mxu0 %v1054
    %1286 = vmatprep.subr.bf16.mxu0 %v1061
    %1287 = vmatpush1.bf16.msra.mxu0 %v1060
    %1288 = vmatprep.subr.bf16.mxu0 %v1067
    %1289 = vmatpush1.bf16.msra.mxu0 %v1066
    %1290 = vmatprep.subr.bf16.mxu0 %v1073
    %1291 = vmatpush1.bf16.msra.mxu0 %v1072
    %1292 = vmatprep.subr.bf16.mxu0 %v1079
    %1293 = vmatpush1.bf16.msra.mxu0 %v1078
    %1294 = vmatprep.subr.bf16.mxu0 %v1085
    %1295 = vmatpush1.bf16.msra.mxu0 %v1084
    %1296 = vmatprep.mubr.bf16.mxu0 0
    %1297 = vmatmul.mubr.bf16.gmra.mrb[0].mxu0 0
    %v1298 = vpop.f32.mrb[0].mxu0
    %v1299 = vadd.f32 %v691, %v1298
    %v1300 = vpop.f32.mrb[0].mxu0
    %v1301 = vadd.f32 %v695, %v1300
    %v1302 = vpop.f32.mrb[0].mxu0
    %v1303 = vpop.f32.mrb[0].mxu0
    %1304 = vdwg.mxu0
    %v1305 = vadd.f32 %v567, %v1217
    %v1306 = vadd.f32 %v568, %v1219
    %v1307 = vxor.u32 %v1305, 2147483648
    %v1308 = vxor.u32 %v1306, 2147483648
    %v1309 = vmul.f32 %v1307, 1.442695
    %v1310 = vpow.pop %v1309
    %v1311 = vmul.f32 %v1308, 1.442695
    %v1312 = vpow.pop %v1311
    %v1313 = vadd.f32 %v1310, 1.0
    %v1314 = vadd.f32 %v1312, 1.0
    %v1315 = vrcp.pop %v1313
    %v1316 = vmul.f32 1.0, %v1315
    %v1317 = vrcp.pop %v1314
    %v1318 = vmul.f32 1.0, %v1317
    %v1319 = vadd.f32 %v569, %v1258
    %v1320 = vadd.f32 %v570, %v1260
    %v1321 = vxor.u32 %v1319, 2147483648
    %v1322 = vxor.u32 %v1320, 2147483648
    %v1323 = vmul.f32 %v1321, 1.442695
    %v1324 = vpow.pop %v1323
    %v1325 = vmul.f32 %v1322, 1.442695
    %v1326 = vpow.pop %v1325
    %v1327 = vadd.f32 %v1324, 1.0
    %v1328 = vadd.f32 %v1326, 1.0
    %v1329 = vrcp.pop %v1327
    %v1330 = vmul.f32 1.0, %v1329
    %v1331 = vrcp.pop %v1328
    %v1332 = vmul.f32 1.0, %v1331
    %v1333 = vmul.f32 %v1316, %v1299
    %v1334 = vmul.f32 %v1318, %v1301
    %v1335 = vadd.f32 %v571, %v1333
    %v1336 = vadd.f32 %v572, %v1334
    %v1337 = vtanh.pop %v1335
    %v1338 = vtanh.pop %v1336
    %v1339 = vsub.f32 1.0, %v1330
    %v1340 = vsub.f32 1.0, %v1332
    %v1341 = vmul.f32 %v1339, %v1337
    %v1342 = vmul.f32 %v1340, %v1338
    %v1343 = vmul.f32 %v1330, 0.0
    %v1344 = vmul.f32 %v1332, 0.0
    %v1345 = vadd.f32 %v1341, %v1343
    %v1346 = vadd.f32 %v1342, %v1344
    %vm1347 = vcmp.gt.f32.partialorder %v573, 0.0
    %v1348 = vsel %vm1347, 1, 0
    %1349 = vset.pattern.permute.xlu0 0
    %1350 = vperm.xlu0 %1349, %v1348
    %v1351 = vpop.permute.xlu0 %1350
    %vm1352 = vcmp.eq.s32.totalorder %v1351, 1
    %v1353 = vsel %vm1352, %v1345, 0.0
    %v1354 = vsel %vm1352, %v1346, 0.0
    %v1355 = vpack.c.bf16 %v1353, %v1353
    %v1356 = vpack.c.bf16 %v1354, %v1354
    %v1357 = vpack.c.bf16 0.0, 0.0
    %v1358 = vld [vmem:[#allocation6] sm:$0xff]
    %v1359 = vld [vmem:[#allocation6 + $0x8] sm:$0xff]
    %v1360 = vld [vmem:[#allocation6 + $0x10] sm:$0xff]
    %v1361 = vld [vmem:[#allocation6 + $0x18] sm:$0xff]
    %v1362 = vld [vmem:[#allocation6 + $0x20] sm:$0xff]
    %v1363 = vld [vmem:[#allocation6 + $0x28] sm:$0xff]
    %v1364 = vld [vmem:[#allocation6 + $0x30] sm:$0xff]
    %v1365 = vld [vmem:[#allocation6 + $0x38] sm:$0xff]
    %v1366 = vld [vmem:[#allocation6 + $0x40] sm:$0xff]
    %v1367 = vld [vmem:[#allocation6 + $0x48] sm:$0xff]
    %v1368 = vld [vmem:[#allocation6 + $0x50] sm:$0xff]
    %v1369 = vld [vmem:[#allocation6 + $0x58] sm:$0xff]
    %v1370 = vld [vmem:[#allocation6 + $0x60] sm:$0xff]
    %v1371 = vld [vmem:[#allocation6 + $0x68] sm:$0xff]
    %v1372 = vld [vmem:[#allocation6 + $0x70] sm:$0xff]
    %v1373 = vld [vmem:[#allocation6 + $0x78] sm:$0xff]
    %v1374 = vld [vmem:[#allocation6 + $0x80] sm:$0xff]
    %v1375 = vld [vmem:[#allocation6 + $0x88] sm:$0xff]
    %v1376 = vld [vmem:[#allocation6 + $0x90] sm:$0xff]
    %v1377 = vld [vmem:[#allocation6 + $0x98] sm:$0xff]
    %v1378 = vld [vmem:[#allocation6 + $0xa0] sm:$0xff]
    %v1379 = vld [vmem:[#allocation6 + $0xa8] sm:$0xff]
    %v1380 = vld [vmem:[#allocation6 + $0xb0] sm:$0xff]
    %v1381 = vld [vmem:[#allocation6 + $0xb8] sm:$0xff]
    %v1382 = vld [vmem:[#allocation6 + $0xc0] sm:$0xff]
    %v1383 = vld [vmem:[#allocation6 + $0xc8] sm:$0xff]
    %v1384 = vld [vmem:[#allocation6 + $0xd0] sm:$0xff]
    %v1385 = vld [vmem:[#allocation6 + $0xd8] sm:$0xff]
    %v1386 = vld [vmem:[#allocation6 + $0xe0] sm:$0xff]
    %v1387 = vld [vmem:[#allocation6 + $0xe8] sm:$0xff]
    %v1388 = vld [vmem:[#allocation6 + $0xf0] sm:$0xff]
    %v1389 = vld [vmem:[#allocation6 + $0xf8] sm:$0xff]
    %v1390 = vld [vmem:[#allocation6 + $0x100] sm:$0xff]
    %v1391 = vld [vmem:[#allocation6 + $0x108] sm:$0xff]
    %v1392 = vld [vmem:[#allocation6 + $0x110] sm:$0xff]
    %v1393 = vld [vmem:[#allocation6 + $0x118] sm:$0xff]
    %v1394 = vld [vmem:[#allocation6 + $0x120] sm:$0xff]
    %v1395 = vld [vmem:[#allocation6 + $0x128] sm:$0xff]
    %v1396 = vld [vmem:[#allocation6 + $0x130] sm:$0xff]
    %v1397 = vld [vmem:[#allocation6 + $0x138] sm:$0xff]
    %v1398 = vld [vmem:[#allocation6 + $0x140] sm:$0xff]
    %v1399 = vld [vmem:[#allocation6 + $0x148] sm:$0xff]
    %v1400 = vld [vmem:[#allocation6 + $0x150] sm:$0xff]
    %v1401 = vld [vmem:[#allocation6 + $0x158] sm:$0xff]
    %v1402 = vld [vmem:[#allocation6 + $0x160] sm:$0xff]
    %v1403 = vld [vmem:[#allocation6 + $0x168] sm:$0xff]
    %v1404 = vld [vmem:[#allocation6 + $0x170] sm:$0xff]
    %v1405 = vld [vmem:[#allocation6 + $0x178] sm:$0xff]
    %v1406 = vld [vmem:[#allocation6 + $0x180] sm:$0xff]
    %v1407 = vld [vmem:[#allocation6 + $0x188] sm:$0xff]
    %v1408 = vld [vmem:[#allocation6 + $0x190] sm:$0xff]
    %v1409 = vld [vmem:[#allocation6 + $0x198] sm:$0xff]
    %v1410 = vld [vmem:[#allocation6 + $0x1a0] sm:$0xff]
    %v1411 = vld [vmem:[#allocation6 + $0x1a8] sm:$0xff]
    %v1412 = vld [vmem:[#allocation6 + $0x1b0] sm:$0xff]
    %v1413 = vld [vmem:[#allocation6 + $0x1b8] sm:$0xff]
    %v1414 = vld [vmem:[#allocation6 + $0x1c0] sm:$0xff]
    %v1415 = vld [vmem:[#allocation6 + $0x1c8] sm:$0xff]
    %v1416 = vld [vmem:[#allocation6 + $0x1d0] sm:$0xff]
    %v1417 = vld [vmem:[#allocation6 + $0x1d8] sm:$0xff]
    %v1418 = vld [vmem:[#allocation6 + $0x1e0] sm:$0xff]
    %v1419 = vld [vmem:[#allocation6 + $0x1e8] sm:$0xff]
    %v1420 = vld [vmem:[#allocation6 + $0x1f0] sm:$0xff]
    %v1421 = vld [vmem:[#allocation6 + $0x1f8] sm:$0xff]
    %v1422 = vld [vmem:[#allocation6 + $0x200] sm:$0xff]
    %v1423 = vld [vmem:[#allocation6 + $0x208] sm:$0xff]
    %v1424 = vld [vmem:[#allocation6 + $0x210] sm:$0xff]
    %v1425 = vld [vmem:[#allocation6 + $0x218] sm:$0xff]
    %v1426 = vld [vmem:[#allocation6 + $0x220] sm:$0xff]
    %v1427 = vld [vmem:[#allocation6 + $0x228] sm:$0xff]
    %v1428 = vld [vmem:[#allocation6 + $0x230] sm:$0xff]
    %v1429 = vld [vmem:[#allocation6 + $0x238] sm:$0xff]
    %v1430 = vld [vmem:[#allocation6 + $0x240] sm:$0xff]
    %v1431 = vld [vmem:[#allocation6 + $0x248] sm:$0xff]
    %v1432 = vld [vmem:[#allocation6 + $0x250] sm:$0xff]
    %v1433 = vld [vmem:[#allocation6 + $0x258] sm:$0xff]
    %v1434 = vld [vmem:[#allocation6 + $0x260] sm:$0xff]
    %v1435 = vld [vmem:[#allocation6 + $0x268] sm:$0xff]
    %v1436 = vld [vmem:[#allocation6 + $0x270] sm:$0xff]
    %v1437 = vld [vmem:[#allocation6 + $0x278] sm:$0xff]
    %v1438 = vld [vmem:[#allocation6 + $0x280] sm:$0xff]
    %v1439 = vld [vmem:[#allocation6 + $0x288] sm:$0xff]
    %v1440 = vld [vmem:[#allocation6 + $0x290] sm:$0xff]
    %v1441 = vld [vmem:[#allocation6 + $0x298] sm:$0xff]
    %v1442 = vld [vmem:[#allocation6 + $0x2a0] sm:$0xff]
    %v1443 = vld [vmem:[#allocation6 + $0x2a8] sm:$0xff]
    %v1444 = vld [vmem:[#allocation6 + $0x2b0] sm:$0xff]
    %v1445 = vld [vmem:[#allocation6 + $0x2b8] sm:$0xff]
    %v1446 = vld [vmem:[#allocation6 + $0x2c0] sm:$0xff]
    %v1447 = vld [vmem:[#allocation6 + $0x2c8] sm:$0xff]
    %v1448 = vld [vmem:[#allocation6 + $0x2d0] sm:$0xff]
    %v1449 = vld [vmem:[#allocation6 + $0x2d8] sm:$0xff]
    %v1450 = vld [vmem:[#allocation6 + $0x2e0] sm:$0xff]
    %v1451 = vld [vmem:[#allocation6 + $0x2e8] sm:$0xff]
    %v1452 = vld [vmem:[#allocation6 + $0x2f0] sm:$0xff]
    %v1453 = vld [vmem:[#allocation6 + $0x2f8] sm:$0xff]
    %v1454 = vld [vmem:[#allocation6 + $0x300] sm:$0xff]
    %v1455 = vld [vmem:[#allocation6 + $0x308] sm:$0xff]
    %v1456 = vld [vmem:[#allocation6 + $0x310] sm:$0xff]
    %v1457 = vld [vmem:[#allocation6 + $0x318] sm:$0xff]
    %v1458 = vld [vmem:[#allocation6 + $0x320] sm:$0xff]
    %v1459 = vld [vmem:[#allocation6 + $0x328] sm:$0xff]
    %v1460 = vld [vmem:[#allocation6 + $0x330] sm:$0xff]
    %v1461 = vld [vmem:[#allocation6 + $0x338] sm:$0xff]
    %v1462 = vld [vmem:[#allocation6 + $0x340] sm:$0xff]
    %v1463 = vld [vmem:[#allocation6 + $0x348] sm:$0xff]
    %v1464 = vld [vmem:[#allocation6 + $0x350] sm:$0xff]
    %v1465 = vld [vmem:[#allocation6 + $0x358] sm:$0xff]
    %v1466 = vld [vmem:[#allocation6 + $0x360] sm:$0xff]
    %v1467 = vld [vmem:[#allocation6 + $0x368] sm:$0xff]
    %v1468 = vld [vmem:[#allocation6 + $0x370] sm:$0xff]
    %v1469 = vld [vmem:[#allocation6 + $0x378] sm:$0xff]
    %v1470 = vld [vmem:[#allocation6 + $0x380] sm:$0xff]
    %v1471 = vld [vmem:[#allocation6 + $0x388] sm:$0xff]
    %v1472 = vld [vmem:[#allocation6 + $0x390] sm:$0xff]
    %v1473 = vld [vmem:[#allocation6 + $0x398] sm:$0xff]
    %v1474 = vld [vmem:[#allocation6 + $0x3a0] sm:$0xff]
    %v1475 = vld [vmem:[#allocation6 + $0x3a8] sm:$0xff]
    %v1476 = vld [vmem:[#allocation6 + $0x3b0] sm:$0xff]
    %v1477 = vld [vmem:[#allocation6 + $0x3b8] sm:$0xff]
    %v1478 = vld [vmem:[#allocation6 + $0x3c0] sm:$0xff]
    %v1479 = vld [vmem:[#allocation6 + $0x3c8] sm:$0xff]
    %v1480 = vld [vmem:[#allocation6 + $0x3d0] sm:$0xff]
    %v1481 = vld [vmem:[#allocation6 + $0x3d8] sm:$0xff]
    %v1482 = vld [vmem:[#allocation6 + $0x3e0] sm:$0xff]
    %v1483 = vld [vmem:[#allocation6 + $0x3e8] sm:$0xff]
    %v1484 = vld [vmem:[#allocation6 + $0x3f0] sm:$0xff]
    %v1485 = vld [vmem:[#allocation6 + $0x3f8] sm:$0xff]
    %v1486 = vld [vmem:[#allocation6 + $0x400] sm:$0xff]
    %v1487 = vld [vmem:[#allocation6 + $0x408] sm:$0xff]
    %v1488 = vld [vmem:[#allocation6 + $0x410] sm:$0xff]
    %v1489 = vld [vmem:[#allocation6 + $0x418] sm:$0xff]
    %v1490 = vld [vmem:[#allocation6 + $0x420] sm:$0xff]
    %v1491 = vld [vmem:[#allocation6 + $0x428] sm:$0xff]
    %v1492 = vld [vmem:[#allocation6 + $0x430] sm:$0xff]
    %v1493 = vld [vmem:[#allocation6 + $0x438] sm:$0xff]
    %v1494 = vld [vmem:[#allocation6 + $0x440] sm:$0xff]
    %v1495 = vld [vmem:[#allocation6 + $0x448] sm:$0xff]
    %v1496 = vld [vmem:[#allocation6 + $0x450] sm:$0xff]
    %v1497 = vld [vmem:[#allocation6 + $0x458] sm:$0xff]
    %v1498 = vld [vmem:[#allocation6 + $0x460] sm:$0xff]
    %v1499 = vld [vmem:[#allocation6 + $0x468] sm:$0xff]
    %v1500 = vld [vmem:[#allocation6 + $0x470] sm:$0xff]
    %v1501 = vld [vmem:[#allocation6 + $0x478] sm:$0xff]
    %v1502 = vld [vmem:[#allocation6 + $0x480] sm:$0xff]
    %v1503 = vld [vmem:[#allocation6 + $0x488] sm:$0xff]
    %v1504 = vld [vmem:[#allocation6 + $0x490] sm:$0xff]
    %v1505 = vld [vmem:[#allocation6 + $0x498] sm:$0xff]
    %v1506 = vld [vmem:[#allocation6 + $0x4a0] sm:$0xff]
    %v1507 = vld [vmem:[#allocation6 + $0x4a8] sm:$0xff]
    %v1508 = vld [vmem:[#allocation6 + $0x4b0] sm:$0xff]
    %v1509 = vld [vmem:[#allocation6 + $0x4b8] sm:$0xff]
    %v1510 = vld [vmem:[#allocation6 + $0x4c0] sm:$0xff]
    %v1511 = vld [vmem:[#allocation6 + $0x4c8] sm:$0xff]
    %v1512 = vld [vmem:[#allocation6 + $0x4d0] sm:$0xff]
    %v1513 = vld [vmem:[#allocation6 + $0x4d8] sm:$0xff]
    %v1514 = vld [vmem:[#allocation6 + $0x4e0] sm:$0xff]
    %v1515 = vld [vmem:[#allocation6 + $0x4e8] sm:$0xff]
    %v1516 = vld [vmem:[#allocation6 + $0x4f0] sm:$0xff]
    %v1517 = vld [vmem:[#allocation6 + $0x4f8] sm:$0xff]
    %v1518 = vld [vmem:[#allocation6 + $0x500] sm:$0xff]
    %v1519 = vld [vmem:[#allocation6 + $0x508] sm:$0xff]
    %v1520 = vld [vmem:[#allocation6 + $0x510] sm:$0xff]
    %v1521 = vld [vmem:[#allocation6 + $0x518] sm:$0xff]
    %v1522 = vld [vmem:[#allocation6 + $0x520] sm:$0xff]
    %v1523 = vld [vmem:[#allocation6 + $0x528] sm:$0xff]
    %v1524 = vld [vmem:[#allocation6 + $0x530] sm:$0xff]
    %v1525 = vld [vmem:[#allocation6 + $0x538] sm:$0xff]
    %v1526 = vld [vmem:[#allocation6 + $0x540] sm:$0xff]
    %v1527 = vld [vmem:[#allocation6 + $0x548] sm:$0xff]
    %v1528 = vld [vmem:[#allocation6 + $0x550] sm:$0xff]
    %v1529 = vld [vmem:[#allocation6 + $0x558] sm:$0xff]
    %v1530 = vld [vmem:[#allocation6 + $0x560] sm:$0xff]
    %v1531 = vld [vmem:[#allocation6 + $0x568] sm:$0xff]
    %v1532 = vld [vmem:[#allocation6 + $0x570] sm:$0xff]
    %v1533 = vld [vmem:[#allocation6 + $0x578] sm:$0xff]
    %v1534 = vld [vmem:[#allocation6 + $0x580] sm:$0xff]
    %v1535 = vld [vmem:[#allocation6 + $0x588] sm:$0xff]
    %v1536 = vld [vmem:[#allocation6 + $0x590] sm:$0xff]
    %v1537 = vld [vmem:[#allocation6 + $0x598] sm:$0xff]
    %v1538 = vld [vmem:[#allocation6 + $0x5a0] sm:$0xff]
    %v1539 = vld [vmem:[#allocation6 + $0x5a8] sm:$0xff]
    %v1540 = vld [vmem:[#allocation6 + $0x5b0] sm:$0xff]
    %v1541 = vld [vmem:[#allocation6 + $0x5b8] sm:$0xff]
    %v1542 = vld [vmem:[#allocation6 + $0x5c0] sm:$0xff]
    %v1543 = vld [vmem:[#allocation6 + $0x5c8] sm:$0xff]
    %v1544 = vld [vmem:[#allocation6 + $0x5d0] sm:$0xff]
    %v1545 = vld [vmem:[#allocation6 + $0x5d8] sm:$0xff]
    %v1546 = vld [vmem:[#allocation6 + $0x5e0] sm:$0xff]
    %v1547 = vld [vmem:[#allocation6 + $0x5e8] sm:$0xff]
    %v1548 = vld [vmem:[#allocation6 + $0x5f0] sm:$0xff]
    %v1549 = vld [vmem:[#allocation6 + $0x5f8] sm:$0xff]
    %v1550 = vld [vmem:[#allocation6 + $0x600] sm:$0xff]
    %v1551 = vld [vmem:[#allocation6 + $0x608] sm:$0xff]
    %v1552 = vld [vmem:[#allocation6 + $0x610] sm:$0xff]
    %v1553 = vld [vmem:[#allocation6 + $0x618] sm:$0xff]
    %v1554 = vld [vmem:[#allocation6 + $0x620] sm:$0xff]
    %v1555 = vld [vmem:[#allocation6 + $0x628] sm:$0xff]
    %v1556 = vld [vmem:[#allocation6 + $0x630] sm:$0xff]
    %v1557 = vld [vmem:[#allocation6 + $0x638] sm:$0xff]
    %v1558 = vld [vmem:[#allocation6 + $0x640] sm:$0xff]
    %v1559 = vld [vmem:[#allocation6 + $0x648] sm:$0xff]
    %v1560 = vld [vmem:[#allocation6 + $0x650] sm:$0xff]
    %v1561 = vld [vmem:[#allocation6 + $0x658] sm:$0xff]
    %v1562 = vld [vmem:[#allocation6 + $0x660] sm:$0xff]
    %v1563 = vld [vmem:[#allocation6 + $0x668] sm:$0xff]
    %v1564 = vld [vmem:[#allocation6 + $0x670] sm:$0xff]
    %v1565 = vld [vmem:[#allocation6 + $0x678] sm:$0xff]
    %v1566 = vld [vmem:[#allocation6 + $0x680] sm:$0xff]
    %v1567 = vld [vmem:[#allocation6 + $0x688] sm:$0xff]
    %v1568 = vld [vmem:[#allocation6 + $0x690] sm:$0xff]
    %v1569 = vld [vmem:[#allocation6 + $0x698] sm:$0xff]
    %v1570 = vld [vmem:[#allocation6 + $0x6a0] sm:$0xff]
    %v1571 = vld [vmem:[#allocation6 + $0x6a8] sm:$0xff]
    %v1572 = vld [vmem:[#allocation6 + $0x6b0] sm:$0xff]
    %v1573 = vld [vmem:[#allocation6 + $0x6b8] sm:$0xff]
    %v1574 = vld [vmem:[#allocation6 + $0x6c0] sm:$0xff]
    %v1575 = vld [vmem:[#allocation6 + $0x6c8] sm:$0xff]
    %v1576 = vld [vmem:[#allocation6 + $0x6d0] sm:$0xff]
    %v1577 = vld [vmem:[#allocation6 + $0x6d8] sm:$0xff]
    %v1578 = vld [vmem:[#allocation6 + $0x6e0] sm:$0xff]
    %v1579 = vld [vmem:[#allocation6 + $0x6e8] sm:$0xff]
    %v1580 = vld [vmem:[#allocation6 + $0x6f0] sm:$0xff]
    %v1581 = vld [vmem:[#allocation6 + $0x6f8] sm:$0xff]
    %v1582 = vld [vmem:[#allocation6 + $0x700] sm:$0xff]
    %v1583 = vld [vmem:[#allocation6 + $0x708] sm:$0xff]
    %v1584 = vld [vmem:[#allocation6 + $0x710] sm:$0xff]
    %v1585 = vld [vmem:[#allocation6 + $0x718] sm:$0xff]
    %v1586 = vld [vmem:[#allocation6 + $0x720] sm:$0xff]
    %v1587 = vld [vmem:[#allocation6 + $0x728] sm:$0xff]
    %v1588 = vld [vmem:[#allocation6 + $0x730] sm:$0xff]
    %v1589 = vld [vmem:[#allocation6 + $0x738] sm:$0xff]
    %v1590 = vld [vmem:[#allocation6 + $0x740] sm:$0xff]
    %v1591 = vld [vmem:[#allocation6 + $0x748] sm:$0xff]
    %v1592 = vld [vmem:[#allocation6 + $0x750] sm:$0xff]
    %v1593 = vld [vmem:[#allocation6 + $0x758] sm:$0xff]
    %v1594 = vld [vmem:[#allocation6 + $0x760] sm:$0xff]
    %v1595 = vld [vmem:[#allocation6 + $0x768] sm:$0xff]
    %v1596 = vld [vmem:[#allocation6 + $0x770] sm:$0xff]
    %v1597 = vld [vmem:[#allocation6 + $0x778] sm:$0xff]
    %v1598 = vld [vmem:[#allocation6 + $0x780] sm:$0xff]
    %v1599 = vld [vmem:[#allocation6 + $0x788] sm:$0xff]
    %v1600 = vld [vmem:[#allocation6 + $0x790] sm:$0xff]
    %v1601 = vld [vmem:[#allocation6 + $0x798] sm:$0xff]
    %v1602 = vld [vmem:[#allocation6 + $0x7a0] sm:$0xff]
    %v1603 = vld [vmem:[#allocation6 + $0x7a8] sm:$0xff]
    %v1604 = vld [vmem:[#allocation6 + $0x7b0] sm:$0xff]
    %v1605 = vld [vmem:[#allocation6 + $0x7b8] sm:$0xff]
    %v1606 = vld [vmem:[#allocation6 + $0x7c0] sm:$0xff]
    %v1607 = vld [vmem:[#allocation6 + $0x7c8] sm:$0xff]
    %v1608 = vld [vmem:[#allocation6 + $0x7d0] sm:$0xff]
    %v1609 = vld [vmem:[#allocation6 + $0x7d8] sm:$0xff]
    %v1610 = vld [vmem:[#allocation6 + $0x7e0] sm:$0xff]
    %v1611 = vld [vmem:[#allocation6 + $0x7e8] sm:$0xff]
    %v1612 = vld [vmem:[#allocation6 + $0x7f0] sm:$0xff]
    %v1613 = vld [vmem:[#allocation6 + $0x7f8] sm:$0xff]
    %v1614 = vld [vmem:[%s8] sm:$0xff]
    %v1616 = vlaneseq
    %v1617 = vshrl.u32 %v1616, 7
    %v1618 = vsub.s32 0, %v1617
    %v1619 = vrot.slane %v1614, %v1618
    %v1620 = vlaneseq
    %v1621 = vshrl.u32 %v1620, 7
    %v1622 = vsub.s32 1, %v1621
    %v1623 = vrot.slane %v1614, %v1622
    %v1624 = vlaneseq
    %v1625 = vshrl.u32 %v1624, 7
    %v1626 = vsub.s32 2, %v1625
    %v1627 = vrot.slane %v1614, %v1626
    %v1628 = vlaneseq
    %v1629 = vshrl.u32 %v1628, 7
    %v1630 = vsub.s32 3, %v1629
    %v1631 = vrot.slane %v1614, %v1630
    %v1632 = vlaneseq
    %v1633 = vshrl.u32 %v1632, 7
    %v1634 = vsub.s32 4, %v1633
    %v1635 = vrot.slane %v1614, %v1634
    %v1636 = vlaneseq
    %v1637 = vshrl.u32 %v1636, 7
    %v1638 = vsub.s32 5, %v1637
    %v1639 = vrot.slane %v1614, %v1638
    %v1640 = vlaneseq
    %v1641 = vshrl.u32 %v1640, 7
    %v1642 = vsub.s32 6, %v1641
    %v1643 = vrot.slane %v1614, %v1642
    %v1644 = vlaneseq
    %v1645 = vshrl.u32 %v1644, 7
    %v1646 = vsub.s32 7, %v1645
    %v1647 = vrot.slane %v1614, %v1646
    %v1912 = vunpack.c.l.b16 %v1358
    %v1913 = vunpack.c.h.b16 %v1358
    %v1914 = vunpack.c.l.b16 %v1359
    %v1915 = vunpack.c.h.b16 %v1359
    %v1916 = vunpack.c.l.b16 %v1360
    %v1917 = vunpack.c.h.b16 %v1360
    %v1918 = vunpack.c.l.b16 %v1361
    %v1919 = vunpack.c.h.b16 %v1361
    %v1920 = vunpack.c.l.b16 %v1362
    %v1921 = vunpack.c.h.b16 %v1362
    %v1922 = vunpack.c.l.b16 %v1363
    %v1923 = vunpack.c.h.b16 %v1363
    %v1924 = vunpack.c.l.b16 %v1364
    %v1925 = vunpack.c.h.b16 %v1364
    %v1926 = vunpack.c.l.b16 %v1365
    %v1927 = vunpack.c.h.b16 %v1365
    %v1928 = vunpack.c.l.b16 %v1366
    %v1929 = vunpack.c.h.b16 %v1366
    %v1930 = vunpack.c.l.b16 %v1367
    %v1931 = vunpack.c.h.b16 %v1367
    %v1932 = vunpack.c.l.b16 %v1368
    %v1933 = vunpack.c.h.b16 %v1368
    %v1934 = vunpack.c.l.b16 %v1369
    %v1935 = vunpack.c.h.b16 %v1369
    %v1936 = vunpack.c.l.b16 %v1370
    %v1937 = vunpack.c.h.b16 %v1370
    %v1938 = vunpack.c.l.b16 %v1371
    %v1939 = vunpack.c.h.b16 %v1371
    %v1940 = vunpack.c.l.b16 %v1372
    %v1941 = vunpack.c.h.b16 %v1372
    %v1942 = vunpack.c.l.b16 %v1373
    %v1943 = vunpack.c.h.b16 %v1373
    %v1944 = vunpack.c.l.b16 %v1374
    %v1945 = vunpack.c.h.b16 %v1374
    %v1946 = vunpack.c.l.b16 %v1375
    %v1947 = vunpack.c.h.b16 %v1375
    %v1948 = vunpack.c.l.b16 %v1376
    %v1949 = vunpack.c.h.b16 %v1376
    %v1950 = vunpack.c.l.b16 %v1377
    %v1951 = vunpack.c.h.b16 %v1377
    %v1952 = vunpack.c.l.b16 %v1378
    %v1953 = vunpack.c.h.b16 %v1378
    %v1954 = vunpack.c.l.b16 %v1379
    %v1955 = vunpack.c.h.b16 %v1379
    %v1956 = vunpack.c.l.b16 %v1380
    %v1957 = vunpack.c.h.b16 %v1380
    %v1958 = vunpack.c.l.b16 %v1381
    %v1959 = vunpack.c.h.b16 %v1381
    %v1960 = vunpack.c.l.b16 %v1382
    %v1961 = vunpack.c.h.b16 %v1382
    %v1962 = vunpack.c.l.b16 %v1383
    %v1963 = vunpack.c.h.b16 %v1383
    %v1964 = vunpack.c.l.b16 %v1384
    %v1965 = vunpack.c.h.b16 %v1384
    %v1966 = vunpack.c.l.b16 %v1385
    %v1967 = vunpack.c.h.b16 %v1385
    %v1968 = vunpack.c.l.b16 %v1386
    %v1969 = vunpack.c.h.b16 %v1386
    %v1970 = vunpack.c.l.b16 %v1387
    %v1971 = vunpack.c.h.b16 %v1387
    %v1972 = vunpack.c.l.b16 %v1388
    %v1973 = vunpack.c.h.b16 %v1388
    %v1974 = vunpack.c.l.b16 %v1389
    %v1975 = vunpack.c.h.b16 %v1389
    %v1976 = vunpack.c.l.b16 %v1390
    %v1977 = vunpack.c.h.b16 %v1390
    %v1978 = vunpack.c.l.b16 %v1391
    %v1979 = vunpack.c.h.b16 %v1391
    %v1980 = vunpack.c.l.b16 %v1392
    %v1981 = vunpack.c.h.b16 %v1392
    %v1982 = vunpack.c.l.b16 %v1393
    %v1983 = vunpack.c.h.b16 %v1393
    %v1984 = vunpack.c.l.b16 %v1394
    %v1985 = vunpack.c.h.b16 %v1394
    %v1986 = vunpack.c.l.b16 %v1395
    %v1987 = vunpack.c.h.b16 %v1395
    %v1988 = vunpack.c.l.b16 %v1396
    %v1989 = vunpack.c.h.b16 %v1396
    %v1990 = vunpack.c.l.b16 %v1397
    %v1991 = vunpack.c.h.b16 %v1397
    %v1992 = vunpack.c.l.b16 %v1398
    %v1993 = vunpack.c.h.b16 %v1398
    %v1994 = vunpack.c.l.b16 %v1399
    %v1995 = vunpack.c.h.b16 %v1399
    %v1996 = vunpack.c.l.b16 %v1400
    %v1997 = vunpack.c.h.b16 %v1400
    %v1998 = vunpack.c.l.b16 %v1401
    %v1999 = vunpack.c.h.b16 %v1401
    %v2000 = vunpack.c.l.b16 %v1402
    %v2001 = vunpack.c.h.b16 %v1402
    %v2002 = vunpack.c.l.b16 %v1403
    %v2003 = vunpack.c.h.b16 %v1403
    %v2004 = vunpack.c.l.b16 %v1404
    %v2005 = vunpack.c.h.b16 %v1404
    %v2006 = vunpack.c.l.b16 %v1405
    %v2007 = vunpack.c.h.b16 %v1405
    %v2008 = vunpack.c.l.b16 %v1406
    %v2009 = vunpack.c.h.b16 %v1406
    %v2010 = vunpack.c.l.b16 %v1407
    %v2011 = vunpack.c.h.b16 %v1407
    %v2012 = vunpack.c.l.b16 %v1408
    %v2013 = vunpack.c.h.b16 %v1408
    %v2014 = vunpack.c.l.b16 %v1409
    %v2015 = vunpack.c.h.b16 %v1409
    %v2016 = vunpack.c.l.b16 %v1410
    %v2017 = vunpack.c.h.b16 %v1410
    %v2018 = vunpack.c.l.b16 %v1411
    %v2019 = vunpack.c.h.b16 %v1411
    %v2020 = vunpack.c.l.b16 %v1412
    %v2021 = vunpack.c.h.b16 %v1412
    %v2022 = vunpack.c.l.b16 %v1413
    %v2023 = vunpack.c.h.b16 %v1413
    %v2024 = vunpack.c.l.b16 %v1414
    %v2025 = vunpack.c.h.b16 %v1414
    %v2026 = vunpack.c.l.b16 %v1415
    %v2027 = vunpack.c.h.b16 %v1415
    %v2028 = vunpack.c.l.b16 %v1416
    %v2029 = vunpack.c.h.b16 %v1416
    %v2030 = vunpack.c.l.b16 %v1417
    %v2031 = vunpack.c.h.b16 %v1417
    %v2032 = vunpack.c.l.b16 %v1418
    %v2033 = vunpack.c.h.b16 %v1418
    %v2034 = vunpack.c.l.b16 %v1419
    %v2035 = vunpack.c.h.b16 %v1419
    %v2036 = vunpack.c.l.b16 %v1420
    %v2037 = vunpack.c.h.b16 %v1420
    %v2038 = vunpack.c.l.b16 %v1421
    %v2039 = vunpack.c.h.b16 %v1421
    %v2040 = vunpack.c.l.b16 %v1422
    %v2041 = vunpack.c.h.b16 %v1422
    %v2042 = vunpack.c.l.b16 %v1423
    %v2043 = vunpack.c.h.b16 %v1423
    %v2044 = vunpack.c.l.b16 %v1424
    %v2045 = vunpack.c.h.b16 %v1424
    %v2046 = vunpack.c.l.b16 %v1425
    %v2047 = vunpack.c.h.b16 %v1425
    %v2048 = vunpack.c.l.b16 %v1426
    %v2049 = vunpack.c.h.b16 %v1426
    %v2050 = vunpack.c.l.b16 %v1427
    %v2051 = vunpack.c.h.b16 %v1427
    %v2052 = vunpack.c.l.b16 %v1428
    %v2053 = vunpack.c.h.b16 %v1428
    %v2054 = vunpack.c.l.b16 %v1429
    %v2055 = vunpack.c.h.b16 %v1429
    %v2056 = vunpack.c.l.b16 %v1430
    %v2057 = vunpack.c.h.b16 %v1430
    %v2058 = vunpack.c.l.b16 %v1431
    %v2059 = vunpack.c.h.b16 %v1431
    %v2060 = vunpack.c.l.b16 %v1432
    %v2061 = vunpack.c.h.b16 %v1432
    %v2062 = vunpack.c.l.b16 %v1433
    %v2063 = vunpack.c.h.b16 %v1433
    %v2064 = vunpack.c.l.b16 %v1434
    %v2065 = vunpack.c.h.b16 %v1434
    %v2066 = vunpack.c.l.b16 %v1435
    %v2067 = vunpack.c.h.b16 %v1435
    %v2068 = vunpack.c.l.b16 %v1436
    %v2069 = vunpack.c.h.b16 %v1436
    %v2070 = vunpack.c.l.b16 %v1437
    %v2071 = vunpack.c.h.b16 %v1437
    %v2072 = vunpack.c.l.b16 %v1438
    %v2073 = vunpack.c.h.b16 %v1438
    %v2074 = vunpack.c.l.b16 %v1439
    %v2075 = vunpack.c.h.b16 %v1439
    %v2076 = vunpack.c.l.b16 %v1440
    %v2077 = vunpack.c.h.b16 %v1440
    %v2078 = vunpack.c.l.b16 %v1441
    %v2079 = vunpack.c.h.b16 %v1441
    %v2080 = vunpack.c.l.b16 %v1442
    %v2081 = vunpack.c.h.b16 %v1442
    %v2082 = vunpack.c.l.b16 %v1443
    %v2083 = vunpack.c.h.b16 %v1443
    %v2084 = vunpack.c.l.b16 %v1444
    %v2085 = vunpack.c.h.b16 %v1444
    %v2086 = vunpack.c.l.b16 %v1445
    %v2087 = vunpack.c.h.b16 %v1445
    %v2088 = vunpack.c.l.b16 %v1446
    %v2089 = vunpack.c.h.b16 %v1446
    %v2090 = vunpack.c.l.b16 %v1447
    %v2091 = vunpack.c.h.b16 %v1447
    %v2092 = vunpack.c.l.b16 %v1448
    %v2093 = vunpack.c.h.b16 %v1448
    %v2094 = vunpack.c.l.b16 %v1449
    %v2095 = vunpack.c.h.b16 %v1449
    %v2096 = vunpack.c.l.b16 %v1450
    %v2097 = vunpack.c.h.b16 %v1450
    %v2098 = vunpack.c.l.b16 %v1451
    %v2099 = vunpack.c.h.b16 %v1451
    %v2100 = vunpack.c.l.b16 %v1452
    %v2101 = vunpack.c.h.b16 %v1452
    %v2102 = vunpack.c.l.b16 %v1453
    %v2103 = vunpack.c.h.b16 %v1453
    %v2104 = vunpack.c.l.b16 %v1454
    %v2105 = vunpack.c.h.b16 %v1454
    %v2106 = vunpack.c.l.b16 %v1455
    %v2107 = vunpack.c.h.b16 %v1455
    %v2108 = vunpack.c.l.b16 %v1456
    %v2109 = vunpack.c.h.b16 %v1456
    %v2110 = vunpack.c.l.b16 %v1457
    %v2111 = vunpack.c.h.b16 %v1457
    %v2112 = vunpack.c.l.b16 %v1458
    %v2113 = vunpack.c.h.b16 %v1458
    %v2114 = vunpack.c.l.b16 %v1459
    %v2115 = vunpack.c.h.b16 %v1459
    %v2116 = vunpack.c.l.b16 %v1460
    %v2117 = vunpack.c.h.b16 %v1460
    %v2118 = vunpack.c.l.b16 %v1461
    %v2119 = vunpack.c.h.b16 %v1461
    %v2120 = vunpack.c.l.b16 %v1462
    %v2121 = vunpack.c.h.b16 %v1462
    %v2122 = vunpack.c.l.b16 %v1463
    %v2123 = vunpack.c.h.b16 %v1463
    %v2124 = vunpack.c.l.b16 %v1464
    %v2125 = vunpack.c.h.b16 %v1464
    %v2126 = vunpack.c.l.b16 %v1465
    %v2127 = vunpack.c.h.b16 %v1465
    %v2128 = vunpack.c.l.b16 %v1466
    %v2129 = vunpack.c.h.b16 %v1466
    %v2130 = vunpack.c.l.b16 %v1467
    %v2131 = vunpack.c.h.b16 %v1467
    %v2132 = vunpack.c.l.b16 %v1468
    %v2133 = vunpack.c.h.b16 %v1468
    %v2134 = vunpack.c.l.b16 %v1469
    %v2135 = vunpack.c.h.b16 %v1469
    %v2136 = vunpack.c.l.b16 %v1470
    %v2137 = vunpack.c.h.b16 %v1470
    %v2138 = vunpack.c.l.b16 %v1471
    %v2139 = vunpack.c.h.b16 %v1471
    %v2140 = vunpack.c.l.b16 %v1472
    %v2141 = vunpack.c.h.b16 %v1472
    %v2142 = vunpack.c.l.b16 %v1473
    %v2143 = vunpack.c.h.b16 %v1473
    %v2144 = vunpack.c.l.b16 %v1474
    %v2145 = vunpack.c.h.b16 %v1474
    %v2146 = vunpack.c.l.b16 %v1475
    %v2147 = vunpack.c.h.b16 %v1475
    %v2148 = vunpack.c.l.b16 %v1476
    %v2149 = vunpack.c.h.b16 %v1476
    %v2150 = vunpack.c.l.b16 %v1477
    %v2151 = vunpack.c.h.b16 %v1477
    %v2152 = vunpack.c.l.b16 %v1478
    %v2153 = vunpack.c.h.b16 %v1478
    %v2154 = vunpack.c.l.b16 %v1479
    %v2155 = vunpack.c.h.b16 %v1479
    %v2156 = vunpack.c.l.b16 %v1480
    %v2157 = vunpack.c.h.b16 %v1480
    %v2158 = vunpack.c.l.b16 %v1481
    %v2159 = vunpack.c.h.b16 %v1481
    %v2160 = vunpack.c.l.b16 %v1482
    %v2161 = vunpack.c.h.b16 %v1482
    %v2162 = vunpack.c.l.b16 %v1483
    %v2163 = vunpack.c.h.b16 %v1483
    %v2164 = vunpack.c.l.b16 %v1484
    %v2165 = vunpack.c.h.b16 %v1484
    %v2166 = vunpack.c.l.b16 %v1485
    %v2167 = vunpack.c.h.b16 %v1485
    %v2168 = vunpack.c.l.b16 %v1486
    %v2169 = vunpack.c.h.b16 %v1486
    %v2170 = vunpack.c.l.b16 %v1487
    %v2171 = vunpack.c.h.b16 %v1487
    %v2172 = vunpack.c.l.b16 %v1488
    %v2173 = vunpack.c.h.b16 %v1488
    %v2174 = vunpack.c.l.b16 %v1489
    %v2175 = vunpack.c.h.b16 %v1489
    %v2176 = vunpack.c.l.b16 %v1490
    %v2177 = vunpack.c.h.b16 %v1490
    %v2178 = vunpack.c.l.b16 %v1491
    %v2179 = vunpack.c.h.b16 %v1491
    %v2180 = vunpack.c.l.b16 %v1492
    %v2181 = vunpack.c.h.b16 %v1492
    %v2182 = vunpack.c.l.b16 %v1493
    %v2183 = vunpack.c.h.b16 %v1493
    %v2184 = vunpack.c.l.b16 %v1494
    %v2185 = vunpack.c.h.b16 %v1494
    %v2186 = vunpack.c.l.b16 %v1495
    %v2187 = vunpack.c.h.b16 %v1495
    %v2188 = vunpack.c.l.b16 %v1496
    %v2189 = vunpack.c.h.b16 %v1496
    %v2190 = vunpack.c.l.b16 %v1497
    %v2191 = vunpack.c.h.b16 %v1497
    %v2192 = vunpack.c.l.b16 %v1498
    %v2193 = vunpack.c.h.b16 %v1498
    %v2194 = vunpack.c.l.b16 %v1499
    %v2195 = vunpack.c.h.b16 %v1499
    %v2196 = vunpack.c.l.b16 %v1500
    %v2197 = vunpack.c.h.b16 %v1500
    %v2198 = vunpack.c.l.b16 %v1501
    %v2199 = vunpack.c.h.b16 %v1501
    %v2200 = vunpack.c.l.b16 %v1502
    %v2201 = vunpack.c.h.b16 %v1502
    %v2202 = vunpack.c.l.b16 %v1503
    %v2203 = vunpack.c.h.b16 %v1503
    %v2204 = vunpack.c.l.b16 %v1504
    %v2205 = vunpack.c.h.b16 %v1504
    %v2206 = vunpack.c.l.b16 %v1505
    %v2207 = vunpack.c.h.b16 %v1505
    %v2208 = vunpack.c.l.b16 %v1506
    %v2209 = vunpack.c.h.b16 %v1506
    %v2210 = vunpack.c.l.b16 %v1507
    %v2211 = vunpack.c.h.b16 %v1507
    %v2212 = vunpack.c.l.b16 %v1508
    %v2213 = vunpack.c.h.b16 %v1508
    %v2214 = vunpack.c.l.b16 %v1509
    %v2215 = vunpack.c.h.b16 %v1509
    %v2216 = vunpack.c.l.b16 %v1510
    %v2217 = vunpack.c.h.b16 %v1510
    %v2218 = vunpack.c.l.b16 %v1511
    %v2219 = vunpack.c.h.b16 %v1511
    %v2220 = vunpack.c.l.b16 %v1512
    %v2221 = vunpack.c.h.b16 %v1512
    %v2222 = vunpack.c.l.b16 %v1513
    %v2223 = vunpack.c.h.b16 %v1513
    %v2224 = vunpack.c.l.b16 %v1514
    %v2225 = vunpack.c.h.b16 %v1514
    %v2226 = vunpack.c.l.b16 %v1515
    %v2227 = vunpack.c.h.b16 %v1515
    %v2228 = vunpack.c.l.b16 %v1516
    %v2229 = vunpack.c.h.b16 %v1516
    %v2230 = vunpack.c.l.b16 %v1517
    %v2231 = vunpack.c.h.b16 %v1517
    %v2232 = vunpack.c.l.b16 %v1518
    %v2233 = vunpack.c.h.b16 %v1518
    %v2234 = vunpack.c.l.b16 %v1519
    %v2235 = vunpack.c.h.b16 %v1519
    %v2236 = vunpack.c.l.b16 %v1520
    %v2237 = vunpack.c.h.b16 %v1520
    %v2238 = vunpack.c.l.b16 %v1521
    %v2239 = vunpack.c.h.b16 %v1521
    %v2240 = vunpack.c.l.b16 %v1522
    %v2241 = vunpack.c.h.b16 %v1522
    %v2242 = vunpack.c.l.b16 %v1523
    %v2243 = vunpack.c.h.b16 %v1523
    %v2244 = vunpack.c.l.b16 %v1524
    %v2245 = vunpack.c.h.b16 %v1524
    %v2246 = vunpack.c.l.b16 %v1525
    %v2247 = vunpack.c.h.b16 %v1525
    %v2248 = vunpack.c.l.b16 %v1526
    %v2249 = vunpack.c.h.b16 %v1526
    %v2250 = vunpack.c.l.b16 %v1527
    %v2251 = vunpack.c.h.b16 %v1527
    %v2252 = vunpack.c.l.b16 %v1528
    %v2253 = vunpack.c.h.b16 %v1528
    %v2254 = vunpack.c.l.b16 %v1529
    %v2255 = vunpack.c.h.b16 %v1529
    %v2256 = vunpack.c.l.b16 %v1530
    %v2257 = vunpack.c.h.b16 %v1530
    %v2258 = vunpack.c.l.b16 %v1531
    %v2259 = vunpack.c.h.b16 %v1531
    %v2260 = vunpack.c.l.b16 %v1532
    %v2261 = vunpack.c.h.b16 %v1532
    %v2262 = vunpack.c.l.b16 %v1533
    %v2263 = vunpack.c.h.b16 %v1533
    %v2264 = vunpack.c.l.b16 %v1534
    %v2265 = vunpack.c.h.b16 %v1534
    %v2266 = vunpack.c.l.b16 %v1535
    %v2267 = vunpack.c.h.b16 %v1535
    %v2268 = vunpack.c.l.b16 %v1536
    %v2269 = vunpack.c.h.b16 %v1536
    %v2270 = vunpack.c.l.b16 %v1537
    %v2271 = vunpack.c.h.b16 %v1537
    %v2272 = vunpack.c.l.b16 %v1538
    %v2273 = vunpack.c.h.b16 %v1538
    %v2274 = vunpack.c.l.b16 %v1539
    %v2275 = vunpack.c.h.b16 %v1539
    %v2276 = vunpack.c.l.b16 %v1540
    %v2277 = vunpack.c.h.b16 %v1540
    %v2278 = vunpack.c.l.b16 %v1541
    %v2279 = vunpack.c.h.b16 %v1541
    %v2280 = vunpack.c.l.b16 %v1542
    %v2281 = vunpack.c.h.b16 %v1542
    %v2282 = vunpack.c.l.b16 %v1543
    %v2283 = vunpack.c.h.b16 %v1543
    %v2284 = vunpack.c.l.b16 %v1544
    %v2285 = vunpack.c.h.b16 %v1544
    %v2286 = vunpack.c.l.b16 %v1545
    %v2287 = vunpack.c.h.b16 %v1545
    %v2288 = vunpack.c.l.b16 %v1546
    %v2289 = vunpack.c.h.b16 %v1546
    %v2290 = vunpack.c.l.b16 %v1547
    %v2291 = vunpack.c.h.b16 %v1547
    %v2292 = vunpack.c.l.b16 %v1548
    %v2293 = vunpack.c.h.b16 %v1548
    %v2294 = vunpack.c.l.b16 %v1549
    %v2295 = vunpack.c.h.b16 %v1549
    %v2296 = vunpack.c.l.b16 %v1550
    %v2297 = vunpack.c.h.b16 %v1550
    %v2298 = vunpack.c.l.b16 %v1551
    %v2299 = vunpack.c.h.b16 %v1551
    %v2300 = vunpack.c.l.b16 %v1552
    %v2301 = vunpack.c.h.b16 %v1552
    %v2302 = vunpack.c.l.b16 %v1553
    %v2303 = vunpack.c.h.b16 %v1553
    %v2304 = vunpack.c.l.b16 %v1554
    %v2305 = vunpack.c.h.b16 %v1554
    %v2306 = vunpack.c.l.b16 %v1555
    %v2307 = vunpack.c.h.b16 %v1555
    %v2308 = vunpack.c.l.b16 %v1556
    %v2309 = vunpack.c.h.b16 %v1556
    %v2310 = vunpack.c.l.b16 %v1557
    %v2311 = vunpack.c.h.b16 %v1557
    %v2312 = vunpack.c.l.b16 %v1558
    %v2313 = vunpack.c.h.b16 %v1558
    %v2314 = vunpack.c.l.b16 %v1559
    %v2315 = vunpack.c.h.b16 %v1559
    %v2316 = vunpack.c.l.b16 %v1560
    %v2317 = vunpack.c.h.b16 %v1560
    %v2318 = vunpack.c.l.b16 %v1561
    %v2319 = vunpack.c.h.b16 %v1561
    %v2320 = vunpack.c.l.b16 %v1562
    %v2321 = vunpack.c.h.b16 %v1562
    %v2322 = vunpack.c.l.b16 %v1563
    %v2323 = vunpack.c.h.b16 %v1563
    %v2324 = vunpack.c.l.b16 %v1564
    %v2325 = vunpack.c.h.b16 %v1564
    %v2326 = vunpack.c.l.b16 %v1565
    %v2327 = vunpack.c.h.b16 %v1565
    %v2328 = vunpack.c.l.b16 %v1566
    %v2329 = vunpack.c.h.b16 %v1566
    %v2330 = vunpack.c.l.b16 %v1567
    %v2331 = vunpack.c.h.b16 %v1567
    %v2332 = vunpack.c.l.b16 %v1568
    %v2333 = vunpack.c.h.b16 %v1568
    %v2334 = vunpack.c.l.b16 %v1569
    %v2335 = vunpack.c.h.b16 %v1569
    %v2336 = vunpack.c.l.b16 %v1570
    %v2337 = vunpack.c.h.b16 %v1570
    %v2338 = vunpack.c.l.b16 %v1571
    %v2339 = vunpack.c.h.b16 %v1571
    %v2340 = vunpack.c.l.b16 %v1572
    %v2341 = vunpack.c.h.b16 %v1572
    %v2342 = vunpack.c.l.b16 %v1573
    %v2343 = vunpack.c.h.b16 %v1573
    %v2344 = vunpack.c.l.b16 %v1574
    %v2345 = vunpack.c.h.b16 %v1574
    %v2346 = vunpack.c.l.b16 %v1575
    %v2347 = vunpack.c.h.b16 %v1575
    %v2348 = vunpack.c.l.b16 %v1576
    %v2349 = vunpack.c.h.b16 %v1576
    %v2350 = vunpack.c.l.b16 %v1577
    %v2351 = vunpack.c.h.b16 %v1577
    %v2352 = vunpack.c.l.b16 %v1578
    %v2353 = vunpack.c.h.b16 %v1578
    %v2354 = vunpack.c.l.b16 %v1579
    %v2355 = vunpack.c.h.b16 %v1579
    %v2356 = vunpack.c.l.b16 %v1580
    %v2357 = vunpack.c.h.b16 %v1580
    %v2358 = vunpack.c.l.b16 %v1581
    %v2359 = vunpack.c.h.b16 %v1581
    %v2360 = vunpack.c.l.b16 %v1582
    %v2361 = vunpack.c.h.b16 %v1582
    %v2362 = vunpack.c.l.b16 %v1583
    %v2363 = vunpack.c.h.b16 %v1583
    %v2364 = vunpack.c.l.b16 %v1584
    %v2365 = vunpack.c.h.b16 %v1584
    %v2366 = vunpack.c.l.b16 %v1585
    %v2367 = vunpack.c.h.b16 %v1585
    %v2368 = vunpack.c.l.b16 %v1586
    %v2369 = vunpack.c.h.b16 %v1586
    %v2370 = vunpack.c.l.b16 %v1587
    %v2371 = vunpack.c.h.b16 %v1587
    %v2372 = vunpack.c.l.b16 %v1588
    %v2373 = vunpack.c.h.b16 %v1588
    %v2374 = vunpack.c.l.b16 %v1589
    %v2375 = vunpack.c.h.b16 %v1589
    %v2376 = vunpack.c.l.b16 %v1590
    %v2377 = vunpack.c.h.b16 %v1590
    %v2378 = vunpack.c.l.b16 %v1591
    %v2379 = vunpack.c.h.b16 %v1591
    %v2380 = vunpack.c.l.b16 %v1592
    %v2381 = vunpack.c.h.b16 %v1592
    %v2382 = vunpack.c.l.b16 %v1593
    %v2383 = vunpack.c.h.b16 %v1593
    %v2384 = vunpack.c.l.b16 %v1594
    %v2385 = vunpack.c.h.b16 %v1594
    %v2386 = vunpack.c.l.b16 %v1595
    %v2387 = vunpack.c.h.b16 %v1595
    %v2388 = vunpack.c.l.b16 %v1596
    %v2389 = vunpack.c.h.b16 %v1596
    %v2390 = vunpack.c.l.b16 %v1597
    %v2391 = vunpack.c.h.b16 %v1597
    %v2392 = vunpack.c.l.b16 %v1598
    %v2393 = vunpack.c.h.b16 %v1598
    %v2394 = vunpack.c.l.b16 %v1599
    %v2395 = vunpack.c.h.b16 %v1599
    %v2396 = vunpack.c.l.b16 %v1600
    %v2397 = vunpack.c.h.b16 %v1600
    %v2398 = vunpack.c.l.b16 %v1601
    %v2399 = vunpack.c.h.b16 %v1601
    %v2400 = vunpack.c.l.b16 %v1602
    %v2401 = vunpack.c.h.b16 %v1602
    %v2402 = vunpack.c.l.b16 %v1603
    %v2403 = vunpack.c.h.b16 %v1603
    %v2404 = vunpack.c.l.b16 %v1604
    %v2405 = vunpack.c.h.b16 %v1604
    %v2406 = vunpack.c.l.b16 %v1605
    %v2407 = vunpack.c.h.b16 %v1605
    %v2408 = vunpack.c.l.b16 %v1606
    %v2409 = vunpack.c.h.b16 %v1606
    %v2410 = vunpack.c.l.b16 %v1607
    %v2411 = vunpack.c.h.b16 %v1607
    %v2412 = vunpack.c.l.b16 %v1608
    %v2413 = vunpack.c.h.b16 %v1608
    %v2414 = vunpack.c.l.b16 %v1609
    %v2415 = vunpack.c.h.b16 %v1609
    %v2416 = vunpack.c.l.b16 %v1610
    %v2417 = vunpack.c.h.b16 %v1610
    %v2418 = vunpack.c.l.b16 %v1611
    %v2419 = vunpack.c.h.b16 %v1611
    %v2420 = vunpack.c.l.b16 %v1612
    %v2421 = vunpack.c.h.b16 %v1612
    %v2422 = vunpack.c.l.b16 %v1613
    %v2423 = vunpack.c.h.b16 %v1613
    %v2424 = vpack.c.b16 %v1920, %v1912
    %v2425 = vpack.c.b16 %v1921, %v1913
    %v2426 = vpack.c.b16 %v1922, %v1914
    %v2427 = vpack.c.b16 %v1923, %v1915
    %v2428 = vpack.c.b16 %v1924, %v1916
    %v2429 = vpack.c.b16 %v1925, %v1917
    %v2430 = vpack.c.b16 %v1926, %v1918
    %v2431 = vpack.c.b16 %v1927, %v1919
    %v2432 = vpack.c.b16 %v1936, %v1928
    %v2433 = vpack.c.b16 %v1937, %v1929
    %v2434 = vpack.c.b16 %v1938, %v1930
    %v2435 = vpack.c.b16 %v1939, %v1931
    %v2436 = vpack.c.b16 %v1940, %v1932
    %v2437 = vpack.c.b16 %v1941, %v1933
    %v2438 = vpack.c.b16 %v1942, %v1934
    %v2439 = vpack.c.b16 %v1943, %v1935
    %v2440 = vpack.c.b16 %v1952, %v1944
    %v2441 = vpack.c.b16 %v1953, %v1945
    %v2442 = vpack.c.b16 %v1954, %v1946
    %v2443 = vpack.c.b16 %v1955, %v1947
    %v2444 = vpack.c.b16 %v1956, %v1948
    %v2445 = vpack.c.b16 %v1957, %v1949
    %v2446 = vpack.c.b16 %v1958, %v1950
    %v2447 = vpack.c.b16 %v1959, %v1951
    %v2448 = vpack.c.b16 %v1968, %v1960
    %v2449 = vpack.c.b16 %v1969, %v1961
    %v2450 = vpack.c.b16 %v1970, %v1962
    %v2451 = vpack.c.b16 %v1971, %v1963
    %v2452 = vpack.c.b16 %v1972, %v1964
    %v2453 = vpack.c.b16 %v1973, %v1965
    %v2454 = vpack.c.b16 %v1974, %v1966
    %v2455 = vpack.c.b16 %v1975, %v1967
    %v2456 = vpack.c.b16 %v1984, %v1976
    %v2457 = vpack.c.b16 %v1985, %v1977
    %v2458 = vpack.c.b16 %v1986, %v1978
    %v2459 = vpack.c.b16 %v1987, %v1979
    %v2460 = vpack.c.b16 %v1988, %v1980
    %v2461 = vpack.c.b16 %v1989, %v1981
    %v2462 = vpack.c.b16 %v1990, %v1982
    %v2463 = vpack.c.b16 %v1991, %v1983
    %v2464 = vpack.c.b16 %v2000, %v1992
    %v2465 = vpack.c.b16 %v2001, %v1993
    %v2466 = vpack.c.b16 %v2002, %v1994
    %v2467 = vpack.c.b16 %v2003, %v1995
    %v2468 = vpack.c.b16 %v2004, %v1996
    %v2469 = vpack.c.b16 %v2005, %v1997
    %v2470 = vpack.c.b16 %v2006, %v1998
    %v2471 = vpack.c.b16 %v2007, %v1999
    %v2472 = vpack.c.b16 %v2016, %v2008
    %v2473 = vpack.c.b16 %v2017, %v2009
    %v2474 = vpack.c.b16 %v2018, %v2010
    %v2475 = vpack.c.b16 %v2019, %v2011
    %v2476 = vpack.c.b16 %v2020, %v2012
    %v2477 = vpack.c.b16 %v2021, %v2013
    %v2478 = vpack.c.b16 %v2022, %v2014
    %v2479 = vpack.c.b16 %v2023, %v2015
    %v2480 = vpack.c.b16 %v2032, %v2024
    %v2481 = vpack.c.b16 %v2033, %v2025
    %v2482 = vpack.c.b16 %v2034, %v2026
    %v2483 = vpack.c.b16 %v2035, %v2027
    %v2484 = vpack.c.b16 %v2036, %v2028
    %v2485 = vpack.c.b16 %v2037, %v2029
    %v2486 = vpack.c.b16 %v2038, %v2030
    %v2487 = vpack.c.b16 %v2039, %v2031
    %v2488 = vpack.c.b16 %v2048, %v2040
    %v2489 = vpack.c.b16 %v2049, %v2041
    %v2490 = vpack.c.b16 %v2050, %v2042
    %v2491 = vpack.c.b16 %v2051, %v2043
    %v2492 = vpack.c.b16 %v2052, %v2044
    %v2493 = vpack.c.b16 %v2053, %v2045
    %v2494 = vpack.c.b16 %v2054, %v2046
    %v2495 = vpack.c.b16 %v2055, %v2047
    %v2496 = vpack.c.b16 %v2064, %v2056
    %v2497 = vpack.c.b16 %v2065, %v2057
    %v2498 = vpack.c.b16 %v2066, %v2058
    %v2499 = vpack.c.b16 %v2067, %v2059
    %v2500 = vpack.c.b16 %v2068, %v2060
    %v2501 = vpack.c.b16 %v2069, %v2061
    %v2502 = vpack.c.b16 %v2070, %v2062
    %v2503 = vpack.c.b16 %v2071, %v2063
    %v2504 = vpack.c.b16 %v2080, %v2072
    %v2505 = vpack.c.b16 %v2081, %v2073
    %v2506 = vpack.c.b16 %v2082, %v2074
    %v2507 = vpack.c.b16 %v2083, %v2075
    %v2508 = vpack.c.b16 %v2084, %v2076
    %v2509 = vpack.c.b16 %v2085, %v2077
    %v2510 = vpack.c.b16 %v2086, %v2078
    %v2511 = vpack.c.b16 %v2087, %v2079
    %v2512 = vpack.c.b16 %v2096, %v2088
    %v2513 = vpack.c.b16 %v2097, %v2089
    %v2514 = vpack.c.b16 %v2098, %v2090
    %v2515 = vpack.c.b16 %v2099, %v2091
    %v2516 = vpack.c.b16 %v2100, %v2092
    %v2517 = vpack.c.b16 %v2101, %v2093
    %v2518 = vpack.c.b16 %v2102, %v2094
    %v2519 = vpack.c.b16 %v2103, %v2095
    %v2520 = vpack.c.b16 %v2112, %v2104
    %v2521 = vpack.c.b16 %v2113, %v2105
    %v2522 = vpack.c.b16 %v2114, %v2106
    %v2523 = vpack.c.b16 %v2115, %v2107
    %v2524 = vpack.c.b16 %v2116, %v2108
    %v2525 = vpack.c.b16 %v2117, %v2109
    %v2526 = vpack.c.b16 %v2118, %v2110
    %v2527 = vpack.c.b16 %v2119, %v2111
    %v2528 = vpack.c.b16 %v2128, %v2120
    %v2529 = vpack.c.b16 %v2129, %v2121
    %v2530 = vpack.c.b16 %v2130, %v2122
    %v2531 = vpack.c.b16 %v2131, %v2123
    %v2532 = vpack.c.b16 %v2132, %v2124
    %v2533 = vpack.c.b16 %v2133, %v2125
    %v2534 = vpack.c.b16 %v2134, %v2126
    %v2535 = vpack.c.b16 %v2135, %v2127
    %v2536 = vpack.c.b16 %v2144, %v2136
    %v2537 = vpack.c.b16 %v2145, %v2137
    %v2538 = vpack.c.b16 %v2146, %v2138
    %v2539 = vpack.c.b16 %v2147, %v2139
    %v2540 = vpack.c.b16 %v2148, %v2140
    %v2541 = vpack.c.b16 %v2149, %v2141
    %v2542 = vpack.c.b16 %v2150, %v2142
    %v2543 = vpack.c.b16 %v2151, %v2143
    %v2544 = vpack.c.b16 %v2160, %v2152
    %v2545 = vpack.c.b16 %v2161, %v2153
    %v2546 = vpack.c.b16 %v2162, %v2154
    %v2547 = vpack.c.b16 %v2163, %v2155
    %v2548 = vpack.c.b16 %v2164, %v2156
    %v2549 = vpack.c.b16 %v2165, %v2157
    %v2550 = vpack.c.b16 %v2166, %v2158
    %v2551 = vpack.c.b16 %v2167, %v2159
    %v2552 = vpack.c.b16 %v2176, %v2168
    %v2553 = vpack.c.b16 %v2177, %v2169
    %v2554 = vpack.c.b16 %v2178, %v2170
    %v2555 = vpack.c.b16 %v2179, %v2171
    %v2556 = vpack.c.b16 %v2180, %v2172
    %v2557 = vpack.c.b16 %v2181, %v2173
    %v2558 = vpack.c.b16 %v2182, %v2174
    %v2559 = vpack.c.b16 %v2183, %v2175
    %v2560 = vpack.c.b16 %v2192, %v2184
    %v2561 = vpack.c.b16 %v2193, %v2185
    %v2562 = vpack.c.b16 %v2194, %v2186
    %v2563 = vpack.c.b16 %v2195, %v2187
    %v2564 = vpack.c.b16 %v2196, %v2188
    %v2565 = vpack.c.b16 %v2197, %v2189
    %v2566 = vpack.c.b16 %v2198, %v2190
    %v2567 = vpack.c.b16 %v2199, %v2191
    %v2568 = vpack.c.b16 %v2208, %v2200
    %v2569 = vpack.c.b16 %v2209, %v2201
    %v2570 = vpack.c.b16 %v2210, %v2202
    %v2571 = vpack.c.b16 %v2211, %v2203
    %v2572 = vpack.c.b16 %v2212, %v2204
    %v2573 = vpack.c.b16 %v2213, %v2205
    %v2574 = vpack.c.b16 %v2214, %v2206
    %v2575 = vpack.c.b16 %v2215, %v2207
    %v2576 = vpack.c.b16 %v2224, %v2216
    %v2577 = vpack.c.b16 %v2225, %v2217
    %v2578 = vpack.c.b16 %v2226, %v2218
    %v2579 = vpack.c.b16 %v2227, %v2219
    %v2580 = vpack.c.b16 %v2228, %v2220
    %v2581 = vpack.c.b16 %v2229, %v2221
    %v2582 = vpack.c.b16 %v2230, %v2222
    %v2583 = vpack.c.b16 %v2231, %v2223
    %v2584 = vpack.c.b16 %v2240, %v2232
    %v2585 = vpack.c.b16 %v2241, %v2233
    %v2586 = vpack.c.b16 %v2242, %v2234
    %v2587 = vpack.c.b16 %v2243, %v2235
    %v2588 = vpack.c.b16 %v2244, %v2236
    %v2589 = vpack.c.b16 %v2245, %v2237
    %v2590 = vpack.c.b16 %v2246, %v2238
    %v2591 = vpack.c.b16 %v2247, %v2239
    %v2592 = vpack.c.b16 %v2256, %v2248
    %v2593 = vpack.c.b16 %v2257, %v2249
    %v2594 = vpack.c.b16 %v2258, %v2250
    %v2595 = vpack.c.b16 %v2259, %v2251
    %v2596 = vpack.c.b16 %v2260, %v2252
    %v2597 = vpack.c.b16 %v2261, %v2253
    %v2598 = vpack.c.b16 %v2262, %v2254
    %v2599 = vpack.c.b16 %v2263, %v2255
    %v2600 = vpack.c.b16 %v2272, %v2264
    %v2601 = vpack.c.b16 %v2273, %v2265
    %v2602 = vpack.c.b16 %v2274, %v2266
    %v2603 = vpack.c.b16 %v2275, %v2267
    %v2604 = vpack.c.b16 %v2276, %v2268
    %v2605 = vpack.c.b16 %v2277, %v2269
    %v2606 = vpack.c.b16 %v2278, %v2270
    %v2607 = vpack.c.b16 %v2279, %v2271
    %v2608 = vpack.c.b16 %v2288, %v2280
    %v2609 = vpack.c.b16 %v2289, %v2281
    %v2610 = vpack.c.b16 %v2290, %v2282
    %v2611 = vpack.c.b16 %v2291, %v2283
    %v2612 = vpack.c.b16 %v2292, %v2284
    %v2613 = vpack.c.b16 %v2293, %v2285
    %v2614 = vpack.c.b16 %v2294, %v2286
    %v2615 = vpack.c.b16 %v2295, %v2287
    %v2616 = vpack.c.b16 %v2304, %v2296
    %v2617 = vpack.c.b16 %v2305, %v2297
    %v2618 = vpack.c.b16 %v2306, %v2298
    %v2619 = vpack.c.b16 %v2307, %v2299
    %v2620 = vpack.c.b16 %v2308, %v2300
    %v2621 = vpack.c.b16 %v2309, %v2301
    %v2622 = vpack.c.b16 %v2310, %v2302
    %v2623 = vpack.c.b16 %v2311, %v2303
    %v2624 = vpack.c.b16 %v2320, %v2312
    %v2625 = vpack.c.b16 %v2321, %v2313
    %v2626 = vpack.c.b16 %v2322, %v2314
    %v2627 = vpack.c.b16 %v2323, %v2315
    %v2628 = vpack.c.b16 %v2324, %v2316
    %v2629 = vpack.c.b16 %v2325, %v2317
    %v2630 = vpack.c.b16 %v2326, %v2318
    %v2631 = vpack.c.b16 %v2327, %v2319
    %v2632 = vpack.c.b16 %v2336, %v2328
    %v2633 = vpack.c.b16 %v2337, %v2329
    %v2634 = vpack.c.b16 %v2338, %v2330
    %v2635 = vpack.c.b16 %v2339, %v2331
    %v2636 = vpack.c.b16 %v2340, %v2332
    %v2637 = vpack.c.b16 %v2341, %v2333
    %v2638 = vpack.c.b16 %v2342, %v2334
    %v2639 = vpack.c.b16 %v2343, %v2335
    %v2640 = vpack.c.b16 %v2352, %v2344
    %v2641 = vpack.c.b16 %v2353, %v2345
    %v2642 = vpack.c.b16 %v2354, %v2346
    %v2643 = vpack.c.b16 %v2355, %v2347
    %v2644 = vpack.c.b16 %v2356, %v2348
    %v2645 = vpack.c.b16 %v2357, %v2349
    %v2646 = vpack.c.b16 %v2358, %v2350
    %v2647 = vpack.c.b16 %v2359, %v2351
    %v2648 = vpack.c.b16 %v2368, %v2360
    %v2649 = vpack.c.b16 %v2369, %v2361
    %v2650 = vpack.c.b16 %v2370, %v2362
    %v2651 = vpack.c.b16 %v2371, %v2363
    %v2652 = vpack.c.b16 %v2372, %v2364
    %v2653 = vpack.c.b16 %v2373, %v2365
    %v2654 = vpack.c.b16 %v2374, %v2366
    %v2655 = vpack.c.b16 %v2375, %v2367
    %v2656 = vpack.c.b16 %v2384, %v2376
    %v2657 = vpack.c.b16 %v2385, %v2377
    %v2658 = vpack.c.b16 %v2386, %v2378
    %v2659 = vpack.c.b16 %v2387, %v2379
    %v2660 = vpack.c.b16 %v2388, %v2380
    %v2661 = vpack.c.b16 %v2389, %v2381
    %v2662 = vpack.c.b16 %v2390, %v2382
    %v2663 = vpack.c.b16 %v2391, %v2383
    %v2664 = vpack.c.b16 %v2400, %v2392
    %v2665 = vpack.c.b16 %v2401, %v2393
    %v2666 = vpack.c.b16 %v2402, %v2394
    %v2667 = vpack.c.b16 %v2403, %v2395
    %v2668 = vpack.c.b16 %v2404, %v2396
    %v2669 = vpack.c.b16 %v2405, %v2397
    %v2670 = vpack.c.b16 %v2406, %v2398
    %v2671 = vpack.c.b16 %v2407, %v2399
    %v2672 = vpack.c.b16 %v2416, %v2408
    %v2673 = vpack.c.b16 %v2417, %v2409
    %v2674 = vpack.c.b16 %v2418, %v2410
    %v2675 = vpack.c.b16 %v2419, %v2411
    %v2676 = vpack.c.b16 %v2420, %v2412
    %v2677 = vpack.c.b16 %v2421, %v2413
    %v2678 = vpack.c.b16 %v2422, %v2414
    %v2679 = vpack.c.b16 %v2423, %v2415
    %2936 = vmatprep.subr.bf16.mxu0 %v2425
    %2937 = vmatpush1.bf16.msra.mxu0 %v2424
    %2938 = vmatprep.subr.bf16.mxu0 %v2433
    %2939 = vmatpush1.bf16.msra.mxu0 %v2432
    %2940 = vmatprep.subr.bf16.mxu0 %v2441
    %2941 = vmatpush1.bf16.msra.mxu0 %v2440
    %2942 = vmatprep.subr.bf16.mxu0 %v2449
    %2943 = vmatpush1.bf16.msra.mxu0 %v2448
    %2944 = vmatprep.subr.bf16.mxu0 %v2457
    %2945 = vmatpush1.bf16.msra.mxu0 %v2456
    %2946 = vmatprep.subr.bf16.mxu0 %v2465
    %2947 = vmatpush1.bf16.msra.mxu0 %v2464
    %2948 = vmatprep.subr.bf16.mxu0 %v2473
    %2949 = vmatpush1.bf16.msra.mxu0 %v2472
    %2950 = vmatprep.subr.bf16.mxu0 %v2481
    %2951 = vmatpush1.bf16.msra.mxu0 %v2480
    %2952 = vmatprep.subr.bf16.mxu0 %v2489
    %2953 = vmatpush1.bf16.msra.mxu0 %v2488
    %2954 = vmatprep.subr.bf16.mxu0 %v2497
    %2955 = vmatpush1.bf16.msra.mxu0 %v2496
    %2956 = vmatprep.subr.bf16.mxu0 %v2505
    %2957 = vmatpush1.bf16.msra.mxu0 %v2504
    %2958 = vmatprep.subr.bf16.mxu0 %v2513
    %2959 = vmatpush1.bf16.msra.mxu0 %v2512
    %2960 = vmatprep.subr.bf16.mxu0 %v2521
    %2961 = vmatpush1.bf16.msra.mxu0 %v2520
    %2962 = vmatprep.subr.bf16.mxu0 %v2529
    %2963 = vmatpush1.bf16.msra.mxu0 %v2528
    %2964 = vmatprep.subr.bf16.mxu0 %v2537
    %2965 = vmatpush1.bf16.msra.mxu0 %v2536
    %2966 = vmatprep.subr.bf16.mxu0 %v2545
    %2967 = vmatpush1.bf16.msra.mxu0 %v2544
    %2968 = vmatprep.mubr.bf16.mxu0 %v1356
    %2969 = vmatmul.mubr.bf16.gmra.mrb[0].mxu0 %v1355
    %v2970 = vpop.f32.mrb[0].mxu0
    %v2971 = vadd.f32 %v1619, %v2970
    %v2972 = vpop.f32.mrb[0].mxu0
    %v2973 = vadd.f32 %v1623, %v2972
    %v2974 = vpop.f32.mrb[0].mxu0
    %v2975 = vpop.f32.mrb[0].mxu0
    %2976 = vdwg.mxu0
    %2977 = vmatprep.subr.bf16.mxu0 %v2553
    %2978 = vmatpush1.bf16.msra.mxu0 %v2552
    %2979 = vmatprep.subr.bf16.mxu0 %v2561
    %2980 = vmatpush1.bf16.msra.mxu0 %v2560
    %2981 = vmatprep.subr.bf16.mxu0 %v2569
    %2982 = vmatpush1.bf16.msra.mxu0 %v2568
    %2983 = vmatprep.subr.bf16.mxu0 %v2577
    %2984 = vmatpush1.bf16.msra.mxu0 %v2576
    %2985 = vmatprep.subr.bf16.mxu0 %v2585
    %2986 = vmatpush1.bf16.msra.mxu0 %v2584
    %2987 = vmatprep.subr.bf16.mxu0 %v2593
    %2988 = vmatpush1.bf16.msra.mxu0 %v2592
    %2989 = vmatprep.subr.bf16.mxu0 %v2601
    %2990 = vmatpush1.bf16.msra.mxu0 %v2600
    %2991 = vmatprep.subr.bf16.mxu0 %v2609
    %2992 = vmatpush1.bf16.msra.mxu0 %v2608
    %2993 = vmatprep.subr.bf16.mxu0 %v2617
    %2994 = vmatpush1.bf16.msra.mxu0 %v2616
    %2995 = vmatprep.subr.bf16.mxu0 %v2625
    %2996 = vmatpush1.bf16.msra.mxu0 %v2624
    %2997 = vmatprep.subr.bf16.mxu0 %v2633
    %2998 = vmatpush1.bf16.msra.mxu0 %v2632
    %2999 = vmatprep.subr.bf16.mxu0 %v2641
    %3000 = vmatpush1.bf16.msra.mxu0 %v2640
    %3001 = vmatprep.subr.bf16.mxu0 %v2649
    %3002 = vmatpush1.bf16.msra.mxu0 %v2648
    %3003 = vmatprep.subr.bf16.mxu0 %v2657
    %3004 = vmatpush1.bf16.msra.mxu0 %v2656
    %3005 = vmatprep.subr.bf16.mxu0 %v2665
    %3006 = vmatpush1.bf16.msra.mxu0 %v2664
    %3007 = vmatprep.subr.bf16.mxu0 %v2673
    %3008 = vmatpush1.bf16.msra.mxu0 %v2672
    %3009 = vmatprep.mubr.bf16.mxu0 %v1357
    %3010 = vmatmul.mubr.bf16.gmra.mrb[0].mxu0 %v1357
    %v3011 = vpop.f32.mrb[0].mxu0
    %v3012 = vadd.f32 %v2971, %v3011
    %v3013 = vpop.f32.mrb[0].mxu0
    %v3014 = vadd.f32 %v2973, %v3013
    %v3015 = vpop.f32.mrb[0].mxu0
    %v3016 = vpop.f32.mrb[0].mxu0
    %3017 = vdwg.mxu0
    %3018 = vmatprep.subr.bf16.mxu0 %v2427
    %3019 = vmatpush1.bf16.msra.mxu0 %v2426
    %3020 = vmatprep.subr.bf16.mxu0 %v2435
    %3021 = vmatpush1.bf16.msra.mxu0 %v2434
    %3022 = vmatprep.subr.bf16.mxu0 %v2443
    %3023 = vmatpush1.bf16.msra.mxu0 %v2442
    %3024 = vmatprep.subr.bf16.mxu0 %v2451
    %3025 = vmatpush1.bf16.msra.mxu0 %v2450
    %3026 = vmatprep.subr.bf16.mxu0 %v2459
    %3027 = vmatpush1.bf16.msra.mxu0 %v2458
    %3028 = vmatprep.subr.bf16.mxu0 %v2467
    %3029 = vmatpush1.bf16.msra.mxu0 %v2466
    %3030 = vmatprep.subr.bf16.mxu0 %v2475
    %3031 = vmatpush1.bf16.msra.mxu0 %v2474
    %3032 = vmatprep.subr.bf16.mxu0 %v2483
    %3033 = vmatpush1.bf16.msra.mxu0 %v2482
    %3034 = vmatprep.subr.bf16.mxu0 %v2491
    %3035 = vmatpush1.bf16.msra.mxu0 %v2490
    %3036 = vmatprep.subr.bf16.mxu0 %v2499
    %3037 = vmatpush1.bf16.msra.mxu0 %v2498
    %3038 = vmatprep.subr.bf16.mxu0 %v2507
    %3039 = vmatpush1.bf16.msra.mxu0 %v2506
    %3040 = vmatprep.subr.bf16.mxu0 %v2515
    %3041 = vmatpush1.bf16.msra.mxu0 %v2514
    %3042 = vmatprep.subr.bf16.mxu0 %v2523
    %3043 = vmatpush1.bf16.msra.mxu0 %v2522
    %3044 = vmatprep.subr.bf16.mxu0 %v2531
    %3045 = vmatpush1.bf16.msra.mxu0 %v2530
    %3046 = vmatprep.subr.bf16.mxu0 %v2539
    %3047 = vmatpush1.bf16.msra.mxu0 %v2538
    %3048 = vmatprep.subr.bf16.mxu0 %v2547
    %3049 = vmatpush1.bf16.msra.mxu0 %v2546
    %3050 = vmatprep.mubr.bf16.mxu0 %v1356
    %3051 = vmatmul.mubr.bf16.gmra.mrb[0].mxu0 %v1355
    %v3052 = vpop.f32.mrb[0].mxu0
    %v3053 = vadd.f32 %v1627, %v3052
    %v3054 = vpop.f32.mrb[0].mxu0
    %v3055 = vadd.f32 %v1631, %v3054
    %v3056 = vpop.f32.mrb[0].mxu0
    %v3057 = vpop.f32.mrb[0].mxu0
    %3058 = vdwg.mxu0
    %3059 = vmatprep.subr.bf16.mxu0 %v2555
    %3060 = vmatpush1.bf16.msra.mxu0 %v2554
    %3061 = vmatprep.subr.bf16.mxu0 %v2563
    %3062 = vmatpush1.bf16.msra.mxu0 %v2562
    %3063 = vmatprep.subr.bf16.mxu0 %v2571
    %3064 = vmatpush1.bf16.msra.mxu0 %v2570
    %3065 = vmatprep.subr.bf16.mxu0 %v2579
    %3066 = vmatpush1.bf16.msra.mxu0 %v2578
    %3067 = vmatprep.subr.bf16.mxu0 %v2587
    %3068 = vmatpush1.bf16.msra.mxu0 %v2586
    %3069 = vmatprep.subr.bf16.mxu0 %v2595
    %3070 = vmatpush1.bf16.msra.mxu0 %v2594
    %3071 = vmatprep.subr.bf16.mxu0 %v2603
    %3072 = vmatpush1.bf16.msra.mxu0 %v2602
    %3073 = vmatprep.subr.bf16.mxu0 %v2611
    %3074 = vmatpush1.bf16.msra.mxu0 %v2610
    %3075 = vmatprep.subr.bf16.mxu0 %v2619
    %3076 = vmatpush1.bf16.msra.mxu0 %v2618
    %3077 = vmatprep.subr.bf16.mxu0 %v2627
    %3078 = vmatpush1.bf16.msra.mxu0 %v2626
    %3079 = vmatprep.subr.bf16.mxu0 %v2635
    %3080 = vmatpush1.bf16.msra.mxu0 %v2634
    %3081 = vmatprep.subr.bf16.mxu0 %v2643
    %3082 = vmatpush1.bf16.msra.mxu0 %v2642
    %3083 = vmatprep.subr.bf16.mxu0 %v2651
    %3084 = vmatpush1.bf16.msra.mxu0 %v2650
    %3085 = vmatprep.subr.bf16.mxu0 %v2659
    %3086 = vmatpush1.bf16.msra.mxu0 %v2658
    %3087 = vmatprep.subr.bf16.mxu0 %v2667
    %3088 = vmatpush1.bf16.msra.mxu0 %v2666
    %3089 = vmatprep.subr.bf16.mxu0 %v2675
    %3090 = vmatpush1.bf16.msra.mxu0 %v2674
    %3091 = vmatprep.mubr.bf16.mxu0 %v1357
    %3092 = vmatmul.mubr.bf16.gmra.mrb[0].mxu0 %v1357
    %v3093 = vpop.f32.mrb[0].mxu0
    %v3094 = vadd.f32 %v3053, %v3093
    %v3095 = vpop.f32.mrb[0].mxu0
    %v3096 = vadd.f32 %v3055, %v3095
    %v3097 = vpop.f32.mrb[0].mxu0
    %v3098 = vpop.f32.mrb[0].mxu0
    %3099 = vdwg.mxu0
    %3100 = vmatprep.subr.bf16.mxu0 %v2429
    %3101 = vmatpush1.bf16.msra.mxu0 %v2428
    %3102 = vmatprep.subr.bf16.mxu0 %v2437
    %3103 = vmatpush1.bf16.msra.mxu0 %v2436
    %3104 = vmatprep.subr.bf16.mxu0 %v2445
    %3105 = vmatpush1.bf16.msra.mxu0 %v2444
    %3106 = vmatprep.subr.bf16.mxu0 %v2453
    %3107 = vmatpush1.bf16.msra.mxu0 %v2452
    %3108 = vmatprep.subr.bf16.mxu0 %v2461
    %3109 = vmatpush1.bf16.msra.mxu0 %v2460
    %3110 = vmatprep.subr.bf16.mxu0 %v2469
    %3111 = vmatpush1.bf16.msra.mxu0 %v2468
    %3112 = vmatprep.subr.bf16.mxu0 %v2477
    %3113 = vmatpush1.bf16.msra.mxu0 %v2476
    %3114 = vmatprep.subr.bf16.mxu0 %v2485
    %3115 = vmatpush1.bf16.msra.mxu0 %v2484
    %3116 = vmatprep.subr.bf16.mxu0 %v2493
    %3117 = vmatpush1.bf16.msra.mxu0 %v2492
    %3118 = vmatprep.subr.bf16.mxu0 %v2501
    %3119 = vmatpush1.bf16.msra.mxu0 %v2500
    %3120 = vmatprep.subr.bf16.mxu0 %v2509
    %3121 = vmatpush1.bf16.msra.mxu0 %v2508
    %3122 = vmatprep.subr.bf16.mxu0 %v2517
    %3123 = vmatpush1.bf16.msra.mxu0 %v2516
    %3124 = vmatprep.subr.bf16.mxu0 %v2525
    %3125 = vmatpush1.bf16.msra.mxu0 %v2524
    %3126 = vmatprep.subr.bf16.mxu0 %v2533
    %3127 = vmatpush1.bf16.msra.mxu0 %v2532
    %3128 = vmatprep.subr.bf16.mxu0 %v2541
    %3129 = vmatpush1.bf16.msra.mxu0 %v2540
    %3130 = vmatprep.subr.bf16.mxu0 %v2549
    %3131 = vmatpush1.bf16.msra.mxu0 %v2548
    %3132 = vmatprep.mubr.bf16.mxu0 %v1356
    %3133 = vmatmul.mubr.bf16.gmra.mrb[0].mxu0 %v1355
    %v3134 = vpop.f32.mrb[0].mxu0
    %v3135 = vadd.f32 %v1635, %v3134
    %v3136 = vpop.f32.mrb[0].mxu0
    %v3137 = vadd.f32 %v1639, %v3136
    %v3138 = vpop.f32.mrb[0].mxu0
    %v3139 = vpop.f32.mrb[0].mxu0
    %3140 = vdwg.mxu0
    %3141 = vmatprep.subr.bf16.mxu0 %v2557
    %3142 = vmatpush1.bf16.msra.mxu0 %v2556
    %3143 = vmatprep.subr.bf16.mxu0 %v2565
    %3144 = vmatpush1.bf16.msra.mxu0 %v2564
    %3145 = vmatprep.subr.bf16.mxu0 %v2573
    %3146 = vmatpush1.bf16.msra.mxu0 %v2572
    %3147 = vmatprep.subr.bf16.mxu0 %v2581
    %3148 = vmatpush1.bf16.msra.mxu0 %v2580
    %3149 = vmatprep.subr.bf16.mxu0 %v2589
    %3150 = vmatpush1.bf16.msra.mxu0 %v2588
    %3151 = vmatprep.subr.bf16.mxu0 %v2597
    %3152 = vmatpush1.bf16.msra.mxu0 %v2596
    %3153 = vmatprep.subr.bf16.mxu0 %v2605
    %3154 = vmatpush1.bf16.msra.mxu0 %v2604
    %3155 = vmatprep.subr.bf16.mxu0 %v2613
    %3156 = vmatpush1.bf16.msra.mxu0 %v2612
    %3157 = vmatprep.subr.bf16.mxu0 %v2621
    %3158 = vmatpush1.bf16.msra.mxu0 %v2620
    %3159 = vmatprep.subr.bf16.mxu0 %v2629
    %3160 = vmatpush1.bf16.msra.mxu0 %v2628
    %3161 = vmatprep.subr.bf16.mxu0 %v2637
    %3162 = vmatpush1.bf16.msra.mxu0 %v2636
    %3163 = vmatprep.subr.bf16.mxu0 %v2645
    %3164 = vmatpush1.bf16.msra.mxu0 %v2644
    %3165 = vmatprep.subr.bf16.mxu0 %v2653
    %3166 = vmatpush1.bf16.msra.mxu0 %v2652
    %3167 = vmatprep.subr.bf16.mxu0 %v2661
    %3168 = vmatpush1.bf16.msra.mxu0 %v2660
    %3169 = vmatprep.subr.bf16.mxu0 %v2669
    %3170 = vmatpush1.bf16.msra.mxu0 %v2668
    %3171 = vmatprep.subr.bf16.mxu0 %v2677
    %3172 = vmatpush1.bf16.msra.mxu0 %v2676
    %3173 = vmatprep.mubr.bf16.mxu0 %v1357
    %3174 = vmatmul.mubr.bf16.gmra.mrb[0].mxu0 %v1357
    %v3175 = vpop.f32.mrb[0].mxu0
    %v3176 = vadd.f32 %v3135, %v3175
    %v3177 = vpop.f32.mrb[0].mxu0
    %v3178 = vadd.f32 %v3137, %v3177
    %v3179 = vpop.f32.mrb[0].mxu0
    %v3180 = vpop.f32.mrb[0].mxu0
    %3181 = vdwg.mxu0
    %3182 = vmatprep.subr.bf16.mxu0 %v2431
    %3183 = vmatpush1.bf16.msra.mxu0 %v2430
    %3184 = vmatprep.subr.bf16.mxu0 %v2439
    %3185 = vmatpush1.bf16.msra.mxu0 %v2438
    %3186 = vmatprep.subr.bf16.mxu0 %v2447
    %3187 = vmatpush1.bf16.msra.mxu0 %v2446
    %3188 = vmatprep.subr.bf16.mxu0 %v2455
    %3189 = vmatpush1.bf16.msra.mxu0 %v2454
    %3190 = vmatprep.subr.bf16.mxu0 %v2463
    %3191 = vmatpush1.bf16.msra.mxu0 %v2462
    %3192 = vmatprep.subr.bf16.mxu0 %v2471
    %3193 = vmatpush1.bf16.msra.mxu0 %v2470
    %3194 = vmatprep.subr.bf16.mxu0 %v2479
    %3195 = vmatpush1.bf16.msra.mxu0 %v2478
    %3196 = vmatprep.subr.bf16.mxu0 %v2487
    %3197 = vmatpush1.bf16.msra.mxu0 %v2486
    %3198 = vmatprep.subr.bf16.mxu0 %v2495
    %3199 = vmatpush1.bf16.msra.mxu0 %v2494
    %3200 = vmatprep.subr.bf16.mxu0 %v2503
    %3201 = vmatpush1.bf16.msra.mxu0 %v2502
    %3202 = vmatprep.subr.bf16.mxu0 %v2511
    %3203 = vmatpush1.bf16.msra.mxu0 %v2510
    %3204 = vmatprep.subr.bf16.mxu0 %v2519
    %3205 = vmatpush1.bf16.msra.mxu0 %v2518
    %3206 = vmatprep.subr.bf16.mxu0 %v2527
    %3207 = vmatpush1.bf16.msra.mxu0 %v2526
    %3208 = vmatprep.subr.bf16.mxu0 %v2535
    %3209 = vmatpush1.bf16.msra.mxu0 %v2534
    %3210 = vmatprep.subr.bf16.mxu0 %v2543
    %3211 = vmatpush1.bf16.msra.mxu0 %v2542
    %3212 = vmatprep.subr.bf16.mxu0 %v2551
    %3213 = vmatpush1.bf16.msra.mxu0 %v2550
    %3214 = vmatprep.mubr.bf16.mxu0 %v1356
    %3215 = vmatmul.mubr.bf16.gmra.mrb[0].mxu0 %v1355
    %v3216 = vpop.f32.mrb[0].mxu0
    %v3217 = vadd.f32 %v1643, %v3216
    %v3218 = vpop.f32.mrb[0].mxu0
    %v3219 = vadd.f32 %v1647, %v3218
    %v3220 = vpop.f32.mrb[0].mxu0
    %v3221 = vpop.f32.mrb[0].mxu0
    %3222 = vdwg.mxu0
    %3223 = vmatprep.subr.bf16.mxu0 %v2559
    %3224 = vmatpush1.bf16.msra.mxu0 %v2558
    %3225 = vmatprep.subr.bf16.mxu0 %v2567
    %3226 = vmatpush1.bf16.msra.mxu0 %v2566
    %3227 = vmatprep.subr.bf16.mxu0 %v2575
    %3228 = vmatpush1.bf16.msra.mxu0 %v2574
    %3229 = vmatprep.subr.bf16.mxu0 %v2583
    %3230 = vmatpush1.bf16.msra.mxu0 %v2582
    %3231 = vmatprep.subr.bf16.mxu0 %v2591
    %3232 = vmatpush1.bf16.msra.mxu0 %v2590
    %3233 = vmatprep.subr.bf16.mxu0 %v2599
    %3234 = vmatpush1.bf16.msra.mxu0 %v2598
    %3235 = vmatprep.subr.bf16.mxu0 %v2607
    %3236 = vmatpush1.bf16.msra.mxu0 %v2606
    %3237 = vmatprep.subr.bf16.mxu0 %v2615
    %3238 = vmatpush1.bf16.msra.mxu0 %v2614
    %3239 = vmatprep.subr.bf16.mxu0 %v2623
    %3240 = vmatpush1.bf16.msra.mxu0 %v2622
    %3241 = vmatprep.subr.bf16.mxu0 %v2631
    %3242 = vmatpush1.bf16.msra.mxu0 %v2630
    %3243 = vmatprep.subr.bf16.mxu0 %v2639
    %3244 = vmatpush1.bf16.msra.mxu0 %v2638
    %3245 = vmatprep.subr.bf16.mxu0 %v2647
    %3246 = vmatpush1.bf16.msra.mxu0 %v2646
    %3247 = vmatprep.subr.bf16.mxu0 %v2655
    %3248 = vmatpush1.bf16.msra.mxu0 %v2654
    %3249 = vmatprep.subr.bf16.mxu0 %v2663
    %3250 = vmatpush1.bf16.msra.mxu0 %v2662
    %3251 = vmatprep.subr.bf16.mxu0 %v2671
    %3252 = vmatpush1.bf16.msra.mxu0 %v2670
    %3253 = vmatprep.subr.bf16.mxu0 %v2679
    %3254 = vmatpush1.bf16.msra.mxu0 %v2678
    %3255 = vmatprep.mubr.bf16.mxu0 %v1357
    %3256 = vmatmul.mubr.bf16.gmra.mrb[0].mxu0 %v1357
    %v3257 = vpop.f32.mrb[0].mxu0
    %v3258 = vadd.f32 %v3217, %v3257
    %v3259 = vpop.f32.mrb[0].mxu0
    %v3260 = vadd.f32 %v3219, %v3259
    %v3261 = vpop.f32.mrb[0].mxu0
    %v3262 = vpop.f32.mrb[0].mxu0
    %3263 = vdwg.mxu0
    %v3264 = vxor.u32 %v3012, 2147483648
    %v3265 = vxor.u32 %v3014, 2147483648
    %v3266 = vmul.f32 %v3264, 1.442695
    %v3267 = vpow.pop %v3266
    %v3268 = vmul.f32 %v3265, 1.442695
    %v3269 = vpow.pop %v3268
    %v3270 = vadd.f32 %v3267, 1.0
    %v3271 = vadd.f32 %v3269, 1.0
    %v3272 = vrcp.pop %v3270
    %v3273 = vmul.f32 1.0, %v3272
    %v3274 = vrcp.pop %v3271
    %v3275 = vmul.f32 1.0, %v3274
    %v3276 = vxor.u32 %v3094, 2147483648
    %v3277 = vxor.u32 %v3096, 2147483648
    %v3278 = vmul.f32 %v3276, 1.442695
    %v3279 = vpow.pop %v3278
    %v3280 = vmul.f32 %v3277, 1.442695
    %v3281 = vpow.pop %v3280
    %v3282 = vadd.f32 %v3279, 1.0
    %v3283 = vadd.f32 %v3281, 1.0
    %v3284 = vrcp.pop %v3282
    %v3285 = vmul.f32 1.0, %v3284
    %v3286 = vrcp.pop %v3283
    %v3287 = vmul.f32 1.0, %v3286
    %v3288 = vmul.f32 %v3273, %v3258
    %v3289 = vmul.f32 %v3275, %v3260
    %v3290 = vadd.f32 %v3176, %v3288
    %v3291 = vadd.f32 %v3178, %v3289
    %v3292 = vtanh.pop %v3290
    %v3293 = vtanh.pop %v3291
    %v3294 = vsub.f32 1.0, %v3285
    %v3295 = vsub.f32 1.0, %v3287
    %v3296 = vmul.f32 %v3294, %v3292
    %v3297 = vmul.f32 %v3295, %v3293
    %v3298 = vmul.f32 %v3285, 0.0
    %v3299 = vmul.f32 %v3287, 0.0
    %v3300 = vadd.f32 %v3296, %v3298
    %v3301 = vadd.f32 %v3297, %v3299
    %v3302 = vsel %vm1352, %v3300, 0.0
    %v3303 = vsel %vm1352, %v3301, 0.0
    %s3304 = smul.u32 1, 6
    %s3305 = smul.addr %s3304, 8
    %s3306 = scalar_lea.vmem [#allocation2], %s3305
    %v3307 = vld [vmem:[%s3306] sm:$0xff]
    %v3308 = vld [vmem:[%s3306 + $0x8] sm:$0xff]
    %v3309 = vld [vmem:[%s3306 + $0x10] sm:$0xff]
    %v3310 = vld [vmem:[%s3306 + $0x18] sm:$0xff]
    %v3311 = vld [vmem:[%s3306 + $0x20] sm:$0xff]
    %v3312 = vld [vmem:[%s3306 + $0x28] sm:$0xff]
    %s3313 = scalar_lea.vmem %s1, 8
    %v3314 = vld [vmem:[%s3313] sm:$0xff]
    %3315 = vmatprep.subr.bf16.mxu0 %v991
    %3316 = vmatpush1.bf16.msra.mxu0 %v990
    %3317 = vmatprep.subr.bf16.mxu0 %v997
    %3318 = vmatpush1.bf16.msra.mxu0 %v996
    %3319 = vmatprep.subr.bf16.mxu0 %v1003
    %3320 = vmatpush1.bf16.msra.mxu0 %v1002
    %3321 = vmatprep.subr.bf16.mxu0 %v1009
    %3322 = vmatpush1.bf16.msra.mxu0 %v1008
    %3323 = vmatprep.subr.bf16.mxu0 %v1015
    %3324 = vmatpush1.bf16.msra.mxu0 %v1014
    %3325 = vmatprep.subr.bf16.mxu0 %v1021
    %3326 = vmatpush1.bf16.msra.mxu0 %v1020
    %3327 = vmatprep.subr.bf16.mxu0 %v1027
    %3328 = vmatpush1.bf16.msra.mxu0 %v1026
    %3329 = vmatprep.subr.bf16.mxu0 %v1033
    %3330 = vmatpush1.bf16.msra.mxu0 %v1032
    %3331 = vmatprep.subr.bf16.mxu0 %v1039
    %3332 = vmatpush1.bf16.msra.mxu0 %v1038
    %3333 = vmatprep.subr.bf16.mxu0 %v1045
    %3334 = vmatpush1.bf16.msra.mxu0 %v1044
    %3335 = vmatprep.subr.bf16.mxu0 %v1051
    %3336 = vmatpush1.bf16.msra.mxu0 %v1050
    %3337 = vmatprep.subr.bf16.mxu0 %v1057
    %3338 = vmatpush1.bf16.msra.mxu0 %v1056
    %3339 = vmatprep.subr.bf16.mxu0 %v1063
    %3340 = vmatpush1.bf16.msra.mxu0 %v1062
    %3341 = vmatprep.subr.bf16.mxu0 %v1069
    %3342 = vmatpush1.bf16.msra.mxu0 %v1068
    %3343 = vmatprep.subr.bf16.mxu0 %v1075
    %3344 = vmatpush1.bf16.msra.mxu0 %v1074
    %3345 = vmatprep.subr.bf16.mxu0 %v1081
    %3346 = vmatpush1.bf16.msra.mxu0 %v1080
    %3347 = vmatprep.mubr.bf16.mxu0 %v1356
    %3348 = vmatmul.mubr.bf16.gmra.mrb[0].mxu0 %v1355
    %v3349 = vpop.f32.mrb[0].mxu0
    %v3350 = vadd.f32 %v675, %v3349
    %v3351 = vpop.f32.mrb[0].mxu0
    %v3352 = vadd.f32 %v679, %v3351
    %v3353 = vpop.f32.mrb[0].mxu0
    %v3354 = vpop.f32.mrb[0].mxu0
    %3355 = vdwg.mxu0
    %3356 = vmatprep.subr.bf16.mxu0 %v993
    %3357 = vmatpush1.bf16.msra.mxu0 %v992
    %3358 = vmatprep.subr.bf16.mxu0 %v999
    %3359 = vmatpush1.bf16.msra.mxu0 %v998
    %3360 = vmatprep.subr.bf16.mxu0 %v1005
    %3361 = vmatpush1.bf16.msra.mxu0 %v1004
    %3362 = vmatprep.subr.bf16.mxu0 %v1011
    %3363 = vmatpush1.bf16.msra.mxu0 %v1010
    %3364 = vmatprep.subr.bf16.mxu0 %v1017
    %3365 = vmatpush1.bf16.msra.mxu0 %v1016
    %3366 = vmatprep.subr.bf16.mxu0 %v1023
    %3367 = vmatpush1.bf16.msra.mxu0 %v1022
    %3368 = vmatprep.subr.bf16.mxu0 %v1029
    %3369 = vmatpush1.bf16.msra.mxu0 %v1028
    %3370 = vmatprep.subr.bf16.mxu0 %v1035
    %3371 = vmatpush1.bf16.msra.mxu0 %v1034
    %3372 = vmatprep.subr.bf16.mxu0 %v1041
    %3373 = vmatpush1.bf16.msra.mxu0 %v1040
    %3374 = vmatprep.subr.bf16.mxu0 %v1047
    %3375 = vmatpush1.bf16.msra.mxu0 %v1046
    %3376 = vmatprep.subr.bf16.mxu0 %v1053
    %3377 = vmatpush1.bf16.msra.mxu0 %v1052
    %3378 = vmatprep.subr.bf16.mxu0 %v1059
    %3379 = vmatpush1.bf16.msra.mxu0 %v1058
    %3380 = vmatprep.subr.bf16.mxu0 %v1065
    %3381 = vmatpush1.bf16.msra.mxu0 %v1064
    %3382 = vmatprep.subr.bf16.mxu0 %v1071
    %3383 = vmatpush1.bf16.msra.mxu0 %v1070
    %3384 = vmatprep.subr.bf16.mxu0 %v1077
    %3385 = vmatpush1.bf16.msra.mxu0 %v1076
    %3386 = vmatprep.subr.bf16.mxu0 %v1083
    %3387 = vmatpush1.bf16.msra.mxu0 %v1082
    %3388 = vmatprep.mubr.bf16.mxu0 %v1356
    %3389 = vmatmul.mubr.bf16.gmra.mrb[0].mxu0 %v1355
    %v3390 = vpop.f32.mrb[0].mxu0
    %v3391 = vadd.f32 %v683, %v3390
    %v3392 = vpop.f32.mrb[0].mxu0
    %v3393 = vadd.f32 %v687, %v3392
    %v3394 = vpop.f32.mrb[0].mxu0
    %v3395 = vpop.f32.mrb[0].mxu0
    %3396 = vdwg.mxu0
    %3397 = vmatprep.subr.bf16.mxu0 %v995
    %3398 = vmatpush1.bf16.msra.mxu0 %v994
    %3399 = vmatprep.subr.bf16.mxu0 %v1001
    %3400 = vmatpush1.bf16.msra.mxu0 %v1000
    %3401 = vmatprep.subr.bf16.mxu0 %v1007
    %3402 = vmatpush1.bf16.msra.mxu0 %v1006
    %3403 = vmatprep.subr.bf16.mxu0 %v1013
    %3404 = vmatpush1.bf16.msra.mxu0 %v1012
    %3405 = vmatprep.subr.bf16.mxu0 %v1019
    %3406 = vmatpush1.bf16.msra.mxu0 %v1018
    %3407 = vmatprep.subr.bf16.mxu0 %v1025
    %3408 = vmatpush1.bf16.msra.mxu0 %v1024
    %3409 = vmatprep.subr.bf16.mxu0 %v1031
    %3410 = vmatpush1.bf16.msra.mxu0 %v1030
    %3411 = vmatprep.subr.bf16.mxu0 %v1037
    %3412 = vmatpush1.bf16.msra.mxu0 %v1036
    %3413 = vmatprep.subr.bf16.mxu0 %v1043
    %3414 = vmatpush1.bf16.msra.mxu0 %v1042
    %3415 = vmatprep.subr.bf16.mxu0 %v1049
    %3416 = vmatpush1.bf16.msra.mxu0 %v1048
    %3417 = vmatprep.subr.bf16.mxu0 %v1055
    %3418 = vmatpush1.bf16.msra.mxu0 %v1054
    %3419 = vmatprep.subr.bf16.mxu0 %v1061
    %3420 = vmatpush1.bf16.msra.mxu0 %v1060
    %3421 = vmatprep.subr.bf16.mxu0 %v1067
    %3422 = vmatpush1.bf16.msra.mxu0 %v1066
    %3423 = vmatprep.subr.bf16.mxu0 %v1073
    %3424 = vmatpush1.bf16.msra.mxu0 %v1072
    %3425 = vmatprep.subr.bf16.mxu0 %v1079
    %3426 = vmatpush1.bf16.msra.mxu0 %v1078
    %3427 = vmatprep.subr.bf16.mxu0 %v1085
    %3428 = vmatpush1.bf16.msra.mxu0 %v1084
    %3429 = vmatprep.mubr.bf16.mxu0 %v1356
    %3430 = vmatmul.mubr.bf16.gmra.mrb[0].mxu0 %v1355
    %v3431 = vpop.f32.mrb[0].mxu0
    %v3432 = vadd.f32 %v691, %v3431
    %v3433 = vpop.f32.mrb[0].mxu0
    %v3434 = vadd.f32 %v695, %v3433
    %v3435 = vpop.f32.mrb[0].mxu0
    %v3436 = vpop.f32.mrb[0].mxu0
    %3437 = vdwg.mxu0
    %v3438 = vadd.f32 %v3307, %v3350
    %v3439 = vadd.f32 %v3308, %v3352
    %v3440 = vxor.u32 %v3438, 2147483648
    %v3441 = vxor.u32 %v3439, 2147483648
    %v3442 = vmul.f32 %v3440, 1.442695
    %v3443 = vpow.pop %v3442
    %v3444 = vmul.f32 %v3441, 1.442695
    %v3445 = vpow.pop %v3444
    %v3446 = vadd.f32 %v3443, 1.0
    %v3447 = vadd.f32 %v3445, 1.0
    %v3448 = vrcp.pop %v3446
    %v3449 = vmul.f32 1.0, %v3448
    %v3450 = vrcp.pop %v3447
    %v3451 = vmul.f32 1.0, %v3450
    %v3452 = vadd.f32 %v3309, %v3391
    %v3453 = vadd.f32 %v3310, %v3393
    %v3454 = vxor.u32 %v3452, 2147483648
    %v3455 = vxor.u32 %v3453, 2147483648
    %v3456 = vmul.f32 %v3454, 1.442695
    %v3457 = vpow.pop %v3456
    %v3458 = vmul.f32 %v3455, 1.442695
    %v3459 = vpow.pop %v3458
    %v3460 = vadd.f32 %v3457, 1.0
    %v3461 = vadd.f32 %v3459, 1.0
    %v3462 = vrcp.pop %v3460
    %v3463 = vmul.f32 1.0, %v3462
    %v3464 = vrcp.pop %v3461
    %v3465 = vmul.f32 1.0, %v3464
    %v3466 = vmul.f32 %v3449, %v3432
    %v3467 = vmul.f32 %v3451, %v3434
    %v3468 = vadd.f32 %v3311, %v3466
    %v3469 = vadd.f32 %v3312, %v3467
    %v3470 = vtanh.pop %v3468
    %v3471 = vtanh.pop %v3469
    %v3472 = vsub.f32 1.0, %v3463
    %v3473 = vsub.f32 1.0, %v3465
    %v3474 = vmul.f32 %v3472, %v3470
    %v3475 = vmul.f32 %v3473, %v3471
    %v3476 = vmul.f32 %v3463, %v1353
    %v3477 = vmul.f32 %v3465, %v1354
    %v3478 = vadd.f32 %v3474, %v3476
    %v3479 = vadd.f32 %v3475, %v3477
    %vm3480 = vcmp.gt.f32.partialorder %v3314, 0.0
    %v3481 = vsel %vm3480, 1, 0
    %3482 = vset.pattern.permute.xlu0 0
    %3483 = vperm.xlu0 %3482, %v3481
    %v3484 = vpop.permute.xlu0 %3483
    %vm3485 = vcmp.eq.s32.totalorder %v3484, 1
    %v3486 = vsel %vm3485, %v3478, %v1353
    %v3487 = vsel %vm3485, %v3479, %v1354
    %v3488 = vpack.c.bf16 %v3486, %v3486
    %v3489 = vpack.c.bf16 %v3487, %v3487
    %v3490 = vpack.c.bf16 %v3302, %v3302
    %v3491 = vpack.c.bf16 %v3303, %v3303
    %3492 = vmatprep.subr.bf16.mxu0 %v2425
    %3493 = vmatpush1.bf16.msra.mxu0 %v2424
    %3494 = vmatprep.subr.bf16.mxu0 %v2433
    %3495 = vmatpush1.bf16.msra.mxu0 %v2432
    %3496 = vmatprep.subr.bf16.mxu0 %v2441
    %3497 = vmatpush1.bf16.msra.mxu0 %v2440
    %3498 = vmatprep.subr.bf16.mxu0 %v2449
    %3499 = vmatpush1.bf16.msra.mxu0 %v2448
    %3500 = vmatprep.subr.bf16.mxu0 %v2457
    %3501 = vmatpush1.bf16.msra.mxu0 %v2456
    %3502 = vmatprep.subr.bf16.mxu0 %v2465
    %3503 = vmatpush1.bf16.msra.mxu0 %v2464
    %3504 = vmatprep.subr.bf16.mxu0 %v2473
    %3505 = vmatpush1.bf16.msra.mxu0 %v2472
    %3506 = vmatprep.subr.bf16.mxu0 %v2481
    %3507 = vmatpush1.bf16.msra.mxu0 %v2480
    %3508 = vmatprep.subr.bf16.mxu0 %v2489
    %3509 = vmatpush1.bf16.msra.mxu0 %v2488
    %3510 = vmatprep.subr.bf16.mxu0 %v2497
    %3511 = vmatpush1.bf16.msra.mxu0 %v2496
    %3512 = vmatprep.subr.bf16.mxu0 %v2505
    %3513 = vmatpush1.bf16.msra.mxu0 %v2504
    %3514 = vmatprep.subr.bf16.mxu0 %v2513
    %3515 = vmatpush1.bf16.msra.mxu0 %v2512
    %3516 = vmatprep.subr.bf16.mxu0 %v2521
    %3517 = vmatpush1.bf16.msra.mxu0 %v2520
    %3518 = vmatprep.subr.bf16.mxu0 %v2529
    %3519 = vmatpush1.bf16.msra.mxu0 %v2528
    %3520 = vmatprep.subr.bf16.mxu0 %v2537
    %3521 = vmatpush1.bf16.msra.mxu0 %v2536
    %3522 = vmatprep.subr.bf16.mxu0 %v2545
    %3523 = vmatpush1.bf16.msra.mxu0 %v2544
    %3524 = vmatprep.mubr.bf16.mxu0 %v3489
    %3525 = vmatmul.mubr.bf16.gmra.mrb[0].mxu0 %v3488
    %v3526 = vpop.f32.mrb[0].mxu0
    %v3527 = vadd.f32 %v1619, %v3526
    %v3528 = vpop.f32.mrb[0].mxu0
    %v3529 = vadd.f32 %v1623, %v3528
    %v3530 = vpop.f32.mrb[0].mxu0
    %v3531 = vpop.f32.mrb[0].mxu0
    %3532 = vdwg.mxu0
    %3533 = vmatprep.subr.bf16.mxu0 %v2553
    %3534 = vmatpush1.bf16.msra.mxu0 %v2552
    %3535 = vmatprep.subr.bf16.mxu0 %v2561
    %3536 = vmatpush1.bf16.msra.mxu0 %v2560
    %3537 = vmatprep.subr.bf16.mxu0 %v2569
    %3538 = vmatpush1.bf16.msra.mxu0 %v2568
    %3539 = vmatprep.subr.bf16.mxu0 %v2577
    %3540 = vmatpush1.bf16.msra.mxu0 %v2576
    %3541 = vmatprep.subr.bf16.mxu0 %v2585
    %3542 = vmatpush1.bf16.msra.mxu0 %v2584
    %3543 = vmatprep.subr.bf16.mxu0 %v2593
    %3544 = vmatpush1.bf16.msra.mxu0 %v2592
    %3545 = vmatprep.subr.bf16.mxu0 %v2601
    %3546 = vmatpush1.bf16.msra.mxu0 %v2600
    %3547 = vmatprep.subr.bf16.mxu0 %v2609
    %3548 = vmatpush1.bf16.msra.mxu0 %v2608
    %3549 = vmatprep.subr.bf16.mxu0 %v2617
    %3550 = vmatpush1.bf16.msra.mxu0 %v2616
    %3551 = vmatprep.subr.bf16.mxu0 %v2625
    %3552 = vmatpush1.bf16.msra.mxu0 %v2624
    %3553 = vmatprep.subr.bf16.mxu0 %v2633
    %3554 = vmatpush1.bf16.msra.mxu0 %v2632
    %3555 = vmatprep.subr.bf16.mxu0 %v2641
    %3556 = vmatpush1.bf16.msra.mxu0 %v2640
    %3557 = vmatprep.subr.bf16.mxu0 %v2649
    %3558 = vmatpush1.bf16.msra.mxu0 %v2648
    %3559 = vmatprep.subr.bf16.mxu0 %v2657
    %3560 = vmatpush1.bf16.msra.mxu0 %v2656
    %3561 = vmatprep.subr.bf16.mxu0 %v2665
    %3562 = vmatpush1.bf16.msra.mxu0 %v2664
    %3563 = vmatprep.subr.bf16.mxu0 %v2673
    %3564 = vmatpush1.bf16.msra.mxu0 %v2672
    %3565 = vmatprep.mubr.bf16.mxu0 %v3491
    %3566 = vmatmul.mubr.bf16.gmra.mrb[0].mxu0 %v3490
    %v3567 = vpop.f32.mrb[0].mxu0
    %v3568 = vadd.f32 %v3527, %v3567
    %v3569 = vpop.f32.mrb[0].mxu0
    %v3570 = vadd.f32 %v3529, %v3569
    %v3571 = vpop.f32.mrb[0].mxu0
    %v3572 = vpop.f32.mrb[0].mxu0
    %3573 = vdwg.mxu0
    %3574 = vmatprep.subr.bf16.mxu0 %v2427
    %3575 = vmatpush1.bf16.msra.mxu0 %v2426
    %3576 = vmatprep.subr.bf16.mxu0 %v2435
    %3577 = vmatpush1.bf16.msra.mxu0 %v2434
    %3578 = vmatprep.subr.bf16.mxu0 %v2443
    %3579 = vmatpush1.bf16.msra.mxu0 %v2442
    %3580 = vmatprep.subr.bf16.mxu0 %v2451
    %3581 = vmatpush1.bf16.msra.mxu0 %v2450
    %3582 = vmatprep.subr.bf16.mxu0 %v2459
    %3583 = vmatpush1.bf16.msra.mxu0 %v2458
    %3584 = vmatprep.subr.bf16.mxu0 %v2467
    %3585 = vmatpush1.bf16.msra.mxu0 %v2466
    %3586 = vmatprep.subr.bf16.mxu0 %v2475
    %3587 = vmatpush1.bf16.msra.mxu0 %v2474
    %3588 = vmatprep.subr.bf16.mxu0 %v2483
    %3589 = vmatpush1.bf16.msra.mxu0 %v2482
    %3590 = vmatprep.subr.bf16.mxu0 %v2491
    %3591 = vmatpush1.bf16.msra.mxu0 %v2490
    %3592 = vmatprep.subr.bf16.mxu0 %v2499
    %3593 = vmatpush1.bf16.msra.mxu0 %v2498
    %3594 = vmatprep.subr.bf16.mxu0 %v2507
    %3595 = vmatpush1.bf16.msra.mxu0 %v2506
    %3596 = vmatprep.subr.bf16.mxu0 %v2515
    %3597 = vmatpush1.bf16.msra.mxu0 %v2514
    %3598 = vmatprep.subr.bf16.mxu0 %v2523
    %3599 = vmatpush1.bf16.msra.mxu0 %v2522
    %3600 = vmatprep.subr.bf16.mxu0 %v2531
    %3601 = vmatpush1.bf16.msra.mxu0 %v2530
    %3602 = vmatprep.subr.bf16.mxu0 %v2539
    %3603 = vmatpush1.bf16.msra.mxu0 %v2538
    %3604 = vmatprep.subr.bf16.mxu0 %v2547
    %3605 = vmatpush1.bf16.msra.mxu0 %v2546
    %3606 = vmatprep.mubr.bf16.mxu0 %v3489
    %3607 = vmatmul.mubr.bf16.gmra.mrb[0].mxu0 %v3488
    %v3608 = vpop.f32.mrb[0].mxu0
    %v3609 = vadd.f32 %v1627, %v3608
    %v3610 = vpop.f32.mrb[0].mxu0
    %v3611 = vadd.f32 %v1631, %v3610
    %v3612 = vpop.f32.mrb[0].mxu0
    %v3613 = vpop.f32.mrb[0].mxu0
    %3614 = vdwg.mxu0
    %3615 = vmatprep.subr.bf16.mxu0 %v2555
    %3616 = vmatpush1.bf16.msra.mxu0 %v2554
    %3617 = vmatprep.subr.bf16.mxu0 %v2563
    %3618 = vmatpush1.bf16.msra.mxu0 %v2562
    %3619 = vmatprep.subr.bf16.mxu0 %v2571
    %3620 = vmatpush1.bf16.msra.mxu0 %v2570
    %3621 = vmatprep.subr.bf16.mxu0 %v2579
    %3622 = vmatpush1.bf16.msra.mxu0 %v2578
    %3623 = vmatprep.subr.bf16.mxu0 %v2587
    %3624 = vmatpush1.bf16.msra.mxu0 %v2586
    %3625 = vmatprep.subr.bf16.mxu0 %v2595
    %3626 = vmatpush1.bf16.msra.mxu0 %v2594
    %3627 = vmatprep.subr.bf16.mxu0 %v2603
    %3628 = vmatpush1.bf16.msra.mxu0 %v2602
    %3629 = vmatprep.subr.bf16.mxu0 %v2611
    %3630 = vmatpush1.bf16.msra.mxu0 %v2610
    %3631 = vmatprep.subr.bf16.mxu0 %v2619
    %3632 = vmatpush1.bf16.msra.mxu0 %v2618
    %3633 = vmatprep.subr.bf16.mxu0 %v2627
    %3634 = vmatpush1.bf16.msra.mxu0 %v2626
    %3635 = vmatprep.subr.bf16.mxu0 %v2635
    %3636 = vmatpush1.bf16.msra.mxu0 %v2634
    %3637 = vmatprep.subr.bf16.mxu0 %v2643
    %3638 = vmatpush1.bf16.msra.mxu0 %v2642
    %3639 = vmatprep.subr.bf16.mxu0 %v2651
    %3640 = vmatpush1.bf16.msra.mxu0 %v2650
    %3641 = vmatprep.subr.bf16.mxu0 %v2659
    %3642 = vmatpush1.bf16.msra.mxu0 %v2658
    %3643 = vmatprep.subr.bf16.mxu0 %v2667
    %3644 = vmatpush1.bf16.msra.mxu0 %v2666
    %3645 = vmatprep.subr.bf16.mxu0 %v2675
    %3646 = vmatpush1.bf16.msra.mxu0 %v2674
    %3647 = vmatprep.mubr.bf16.mxu0 %v3491
    %3648 = vmatmul.mubr.bf16.gmra.mrb[0].mxu0 %v3490
    %v3649 = vpop.f32.mrb[0].mxu0
    %v3650 = vadd.f32 %v3609, %v3649
    %v3651 = vpop.f32.mrb[0].mxu0
    %v3652 = vadd.f32 %v3611, %v3651
    %v3653 = vpop.f32.mrb[0].mxu0
    %v3654 = vpop.f32.mrb[0].mxu0
    %3655 = vdwg.mxu0
    %3656 = vmatprep.subr.bf16.mxu0 %v2429
    %3657 = vmatpush1.bf16.msra.mxu0 %v2428
    %3658 = vmatprep.subr.bf16.mxu0 %v2437
    %3659 = vmatpush1.bf16.msra.mxu0 %v2436
    %3660 = vmatprep.subr.bf16.mxu0 %v2445
    %3661 = vmatpush1.bf16.msra.mxu0 %v2444
    %3662 = vmatprep.subr.bf16.mxu0 %v2453
    %3663 = vmatpush1.bf16.msra.mxu0 %v2452
    %3664 = vmatprep.subr.bf16.mxu0 %v2461
    %3665 = vmatpush1.bf16.msra.mxu0 %v2460
    %3666 = vmatprep.subr.bf16.mxu0 %v2469
    %3667 = vmatpush1.bf16.msra.mxu0 %v2468
    %3668 = vmatprep.subr.bf16.mxu0 %v2477
    %3669 = vmatpush1.bf16.msra.mxu0 %v2476
    %3670 = vmatprep.subr.bf16.mxu0 %v2485
    %3671 = vmatpush1.bf16.msra.mxu0 %v2484
    %3672 = vmatprep.subr.bf16.mxu0 %v2493
    %3673 = vmatpush1.bf16.msra.mxu0 %v2492
    %3674 = vmatprep.subr.bf16.mxu0 %v2501
    %3675 = vmatpush1.bf16.msra.mxu0 %v2500
    %3676 = vmatprep.subr.bf16.mxu0 %v2509
    %3677 = vmatpush1.bf16.msra.mxu0 %v2508
    %3678 = vmatprep.subr.bf16.mxu0 %v2517
    %3679 = vmatpush1.bf16.msra.mxu0 %v2516
    %3680 = vmatprep.subr.bf16.mxu0 %v2525
    %3681 = vmatpush1.bf16.msra.mxu0 %v2524
    %3682 = vmatprep.subr.bf16.mxu0 %v2533
    %3683 = vmatpush1.bf16.msra.mxu0 %v2532
    %3684 = vmatprep.subr.bf16.mxu0 %v2541
    %3685 = vmatpush1.bf16.msra.mxu0 %v2540
    %3686 = vmatprep.subr.bf16.mxu0 %v2549
    %3687 = vmatpush1.bf16.msra.mxu0 %v2548
    %3688 = vmatprep.mubr.bf16.mxu0 %v3489
    %3689 = vmatmul.mubr.bf16.gmra.mrb[0].mxu0 %v3488
    %v3690 = vpop.f32.mrb[0].mxu0
    %v3691 = vadd.f32 %v1635, %v3690
    %v3692 = vpop.f32.mrb[0].mxu0
    %v3693 = vadd.f32 %v1639, %v3692
    %v3694 = vpop.f32.mrb[0].mxu0
    %v3695 = vpop.f32.mrb[0].mxu0
    %3696 = vdwg.mxu0
    %3697 = vmatprep.subr.bf16.mxu0 %v2557
    %3698 = vmatpush1.bf16.msra.mxu0 %v2556
    %3699 = vmatprep.subr.bf16.mxu0 %v2565
    %3700 = vmatpush1.bf16.msra.mxu0 %v2564
    %3701 = vmatprep.subr.bf16.mxu0 %v2573
    %3702 = vmatpush1.bf16.msra.mxu0 %v2572
    %3703 = vmatprep.subr.bf16.mxu0 %v2581
    %3704 = vmatpush1.bf16.msra.mxu0 %v2580
    %3705 = vmatprep.subr.bf16.mxu0 %v2589
    %3706 = vmatpush1.bf16.msra.mxu0 %v2588
    %3707 = vmatprep.subr.bf16.mxu0 %v2597
    %3708 = vmatpush1.bf16.msra.mxu0 %v2596
    %3709 = vmatprep.subr.bf16.mxu0 %v2605
    %3710 = vmatpush1.bf16.msra.mxu0 %v2604
    %3711 = vmatprep.subr.bf16.mxu0 %v2613
    %3712 = vmatpush1.bf16.msra.mxu0 %v2612
    %3713 = vmatprep.subr.bf16.mxu0 %v2621
    %3714 = vmatpush1.bf16.msra.mxu0 %v2620
    %3715 = vmatprep.subr.bf16.mxu0 %v2629
    %3716 = vmatpush1.bf16.msra.mxu0 %v2628
    %3717 = vmatprep.subr.bf16.mxu0 %v2637
    %3718 = vmatpush1.bf16.msra.mxu0 %v2636
    %3719 = vmatprep.subr.bf16.mxu0 %v2645
    %3720 = vmatpush1.bf16.msra.mxu0 %v2644
    %3721 = vmatprep.subr.bf16.mxu0 %v2653
    %3722 = vmatpush1.bf16.msra.mxu0 %v2652
    %3723 = vmatprep.subr.bf16.mxu0 %v2661
    %3724 = vmatpush1.bf16.msra.mxu0 %v2660
    %3725 = vmatprep.subr.bf16.mxu0 %v2669
    %3726 = vmatpush1.bf16.msra.mxu0 %v2668
    %3727 = vmatprep.subr.bf16.mxu0 %v2677
    %3728 = vmatpush1.bf16.msra.mxu0 %v2676
    %3729 = vmatprep.mubr.bf16.mxu0 %v3491
    %3730 = vmatmul.mubr.bf16.gmra.mrb[0].mxu0 %v3490
    %v3731 = vpop.f32.mrb[0].mxu0
    %v3732 = vadd.f32 %v3691, %v3731
    %v3733 = vpop.f32.mrb[0].mxu0
    %v3734 = vadd.f32 %v3693, %v3733
    %v3735 = vpop.f32.mrb[0].mxu0
    %v3736 = vpop.f32.mrb[0].mxu0
    %3737 = vdwg.mxu0
    %3738 = vmatprep.subr.bf16.mxu0 %v2431
    %3739 = vmatpush1.bf16.msra.mxu0 %v2430
    %3740 = vmatprep.subr.bf16.mxu0 %v2439
    %3741 = vmatpush1.bf16.msra.mxu0 %v2438
    %3742 = vmatprep.subr.bf16.mxu0 %v2447
    %3743 = vmatpush1.bf16.msra.mxu0 %v2446
    %3744 = vmatprep.subr.bf16.mxu0 %v2455
    %3745 = vmatpush1.bf16.msra.mxu0 %v2454
    %3746 = vmatprep.subr.bf16.mxu0 %v2463
    %3747 = vmatpush1.bf16.msra.mxu0 %v2462
    %3748 = vmatprep.subr.bf16.mxu0 %v2471
    %3749 = vmatpush1.bf16.msra.mxu0 %v2470
    %3750 = vmatprep.subr.bf16.mxu0 %v2479
    %3751 = vmatpush1.bf16.msra.mxu0 %v2478
    %3752 = vmatprep.subr.bf16.mxu0 %v2487
    %3753 = vmatpush1.bf16.msra.mxu0 %v2486
    %3754 = vmatprep.subr.bf16.mxu0 %v2495
    %3755 = vmatpush1.bf16.msra.mxu0 %v2494
    %3756 = vmatprep.subr.bf16.mxu0 %v2503
    %3757 = vmatpush1.bf16.msra.mxu0 %v2502
    %3758 = vmatprep.subr.bf16.mxu0 %v2511
    %3759 = vmatpush1.bf16.msra.mxu0 %v2510
    %3760 = vmatprep.subr.bf16.mxu0 %v2519
    %3761 = vmatpush1.bf16.msra.mxu0 %v2518
    %3762 = vmatprep.subr.bf16.mxu0 %v2527
    %3763 = vmatpush1.bf16.msra.mxu0 %v2526
    %3764 = vmatprep.subr.bf16.mxu0 %v2535
    %3765 = vmatpush1.bf16.msra.mxu0 %v2534
    %3766 = vmatprep.subr.bf16.mxu0 %v2543
    %3767 = vmatpush1.bf16.msra.mxu0 %v2542
    %3768 = vmatprep.subr.bf16.mxu0 %v2551
    %3769 = vmatpush1.bf16.msra.mxu0 %v2550
    %3770 = vmatprep.mubr.bf16.mxu0 %v3489
    %3771 = vmatmul.mubr.bf16.gmra.mrb[0].mxu0 %v3488
    %v3772 = vpop.f32.mrb[0].mxu0
    %v3773 = vadd.f32 %v1643, %v3772
    %v3774 = vpop.f32.mrb[0].mxu0
    %v3775 = vadd.f32 %v1647, %v3774
    %v3776 = vpop.f32.mrb[0].mxu0
    %v3777 = vpop.f32.mrb[0].mxu0
    %3778 = vdwg.mxu0
    %3779 = vmatprep.subr.bf16.mxu0 %v2559
    %3780 = vmatpush1.bf16.msra.mxu0 %v2558
    %3781 = vmatprep.subr.bf16.mxu0 %v2567
    %3782 = vmatpush1.bf16.msra.mxu0 %v2566
    %3783 = vmatprep.subr.bf16.mxu0 %v2575
    %3784 = vmatpush1.bf16.msra.mxu0 %v2574
    %3785 = vmatprep.subr.bf16.mxu0 %v2583
    %3786 = vmatpush1.bf16.msra.mxu0 %v2582
    %3787 = vmatprep.subr.bf16.mxu0 %v2591
    %3788 = vmatpush1.bf16.msra.mxu0 %v2590
    %3789 = vmatprep.subr.bf16.mxu0 %v2599
    %3790 = vmatpush1.bf16.msra.mxu0 %v2598
    %3791 = vmatprep.subr.bf16.mxu0 %v2607
    %3792 = vmatpush1.bf16.msra.mxu0 %v2606
    %3793 = vmatprep.subr.bf16.mxu0 %v2615
    %3794 = vmatpush1.bf16.msra.mxu0 %v2614
    %3795 = vmatprep.subr.bf16.mxu0 %v2623
    %3796 = vmatpush1.bf16.msra.mxu0 %v2622
    %3797 = vmatprep.subr.bf16.mxu0 %v2631
    %3798 = vmatpush1.bf16.msra.mxu0 %v2630
    %3799 = vmatprep.subr.bf16.mxu0 %v2639
    %3800 = vmatpush1.bf16.msra.mxu0 %v2638
    %3801 = vmatprep.subr.bf16.mxu0 %v2647
    %3802 = vmatpush1.bf16.msra.mxu0 %v2646
    %3803 = vmatprep.subr.bf16.mxu0 %v2655
    %3804 = vmatpush1.bf16.msra.mxu0 %v2654
    %3805 = vmatprep.subr.bf16.mxu0 %v2663
    %3806 = vmatpush1.bf16.msra.mxu0 %v2662
    %3807 = vmatprep.subr.bf16.mxu0 %v2671
    %3808 = vmatpush1.bf16.msra.mxu0 %v2670
    %3809 = vmatprep.subr.bf16.mxu0 %v2679
    %3810 = vmatpush1.bf16.msra.mxu0 %v2678
    %3811 = vmatprep.mubr.bf16.mxu0 %v3491
    %3812 = vmatmul.mubr.bf16.gmra.mrb[0].mxu0 %v3490
    %v3813 = vpop.f32.mrb[0].mxu0
    %v3814 = vadd.f32 %v3773, %v3813
    %v3815 = vpop.f32.mrb[0].mxu0
    %v3816 = vadd.f32 %v3775, %v3815
    %v3817 = vpop.f32.mrb[0].mxu0
    %v3818 = vpop.f32.mrb[0].mxu0
    %3819 = vdwg.mxu0
    %v3820 = vxor.u32 %v3568, 2147483648
    %v3821 = vxor.u32 %v3570, 2147483648
    %v3822 = vmul.f32 %v3820, 1.442695
    %v3823 = vpow.pop %v3822
    %v3824 = vmul.f32 %v3821, 1.442695
    %v3825 = vpow.pop %v3824
    %v3826 = vadd.f32 %v3823, 1.0
    %v3827 = vadd.f32 %v3825, 1.0
    %v3828 = vrcp.pop %v3826
    %v3829 = vmul.f32 1.0, %v3828
    %v3830 = vrcp.pop %v3827
    %v3831 = vmul.f32 1.0, %v3830
    %v3832 = vxor.u32 %v3650, 2147483648
    %v3833 = vxor.u32 %v3652, 2147483648
    %v3834 = vmul.f32 %v3832, 1.442695
    %v3835 = vpow.pop %v3834
    %v3836 = vmul.f32 %v3833, 1.442695
    %v3837 = vpow.pop %v3836
    %v3838 = vadd.f32 %v3835, 1.0
    %v3839 = vadd.f32 %v3837, 1.0
    %v3840 = vrcp.pop %v3838
    %v3841 = vmul.f32 1.0, %v3840
    %v3842 = vrcp.pop %v3839
    %v3843 = vmul.f32 1.0, %v3842
    %v3844 = vmul.f32 %v3829, %v3814
    %v3845 = vmul.f32 %v3831, %v3816
    %v3846 = vadd.f32 %v3732, %v3844
    %v3847 = vadd.f32 %v3734, %v3845
    %v3848 = vtanh.pop %v3846
    %v3849 = vtanh.pop %v3847
    %v3850 = vsub.f32 1.0, %v3841
    %v3851 = vsub.f32 1.0, %v3843
    %v3852 = vmul.f32 %v3850, %v3848
    %v3853 = vmul.f32 %v3851, %v3849
    %v3854 = vmul.f32 %v3841, %v3302
    %v3855 = vmul.f32 %v3843, %v3303
    %v3856 = vadd.f32 %v3852, %v3854
    %v3857 = vadd.f32 %v3853, %v3855
    %v3858 = vsel %vm3485, %v3856, %v3302
    %v3859 = vsel %vm3485, %v3857, %v3303
    %s3860 = smul.u32 2, 6
    %s3861 = smul.addr %s3860, 8
    %s3862 = scalar_lea.vmem [#allocation2], %s3861
    %v3863 = vld [vmem:[%s3862] sm:$0xff]
    %v3864 = vld [vmem:[%s3862 + $0x8] sm:$0xff]
    %v3865 = vld [vmem:[%s3862 + $0x10] sm:$0xff]
    %v3866 = vld [vmem:[%s3862 + $0x18] sm:$0xff]
    %v3867 = vld [vmem:[%s3862 + $0x20] sm:$0xff]
    %v3868 = vld [vmem:[%s3862 + $0x28] sm:$0xff]
    %s3869 = scalar_lea.vmem %s1, 16
    %v3870 = vld [vmem:[%s3869] sm:$0xff]
    %3871 = vmatprep.subr.bf16.mxu0 %v991
    %3872 = vmatpush1.bf16.msra.mxu0 %v990
    %3873 = vmatprep.subr.bf16.mxu0 %v997
    %3874 = vmatpush1.bf16.msra.mxu0 %v996
    %3875 = vmatprep.subr.bf16.mxu0 %v1003
    %3876 = vmatpush1.bf16.msra.mxu0 %v1002
    %3877 = vmatprep.subr.bf16.mxu0 %v1009
    %3878 = vmatpush1.bf16.msra.mxu0 %v1008
    %3879 = vmatprep.subr.bf16.mxu0 %v1015
    %3880 = vmatpush1.bf16.msra.mxu0 %v1014
    %3881 = vmatprep.subr.bf16.mxu0 %v1021
    %3882 = vmatpush1.bf16.msra.mxu0 %v1020
    %3883 = vmatprep.subr.bf16.mxu0 %v1027
    %3884 = vmatpush1.bf16.msra.mxu0 %v1026
    %3885 = vmatprep.subr.bf16.mxu0 %v1033
    %3886 = vmatpush1.bf16.msra.mxu0 %v1032
    %3887 = vmatprep.subr.bf16.mxu0 %v1039
    %3888 = vmatpush1.bf16.msra.mxu0 %v1038
    %3889 = vmatprep.subr.bf16.mxu0 %v1045
    %3890 = vmatpush1.bf16.msra.mxu0 %v1044
    %3891 = vmatprep.subr.bf16.mxu0 %v1051
    %3892 = vmatpush1.bf16.msra.mxu0 %v1050
    %3893 = vmatprep.subr.bf16.mxu0 %v1057
    %3894 = vmatpush1.bf16.msra.mxu0 %v1056
    %3895 = vmatprep.subr.bf16.mxu0 %v1063
    %3896 = vmatpush1.bf16.msra.mxu0 %v1062
    %3897 = vmatprep.subr.bf16.mxu0 %v1069
    %3898 = vmatpush1.bf16.msra.mxu0 %v1068
    %3899 = vmatprep.subr.bf16.mxu0 %v1075
    %3900 = vmatpush1.bf16.msra.mxu0 %v1074
    %3901 = vmatprep.subr.bf16.mxu0 %v1081
    %3902 = vmatpush1.bf16.msra.mxu0 %v1080
    %3903 = vmatprep.mubr.bf16.mxu0 %v3489
    %3904 = vmatmul.mubr.bf16.gmra.mrb[0].mxu0 %v3488
    %v3905 = vpop.f32.mrb[0].mxu0
    %v3906 = vadd.f32 %v675, %v3905
    %v3907 = vpop.f32.mrb[0].mxu0
    %v3908 = vadd.f32 %v679, %v3907
    %v3909 = vpop.f32.mrb[0].mxu0
    %v3910 = vpop.f32.mrb[0].mxu0
    %3911 = vdwg.mxu0
    %3912 = vmatprep.subr.bf16.mxu0 %v993
    %3913 = vmatpush1.bf16.msra.mxu0 %v992
    %3914 = vmatprep.subr.bf16.mxu0 %v999
    %3915 = vmatpush1.bf16.msra.mxu0 %v998
    %3916 = vmatprep.subr.bf16.mxu0 %v1005
    %3917 = vmatpush1.bf16.msra.mxu0 %v1004
    %3918 = vmatprep.subr.bf16.mxu0 %v1011
    %3919 = vmatpush1.bf16.msra.mxu0 %v1010
    %3920 = vmatprep.subr.bf16.mxu0 %v1017
    %3921 = vmatpush1.bf16.msra.mxu0 %v1016
    %3922 = vmatprep.subr.bf16.mxu0 %v1023
    %3923 = vmatpush1.bf16.msra.mxu0 %v1022
    %3924 = vmatprep.subr.bf16.mxu0 %v1029
    %3925 = vmatpush1.bf16.msra.mxu0 %v1028
    %3926 = vmatprep.subr.bf16.mxu0 %v1035
    %3927 = vmatpush1.bf16.msra.mxu0 %v1034
    %3928 = vmatprep.subr.bf16.mxu0 %v1041
    %3929 = vmatpush1.bf16.msra.mxu0 %v1040
    %3930 = vmatprep.subr.bf16.mxu0 %v1047
    %3931 = vmatpush1.bf16.msra.mxu0 %v1046
    %3932 = vmatprep.subr.bf16.mxu0 %v1053
    %3933 = vmatpush1.bf16.msra.mxu0 %v1052
    %3934 = vmatprep.subr.bf16.mxu0 %v1059
    %3935 = vmatpush1.bf16.msra.mxu0 %v1058
    %3936 = vmatprep.subr.bf16.mxu0 %v1065
    %3937 = vmatpush1.bf16.msra.mxu0 %v1064
    %3938 = vmatprep.subr.bf16.mxu0 %v1071
    %3939 = vmatpush1.bf16.msra.mxu0 %v1070
    %3940 = vmatprep.subr.bf16.mxu0 %v1077
    %3941 = vmatpush1.bf16.msra.mxu0 %v1076
    %3942 = vmatprep.subr.bf16.mxu0 %v1083
    %3943 = vmatpush1.bf16.msra.mxu0 %v1082
    %3944 = vmatprep.mubr.bf16.mxu0 %v3489
    %3945 = vmatmul.mubr.bf16.gmra.mrb[0].mxu0 %v3488
    %v3946 = vpop.f32.mrb[0].mxu0
    %v3947 = vadd.f32 %v683, %v3946
    %v3948 = vpop.f32.mrb[0].mxu0
    %v3949 = vadd.f32 %v687, %v3948
    %v3950 = vpop.f32.mrb[0].mxu0
    %v3951 = vpop.f32.mrb[0].mxu0
    %3952 = vdwg.mxu0
    %3953 = vmatprep.subr.bf16.mxu0 %v995
    %3954 = vmatpush1.bf16.msra.mxu0 %v994
    %3955 = vmatprep.subr.bf16.mxu0 %v1001
    %3956 = vmatpush1.bf16.msra.mxu0 %v1000
    %3957 = vmatprep.subr.bf16.mxu0 %v1007
    %3958 = vmatpush1.bf16.msra.mxu0 %v1006
    %3959 = vmatprep.subr.bf16.mxu0 %v1013
    %3960 = vmatpush1.bf16.msra.mxu0 %v1012
    %3961 = vmatprep.subr.bf16.mxu0 %v1019
    %3962 = vmatpush1.bf16.msra.mxu0 %v1018
    %3963 = vmatprep.subr.bf16.mxu0 %v1025
    %3964 = vmatpush1.bf16.msra.mxu0 %v1024
    %3965 = vmatprep.subr.bf16.mxu0 %v1031
    %3966 = vmatpush1.bf16.msra.mxu0 %v1030
    %3967 = vmatprep.subr.bf16.mxu0 %v1037
    %3968 = vmatpush1.bf16.msra.mxu0 %v1036
    %3969 = vmatprep.subr.bf16.mxu0 %v1043
    %3970 = vmatpush1.bf16.msra.mxu0 %v1042
    %3971 = vmatprep.subr.bf16.mxu0 %v1049
    %3972 = vmatpush1.bf16.msra.mxu0 %v1048
    %3973 = vmatprep.subr.bf16.mxu0 %v1055
    %3974 = vmatpush1.bf16.msra.mxu0 %v1054
    %3975 = vmatprep.subr.bf16.mxu0 %v1061
    %3976 = vmatpush1.bf16.msra.mxu0 %v1060
    %3977 = vmatprep.subr.bf16.mxu0 %v1067
    %3978 = vmatpush1.bf16.msra.mxu0 %v1066
    %3979 = vmatprep.subr.bf16.mxu0 %v1073
    %3980 = vmatpush1.bf16.msra.mxu0 %v1072
    %3981 = vmatprep.subr.bf16.mxu0 %v1079
    %3982 = vmatpush1.bf16.msra.mxu0 %v1078
    %3983 = vmatprep.subr.bf16.mxu0 %v1085
    %3984 = vmatpush1.bf16.msra.mxu0 %v1084
    %3985 = vmatprep.mubr.bf16.mxu0 %v3489
    %3986 = vmatmul.mubr.bf16.gmra.mrb[0].mxu0 %v3488
    %v3987 = vpop.f32.mrb[0].mxu0
    %v3988 = vadd.f32 %v691, %v3987
    %v3989 = vpop.f32.mrb[0].mxu0
    %v3990 = vadd.f32 %v695, %v3989
    %v3991 = vpop.f32.mrb[0].mxu0
    %v3992 = vpop.f32.mrb[0].mxu0
    %3993 = vdwg.mxu0
    %v3994 = vadd.f32 %v3863, %v3906
    %v3995 = vadd.f32 %v3864, %v3908
    %v3996 = vxor.u32 %v3994, 2147483648
    %v3997 = vxor.u32 %v3995, 2147483648
    %v3998 = vmul.f32 %v3996, 1.442695
    %v3999 = vpow.pop %v3998
    %v4000 = vmul.f32 %v3997, 1.442695
    %v4001 = vpow.pop %v4000
    %v4002 = vadd.f32 %v3999, 1.0
    %v4003 = vadd.f32 %v4001, 1.0
    %v4004 = vrcp.pop %v4002
    %v4005 = vmul.f32 1.0, %v4004
    %v4006 = vrcp.pop %v4003
    %v4007 = vmul.f32 1.0, %v4006
    %v4008 = vadd.f32 %v3865, %v3947
    %v4009 = vadd.f32 %v3866, %v3949
    %v4010 = vxor.u32 %v4008, 2147483648
    %v4011 = vxor.u32 %v4009, 2147483648
    %v4012 = vmul.f32 %v4010, 1.442695
    %v4013 = vpow.pop %v4012
    %v4014 = vmul.f32 %v4011, 1.442695
    %v4015 = vpow.pop %v4014
    %v4016 = vadd.f32 %v4013, 1.0
    %v4017 = vadd.f32 %v4015, 1.0
    %v4018 = vrcp.pop %v4016
    %v4019 = vmul.f32 1.0, %v4018
    %v4020 = vrcp.pop %v4017
    %v4021 = vmul.f32 1.0, %v4020
    %v4022 = vmul.f32 %v4005, %v3988
    %v4023 = vmul.f32 %v4007, %v3990
    %v4024 = vadd.f32 %v3867, %v4022
    %v4025 = vadd.f32 %v3868, %v4023
    %v4026 = vtanh.pop %v4024
    %v4027 = vtanh.pop %v4025
    %v4028 = vsub.f32 1.0, %v4019
    %v4029 = vsub.f32 1.0, %v4021
    %v4030 = vmul.f32 %v4028, %v4026
    %v4031 = vmul.f32 %v4029, %v4027
    %v4032 = vmul.f32 %v4019, %v3486
    %v4033 = vmul.f32 %v4021, %v3487
    %v4034 = vadd.f32 %v4030, %v4032
    %v4035 = vadd.f32 %v4031, %v4033
    %vm4036 = vcmp.gt.f32.partialorder %v3870, 0.0
    %v4037 = vsel %vm4036, 1, 0
    %4038 = vset.pattern.permute.xlu0 0
    %4039 = vperm.xlu0 %4038, %v4037
    %v4040 = vpop.permute.xlu0 %4039
    %vm4041 = vcmp.eq.s32.totalorder %v4040, 1
    %v4042 = vsel %vm4041, %v4034, %v3486
    %v4043 = vsel %vm4041, %v4035, %v3487
    %v4044 = vpack.c.bf16 %v4042, %v4042
    %v4045 = vpack.c.bf16 %v4043, %v4043
    %v4046 = vpack.c.bf16 %v3858, %v3858
    %v4047 = vpack.c.bf16 %v3859, %v3859
    %4048 = vmatprep.subr.bf16.mxu0 %v2425
    %4049 = vmatpush1.bf16.msra.mxu0 %v2424
    %4050 = vmatprep.subr.bf16.mxu0 %v2433
    %4051 = vmatpush1.bf16.msra.mxu0 %v2432
    %4052 = vmatprep.subr.bf16.mxu0 %v2441
    %4053 = vmatpush1.bf16.msra.mxu0 %v2440
    %4054 = vmatprep.subr.bf16.mxu0 %v2449
    %4055 = vmatpush1.bf16.msra.mxu0 %v2448
    %4056 = vmatprep.subr.bf16.mxu0 %v2457
    %4057 = vmatpush1.bf16.msra.mxu0 %v2456
    %4058 = vmatprep.subr.bf16.mxu0 %v2465
    %4059 = vmatpush1.bf16.msra.mxu0 %v2464
    %4060 = vmatprep.subr.bf16.mxu0 %v2473
    %4061 = vmatpush1.bf16.msra.mxu0 %v2472
    %4062 = vmatprep.subr.bf16.mxu0 %v2481
    %4063 = vmatpush1.bf16.msra.mxu0 %v2480
    %4064 = vmatprep.subr.bf16.mxu0 %v2489
    %4065 = vmatpush1.bf16.msra.mxu0 %v2488
    %4066 = vmatprep.subr.bf16.mxu0 %v2497
    %4067 = vmatpush1.bf16.msra.mxu0 %v2496
    %4068 = vmatprep.subr.bf16.mxu0 %v2505
    %4069 = vmatpush1.bf16.msra.mxu0 %v2504
    %4070 = vmatprep.subr.bf16.mxu0 %v2513
    %4071 = vmatpush1.bf16.msra.mxu0 %v2512
    %4072 = vmatprep.subr.bf16.mxu0 %v2521
    %4073 = vmatpush1.bf16.msra.mxu0 %v2520
    %4074 = vmatprep.subr.bf16.mxu0 %v2529
    %4075 = vmatpush1.bf16.msra.mxu0 %v2528
    %4076 = vmatprep.subr.bf16.mxu0 %v2537
    %4077 = vmatpush1.bf16.msra.mxu0 %v2536
    %4078 = vmatprep.subr.bf16.mxu0 %v2545
    %4079 = vmatpush1.bf16.msra.mxu0 %v2544
    %4080 = vmatprep.mubr.bf16.mxu0 %v4045
    %4081 = vmatmul.mubr.bf16.gmra.mrb[0].mxu0 %v4044
    %v4082 = vpop.f32.mrb[0].mxu0
    %v4083 = vadd.f32 %v1619, %v4082
    %v4084 = vpop.f32.mrb[0].mxu0
    %v4085 = vadd.f32 %v1623, %v4084
    %v4086 = vpop.f32.mrb[0].mxu0
    %v4087 = vpop.f32.mrb[0].mxu0
    %4088 = vdwg.mxu0
    %4089 = vmatprep.subr.bf16.mxu0 %v2553
    %4090 = vmatpush1.bf16.msra.mxu0 %v2552
    %4091 = vmatprep.subr.bf16.mxu0 %v2561
    %4092 = vmatpush1.bf16.msra.mxu0 %v2560
    %4093 = vmatprep.subr.bf16.mxu0 %v2569
    %4094 = vmatpush1.bf16.msra.mxu0 %v2568
    %4095 = vmatprep.subr.bf16.mxu0 %v2577
    %4096 = vmatpush1.bf16.msra.mxu0 %v2576
    %4097 = vmatprep.subr.bf16.mxu0 %v2585
    %4098 = vmatpush1.bf16.msra.mxu0 %v2584
    %4099 = vmatprep.subr.bf16.mxu0 %v2593
    %4100 = vmatpush1.bf16.msra.mxu0 %v2592
    %4101 = vmatprep.subr.bf16.mxu0 %v2601
    %4102 = vmatpush1.bf16.msra.mxu0 %v2600
    %4103 = vmatprep.subr.bf16.mxu0 %v2609
    %4104 = vmatpush1.bf16.msra.mxu0 %v2608
    %4105 = vmatprep.subr.bf16.mxu0 %v2617
    %4106 = vmatpush1.bf16.msra.mxu0 %v2616
    %4107 = vmatprep.subr.bf16.mxu0 %v2625
    %4108 = vmatpush1.bf16.msra.mxu0 %v2624
    %4109 = vmatprep.subr.bf16.mxu0 %v2633
    %4110 = vmatpush1.bf16.msra.mxu0 %v2632
    %4111 = vmatprep.subr.bf16.mxu0 %v2641
    %4112 = vmatpush1.bf16.msra.mxu0 %v2640
    %4113 = vmatprep.subr.bf16.mxu0 %v2649
    %4114 = vmatpush1.bf16.msra.mxu0 %v2648
    %4115 = vmatprep.subr.bf16.mxu0 %v2657
    %4116 = vmatpush1.bf16.msra.mxu0 %v2656
    %4117 = vmatprep.subr.bf16.mxu0 %v2665
    %4118 = vmatpush1.bf16.msra.mxu0 %v2664
    %4119 = vmatprep.subr.bf16.mxu0 %v2673
    %4120 = vmatpush1.bf16.msra.mxu0 %v2672
    %4121 = vmatprep.mubr.bf16.mxu0 %v4047
    %4122 = vmatmul.mubr.bf16.gmra.mrb[0].mxu0 %v4046
    %v4123 = vpop.f32.mrb[0].mxu0
    %v4124 = vadd.f32 %v4083, %v4123
    %v4125 = vpop.f32.mrb[0].mxu0
    %v4126 = vadd.f32 %v4085, %v4125
    %v4127 = vpop.f32.mrb[0].mxu0
    %v4128 = vpop.f32.mrb[0].mxu0
    %4129 = vdwg.mxu0
    %4130 = vmatprep.subr.bf16.mxu0 %v2427
    %4131 = vmatpush1.bf16.msra.mxu0 %v2426
    %4132 = vmatprep.subr.bf16.mxu0 %v2435
    %4133 = vmatpush1.bf16.msra.mxu0 %v2434
    %4134 = vmatprep.subr.bf16.mxu0 %v2443
    %4135 = vmatpush1.bf16.msra.mxu0 %v2442
    %4136 = vmatprep.subr.bf16.mxu0 %v2451
    %4137 = vmatpush1.bf16.msra.mxu0 %v2450
    %4138 = vmatprep.subr.bf16.mxu0 %v2459
    %4139 = vmatpush1.bf16.msra.mxu0 %v2458
    %4140 = vmatprep.subr.bf16.mxu0 %v2467
    %4141 = vmatpush1.bf16.msra.mxu0 %v2466
    %4142 = vmatprep.subr.bf16.mxu0 %v2475
    %4143 = vmatpush1.bf16.msra.mxu0 %v2474
    %4144 = vmatprep.subr.bf16.mxu0 %v2483
    %4145 = vmatpush1.bf16.msra.mxu0 %v2482
    %4146 = vmatprep.subr.bf16.mxu0 %v2491
    %4147 = vmatpush1.bf16.msra.mxu0 %v2490
    %4148 = vmatprep.subr.bf16.mxu0 %v2499
    %4149 = vmatpush1.bf16.msra.mxu0 %v2498
    %4150 = vmatprep.subr.bf16.mxu0 %v2507
    %4151 = vmatpush1.bf16.msra.mxu0 %v2506
    %4152 = vmatprep.subr.bf16.mxu0 %v2515
    %4153 = vmatpush1.bf16.msra.mxu0 %v2514
    %4154 = vmatprep.subr.bf16.mxu0 %v2523
    %4155 = vmatpush1.bf16.msra.mxu0 %v2522
    %4156 = vmatprep.subr.bf16.mxu0 %v2531
    %4157 = vmatpush1.bf16.msra.mxu0 %v2530
    %4158 = vmatprep.subr.bf16.mxu0 %v2539
    %4159 = vmatpush1.bf16.msra.mxu0 %v2538
    %4160 = vmatprep.subr.bf16.mxu0 %v2547
    %4161 = vmatpush1.bf16.msra.mxu0 %v2546
    %4162 = vmatprep.mubr.bf16.mxu0 %v4045
    %4163 = vmatmul.mubr.bf16.gmra.mrb[0].mxu0 %v4044
    %v4164 = vpop.f32.mrb[0].mxu0
    %v4165 = vadd.f32 %v1627, %v4164
    %v4166 = vpop.f32.mrb[0].mxu0
    %v4167 = vadd.f32 %v1631, %v4166
    %v4168 = vpop.f32.mrb[0].mxu0
    %v4169 = vpop.f32.mrb[0].mxu0
    %4170 = vdwg.mxu0
    %4171 = vmatprep.subr.bf16.mxu0 %v2555
    %4172 = vmatpush1.bf16.msra.mxu0 %v2554
    %4173 = vmatprep.subr.bf16.mxu0 %v2563
    %4174 = vmatpush1.bf16.msra.mxu0 %v2562
    %4175 = vmatprep.subr.bf16.mxu0 %v2571
    %4176 = vmatpush1.bf16.msra.mxu0 %v2570
    %4177 = vmatprep.subr.bf16.mxu0 %v2579
    %4178 = vmatpush1.bf16.msra.mxu0 %v2578
    %4179 = vmatprep.subr.bf16.mxu0 %v2587
    %4180 = vmatpush1.bf16.msra.mxu0 %v2586
    %4181 = vmatprep.subr.bf16.mxu0 %v2595
    %4182 = vmatpush1.bf16.msra.mxu0 %v2594
    %4183 = vmatprep.subr.bf16.mxu0 %v2603
    %4184 = vmatpush1.bf16.msra.mxu0 %v2602
    %4185 = vmatprep.subr.bf16.mxu0 %v2611
    %4186 = vmatpush1.bf16.msra.mxu0 %v2610
    %4187 = vmatprep.subr.bf16.mxu0 %v2619
    %4188 = vmatpush1.bf16.msra.mxu0 %v2618
    %4189 = vmatprep.subr.bf16.mxu0 %v2627
    %4190 = vmatpush1.bf16.msra.mxu0 %v2626
    %4191 = vmatprep.subr.bf16.mxu0 %v2635
    %4192 = vmatpush1.bf16.msra.mxu0 %v2634
    %4193 = vmatprep.subr.bf16.mxu0 %v2643
    %4194 = vmatpush1.bf16.msra.mxu0 %v2642
    %4195 = vmatprep.subr.bf16.mxu0 %v2651
    %4196 = vmatpush1.bf16.msra.mxu0 %v2650
    %4197 = vmatprep.subr.bf16.mxu0 %v2659
    %4198 = vmatpush1.bf16.msra.mxu0 %v2658
    %4199 = vmatprep.subr.bf16.mxu0 %v2667
    %4200 = vmatpush1.bf16.msra.mxu0 %v2666
    %4201 = vmatprep.subr.bf16.mxu0 %v2675
    %4202 = vmatpush1.bf16.msra.mxu0 %v2674
    %4203 = vmatprep.mubr.bf16.mxu0 %v4047
    %4204 = vmatmul.mubr.bf16.gmra.mrb[0].mxu0 %v4046
    %v4205 = vpop.f32.mrb[0].mxu0
    %v4206 = vadd.f32 %v4165, %v4205
    %v4207 = vpop.f32.mrb[0].mxu0
    %v4208 = vadd.f32 %v4167, %v4207
    %v4209 = vpop.f32.mrb[0].mxu0
    %v4210 = vpop.f32.mrb[0].mxu0
    %4211 = vdwg.mxu0
    %4212 = vmatprep.subr.bf16.mxu0 %v2429
    %4213 = vmatpush1.bf16.msra.mxu0 %v2428
    %4214 = vmatprep.subr.bf16.mxu0 %v2437
    %4215 = vmatpush1.bf16.msra.mxu0 %v2436
    %4216 = vmatprep.subr.bf16.mxu0 %v2445
    %4217 = vmatpush1.bf16.msra.mxu0 %v2444
    %4218 = vmatprep.subr.bf16.mxu0 %v2453
    %4219 = vmatpush1.bf16.msra.mxu0 %v2452
    %4220 = vmatprep.subr.bf16.mxu0 %v2461
    %4221 = vmatpush1.bf16.msra.mxu0 %v2460
    %4222 = vmatprep.subr.bf16.mxu0 %v2469
    %4223 = vmatpush1.bf16.msra.mxu0 %v2468
    %4224 = vmatprep.subr.bf16.mxu0 %v2477
    %4225 = vmatpush1.bf16.msra.mxu0 %v2476
    %4226 = vmatprep.subr.bf16.mxu0 %v2485
    %4227 = vmatpush1.bf16.msra.mxu0 %v2484
    %4228 = vmatprep.subr.bf16.mxu0 %v2493
    %4229 = vmatpush1.bf16.msra.mxu0 %v2492
    %4230 = vmatprep.subr.bf16.mxu0 %v2501
    %4231 = vmatpush1.bf16.msra.mxu0 %v2500
    %4232 = vmatprep.subr.bf16.mxu0 %v2509
    %4233 = vmatpush1.bf16.msra.mxu0 %v2508
    %4234 = vmatprep.subr.bf16.mxu0 %v2517
    %4235 = vmatpush1.bf16.msra.mxu0 %v2516
    %4236 = vmatprep.subr.bf16.mxu0 %v2525
    %4237 = vmatpush1.bf16.msra.mxu0 %v2524
    %4238 = vmatprep.subr.bf16.mxu0 %v2533
    %4239 = vmatpush1.bf16.msra.mxu0 %v2532
    %4240 = vmatprep.subr.bf16.mxu0 %v2541
    %4241 = vmatpush1.bf16.msra.mxu0 %v2540
    %4242 = vmatprep.subr.bf16.mxu0 %v2549
    %4243 = vmatpush1.bf16.msra.mxu0 %v2548
    %4244 = vmatprep.mubr.bf16.mxu0 %v4045
    %4245 = vmatmul.mubr.bf16.gmra.mrb[0].mxu0 %v4044
    %v4246 = vpop.f32.mrb[0].mxu0
    %v4247 = vadd.f32 %v1635, %v4246
    %v4248 = vpop.f32.mrb[0].mxu0
    %v4249 = vadd.f32 %v1639, %v4248
    %v4250 = vpop.f32.mrb[0].mxu0
    %v4251 = vpop.f32.mrb[0].mxu0
    %4252 = vdwg.mxu0
    %4253 = vmatprep.subr.bf16.mxu0 %v2557
    %4254 = vmatpush1.bf16.msra.mxu0 %v2556
    %4255 = vmatprep.subr.bf16.mxu0 %v2565
    %4256 = vmatpush1.bf16.msra.mxu0 %v2564
    %4257 = vmatprep.subr.bf16.mxu0 %v2573
    %4258 = vmatpush1.bf16.msra.mxu0 %v2572
    %4259 = vmatprep.subr.bf16.mxu0 %v2581
    %4260 = vmatpush1.bf16.msra.mxu0 %v2580
    %4261 = vmatprep.subr.bf16.mxu0 %v2589
    %4262 = vmatpush1.bf16.msra.mxu0 %v2588
    %4263 = vmatprep.subr.bf16.mxu0 %v2597
    %4264 = vmatpush1.bf16.msra.mxu0 %v2596
    %4265 = vmatprep.subr.bf16.mxu0 %v2605
    %4266 = vmatpush1.bf16.msra.mxu0 %v2604
    %4267 = vmatprep.subr.bf16.mxu0 %v2613
    %4268 = vmatpush1.bf16.msra.mxu0 %v2612
    %4269 = vmatprep.subr.bf16.mxu0 %v2621
    %4270 = vmatpush1.bf16.msra.mxu0 %v2620
    %4271 = vmatprep.subr.bf16.mxu0 %v2629
    %4272 = vmatpush1.bf16.msra.mxu0 %v2628
    %4273 = vmatprep.subr.bf16.mxu0 %v2637
    %4274 = vmatpush1.bf16.msra.mxu0 %v2636
    %4275 = vmatprep.subr.bf16.mxu0 %v2645
    %4276 = vmatpush1.bf16.msra.mxu0 %v2644
    %4277 = vmatprep.subr.bf16.mxu0 %v2653
    %4278 = vmatpush1.bf16.msra.mxu0 %v2652
    %4279 = vmatprep.subr.bf16.mxu0 %v2661
    %4280 = vmatpush1.bf16.msra.mxu0 %v2660
    %4281 = vmatprep.subr.bf16.mxu0 %v2669
    %4282 = vmatpush1.bf16.msra.mxu0 %v2668
    %4283 = vmatprep.subr.bf16.mxu0 %v2677
    %4284 = vmatpush1.bf16.msra.mxu0 %v2676
    %4285 = vmatprep.mubr.bf16.mxu0 %v4047
    %4286 = vmatmul.mubr.bf16.gmra.mrb[0].mxu0 %v4046
    %v4287 = vpop.f32.mrb[0].mxu0
    %v4288 = vadd.f32 %v4247, %v4287
    %v4289 = vpop.f32.mrb[0].mxu0
    %v4290 = vadd.f32 %v4249, %v4289
    %v4291 = vpop.f32.mrb[0].mxu0
    %v4292 = vpop.f32.mrb[0].mxu0
    %4293 = vdwg.mxu0
    %4294 = vmatprep.subr.bf16.mxu0 %v2431
    %4295 = vmatpush1.bf16.msra.mxu0 %v2430
    %4296 = vmatprep.subr.bf16.mxu0 %v2439
    %4297 = vmatpush1.bf16.msra.mxu0 %v2438
    %4298 = vmatprep.subr.bf16.mxu0 %v2447
    %4299 = vmatpush1.bf16.msra.mxu0 %v2446
    %4300 = vmatprep.subr.bf16.mxu0 %v2455
    %4301 = vmatpush1.bf16.msra.mxu0 %v2454
    %4302 = vmatprep.subr.bf16.mxu0 %v2463
    %4303 = vmatpush1.bf16.msra.mxu0 %v2462
    %4304 = vmatprep.subr.bf16.mxu0 %v2471
    %4305 = vmatpush1.bf16.msra.mxu0 %v2470
    %4306 = vmatprep.subr.bf16.mxu0 %v2479
    %4307 = vmatpush1.bf16.msra.mxu0 %v2478
    %4308 = vmatprep.subr.bf16.mxu0 %v2487
    %4309 = vmatpush1.bf16.msra.mxu0 %v2486
    %4310 = vmatprep.subr.bf16.mxu0 %v2495
    %4311 = vmatpush1.bf16.msra.mxu0 %v2494
    %4312 = vmatprep.subr.bf16.mxu0 %v2503
    %4313 = vmatpush1.bf16.msra.mxu0 %v2502
    %4314 = vmatprep.subr.bf16.mxu0 %v2511
    %4315 = vmatpush1.bf16.msra.mxu0 %v2510
    %4316 = vmatprep.subr.bf16.mxu0 %v2519
    %4317 = vmatpush1.bf16.msra.mxu0 %v2518
    %4318 = vmatprep.subr.bf16.mxu0 %v2527
    %4319 = vmatpush1.bf16.msra.mxu0 %v2526
    %4320 = vmatprep.subr.bf16.mxu0 %v2535
    %4321 = vmatpush1.bf16.msra.mxu0 %v2534
    %4322 = vmatprep.subr.bf16.mxu0 %v2543
    %4323 = vmatpush1.bf16.msra.mxu0 %v2542
    %4324 = vmatprep.subr.bf16.mxu0 %v2551
    %4325 = vmatpush1.bf16.msra.mxu0 %v2550
    %4326 = vmatprep.mubr.bf16.mxu0 %v4045
    %4327 = vmatmul.mubr.bf16.gmra.mrb[0].mxu0 %v4044
    %v4328 = vpop.f32.mrb[0].mxu0
    %v4329 = vadd.f32 %v1643, %v4328
    %v4330 = vpop.f32.mrb[0].mxu0
    %v4331 = vadd.f32 %v1647, %v4330
    %v4332 = vpop.f32.mrb[0].mxu0
    %v4333 = vpop.f32.mrb[0].mxu0
    %4334 = vdwg.mxu0
    %4335 = vmatprep.subr.bf16.mxu0 %v2559
    %4336 = vmatpush1.bf16.msra.mxu0 %v2558
    %4337 = vmatprep.subr.bf16.mxu0 %v2567
    %4338 = vmatpush1.bf16.msra.mxu0 %v2566
    %4339 = vmatprep.subr.bf16.mxu0 %v2575
    %4340 = vmatpush1.bf16.msra.mxu0 %v2574
    %4341 = vmatprep.subr.bf16.mxu0 %v2583
    %4342 = vmatpush1.bf16.msra.mxu0 %v2582
    %4343 = vmatprep.subr.bf16.mxu0 %v2591
    %4344 = vmatpush1.bf16.msra.mxu0 %v2590
    %4345 = vmatprep.subr.bf16.mxu0 %v2599
    %4346 = vmatpush1.bf16.msra.mxu0 %v2598
    %4347 = vmatprep.subr.bf16.mxu0 %v2607
    %4348 = vmatpush1.bf16.msra.mxu0 %v2606
    %4349 = vmatprep.subr.bf16.mxu0 %v2615
    %4350 = vmatpush1.bf16.msra.mxu0 %v2614
    %4351 = vmatprep.subr.bf16.mxu0 %v2623
    %4352 = vmatpush1.bf16.msra.mxu0 %v2622
    %4353 = vmatprep.subr.bf16.mxu0 %v2631
    %4354 = vmatpush1.bf16.msra.mxu0 %v2630
    %4355 = vmatprep.subr.bf16.mxu0 %v2639
    %4356 = vmatpush1.bf16.msra.mxu0 %v2638
    %4357 = vmatprep.subr.bf16.mxu0 %v2647
    %4358 = vmatpush1.bf16.msra.mxu0 %v2646
    %4359 = vmatprep.subr.bf16.mxu0 %v2655
    %4360 = vmatpush1.bf16.msra.mxu0 %v2654
    %4361 = vmatprep.subr.bf16.mxu0 %v2663
    %4362 = vmatpush1.bf16.msra.mxu0 %v2662
    %4363 = vmatprep.subr.bf16.mxu0 %v2671
    %4364 = vmatpush1.bf16.msra.mxu0 %v2670
    %4365 = vmatprep.subr.bf16.mxu0 %v2679
    %4366 = vmatpush1.bf16.msra.mxu0 %v2678
    %4367 = vmatprep.mubr.bf16.mxu0 %v4047
    %4368 = vmatmul.mubr.bf16.gmra.mrb[0].mxu0 %v4046
    %v4369 = vpop.f32.mrb[0].mxu0
    %v4370 = vadd.f32 %v4329, %v4369
    %v4371 = vpop.f32.mrb[0].mxu0
    %v4372 = vadd.f32 %v4331, %v4371
    %v4373 = vpop.f32.mrb[0].mxu0
    %v4374 = vpop.f32.mrb[0].mxu0
    %4375 = vdwg.mxu0
    %v4376 = vxor.u32 %v4124, 2147483648
    %v4377 = vxor.u32 %v4126, 2147483648
    %v4378 = vmul.f32 %v4376, 1.442695
    %v4379 = vpow.pop %v4378
    %v4380 = vmul.f32 %v4377, 1.442695
    %v4381 = vpow.pop %v4380
    %v4382 = vadd.f32 %v4379, 1.0
    %v4383 = vadd.f32 %v4381, 1.0
    %v4384 = vrcp.pop %v4382
    %v4385 = vmul.f32 1.0, %v4384
    %v4386 = vrcp.pop %v4383
    %v4387 = vmul.f32 1.0, %v4386
    %v4388 = vxor.u32 %v4206, 2147483648
    %v4389 = vxor.u32 %v4208, 2147483648
    %v4390 = vmul.f32 %v4388, 1.442695
    %v4391 = vpow.pop %v4390
    %v4392 = vmul.f32 %v4389, 1.442695
    %v4393 = vpow.pop %v4392
    %v4394 = vadd.f32 %v4391, 1.0
    %v4395 = vadd.f32 %v4393, 1.0
    %v4396 = vrcp.pop %v4394
    %v4397 = vmul.f32 1.0, %v4396
    %v4398 = vrcp.pop %v4395
    %v4399 = vmul.f32 1.0, %v4398
    %v4400 = vmul.f32 %v4385, %v4370
    %v4401 = vmul.f32 %v4387, %v4372
    %v4402 = vadd.f32 %v4288, %v4400
    %v4403 = vadd.f32 %v4290, %v4401
    %v4404 = vtanh.pop %v4402
    %v4405 = vtanh.pop %v4403
    %v4406 = vsub.f32 1.0, %v4397
    %v4407 = vsub.f32 1.0, %v4399
    %v4408 = vmul.f32 %v4406, %v4404
    %v4409 = vmul.f32 %v4407, %v4405
    %v4410 = vmul.f32 %v4397, %v3858
    %v4411 = vmul.f32 %v4399, %v3859
    %v4412 = vadd.f32 %v4408, %v4410
    %v4413 = vadd.f32 %v4409, %v4411
    %v4414 = vsel %vm4041, %v4412, %v3858
    %v4415 = vsel %vm4041, %v4413, %v3859
    %s4416 = smul.u32 3, 6
    %s4417 = smul.addr %s4416, 8
    %s4418 = scalar_lea.vmem [#allocation2], %s4417
    %v4419 = vld [vmem:[%s4418] sm:$0xff]
    %v4420 = vld [vmem:[%s4418 + $0x8] sm:$0xff]
    %v4421 = vld [vmem:[%s4418 + $0x10] sm:$0xff]
    %v4422 = vld [vmem:[%s4418 + $0x18] sm:$0xff]
    %v4423 = vld [vmem:[%s4418 + $0x20] sm:$0xff]
    %v4424 = vld [vmem:[%s4418 + $0x28] sm:$0xff]
    %s4425 = scalar_lea.vmem %s1, 24
    %v4426 = vld [vmem:[%s4425] sm:$0xff]
    %4427 = vmatprep.subr.bf16.mxu0 %v991
    %4428 = vmatpush1.bf16.msra.mxu0 %v990
    %4429 = vmatprep.subr.bf16.mxu0 %v997
    %4430 = vmatpush1.bf16.msra.mxu0 %v996
    %4431 = vmatprep.subr.bf16.mxu0 %v1003
    %4432 = vmatpush1.bf16.msra.mxu0 %v1002
    %4433 = vmatprep.subr.bf16.mxu0 %v1009
    %4434 = vmatpush1.bf16.msra.mxu0 %v1008
    %4435 = vmatprep.subr.bf16.mxu0 %v1015
    %4436 = vmatpush1.bf16.msra.mxu0 %v1014
    %4437 = vmatprep.subr.bf16.mxu0 %v1021
    %4438 = vmatpush1.bf16.msra.mxu0 %v1020
    %4439 = vmatprep.subr.bf16.mxu0 %v1027
    %4440 = vmatpush1.bf16.msra.mxu0 %v1026
    %4441 = vmatprep.subr.bf16.mxu0 %v1033
    %4442 = vmatpush1.bf16.msra.mxu0 %v1032
    %4443 = vmatprep.subr.bf16.mxu0 %v1039
    %4444 = vmatpush1.bf16.msra.mxu0 %v1038
    %4445 = vmatprep.subr.bf16.mxu0 %v1045
    %4446 = vmatpush1.bf16.msra.mxu0 %v1044
    %4447 = vmatprep.subr.bf16.mxu0 %v1051
    %4448 = vmatpush1.bf16.msra.mxu0 %v1050
    %4449 = vmatprep.subr.bf16.mxu0 %v1057
    %4450 = vmatpush1.bf16.msra.mxu0 %v1056
    %4451 = vmatprep.subr.bf16.mxu0 %v1063
    %4452 = vmatpush1.bf16.msra.mxu0 %v1062
    %4453 = vmatprep.subr.bf16.mxu0 %v1069
    %4454 = vmatpush1.bf16.msra.mxu0 %v1068
    %4455 = vmatprep.subr.bf16.mxu0 %v1075
    %4456 = vmatpush1.bf16.msra.mxu0 %v1074
    %4457 = vmatprep.subr.bf16.mxu0 %v1081
    %4458 = vmatpush1.bf16.msra.mxu0 %v1080
    %4459 = vmatprep.mubr.bf16.mxu0 %v4045
    %4460 = vmatmul.mubr.bf16.gmra.mrb[0].mxu0 %v4044
    %v4461 = vpop.f32.mrb[0].mxu0
    %v4462 = vadd.f32 %v675, %v4461
    %v4463 = vpop.f32.mrb[0].mxu0
    %v4464 = vadd.f32 %v679, %v4463
    %v4465 = vpop.f32.mrb[0].mxu0
    %v4466 = vpop.f32.mrb[0].mxu0
    %4467 = vdwg.mxu0
    %4468 = vmatprep.subr.bf16.mxu0 %v993
    %4469 = vmatpush1.bf16.msra.mxu0 %v992
    %4470 = vmatprep.subr.bf16.mxu0 %v999
    %4471 = vmatpush1.bf16.msra.mxu0 %v998
    %4472 = vmatprep.subr.bf16.mxu0 %v1005
    %4473 = vmatpush1.bf16.msra.mxu0 %v1004
    %4474 = vmatprep.subr.bf16.mxu0 %v1011
    %4475 = vmatpush1.bf16.msra.mxu0 %v1010
    %4476 = vmatprep.subr.bf16.mxu0 %v1017
    %4477 = vmatpush1.bf16.msra.mxu0 %v1016
    %4478 = vmatprep.subr.bf16.mxu0 %v1023
    %4479 = vmatpush1.bf16.msra.mxu0 %v1022
    %4480 = vmatprep.subr.bf16.mxu0 %v1029
    %4481 = vmatpush1.bf16.msra.mxu0 %v1028
    %4482 = vmatprep.subr.bf16.mxu0 %v1035
    %4483 = vmatpush1.bf16.msra.mxu0 %v1034
    %4484 = vmatprep.subr.bf16.mxu0 %v1041
    %4485 = vmatpush1.bf16.msra.mxu0 %v1040
    %4486 = vmatprep.subr.bf16.mxu0 %v1047
    %4487 = vmatpush1.bf16.msra.mxu0 %v1046
    %4488 = vmatprep.subr.bf16.mxu0 %v1053
    %4489 = vmatpush1.bf16.msra.mxu0 %v1052
    %4490 = vmatprep.subr.bf16.mxu0 %v1059
    %4491 = vmatpush1.bf16.msra.mxu0 %v1058
    %4492 = vmatprep.subr.bf16.mxu0 %v1065
    %4493 = vmatpush1.bf16.msra.mxu0 %v1064
    %4494 = vmatprep.subr.bf16.mxu0 %v1071
    %4495 = vmatpush1.bf16.msra.mxu0 %v1070
    %4496 = vmatprep.subr.bf16.mxu0 %v1077
    %4497 = vmatpush1.bf16.msra.mxu0 %v1076
    %4498 = vmatprep.subr.bf16.mxu0 %v1083
    %4499 = vmatpush1.bf16.msra.mxu0 %v1082
    %4500 = vmatprep.mubr.bf16.mxu0 %v4045
    %4501 = vmatmul.mubr.bf16.gmra.mrb[0].mxu0 %v4044
    %v4502 = vpop.f32.mrb[0].mxu0
    %v4503 = vadd.f32 %v683, %v4502
    %v4504 = vpop.f32.mrb[0].mxu0
    %v4505 = vadd.f32 %v687, %v4504
    %v4506 = vpop.f32.mrb[0].mxu0
    %v4507 = vpop.f32.mrb[0].mxu0
    %4508 = vdwg.mxu0
    %4509 = vmatprep.subr.bf16.mxu0 %v995
    %4510 = vmatpush1.bf16.msra.mxu0 %v994
    %4511 = vmatprep.subr.bf16.mxu0 %v1001
    %4512 = vmatpush1.bf16.msra.mxu0 %v1000
    %4513 = vmatprep.subr.bf16.mxu0 %v1007
    %4514 = vmatpush1.bf16.msra.mxu0 %v1006
    %4515 = vmatprep.subr.bf16.mxu0 %v1013
    %4516 = vmatpush1.bf16.msra.mxu0 %v1012
    %4517 = vmatprep.subr.bf16.mxu0 %v1019
    %4518 = vmatpush1.bf16.msra.mxu0 %v1018
    %4519 = vmatprep.subr.bf16.mxu0 %v1025
    %4520 = vmatpush1.bf16.msra.mxu0 %v1024
    %4521 = vmatprep.subr.bf16.mxu0 %v1031
    %4522 = vmatpush1.bf16.msra.mxu0 %v1030
    %4523 = vmatprep.subr.bf16.mxu0 %v1037
    %4524 = vmatpush1.bf16.msra.mxu0 %v1036
    %4525 = vmatprep.subr.bf16.mxu0 %v1043
    %4526 = vmatpush1.bf16.msra.mxu0 %v1042
    %4527 = vmatprep.subr.bf16.mxu0 %v1049
    %4528 = vmatpush1.bf16.msra.mxu0 %v1048
    %4529 = vmatprep.subr.bf16.mxu0 %v1055
    %4530 = vmatpush1.bf16.msra.mxu0 %v1054
    %4531 = vmatprep.subr.bf16.mxu0 %v1061
    %4532 = vmatpush1.bf16.msra.mxu0 %v1060
    %4533 = vmatprep.subr.bf16.mxu0 %v1067
    %4534 = vmatpush1.bf16.msra.mxu0 %v1066
    %4535 = vmatprep.subr.bf16.mxu0 %v1073
    %4536 = vmatpush1.bf16.msra.mxu0 %v1072
    %4537 = vmatprep.subr.bf16.mxu0 %v1079
    %4538 = vmatpush1.bf16.msra.mxu0 %v1078
    %4539 = vmatprep.subr.bf16.mxu0 %v1085
    %4540 = vmatpush1.bf16.msra.mxu0 %v1084
    %4541 = vmatprep.mubr.bf16.mxu0 %v4045
    %4542 = vmatmul.mubr.bf16.gmra.mrb[0].mxu0 %v4044
    %v4543 = vpop.f32.mrb[0].mxu0
    %v4544 = vadd.f32 %v691, %v4543
    %v4545 = vpop.f32.mrb[0].mxu0
    %v4546 = vadd.f32 %v695, %v4545
    %v4547 = vpop.f32.mrb[0].mxu0
    %v4548 = vpop.f32.mrb[0].mxu0
    %4549 = vdwg.mxu0
    %v4550 = vadd.f32 %v4419, %v4462
    %v4551 = vadd.f32 %v4420, %v4464
    %v4552 = vxor.u32 %v4550, 2147483648
    %v4553 = vxor.u32 %v4551, 2147483648
    %v4554 = vmul.f32 %v4552, 1.442695
    %v4555 = vpow.pop %v4554
    %v4556 = vmul.f32 %v4553, 1.442695
    %v4557 = vpow.pop %v4556
    %v4558 = vadd.f32 %v4555, 1.0
    %v4559 = vadd.f32 %v4557, 1.0
    %v4560 = vrcp.pop %v4558
    %v4561 = vmul.f32 1.0, %v4560
    %v4562 = vrcp.pop %v4559
    %v4563 = vmul.f32 1.0, %v4562
    %v4564 = vadd.f32 %v4421, %v4503
    %v4565 = vadd.f32 %v4422, %v4505
    %v4566 = vxor.u32 %v4564, 2147483648
    %v4567 = vxor.u32 %v4565, 2147483648
    %v4568 = vmul.f32 %v4566, 1.442695
    %v4569 = vpow.pop %v4568
    %v4570 = vmul.f32 %v4567, 1.442695
    %v4571 = vpow.pop %v4570
    %v4572 = vadd.f32 %v4569, 1.0
    %v4573 = vadd.f32 %v4571, 1.0
    %v4574 = vrcp.pop %v4572
    %v4575 = vmul.f32 1.0, %v4574
    %v4576 = vrcp.pop %v4573
    %v4577 = vmul.f32 1.0, %v4576
    %v4578 = vmul.f32 %v4561, %v4544
    %v4579 = vmul.f32 %v4563, %v4546
    %v4580 = vadd.f32 %v4423, %v4578
    %v4581 = vadd.f32 %v4424, %v4579
    %v4582 = vtanh.pop %v4580
    %v4583 = vtanh.pop %v4581
    %v4584 = vsub.f32 1.0, %v4575
    %v4585 = vsub.f32 1.0, %v4577
    %v4586 = vmul.f32 %v4584, %v4582
    %v4587 = vmul.f32 %v4585, %v4583
    %v4588 = vmul.f32 %v4575, %v4042
    %v4589 = vmul.f32 %v4577, %v4043
    %v4590 = vadd.f32 %v4586, %v4588
    %v4591 = vadd.f32 %v4587, %v4589
    %vm4592 = vcmp.gt.f32.partialorder %v4426, 0.0
    %v4593 = vsel %vm4592, 1, 0
    %4594 = vset.pattern.permute.xlu0 0
    %4595 = vperm.xlu0 %4594, %v4593
    %v4596 = vpop.permute.xlu0 %4595
    %vm4597 = vcmp.eq.s32.totalorder %v4596, 1
    %v4598 = vsel %vm4597, %v4590, %v4042
    %v4599 = vsel %vm4597, %v4591, %v4043
    %v4600 = vpack.c.bf16 %v4598, %v4598
    %v4601 = vpack.c.bf16 %v4599, %v4599
    %v4602 = vpack.c.bf16 %v4414, %v4414
    %v4603 = vpack.c.bf16 %v4415, %v4415
    %4604 = vmatprep.subr.bf16.mxu0 %v2425
    %4605 = vmatpush1.bf16.msra.mxu0 %v2424
    %4606 = vmatprep.subr.bf16.mxu0 %v2433
    %4607 = vmatpush1.bf16.msra.mxu0 %v2432
    %4608 = vmatprep.subr.bf16.mxu0 %v2441
    %4609 = vmatpush1.bf16.msra.mxu0 %v2440
    %4610 = vmatprep.subr.bf16.mxu0 %v2449
    %4611 = vmatpush1.bf16.msra.mxu0 %v2448
    %4612 = vmatprep.subr.bf16.mxu0 %v2457
    %4613 = vmatpush1.bf16.msra.mxu0 %v2456
    %4614 = vmatprep.subr.bf16.mxu0 %v2465
    %4615 = vmatpush1.bf16.msra.mxu0 %v2464
    %4616 = vmatprep.subr.bf16.mxu0 %v2473
    %4617 = vmatpush1.bf16.msra.mxu0 %v2472
    %4618 = vmatprep.subr.bf16.mxu0 %v2481
    %4619 = vmatpush1.bf16.msra.mxu0 %v2480
    %4620 = vmatprep.subr.bf16.mxu0 %v2489
    %4621 = vmatpush1.bf16.msra.mxu0 %v2488
    %4622 = vmatprep.subr.bf16.mxu0 %v2497
    %4623 = vmatpush1.bf16.msra.mxu0 %v2496
    %4624 = vmatprep.subr.bf16.mxu0 %v2505
    %4625 = vmatpush1.bf16.msra.mxu0 %v2504
    %4626 = vmatprep.subr.bf16.mxu0 %v2513
    %4627 = vmatpush1.bf16.msra.mxu0 %v2512
    %4628 = vmatprep.subr.bf16.mxu0 %v2521
    %4629 = vmatpush1.bf16.msra.mxu0 %v2520
    %4630 = vmatprep.subr.bf16.mxu0 %v2529
    %4631 = vmatpush1.bf16.msra.mxu0 %v2528
    %4632 = vmatprep.subr.bf16.mxu0 %v2537
    %4633 = vmatpush1.bf16.msra.mxu0 %v2536
    %4634 = vmatprep.subr.bf16.mxu0 %v2545
    %4635 = vmatpush1.bf16.msra.mxu0 %v2544
    %4636 = vmatprep.mubr.bf16.mxu0 %v4601
    %4637 = vmatmul.mubr.bf16.gmra.mrb[0].mxu0 %v4600
    %v4638 = vpop.f32.mrb[0].mxu0
    %v4639 = vadd.f32 %v1619, %v4638
    %v4640 = vpop.f32.mrb[0].mxu0
    %v4641 = vadd.f32 %v1623, %v4640
    %v4642 = vpop.f32.mrb[0].mxu0
    %v4643 = vpop.f32.mrb[0].mxu0
    %4644 = vdwg.mxu0
    %4645 = vmatprep.subr.bf16.mxu0 %v2553
    %4646 = vmatpush1.bf16.msra.mxu0 %v2552
    %4647 = vmatprep.subr.bf16.mxu0 %v2561
    %4648 = vmatpush1.bf16.msra.mxu0 %v2560
    %4649 = vmatprep.subr.bf16.mxu0 %v2569
    %4650 = vmatpush1.bf16.msra.mxu0 %v2568
    %4651 = vmatprep.subr.bf16.mxu0 %v2577
    %4652 = vmatpush1.bf16.msra.mxu0 %v2576
    %4653 = vmatprep.subr.bf16.mxu0 %v2585
    %4654 = vmatpush1.bf16.msra.mxu0 %v2584
    %4655 = vmatprep.subr.bf16.mxu0 %v2593
    %4656 = vmatpush1.bf16.msra.mxu0 %v2592
    %4657 = vmatprep.subr.bf16.mxu0 %v2601
    %4658 = vmatpush1.bf16.msra.mxu0 %v2600
    %4659 = vmatprep.subr.bf16.mxu0 %v2609
    %4660 = vmatpush1.bf16.msra.mxu0 %v2608
    %4661 = vmatprep.subr.bf16.mxu0 %v2617
    %4662 = vmatpush1.bf16.msra.mxu0 %v2616
    %4663 = vmatprep.subr.bf16.mxu0 %v2625
    %4664 = vmatpush1.bf16.msra.mxu0 %v2624
    %4665 = vmatprep.subr.bf16.mxu0 %v2633
    %4666 = vmatpush1.bf16.msra.mxu0 %v2632
    %4667 = vmatprep.subr.bf16.mxu0 %v2641
    %4668 = vmatpush1.bf16.msra.mxu0 %v2640
    %4669 = vmatprep.subr.bf16.mxu0 %v2649
    %4670 = vmatpush1.bf16.msra.mxu0 %v2648
    %4671 = vmatprep.subr.bf16.mxu0 %v2657
    %4672 = vmatpush1.bf16.msra.mxu0 %v2656
    %4673 = vmatprep.subr.bf16.mxu0 %v2665
    %4674 = vmatpush1.bf16.msra.mxu0 %v2664
    %4675 = vmatprep.subr.bf16.mxu0 %v2673
    %4676 = vmatpush1.bf16.msra.mxu0 %v2672
    %4677 = vmatprep.mubr.bf16.mxu0 %v4603
    %4678 = vmatmul.mubr.bf16.gmra.mrb[0].mxu0 %v4602
    %v4679 = vpop.f32.mrb[0].mxu0
    %v4680 = vadd.f32 %v4639, %v4679
    %v4681 = vpop.f32.mrb[0].mxu0
    %v4682 = vadd.f32 %v4641, %v4681
    %v4683 = vpop.f32.mrb[0].mxu0
    %v4684 = vpop.f32.mrb[0].mxu0
    %4685 = vdwg.mxu0
    %4686 = vmatprep.subr.bf16.mxu0 %v2427
    %4687 = vmatpush1.bf16.msra.mxu0 %v2426
    %4688 = vmatprep.subr.bf16.mxu0 %v2435
    %4689 = vmatpush1.bf16.msra.mxu0 %v2434
    %4690 = vmatprep.subr.bf16.mxu0 %v2443
    %4691 = vmatpush1.bf16.msra.mxu0 %v2442
    %4692 = vmatprep.subr.bf16.mxu0 %v2451
    %4693 = vmatpush1.bf16.msra.mxu0 %v2450
    %4694 = vmatprep.subr.bf16.mxu0 %v2459
    %4695 = vmatpush1.bf16.msra.mxu0 %v2458
    %4696 = vmatprep.subr.bf16.mxu0 %v2467
    %4697 = vmatpush1.bf16.msra.mxu0 %v2466
    %4698 = vmatprep.subr.bf16.mxu0 %v2475
    %4699 = vmatpush1.bf16.msra.mxu0 %v2474
    %4700 = vmatprep.subr.bf16.mxu0 %v2483
    %4701 = vmatpush1.bf16.msra.mxu0 %v2482
    %4702 = vmatprep.subr.bf16.mxu0 %v2491
    %4703 = vmatpush1.bf16.msra.mxu0 %v2490
    %4704 = vmatprep.subr.bf16.mxu0 %v2499
    %4705 = vmatpush1.bf16.msra.mxu0 %v2498
    %4706 = vmatprep.subr.bf16.mxu0 %v2507
    %4707 = vmatpush1.bf16.msra.mxu0 %v2506
    %4708 = vmatprep.subr.bf16.mxu0 %v2515
    %4709 = vmatpush1.bf16.msra.mxu0 %v2514
    %4710 = vmatprep.subr.bf16.mxu0 %v2523
    %4711 = vmatpush1.bf16.msra.mxu0 %v2522
    %4712 = vmatprep.subr.bf16.mxu0 %v2531
    %4713 = vmatpush1.bf16.msra.mxu0 %v2530
    %4714 = vmatprep.subr.bf16.mxu0 %v2539
    %4715 = vmatpush1.bf16.msra.mxu0 %v2538
    %4716 = vmatprep.subr.bf16.mxu0 %v2547
    %4717 = vmatpush1.bf16.msra.mxu0 %v2546
    %4718 = vmatprep.mubr.bf16.mxu0 %v4601
    %4719 = vmatmul.mubr.bf16.gmra.mrb[0].mxu0 %v4600
    %v4720 = vpop.f32.mrb[0].mxu0
    %v4721 = vadd.f32 %v1627, %v4720
    %v4722 = vpop.f32.mrb[0].mxu0
    %v4723 = vadd.f32 %v1631, %v4722
    %v4724 = vpop.f32.mrb[0].mxu0
    %v4725 = vpop.f32.mrb[0].mxu0
    %4726 = vdwg.mxu0
    %4727 = vmatprep.subr.bf16.mxu0 %v2555
    %4728 = vmatpush1.bf16.msra.mxu0 %v2554
    %4729 = vmatprep.subr.bf16.mxu0 %v2563
    %4730 = vmatpush1.bf16.msra.mxu0 %v2562
    %4731 = vmatprep.subr.bf16.mxu0 %v2571
    %4732 = vmatpush1.bf16.msra.mxu0 %v2570
    %4733 = vmatprep.subr.bf16.mxu0 %v2579
    %4734 = vmatpush1.bf16.msra.mxu0 %v2578
    %4735 = vmatprep.subr.bf16.mxu0 %v2587
    %4736 = vmatpush1.bf16.msra.mxu0 %v2586
    %4737 = vmatprep.subr.bf16.mxu0 %v2595
    %4738 = vmatpush1.bf16.msra.mxu0 %v2594
    %4739 = vmatprep.subr.bf16.mxu0 %v2603
    %4740 = vmatpush1.bf16.msra.mxu0 %v2602
    %4741 = vmatprep.subr.bf16.mxu0 %v2611
    %4742 = vmatpush1.bf16.msra.mxu0 %v2610
    %4743 = vmatprep.subr.bf16.mxu0 %v2619
    %4744 = vmatpush1.bf16.msra.mxu0 %v2618
    %4745 = vmatprep.subr.bf16.mxu0 %v2627
    %4746 = vmatpush1.bf16.msra.mxu0 %v2626
    %4747 = vmatprep.subr.bf16.mxu0 %v2635
    %4748 = vmatpush1.bf16.msra.mxu0 %v2634
    %4749 = vmatprep.subr.bf16.mxu0 %v2643
    %4750 = vmatpush1.bf16.msra.mxu0 %v2642
    %4751 = vmatprep.subr.bf16.mxu0 %v2651
    %4752 = vmatpush1.bf16.msra.mxu0 %v2650
    %4753 = vmatprep.subr.bf16.mxu0 %v2659
    %4754 = vmatpush1.bf16.msra.mxu0 %v2658
    %4755 = vmatprep.subr.bf16.mxu0 %v2667
    %4756 = vmatpush1.bf16.msra.mxu0 %v2666
    %4757 = vmatprep.subr.bf16.mxu0 %v2675
    %4758 = vmatpush1.bf16.msra.mxu0 %v2674
    %4759 = vmatprep.mubr.bf16.mxu0 %v4603
    %4760 = vmatmul.mubr.bf16.gmra.mrb[0].mxu0 %v4602
    %v4761 = vpop.f32.mrb[0].mxu0
    %v4762 = vadd.f32 %v4721, %v4761
    %v4763 = vpop.f32.mrb[0].mxu0
    %v4764 = vadd.f32 %v4723, %v4763
    %v4765 = vpop.f32.mrb[0].mxu0
    %v4766 = vpop.f32.mrb[0].mxu0
    %4767 = vdwg.mxu0
    %4768 = vmatprep.subr.bf16.mxu0 %v2429
    %4769 = vmatpush1.bf16.msra.mxu0 %v2428
    %4770 = vmatprep.subr.bf16.mxu0 %v2437
    %4771 = vmatpush1.bf16.msra.mxu0 %v2436
    %4772 = vmatprep.subr.bf16.mxu0 %v2445
    %4773 = vmatpush1.bf16.msra.mxu0 %v2444
    %4774 = vmatprep.subr.bf16.mxu0 %v2453
    %4775 = vmatpush1.bf16.msra.mxu0 %v2452
    %4776 = vmatprep.subr.bf16.mxu0 %v2461
    %4777 = vmatpush1.bf16.msra.mxu0 %v2460
    %4778 = vmatprep.subr.bf16.mxu0 %v2469
    %4779 = vmatpush1.bf16.msra.mxu0 %v2468
    %4780 = vmatprep.subr.bf16.mxu0 %v2477
    %4781 = vmatpush1.bf16.msra.mxu0 %v2476
    %4782 = vmatprep.subr.bf16.mxu0 %v2485
    %4783 = vmatpush1.bf16.msra.mxu0 %v2484
    %4784 = vmatprep.subr.bf16.mxu0 %v2493
    %4785 = vmatpush1.bf16.msra.mxu0 %v2492
    %4786 = vmatprep.subr.bf16.mxu0 %v2501
    %4787 = vmatpush1.bf16.msra.mxu0 %v2500
    %4788 = vmatprep.subr.bf16.mxu0 %v2509
    %4789 = vmatpush1.bf16.msra.mxu0 %v2508
    %4790 = vmatprep.subr.bf16.mxu0 %v2517
    %4791 = vmatpush1.bf16.msra.mxu0 %v2516
    %4792 = vmatprep.subr.bf16.mxu0 %v2525
    %4793 = vmatpush1.bf16.msra.mxu0 %v2524
    %4794 = vmatprep.subr.bf16.mxu0 %v2533
    %4795 = vmatpush1.bf16.msra.mxu0 %v2532
    %4796 = vmatprep.subr.bf16.mxu0 %v2541
    %4797 = vmatpush1.bf16.msra.mxu0 %v2540
    %4798 = vmatprep.subr.bf16.mxu0 %v2549
    %4799 = vmatpush1.bf16.msra.mxu0 %v2548
    %4800 = vmatprep.mubr.bf16.mxu0 %v4601
    %4801 = vmatmul.mubr.bf16.gmra.mrb[0].mxu0 %v4600
    %v4802 = vpop.f32.mrb[0].mxu0
    %v4803 = vadd.f32 %v1635, %v4802
    %v4804 = vpop.f32.mrb[0].mxu0
    %v4805 = vadd.f32 %v1639, %v4804
    %v4806 = vpop.f32.mrb[0].mxu0
    %v4807 = vpop.f32.mrb[0].mxu0
    %4808 = vdwg.mxu0
    %4809 = vmatprep.subr.bf16.mxu0 %v2557
    %4810 = vmatpush1.bf16.msra.mxu0 %v2556
    %4811 = vmatprep.subr.bf16.mxu0 %v2565
    %4812 = vmatpush1.bf16.msra.mxu0 %v2564
    %4813 = vmatprep.subr.bf16.mxu0 %v2573
    %4814 = vmatpush1.bf16.msra.mxu0 %v2572
    %4815 = vmatprep.subr.bf16.mxu0 %v2581
    %4816 = vmatpush1.bf16.msra.mxu0 %v2580
    %4817 = vmatprep.subr.bf16.mxu0 %v2589
    %4818 = vmatpush1.bf16.msra.mxu0 %v2588
    %4819 = vmatprep.subr.bf16.mxu0 %v2597
    %4820 = vmatpush1.bf16.msra.mxu0 %v2596
    %4821 = vmatprep.subr.bf16.mxu0 %v2605
    %4822 = vmatpush1.bf16.msra.mxu0 %v2604
    %4823 = vmatprep.subr.bf16.mxu0 %v2613
    %4824 = vmatpush1.bf16.msra.mxu0 %v2612
    %4825 = vmatprep.subr.bf16.mxu0 %v2621
    %4826 = vmatpush1.bf16.msra.mxu0 %v2620
    %4827 = vmatprep.subr.bf16.mxu0 %v2629
    %4828 = vmatpush1.bf16.msra.mxu0 %v2628
    %4829 = vmatprep.subr.bf16.mxu0 %v2637
    %4830 = vmatpush1.bf16.msra.mxu0 %v2636
    %4831 = vmatprep.subr.bf16.mxu0 %v2645
    %4832 = vmatpush1.bf16.msra.mxu0 %v2644
    %4833 = vmatprep.subr.bf16.mxu0 %v2653
    %4834 = vmatpush1.bf16.msra.mxu0 %v2652
    %4835 = vmatprep.subr.bf16.mxu0 %v2661
    %4836 = vmatpush1.bf16.msra.mxu0 %v2660
    %4837 = vmatprep.subr.bf16.mxu0 %v2669
    %4838 = vmatpush1.bf16.msra.mxu0 %v2668
    %4839 = vmatprep.subr.bf16.mxu0 %v2677
    %4840 = vmatpush1.bf16.msra.mxu0 %v2676
    %4841 = vmatprep.mubr.bf16.mxu0 %v4603
    %4842 = vmatmul.mubr.bf16.gmra.mrb[0].mxu0 %v4602
    %v4843 = vpop.f32.mrb[0].mxu0
    %v4844 = vadd.f32 %v4803, %v4843
    %v4845 = vpop.f32.mrb[0].mxu0
    %v4846 = vadd.f32 %v4805, %v4845
    %v4847 = vpop.f32.mrb[0].mxu0
    %v4848 = vpop.f32.mrb[0].mxu0
    %4849 = vdwg.mxu0
    %4850 = vmatprep.subr.bf16.mxu0 %v2431
    %4851 = vmatpush1.bf16.msra.mxu0 %v2430
    %4852 = vmatprep.subr.bf16.mxu0 %v2439
    %4853 = vmatpush1.bf16.msra.mxu0 %v2438
    %4854 = vmatprep.subr.bf16.mxu0 %v2447
    %4855 = vmatpush1.bf16.msra.mxu0 %v2446
    %4856 = vmatprep.subr.bf16.mxu0 %v2455
    %4857 = vmatpush1.bf16.msra.mxu0 %v2454
    %4858 = vmatprep.subr.bf16.mxu0 %v2463
    %4859 = vmatpush1.bf16.msra.mxu0 %v2462
    %4860 = vmatprep.subr.bf16.mxu0 %v2471
    %4861 = vmatpush1.bf16.msra.mxu0 %v2470
    %4862 = vmatprep.subr.bf16.mxu0 %v2479
    %4863 = vmatpush1.bf16.msra.mxu0 %v2478
    %4864 = vmatprep.subr.bf16.mxu0 %v2487
    %4865 = vmatpush1.bf16.msra.mxu0 %v2486
    %4866 = vmatprep.subr.bf16.mxu0 %v2495
    %4867 = vmatpush1.bf16.msra.mxu0 %v2494
    %4868 = vmatprep.subr.bf16.mxu0 %v2503
    %4869 = vmatpush1.bf16.msra.mxu0 %v2502
    %4870 = vmatprep.subr.bf16.mxu0 %v2511
    %4871 = vmatpush1.bf16.msra.mxu0 %v2510
    %4872 = vmatprep.subr.bf16.mxu0 %v2519
    %4873 = vmatpush1.bf16.msra.mxu0 %v2518
    %4874 = vmatprep.subr.bf16.mxu0 %v2527
    %4875 = vmatpush1.bf16.msra.mxu0 %v2526
    %4876 = vmatprep.subr.bf16.mxu0 %v2535
    %4877 = vmatpush1.bf16.msra.mxu0 %v2534
    %4878 = vmatprep.subr.bf16.mxu0 %v2543
    %4879 = vmatpush1.bf16.msra.mxu0 %v2542
    %4880 = vmatprep.subr.bf16.mxu0 %v2551
    %4881 = vmatpush1.bf16.msra.mxu0 %v2550
    %4882 = vmatprep.mubr.bf16.mxu0 %v4601
    %4883 = vmatmul.mubr.bf16.gmra.mrb[0].mxu0 %v4600
    %v4884 = vpop.f32.mrb[0].mxu0
    %v4885 = vadd.f32 %v1643, %v4884
    %v4886 = vpop.f32.mrb[0].mxu0
    %v4887 = vadd.f32 %v1647, %v4886
    %v4888 = vpop.f32.mrb[0].mxu0
    %v4889 = vpop.f32.mrb[0].mxu0
    %4890 = vdwg.mxu0
    %4891 = vmatprep.subr.bf16.mxu0 %v2559
    %4892 = vmatpush1.bf16.msra.mxu0 %v2558
    %4893 = vmatprep.subr.bf16.mxu0 %v2567
    %4894 = vmatpush1.bf16.msra.mxu0 %v2566
    %4895 = vmatprep.subr.bf16.mxu0 %v2575
    %4896 = vmatpush1.bf16.msra.mxu0 %v2574
    %4897 = vmatprep.subr.bf16.mxu0 %v2583
    %4898 = vmatpush1.bf16.msra.mxu0 %v2582
    %4899 = vmatprep.subr.bf16.mxu0 %v2591
    %4900 = vmatpush1.bf16.msra.mxu0 %v2590
    %4901 = vmatprep.subr.bf16.mxu0 %v2599
    %4902 = vmatpush1.bf16.msra.mxu0 %v2598
    %4903 = vmatprep.subr.bf16.mxu0 %v2607
    %4904 = vmatpush1.bf16.msra.mxu0 %v2606
    %4905 = vmatprep.subr.bf16.mxu0 %v2615
    %4906 = vmatpush1.bf16.msra.mxu0 %v2614
    %4907 = vmatprep.subr.bf16.mxu0 %v2623
    %4908 = vmatpush1.bf16.msra.mxu0 %v2622
    %4909 = vmatprep.subr.bf16.mxu0 %v2631
    %4910 = vmatpush1.bf16.msra.mxu0 %v2630
    %4911 = vmatprep.subr.bf16.mxu0 %v2639
    %4912 = vmatpush1.bf16.msra.mxu0 %v2638
    %4913 = vmatprep.subr.bf16.mxu0 %v2647
    %4914 = vmatpush1.bf16.msra.mxu0 %v2646
    %4915 = vmatprep.subr.bf16.mxu0 %v2655
    %4916 = vmatpush1.bf16.msra.mxu0 %v2654
    %4917 = vmatprep.subr.bf16.mxu0 %v2663
    %4918 = vmatpush1.bf16.msra.mxu0 %v2662
    %4919 = vmatprep.subr.bf16.mxu0 %v2671
    %4920 = vmatpush1.bf16.msra.mxu0 %v2670
    %4921 = vmatprep.subr.bf16.mxu0 %v2679
    %4922 = vmatpush1.bf16.msra.mxu0 %v2678
    %4923 = vmatprep.mubr.bf16.mxu0 %v4603
    %4924 = vmatmul.mubr.bf16.gmra.mrb[0].mxu0 %v4602
    %v4925 = vpop.f32.mrb[0].mxu0
    %v4926 = vadd.f32 %v4885, %v4925
    %v4927 = vpop.f32.mrb[0].mxu0
    %v4928 = vadd.f32 %v4887, %v4927
    %v4929 = vpop.f32.mrb[0].mxu0
    %v4930 = vpop.f32.mrb[0].mxu0
    %4931 = vdwg.mxu0
    %v4932 = vxor.u32 %v4680, 2147483648
    %v4933 = vxor.u32 %v4682, 2147483648
    %v4934 = vmul.f32 %v4932, 1.442695
    %v4935 = vpow.pop %v4934
    %v4936 = vmul.f32 %v4933, 1.442695
    %v4937 = vpow.pop %v4936
    %v4938 = vadd.f32 %v4935, 1.0
    %v4939 = vadd.f32 %v4937, 1.0
    %v4940 = vrcp.pop %v4938
    %v4941 = vmul.f32 1.0, %v4940
    %v4942 = vrcp.pop %v4939
    %v4943 = vmul.f32 1.0, %v4942
    %v4944 = vxor.u32 %v4762, 2147483648
    %v4945 = vxor.u32 %v4764, 2147483648
    %v4946 = vmul.f32 %v4944, 1.442695
    %v4947 = vpow.pop %v4946
    %v4948 = vmul.f32 %v4945, 1.442695
    %v4949 = vpow.pop %v4948
    %v4950 = vadd.f32 %v4947, 1.0
    %v4951 = vadd.f32 %v4949, 1.0
    %v4952 = vrcp.pop %v4950
    %v4953 = vmul.f32 1.0, %v4952
    %v4954 = vrcp.pop %v4951
    %v4955 = vmul.f32 1.0, %v4954
    %v4956 = vmul.f32 %v4941, %v4926
    %v4957 = vmul.f32 %v4943, %v4928
    %v4958 = vadd.f32 %v4844, %v4956
    %v4959 = vadd.f32 %v4846, %v4957
    %v4960 = vtanh.pop %v4958
    %v4961 = vtanh.pop %v4959
    %v4962 = vsub.f32 1.0, %v4953
    %v4963 = vsub.f32 1.0, %v4955
    %v4964 = vmul.f32 %v4962, %v4960
    %v4965 = vmul.f32 %v4963, %v4961
    %v4966 = vmul.f32 %v4953, %v4414
    %v4967 = vmul.f32 %v4955, %v4415
    %v4968 = vadd.f32 %v4964, %v4966
    %v4969 = vadd.f32 %v4965, %v4967
    %v4970 = vsel %vm4597, %v4968, %v4414
    %v4971 = vsel %vm4597, %v4969, %v4415
    %s4972 = smul.u32 4, 6
    %s4973 = smul.addr %s4972, 8
    %s4974 = scalar_lea.vmem [#allocation2], %s4973
    %v4975 = vld [vmem:[%s4974] sm:$0xff]
    %v4976 = vld [vmem:[%s4974 + $0x8] sm:$0xff]
    %v4977 = vld [vmem:[%s4974 + $0x10] sm:$0xff]
    %v4978 = vld [vmem:[%s4974 + $0x18] sm:$0xff]
    %v4979 = vld [vmem:[%s4974 + $0x20] sm:$0xff]
    %v4980 = vld [vmem:[%s4974 + $0x28] sm:$0xff]
    %s4981 = scalar_lea.vmem %s1, 32
    %v4982 = vld [vmem:[%s4981] sm:$0xff]
    %4983 = vmatprep.subr.bf16.mxu0 %v991
    %4984 = vmatpush1.bf16.msra.mxu0 %v990
    %4985 = vmatprep.subr.bf16.mxu0 %v997
    %4986 = vmatpush1.bf16.msra.mxu0 %v996
    %4987 = vmatprep.subr.bf16.mxu0 %v1003
    %4988 = vmatpush1.bf16.msra.mxu0 %v1002
    %4989 = vmatprep.subr.bf16.mxu0 %v1009
    %4990 = vmatpush1.bf16.msra.mxu0 %v1008
    %4991 = vmatprep.subr.bf16.mxu0 %v1015
    %4992 = vmatpush1.bf16.msra.mxu0 %v1014
    %4993 = vmatprep.subr.bf16.mxu0 %v1021
    %4994 = vmatpush1.bf16.msra.mxu0 %v1020
    %4995 = vmatprep.subr.bf16.mxu0 %v1027
    %4996 = vmatpush1.bf16.msra.mxu0 %v1026
    %4997 = vmatprep.subr.bf16.mxu0 %v1033
    %4998 = vmatpush1.bf16.msra.mxu0 %v1032
    %4999 = vmatprep.subr.bf16.mxu0 %v1039
    %5000 = vmatpush1.bf16.msra.mxu0 %v1038
    %5001 = vmatprep.subr.bf16.mxu0 %v1045
    %5002 = vmatpush1.bf16.msra.mxu0 %v1044
    %5003 = vmatprep.subr.bf16.mxu0 %v1051
    %5004 = vmatpush1.bf16.msra.mxu0 %v1050
    %5005 = vmatprep.subr.bf16.mxu0 %v1057
    %5006 = vmatpush1.bf16.msra.mxu0 %v1056
    %5007 = vmatprep.subr.bf16.mxu0 %v1063
    %5008 = vmatpush1.bf16.msra.mxu0 %v1062
    %5009 = vmatprep.subr.bf16.mxu0 %v1069
    %5010 = vmatpush1.bf16.msra.mxu0 %v1068
    %5011 = vmatprep.subr.bf16.mxu0 %v1075
    %5012 = vmatpush1.bf16.msra.mxu0 %v1074
    %5013 = vmatprep.subr.bf16.mxu0 %v1081
    %5014 = vmatpush1.bf16.msra.mxu0 %v1080
    %5015 = vmatprep.mubr.bf16.mxu0 %v4601
    %5016 = vmatmul.mubr.bf16.gmra.mrb[0].mxu0 %v4600
    %v5017 = vpop.f32.mrb[0].mxu0
    %v5018 = vadd.f32 %v675, %v5017
    %v5019 = vpop.f32.mrb[0].mxu0
    %v5020 = vadd.f32 %v679, %v5019
    %v5021 = vpop.f32.mrb[0].mxu0
    %v5022 = vpop.f32.mrb[0].mxu0
    %5023 = vdwg.mxu0
    %5024 = vmatprep.subr.bf16.mxu0 %v993
    %5025 = vmatpush1.bf16.msra.mxu0 %v992
    %5026 = vmatprep.subr.bf16.mxu0 %v999
    %5027 = vmatpush1.bf16.msra.mxu0 %v998
    %5028 = vmatprep.subr.bf16.mxu0 %v1005
    %5029 = vmatpush1.bf16.msra.mxu0 %v1004
    %5030 = vmatprep.subr.bf16.mxu0 %v1011
    %5031 = vmatpush1.bf16.msra.mxu0 %v1010
    %5032 = vmatprep.subr.bf16.mxu0 %v1017
    %5033 = vmatpush1.bf16.msra.mxu0 %v1016
    %5034 = vmatprep.subr.bf16.mxu0 %v1023
    %5035 = vmatpush1.bf16.msra.mxu0 %v1022
    %5036 = vmatprep.subr.bf16.mxu0 %v1029
    %5037 = vmatpush1.bf16.msra.mxu0 %v1028
    %5038 = vmatprep.subr.bf16.mxu0 %v1035
    %5039 = vmatpush1.bf16.msra.mxu0 %v1034
    %5040 = vmatprep.subr.bf16.mxu0 %v1041
    %5041 = vmatpush1.bf16.msra.mxu0 %v1040
    %5042 = vmatprep.subr.bf16.mxu0 %v1047
    %5043 = vmatpush1.bf16.msra.mxu0 %v1046
    %5044 = vmatprep.subr.bf16.mxu0 %v1053
    %5045 = vmatpush1.bf16.msra.mxu0 %v1052
    %5046 = vmatprep.subr.bf16.mxu0 %v1059
    %5047 = vmatpush1.bf16.msra.mxu0 %v1058
    %5048 = vmatprep.subr.bf16.mxu0 %v1065
    %5049 = vmatpush1.bf16.msra.mxu0 %v1064
    %5050 = vmatprep.subr.bf16.mxu0 %v1071
    %5051 = vmatpush1.bf16.msra.mxu0 %v1070
    %5052 = vmatprep.subr.bf16.mxu0 %v1077
    %5053 = vmatpush1.bf16.msra.mxu0 %v1076
    %5054 = vmatprep.subr.bf16.mxu0 %v1083
    %5055 = vmatpush1.bf16.msra.mxu0 %v1082
    %5056 = vmatprep.mubr.bf16.mxu0 %v4601
    %5057 = vmatmul.mubr.bf16.gmra.mrb[0].mxu0 %v4600
    %v5058 = vpop.f32.mrb[0].mxu0
    %v5059 = vadd.f32 %v683, %v5058
    %v5060 = vpop.f32.mrb[0].mxu0
    %v5061 = vadd.f32 %v687, %v5060
    %v5062 = vpop.f32.mrb[0].mxu0
    %v5063 = vpop.f32.mrb[0].mxu0
    %5064 = vdwg.mxu0
    %5065 = vmatprep.subr.bf16.mxu0 %v995
    %5066 = vmatpush1.bf16.msra.mxu0 %v994
    %5067 = vmatprep.subr.bf16.mxu0 %v1001
    %5068 = vmatpush1.bf16.msra.mxu0 %v1000
    %5069 = vmatprep.subr.bf16.mxu0 %v1007
    %5070 = vmatpush1.bf16.msra.mxu0 %v1006
    %5071 = vmatprep.subr.bf16.mxu0 %v1013
    %5072 = vmatpush1.bf16.msra.mxu0 %v1012
    %5073 = vmatprep.subr.bf16.mxu0 %v1019
    %5074 = vmatpush1.bf16.msra.mxu0 %v1018
    %5075 = vmatprep.subr.bf16.mxu0 %v1025
    %5076 = vmatpush1.bf16.msra.mxu0 %v1024
    %5077 = vmatprep.subr.bf16.mxu0 %v1031
    %5078 = vmatpush1.bf16.msra.mxu0 %v1030
    %5079 = vmatprep.subr.bf16.mxu0 %v1037
    %5080 = vmatpush1.bf16.msra.mxu0 %v1036
    %5081 = vmatprep.subr.bf16.mxu0 %v1043
    %5082 = vmatpush1.bf16.msra.mxu0 %v1042
    %5083 = vmatprep.subr.bf16.mxu0 %v1049
    %5084 = vmatpush1.bf16.msra.mxu0 %v1048
    %5085 = vmatprep.subr.bf16.mxu0 %v1055
    %5086 = vmatpush1.bf16.msra.mxu0 %v1054
    %5087 = vmatprep.subr.bf16.mxu0 %v1061
    %5088 = vmatpush1.bf16.msra.mxu0 %v1060
    %5089 = vmatprep.subr.bf16.mxu0 %v1067
    %5090 = vmatpush1.bf16.msra.mxu0 %v1066
    %5091 = vmatprep.subr.bf16.mxu0 %v1073
    %5092 = vmatpush1.bf16.msra.mxu0 %v1072
    %5093 = vmatprep.subr.bf16.mxu0 %v1079
    %5094 = vmatpush1.bf16.msra.mxu0 %v1078
    %5095 = vmatprep.subr.bf16.mxu0 %v1085
    %5096 = vmatpush1.bf16.msra.mxu0 %v1084
    %5097 = vmatprep.mubr.bf16.mxu0 %v4601
    %5098 = vmatmul.mubr.bf16.gmra.mrb[0].mxu0 %v4600
    %v5099 = vpop.f32.mrb[0].mxu0
    %v5100 = vadd.f32 %v691, %v5099
    %v5101 = vpop.f32.mrb[0].mxu0
    %v5102 = vadd.f32 %v695, %v5101
    %v5103 = vpop.f32.mrb[0].mxu0
    %v5104 = vpop.f32.mrb[0].mxu0
    %5105 = vdwg.mxu0
    %v5106 = vadd.f32 %v4975, %v5018
    %v5107 = vadd.f32 %v4976, %v5020
    %v5108 = vxor.u32 %v5106, 2147483648
    %v5109 = vxor.u32 %v5107, 2147483648
    %v5110 = vmul.f32 %v5108, 1.442695
    %v5111 = vpow.pop %v5110
    %v5112 = vmul.f32 %v5109, 1.442695
    %v5113 = vpow.pop %v5112
    %v5114 = vadd.f32 %v5111, 1.0
    %v5115 = vadd.f32 %v5113, 1.0
    %v5116 = vrcp.pop %v5114
    %v5117 = vmul.f32 1.0, %v5116
    %v5118 = vrcp.pop %v5115
    %v5119 = vmul.f32 1.0, %v5118
    %v5120 = vadd.f32 %v4977, %v5059
    %v5121 = vadd.f32 %v4978, %v5061
    %v5122 = vxor.u32 %v5120, 2147483648
    %v5123 = vxor.u32 %v5121, 2147483648
    %v5124 = vmul.f32 %v5122, 1.442695
    %v5125 = vpow.pop %v5124
    %v5126 = vmul.f32 %v5123, 1.442695
    %v5127 = vpow.pop %v5126
    %v5128 = vadd.f32 %v5125, 1.0
    %v5129 = vadd.f32 %v5127, 1.0
    %v5130 = vrcp.pop %v5128
    %v5131 = vmul.f32 1.0, %v5130
    %v5132 = vrcp.pop %v5129
    %v5133 = vmul.f32 1.0, %v5132
    %v5134 = vmul.f32 %v5117, %v5100
    %v5135 = vmul.f32 %v5119, %v5102
    %v5136 = vadd.f32 %v4979, %v5134
    %v5137 = vadd.f32 %v4980, %v5135
    %v5138 = vtanh.pop %v5136
    %v5139 = vtanh.pop %v5137
    %v5140 = vsub.f32 1.0, %v5131
    %v5141 = vsub.f32 1.0, %v5133
    %v5142 = vmul.f32 %v5140, %v5138
    %v5143 = vmul.f32 %v5141, %v5139
    %v5144 = vmul.f32 %v5131, %v4598
    %v5145 = vmul.f32 %v5133, %v4599
    %v5146 = vadd.f32 %v5142, %v5144
    %v5147 = vadd.f32 %v5143, %v5145
    %vm5148 = vcmp.gt.f32.partialorder %v4982, 0.0
    %v5149 = vsel %vm5148, 1, 0
    %5150 = vset.pattern.permute.xlu0 0
    %5151 = vperm.xlu0 %5150, %v5149
    %v5152 = vpop.permute.xlu0 %5151
    %vm5153 = vcmp.eq.s32.totalorder %v5152, 1
    %v5154 = vsel %vm5153, %v5146, %v4598
    %v5155 = vsel %vm5153, %v5147, %v4599
    %v5156 = vpack.c.bf16 %v5154, %v5154
    %v5157 = vpack.c.bf16 %v5155, %v5155
    %v5158 = vpack.c.bf16 %v4970, %v4970
    %v5159 = vpack.c.bf16 %v4971, %v4971
    %5160 = vmatprep.subr.bf16.mxu0 %v2425
    %5161 = vmatpush1.bf16.msra.mxu0 %v2424
    %5162 = vmatprep.subr.bf16.mxu0 %v2433
    %5163 = vmatpush1.bf16.msra.mxu0 %v2432
    %5164 = vmatprep.subr.bf16.mxu0 %v2441
    %5165 = vmatpush1.bf16.msra.mxu0 %v2440
    %5166 = vmatprep.subr.bf16.mxu0 %v2449
    %5167 = vmatpush1.bf16.msra.mxu0 %v2448
    %5168 = vmatprep.subr.bf16.mxu0 %v2457
    %5169 = vmatpush1.bf16.msra.mxu0 %v2456
    %5170 = vmatprep.subr.bf16.mxu0 %v2465
    %5171 = vmatpush1.bf16.msra.mxu0 %v2464
    %5172 = vmatprep.subr.bf16.mxu0 %v2473
    %5173 = vmatpush1.bf16.msra.mxu0 %v2472
    %5174 = vmatprep.subr.bf16.mxu0 %v2481
    %5175 = vmatpush1.bf16.msra.mxu0 %v2480
    %5176 = vmatprep.subr.bf16.mxu0 %v2489
    %5177 = vmatpush1.bf16.msra.mxu0 %v2488
    %5178 = vmatprep.subr.bf16.mxu0 %v2497
    %5179 = vmatpush1.bf16.msra.mxu0 %v2496
    %5180 = vmatprep.subr.bf16.mxu0 %v2505
    %5181 = vmatpush1.bf16.msra.mxu0 %v2504
    %5182 = vmatprep.subr.bf16.mxu0 %v2513
    %5183 = vmatpush1.bf16.msra.mxu0 %v2512
    %5184 = vmatprep.subr.bf16.mxu0 %v2521
    %5185 = vmatpush1.bf16.msra.mxu0 %v2520
    %5186 = vmatprep.subr.bf16.mxu0 %v2529
    %5187 = vmatpush1.bf16.msra.mxu0 %v2528
    %5188 = vmatprep.subr.bf16.mxu0 %v2537
    %5189 = vmatpush1.bf16.msra.mxu0 %v2536
    %5190 = vmatprep.subr.bf16.mxu0 %v2545
    %5191 = vmatpush1.bf16.msra.mxu0 %v2544
    %5192 = vmatprep.mubr.bf16.mxu0 %v5157
    %5193 = vmatmul.mubr.bf16.gmra.mrb[0].mxu0 %v5156
    %v5194 = vpop.f32.mrb[0].mxu0
    %v5195 = vadd.f32 %v1619, %v5194
    %v5196 = vpop.f32.mrb[0].mxu0
    %v5197 = vadd.f32 %v1623, %v5196
    %v5198 = vpop.f32.mrb[0].mxu0
    %v5199 = vpop.f32.mrb[0].mxu0
    %5200 = vdwg.mxu0
    %5201 = vmatprep.subr.bf16.mxu0 %v2553
    %5202 = vmatpush1.bf16.msra.mxu0 %v2552
    %5203 = vmatprep.subr.bf16.mxu0 %v2561
    %5204 = vmatpush1.bf16.msra.mxu0 %v2560
    %5205 = vmatprep.subr.bf16.mxu0 %v2569
    %5206 = vmatpush1.bf16.msra.mxu0 %v2568
    %5207 = vmatprep.subr.bf16.mxu0 %v2577
    %5208 = vmatpush1.bf16.msra.mxu0 %v2576
    %5209 = vmatprep.subr.bf16.mxu0 %v2585
    %5210 = vmatpush1.bf16.msra.mxu0 %v2584
    %5211 = vmatprep.subr.bf16.mxu0 %v2593
    %5212 = vmatpush1.bf16.msra.mxu0 %v2592
    %5213 = vmatprep.subr.bf16.mxu0 %v2601
    %5214 = vmatpush1.bf16.msra.mxu0 %v2600
    %5215 = vmatprep.subr.bf16.mxu0 %v2609
    %5216 = vmatpush1.bf16.msra.mxu0 %v2608
    %5217 = vmatprep.subr.bf16.mxu0 %v2617
    %5218 = vmatpush1.bf16.msra.mxu0 %v2616
    %5219 = vmatprep.subr.bf16.mxu0 %v2625
    %5220 = vmatpush1.bf16.msra.mxu0 %v2624
    %5221 = vmatprep.subr.bf16.mxu0 %v2633
    %5222 = vmatpush1.bf16.msra.mxu0 %v2632
    %5223 = vmatprep.subr.bf16.mxu0 %v2641
    %5224 = vmatpush1.bf16.msra.mxu0 %v2640
    %5225 = vmatprep.subr.bf16.mxu0 %v2649
    %5226 = vmatpush1.bf16.msra.mxu0 %v2648
    %5227 = vmatprep.subr.bf16.mxu0 %v2657
    %5228 = vmatpush1.bf16.msra.mxu0 %v2656
    %5229 = vmatprep.subr.bf16.mxu0 %v2665
    %5230 = vmatpush1.bf16.msra.mxu0 %v2664
    %5231 = vmatprep.subr.bf16.mxu0 %v2673
    %5232 = vmatpush1.bf16.msra.mxu0 %v2672
    %5233 = vmatprep.mubr.bf16.mxu0 %v5159
    %5234 = vmatmul.mubr.bf16.gmra.mrb[0].mxu0 %v5158
    %v5235 = vpop.f32.mrb[0].mxu0
    %v5236 = vadd.f32 %v5195, %v5235
    %v5237 = vpop.f32.mrb[0].mxu0
    %v5238 = vadd.f32 %v5197, %v5237
    %v5239 = vpop.f32.mrb[0].mxu0
    %v5240 = vpop.f32.mrb[0].mxu0
    %5241 = vdwg.mxu0
    %5242 = vmatprep.subr.bf16.mxu0 %v2427
    %5243 = vmatpush1.bf16.msra.mxu0 %v2426
    %5244 = vmatprep.subr.bf16.mxu0 %v2435
    %5245 = vmatpush1.bf16.msra.mxu0 %v2434
    %5246 = vmatprep.subr.bf16.mxu0 %v2443
    %5247 = vmatpush1.bf16.msra.mxu0 %v2442
    %5248 = vmatprep.subr.bf16.mxu0 %v2451
    %5249 = vmatpush1.bf16.msra.mxu0 %v2450
    %5250 = vmatprep.subr.bf16.mxu0 %v2459
    %5251 = vmatpush1.bf16.msra.mxu0 %v2458
    %5252 = vmatprep.subr.bf16.mxu0 %v2467
    %5253 = vmatpush1.bf16.msra.mxu0 %v2466
    %5254 = vmatprep.subr.bf16.mxu0 %v2475
    %5255 = vmatpush1.bf16.msra.mxu0 %v2474
    %5256 = vmatprep.subr.bf16.mxu0 %v2483
    %5257 = vmatpush1.bf16.msra.mxu0 %v2482
    %5258 = vmatprep.subr.bf16.mxu0 %v2491
    %5259 = vmatpush1.bf16.msra.mxu0 %v2490
    %5260 = vmatprep.subr.bf16.mxu0 %v2499
    %5261 = vmatpush1.bf16.msra.mxu0 %v2498
    %5262 = vmatprep.subr.bf16.mxu0 %v2507
    %5263 = vmatpush1.bf16.msra.mxu0 %v2506
    %5264 = vmatprep.subr.bf16.mxu0 %v2515
    %5265 = vmatpush1.bf16.msra.mxu0 %v2514
    %5266 = vmatprep.subr.bf16.mxu0 %v2523
    %5267 = vmatpush1.bf16.msra.mxu0 %v2522
    %5268 = vmatprep.subr.bf16.mxu0 %v2531
    %5269 = vmatpush1.bf16.msra.mxu0 %v2530
    %5270 = vmatprep.subr.bf16.mxu0 %v2539
    %5271 = vmatpush1.bf16.msra.mxu0 %v2538
    %5272 = vmatprep.subr.bf16.mxu0 %v2547
    %5273 = vmatpush1.bf16.msra.mxu0 %v2546
    %5274 = vmatprep.mubr.bf16.mxu0 %v5157
    %5275 = vmatmul.mubr.bf16.gmra.mrb[0].mxu0 %v5156
    %v5276 = vpop.f32.mrb[0].mxu0
    %v5277 = vadd.f32 %v1627, %v5276
    %v5278 = vpop.f32.mrb[0].mxu0
    %v5279 = vadd.f32 %v1631, %v5278
    %v5280 = vpop.f32.mrb[0].mxu0
    %v5281 = vpop.f32.mrb[0].mxu0
    %5282 = vdwg.mxu0
    %5283 = vmatprep.subr.bf16.mxu0 %v2555
    %5284 = vmatpush1.bf16.msra.mxu0 %v2554
    %5285 = vmatprep.subr.bf16.mxu0 %v2563
    %5286 = vmatpush1.bf16.msra.mxu0 %v2562
    %5287 = vmatprep.subr.bf16.mxu0 %v2571
    %5288 = vmatpush1.bf16.msra.mxu0 %v2570
    %5289 = vmatprep.subr.bf16.mxu0 %v2579
    %5290 = vmatpush1.bf16.msra.mxu0 %v2578
    %5291 = vmatprep.subr.bf16.mxu0 %v2587
    %5292 = vmatpush1.bf16.msra.mxu0 %v2586
    %5293 = vmatprep.subr.bf16.mxu0 %v2595
    %5294 = vmatpush1.bf16.msra.mxu0 %v2594
    %5295 = vmatprep.subr.bf16.mxu0 %v2603
    %5296 = vmatpush1.bf16.msra.mxu0 %v2602
    %5297 = vmatprep.subr.bf16.mxu0 %v2611
    %5298 = vmatpush1.bf16.msra.mxu0 %v2610
    %5299 = vmatprep.subr.bf16.mxu0 %v2619
    %5300 = vmatpush1.bf16.msra.mxu0 %v2618
    %5301 = vmatprep.subr.bf16.mxu0 %v2627
    %5302 = vmatpush1.bf16.msra.mxu0 %v2626
    %5303 = vmatprep.subr.bf16.mxu0 %v2635
    %5304 = vmatpush1.bf16.msra.mxu0 %v2634
    %5305 = vmatprep.subr.bf16.mxu0 %v2643
    %5306 = vmatpush1.bf16.msra.mxu0 %v2642
    %5307 = vmatprep.subr.bf16.mxu0 %v2651
    %5308 = vmatpush1.bf16.msra.mxu0 %v2650
    %5309 = vmatprep.subr.bf16.mxu0 %v2659
    %5310 = vmatpush1.bf16.msra.mxu0 %v2658
    %5311 = vmatprep.subr.bf16.mxu0 %v2667
    %5312 = vmatpush1.bf16.msra.mxu0 %v2666
    %5313 = vmatprep.subr.bf16.mxu0 %v2675
    %5314 = vmatpush1.bf16.msra.mxu0 %v2674
    %5315 = vmatprep.mubr.bf16.mxu0 %v5159
    %5316 = vmatmul.mubr.bf16.gmra.mrb[0].mxu0 %v5158
    %v5317 = vpop.f32.mrb[0].mxu0
    %v5318 = vadd.f32 %v5277, %v5317
    %v5319 = vpop.f32.mrb[0].mxu0
    %v5320 = vadd.f32 %v5279, %v5319
    %v5321 = vpop.f32.mrb[0].mxu0
    %v5322 = vpop.f32.mrb[0].mxu0
    %5323 = vdwg.mxu0
    %5324 = vmatprep.subr.bf16.mxu0 %v2429
    %5325 = vmatpush1.bf16.msra.mxu0 %v2428
    %5326 = vmatprep.subr.bf16.mxu0 %v2437
    %5327 = vmatpush1.bf16.msra.mxu0 %v2436
    %5328 = vmatprep.subr.bf16.mxu0 %v2445
    %5329 = vmatpush1.bf16.msra.mxu0 %v2444
    %5330 = vmatprep.subr.bf16.mxu0 %v2453
    %5331 = vmatpush1.bf16.msra.mxu0 %v2452
    %5332 = vmatprep.subr.bf16.mxu0 %v2461
    %5333 = vmatpush1.bf16.msra.mxu0 %v2460
    %5334 = vmatprep.subr.bf16.mxu0 %v2469
    %5335 = vmatpush1.bf16.msra.mxu0 %v2468
    %5336 = vmatprep.subr.bf16.mxu0 %v2477
    %5337 = vmatpush1.bf16.msra.mxu0 %v2476
    %5338 = vmatprep.subr.bf16.mxu0 %v2485
    %5339 = vmatpush1.bf16.msra.mxu0 %v2484
    %5340 = vmatprep.subr.bf16.mxu0 %v2493
    %5341 = vmatpush1.bf16.msra.mxu0 %v2492
    %5342 = vmatprep.subr.bf16.mxu0 %v2501
    %5343 = vmatpush1.bf16.msra.mxu0 %v2500
    %5344 = vmatprep.subr.bf16.mxu0 %v2509
    %5345 = vmatpush1.bf16.msra.mxu0 %v2508
    %5346 = vmatprep.subr.bf16.mxu0 %v2517
    %5347 = vmatpush1.bf16.msra.mxu0 %v2516
    %5348 = vmatprep.subr.bf16.mxu0 %v2525
    %5349 = vmatpush1.bf16.msra.mxu0 %v2524
    %5350 = vmatprep.subr.bf16.mxu0 %v2533
    %5351 = vmatpush1.bf16.msra.mxu0 %v2532
    %5352 = vmatprep.subr.bf16.mxu0 %v2541
    %5353 = vmatpush1.bf16.msra.mxu0 %v2540
    %5354 = vmatprep.subr.bf16.mxu0 %v2549
    %5355 = vmatpush1.bf16.msra.mxu0 %v2548
    %5356 = vmatprep.mubr.bf16.mxu0 %v5157
    %5357 = vmatmul.mubr.bf16.gmra.mrb[0].mxu0 %v5156
    %v5358 = vpop.f32.mrb[0].mxu0
    %v5359 = vadd.f32 %v1635, %v5358
    %v5360 = vpop.f32.mrb[0].mxu0
    %v5361 = vadd.f32 %v1639, %v5360
    %v5362 = vpop.f32.mrb[0].mxu0
    %v5363 = vpop.f32.mrb[0].mxu0
    %5364 = vdwg.mxu0
    %5365 = vmatprep.subr.bf16.mxu0 %v2557
    %5366 = vmatpush1.bf16.msra.mxu0 %v2556
    %5367 = vmatprep.subr.bf16.mxu0 %v2565
    %5368 = vmatpush1.bf16.msra.mxu0 %v2564
    %5369 = vmatprep.subr.bf16.mxu0 %v2573
    %5370 = vmatpush1.bf16.msra.mxu0 %v2572
    %5371 = vmatprep.subr.bf16.mxu0 %v2581
    %5372 = vmatpush1.bf16.msra.mxu0 %v2580
    %5373 = vmatprep.subr.bf16.mxu0 %v2589
    %5374 = vmatpush1.bf16.msra.mxu0 %v2588
    %5375 = vmatprep.subr.bf16.mxu0 %v2597
    %5376 = vmatpush1.bf16.msra.mxu0 %v2596
    %5377 = vmatprep.subr.bf16.mxu0 %v2605
    %5378 = vmatpush1.bf16.msra.mxu0 %v2604
    %5379 = vmatprep.subr.bf16.mxu0 %v2613
    %5380 = vmatpush1.bf16.msra.mxu0 %v2612
    %5381 = vmatprep.subr.bf16.mxu0 %v2621
    %5382 = vmatpush1.bf16.msra.mxu0 %v2620
    %5383 = vmatprep.subr.bf16.mxu0 %v2629
    %5384 = vmatpush1.bf16.msra.mxu0 %v2628
    %5385 = vmatprep.subr.bf16.mxu0 %v2637
    %5386 = vmatpush1.bf16.msra.mxu0 %v2636
    %5387 = vmatprep.subr.bf16.mxu0 %v2645
    %5388 = vmatpush1.bf16.msra.mxu0 %v2644
    %5389 = vmatprep.subr.bf16.mxu0 %v2653
    %5390 = vmatpush1.bf16.msra.mxu0 %v2652
    %5391 = vmatprep.subr.bf16.mxu0 %v2661
    %5392 = vmatpush1.bf16.msra.mxu0 %v2660
    %5393 = vmatprep.subr.bf16.mxu0 %v2669
    %5394 = vmatpush1.bf16.msra.mxu0 %v2668
    %5395 = vmatprep.subr.bf16.mxu0 %v2677
    %5396 = vmatpush1.bf16.msra.mxu0 %v2676
    %5397 = vmatprep.mubr.bf16.mxu0 %v5159
    %5398 = vmatmul.mubr.bf16.gmra.mrb[0].mxu0 %v5158
    %v5399 = vpop.f32.mrb[0].mxu0
    %v5400 = vadd.f32 %v5359, %v5399
    %v5401 = vpop.f32.mrb[0].mxu0
    %v5402 = vadd.f32 %v5361, %v5401
    %v5403 = vpop.f32.mrb[0].mxu0
    %v5404 = vpop.f32.mrb[0].mxu0
    %5405 = vdwg.mxu0
    %5406 = vmatprep.subr.bf16.mxu0 %v2431
    %5407 = vmatpush1.bf16.msra.mxu0 %v2430
    %5408 = vmatprep.subr.bf16.mxu0 %v2439
    %5409 = vmatpush1.bf16.msra.mxu0 %v2438
    %5410 = vmatprep.subr.bf16.mxu0 %v2447
    %5411 = vmatpush1.bf16.msra.mxu0 %v2446
    %5412 = vmatprep.subr.bf16.mxu0 %v2455
    %5413 = vmatpush1.bf16.msra.mxu0 %v2454
    %5414 = vmatprep.subr.bf16.mxu0 %v2463
    %5415 = vmatpush1.bf16.msra.mxu0 %v2462
    %5416 = vmatprep.subr.bf16.mxu0 %v2471
    %5417 = vmatpush1.bf16.msra.mxu0 %v2470
    %5418 = vmatprep.subr.bf16.mxu0 %v2479
    %5419 = vmatpush1.bf16.msra.mxu0 %v2478
    %5420 = vmatprep.subr.bf16.mxu0 %v2487
    %5421 = vmatpush1.bf16.msra.mxu0 %v2486
    %5422 = vmatprep.subr.bf16.mxu0 %v2495
    %5423 = vmatpush1.bf16.msra.mxu0 %v2494
    %5424 = vmatprep.subr.bf16.mxu0 %v2503
    %5425 = vmatpush1.bf16.msra.mxu0 %v2502
    %5426 = vmatprep.subr.bf16.mxu0 %v2511
    %5427 = vmatpush1.bf16.msra.mxu0 %v2510
    %5428 = vmatprep.subr.bf16.mxu0 %v2519
    %5429 = vmatpush1.bf16.msra.mxu0 %v2518
    %5430 = vmatprep.subr.bf16.mxu0 %v2527
    %5431 = vmatpush1.bf16.msra.mxu0 %v2526
    %5432 = vmatprep.subr.bf16.mxu0 %v2535
    %5433 = vmatpush1.bf16.msra.mxu0 %v2534
    %5434 = vmatprep.subr.bf16.mxu0 %v2543
    %5435 = vmatpush1.bf16.msra.mxu0 %v2542
    %5436 = vmatprep.subr.bf16.mxu0 %v2551
    %5437 = vmatpush1.bf16.msra.mxu0 %v2550
    %5438 = vmatprep.mubr.bf16.mxu0 %v5157
    %5439 = vmatmul.mubr.bf16.gmra.mrb[0].mxu0 %v5156
    %v5440 = vpop.f32.mrb[0].mxu0
    %v5441 = vadd.f32 %v1643, %v5440
    %v5442 = vpop.f32.mrb[0].mxu0
    %v5443 = vadd.f32 %v1647, %v5442
    %v5444 = vpop.f32.mrb[0].mxu0
    %v5445 = vpop.f32.mrb[0].mxu0
    %5446 = vdwg.mxu0
    %5447 = vmatprep.subr.bf16.mxu0 %v2559
    %5448 = vmatpush1.bf16.msra.mxu0 %v2558
    %5449 = vmatprep.subr.bf16.mxu0 %v2567
    %5450 = vmatpush1.bf16.msra.mxu0 %v2566
    %5451 = vmatprep.subr.bf16.mxu0 %v2575
    %5452 = vmatpush1.bf16.msra.mxu0 %v2574
    %5453 = vmatprep.subr.bf16.mxu0 %v2583
    %5454 = vmatpush1.bf16.msra.mxu0 %v2582
    %5455 = vmatprep.subr.bf16.mxu0 %v2591
    %5456 = vmatpush1.bf16.msra.mxu0 %v2590
    %5457 = vmatprep.subr.bf16.mxu0 %v2599
    %5458 = vmatpush1.bf16.msra.mxu0 %v2598
    %5459 = vmatprep.subr.bf16.mxu0 %v2607
    %5460 = vmatpush1.bf16.msra.mxu0 %v2606
    %5461 = vmatprep.subr.bf16.mxu0 %v2615
    %5462 = vmatpush1.bf16.msra.mxu0 %v2614
    %5463 = vmatprep.subr.bf16.mxu0 %v2623
    %5464 = vmatpush1.bf16.msra.mxu0 %v2622
    %5465 = vmatprep.subr.bf16.mxu0 %v2631
    %5466 = vmatpush1.bf16.msra.mxu0 %v2630
    %5467 = vmatprep.subr.bf16.mxu0 %v2639
    %5468 = vmatpush1.bf16.msra.mxu0 %v2638
    %5469 = vmatprep.subr.bf16.mxu0 %v2647
    %5470 = vmatpush1.bf16.msra.mxu0 %v2646
    %5471 = vmatprep.subr.bf16.mxu0 %v2655
    %5472 = vmatpush1.bf16.msra.mxu0 %v2654
    %5473 = vmatprep.subr.bf16.mxu0 %v2663
    %5474 = vmatpush1.bf16.msra.mxu0 %v2662
    %5475 = vmatprep.subr.bf16.mxu0 %v2671
    %5476 = vmatpush1.bf16.msra.mxu0 %v2670
    %5477 = vmatprep.subr.bf16.mxu0 %v2679
    %5478 = vmatpush1.bf16.msra.mxu0 %v2678
    %5479 = vmatprep.mubr.bf16.mxu0 %v5159
    %5480 = vmatmul.mubr.bf16.gmra.mrb[0].mxu0 %v5158
    %v5481 = vpop.f32.mrb[0].mxu0
    %v5482 = vadd.f32 %v5441, %v5481
    %v5483 = vpop.f32.mrb[0].mxu0
    %v5484 = vadd.f32 %v5443, %v5483
    %v5485 = vpop.f32.mrb[0].mxu0
    %v5486 = vpop.f32.mrb[0].mxu0
    %5487 = vdwg.mxu0
    %v5488 = vxor.u32 %v5236, 2147483648
    %v5489 = vxor.u32 %v5238, 2147483648
    %v5490 = vmul.f32 %v5488, 1.442695
    %v5491 = vpow.pop %v5490
    %v5492 = vmul.f32 %v5489, 1.442695
    %v5493 = vpow.pop %v5492
    %v5494 = vadd.f32 %v5491, 1.0
    %v5495 = vadd.f32 %v5493, 1.0
    %v5496 = vrcp.pop %v5494
    %v5497 = vmul.f32 1.0, %v5496
    %v5498 = vrcp.pop %v5495
    %v5499 = vmul.f32 1.0, %v5498
    %v5500 = vxor.u32 %v5318, 2147483648
    %v5501 = vxor.u32 %v5320, 2147483648
    %v5502 = vmul.f32 %v5500, 1.442695
    %v5503 = vpow.pop %v5502
    %v5504 = vmul.f32 %v5501, 1.442695
    %v5505 = vpow.pop %v5504
    %v5506 = vadd.f32 %v5503, 1.0
    %v5507 = vadd.f32 %v5505, 1.0
    %v5508 = vrcp.pop %v5506
    %v5509 = vmul.f32 1.0, %v5508
    %v5510 = vrcp.pop %v5507
    %v5511 = vmul.f32 1.0, %v5510
    %v5512 = vmul.f32 %v5497, %v5482
    %v5513 = vmul.f32 %v5499, %v5484
    %v5514 = vadd.f32 %v5400, %v5512
    %v5515 = vadd.f32 %v5402, %v5513
    %v5516 = vtanh.pop %v5514
    %v5517 = vtanh.pop %v5515
    %v5518 = vsub.f32 1.0, %v5509
    %v5519 = vsub.f32 1.0, %v5511
    %v5520 = vmul.f32 %v5518, %v5516
    %v5521 = vmul.f32 %v5519, %v5517
    %v5522 = vmul.f32 %v5509, %v4970
    %v5523 = vmul.f32 %v5511, %v4971
    %v5524 = vadd.f32 %v5520, %v5522
    %v5525 = vadd.f32 %v5521, %v5523
    %v5526 = vsel %vm5153, %v5524, %v4970
    %v5527 = vsel %vm5153, %v5525, %v4971
    %s5528 = smul.u32 5, 6
    %s5529 = smul.addr %s5528, 8
    %s5530 = scalar_lea.vmem [#allocation2], %s5529
    %v5531 = vld [vmem:[%s5530] sm:$0xff]
    %v5532 = vld [vmem:[%s5530 + $0x8] sm:$0xff]
    %v5533 = vld [vmem:[%s5530 + $0x10] sm:$0xff]
    %v5534 = vld [vmem:[%s5530 + $0x18] sm:$0xff]
    %v5535 = vld [vmem:[%s5530 + $0x20] sm:$0xff]
    %v5536 = vld [vmem:[%s5530 + $0x28] sm:$0xff]
    %s5537 = scalar_lea.vmem %s1, 40
    %v5538 = vld [vmem:[%s5537] sm:$0xff]
    %5539 = vmatprep.subr.bf16.mxu0 %v991
    %5540 = vmatpush1.bf16.msra.mxu0 %v990
    %5541 = vmatprep.subr.bf16.mxu0 %v997
    %5542 = vmatpush1.bf16.msra.mxu0 %v996
    %5543 = vmatprep.subr.bf16.mxu0 %v1003
    %5544 = vmatpush1.bf16.msra.mxu0 %v1002
    %5545 = vmatprep.subr.bf16.mxu0 %v1009
    %5546 = vmatpush1.bf16.msra.mxu0 %v1008
    %5547 = vmatprep.subr.bf16.mxu0 %v1015
    %5548 = vmatpush1.bf16.msra.mxu0 %v1014
    %5549 = vmatprep.subr.bf16.mxu0 %v1021
    %5550 = vmatpush1.bf16.msra.mxu0 %v1020
    %5551 = vmatprep.subr.bf16.mxu0 %v1027
    %5552 = vmatpush1.bf16.msra.mxu0 %v1026
    %5553 = vmatprep.subr.bf16.mxu0 %v1033
    %5554 = vmatpush1.bf16.msra.mxu0 %v1032
    %5555 = vmatprep.subr.bf16.mxu0 %v1039
    %5556 = vmatpush1.bf16.msra.mxu0 %v1038
    %5557 = vmatprep.subr.bf16.mxu0 %v1045
    %5558 = vmatpush1.bf16.msra.mxu0 %v1044
    %5559 = vmatprep.subr.bf16.mxu0 %v1051
    %5560 = vmatpush1.bf16.msra.mxu0 %v1050
    %5561 = vmatprep.subr.bf16.mxu0 %v1057
    %5562 = vmatpush1.bf16.msra.mxu0 %v1056
    %5563 = vmatprep.subr.bf16.mxu0 %v1063
    %5564 = vmatpush1.bf16.msra.mxu0 %v1062
    %5565 = vmatprep.subr.bf16.mxu0 %v1069
    %5566 = vmatpush1.bf16.msra.mxu0 %v1068
    %5567 = vmatprep.subr.bf16.mxu0 %v1075
    %5568 = vmatpush1.bf16.msra.mxu0 %v1074
    %5569 = vmatprep.subr.bf16.mxu0 %v1081
    %5570 = vmatpush1.bf16.msra.mxu0 %v1080
    %5571 = vmatprep.mubr.bf16.mxu0 %v5157
    %5572 = vmatmul.mubr.bf16.gmra.mrb[0].mxu0 %v5156
    %v5573 = vpop.f32.mrb[0].mxu0
    %v5574 = vadd.f32 %v675, %v5573
    %v5575 = vpop.f32.mrb[0].mxu0
    %v5576 = vadd.f32 %v679, %v5575
    %v5577 = vpop.f32.mrb[0].mxu0
    %v5578 = vpop.f32.mrb[0].mxu0
    %5579 = vdwg.mxu0
    %5580 = vmatprep.subr.bf16.mxu0 %v993
    %5581 = vmatpush1.bf16.msra.mxu0 %v992
    %5582 = vmatprep.subr.bf16.mxu0 %v999
    %5583 = vmatpush1.bf16.msra.mxu0 %v998
    %5584 = vmatprep.subr.bf16.mxu0 %v1005
    %5585 = vmatpush1.bf16.msra.mxu0 %v1004
    %5586 = vmatprep.subr.bf16.mxu0 %v1011
    %5587 = vmatpush1.bf16.msra.mxu0 %v1010
    %5588 = vmatprep.subr.bf16.mxu0 %v1017
    %5589 = vmatpush1.bf16.msra.mxu0 %v1016
    %5590 = vmatprep.subr.bf16.mxu0 %v1023
    %5591 = vmatpush1.bf16.msra.mxu0 %v1022
    %5592 = vmatprep.subr.bf16.mxu0 %v1029
    %5593 = vmatpush1.bf16.msra.mxu0 %v1028
    %5594 = vmatprep.subr.bf16.mxu0 %v1035
    %5595 = vmatpush1.bf16.msra.mxu0 %v1034
    %5596 = vmatprep.subr.bf16.mxu0 %v1041
    %5597 = vmatpush1.bf16.msra.mxu0 %v1040
    %5598 = vmatprep.subr.bf16.mxu0 %v1047
    %5599 = vmatpush1.bf16.msra.mxu0 %v1046
    %5600 = vmatprep.subr.bf16.mxu0 %v1053
    %5601 = vmatpush1.bf16.msra.mxu0 %v1052
    %5602 = vmatprep.subr.bf16.mxu0 %v1059
    %5603 = vmatpush1.bf16.msra.mxu0 %v1058
    %5604 = vmatprep.subr.bf16.mxu0 %v1065
    %5605 = vmatpush1.bf16.msra.mxu0 %v1064
    %5606 = vmatprep.subr.bf16.mxu0 %v1071
    %5607 = vmatpush1.bf16.msra.mxu0 %v1070
    %5608 = vmatprep.subr.bf16.mxu0 %v1077
    %5609 = vmatpush1.bf16.msra.mxu0 %v1076
    %5610 = vmatprep.subr.bf16.mxu0 %v1083
    %5611 = vmatpush1.bf16.msra.mxu0 %v1082
    %5612 = vmatprep.mubr.bf16.mxu0 %v5157
    %5613 = vmatmul.mubr.bf16.gmra.mrb[0].mxu0 %v5156
    %v5614 = vpop.f32.mrb[0].mxu0
    %v5615 = vadd.f32 %v683, %v5614
    %v5616 = vpop.f32.mrb[0].mxu0
    %v5617 = vadd.f32 %v687, %v5616
    %v5618 = vpop.f32.mrb[0].mxu0
    %v5619 = vpop.f32.mrb[0].mxu0
    %5620 = vdwg.mxu0
    %5621 = vmatprep.subr.bf16.mxu0 %v995
    %5622 = vmatpush1.bf16.msra.mxu0 %v994
    %5623 = vmatprep.subr.bf16.mxu0 %v1001
    %5624 = vmatpush1.bf16.msra.mxu0 %v1000
    %5625 = vmatprep.subr.bf16.mxu0 %v1007
    %5626 = vmatpush1.bf16.msra.mxu0 %v1006
    %5627 = vmatprep.subr.bf16.mxu0 %v1013
    %5628 = vmatpush1.bf16.msra.mxu0 %v1012
    %5629 = vmatprep.subr.bf16.mxu0 %v1019
    %5630 = vmatpush1.bf16.msra.mxu0 %v1018
    %5631 = vmatprep.subr.bf16.mxu0 %v1025
    %5632 = vmatpush1.bf16.msra.mxu0 %v1024
    %5633 = vmatprep.subr.bf16.mxu0 %v1031
    %5634 = vmatpush1.bf16.msra.mxu0 %v1030
    %5635 = vmatprep.subr.bf16.mxu0 %v1037
    %5636 = vmatpush1.bf16.msra.mxu0 %v1036
    %5637 = vmatprep.subr.bf16.mxu0 %v1043
    %5638 = vmatpush1.bf16.msra.mxu0 %v1042
    %5639 = vmatprep.subr.bf16.mxu0 %v1049
    %5640 = vmatpush1.bf16.msra.mxu0 %v1048
    %5641 = vmatprep.subr.bf16.mxu0 %v1055
    %5642 = vmatpush1.bf16.msra.mxu0 %v1054
    %5643 = vmatprep.subr.bf16.mxu0 %v1061
    %5644 = vmatpush1.bf16.msra.mxu0 %v1060
    %5645 = vmatprep.subr.bf16.mxu0 %v1067
    %5646 = vmatpush1.bf16.msra.mxu0 %v1066
    %5647 = vmatprep.subr.bf16.mxu0 %v1073
    %5648 = vmatpush1.bf16.msra.mxu0 %v1072
    %5649 = vmatprep.subr.bf16.mxu0 %v1079
    %5650 = vmatpush1.bf16.msra.mxu0 %v1078
    %5651 = vmatprep.subr.bf16.mxu0 %v1085
    %5652 = vmatpush1.bf16.msra.mxu0 %v1084
    %5653 = vmatprep.mubr.bf16.mxu0 %v5157
    %5654 = vmatmul.mubr.bf16.gmra.mrb[0].mxu0 %v5156
    %v5655 = vpop.f32.mrb[0].mxu0
    %v5656 = vadd.f32 %v691, %v5655
    %v5657 = vpop.f32.mrb[0].mxu0
    %v5658 = vadd.f32 %v695, %v5657
    %v5659 = vpop.f32.mrb[0].mxu0
    %v5660 = vpop.f32.mrb[0].mxu0
    %5661 = vdwg.mxu0
    %v5662 = vadd.f32 %v5531, %v5574
    %v5663 = vadd.f32 %v5532, %v5576
    %v5664 = vxor.u32 %v5662, 2147483648
    %v5665 = vxor.u32 %v5663, 2147483648
    %v5666 = vmul.f32 %v5664, 1.442695
    %v5667 = vpow.pop %v5666
    %v5668 = vmul.f32 %v5665, 1.442695
    %v5669 = vpow.pop %v5668
    %v5670 = vadd.f32 %v5667, 1.0
    %v5671 = vadd.f32 %v5669, 1.0
    %v5672 = vrcp.pop %v5670
    %v5673 = vmul.f32 1.0, %v5672
    %v5674 = vrcp.pop %v5671
    %v5675 = vmul.f32 1.0, %v5674
    %v5676 = vadd.f32 %v5533, %v5615
    %v5677 = vadd.f32 %v5534, %v5617
    %v5678 = vxor.u32 %v5676, 2147483648
    %v5679 = vxor.u32 %v5677, 2147483648
    %v5680 = vmul.f32 %v5678, 1.442695
    %v5681 = vpow.pop %v5680
    %v5682 = vmul.f32 %v5679, 1.442695
    %v5683 = vpow.pop %v5682
    %v5684 = vadd.f32 %v5681, 1.0
    %v5685 = vadd.f32 %v5683, 1.0
    %v5686 = vrcp.pop %v5684
    %v5687 = vmul.f32 1.0, %v5686
    %v5688 = vrcp.pop %v5685
    %v5689 = vmul.f32 1.0, %v5688
    %v5690 = vmul.f32 %v5673, %v5656
    %v5691 = vmul.f32 %v5675, %v5658
    %v5692 = vadd.f32 %v5535, %v5690
    %v5693 = vadd.f32 %v5536, %v5691
    %v5694 = vtanh.pop %v5692
    %v5695 = vtanh.pop %v5693
    %v5696 = vsub.f32 1.0, %v5687
    %v5697 = vsub.f32 1.0, %v5689
    %v5698 = vmul.f32 %v5696, %v5694
    %v5699 = vmul.f32 %v5697, %v5695
    %v5700 = vmul.f32 %v5687, %v5154
    %v5701 = vmul.f32 %v5689, %v5155
    %v5702 = vadd.f32 %v5698, %v5700
    %v5703 = vadd.f32 %v5699, %v5701
    %vm5704 = vcmp.gt.f32.partialorder %v5538, 0.0
    %v5705 = vsel %vm5704, 1, 0
    %5706 = vset.pattern.permute.xlu0 0
    %5707 = vperm.xlu0 %5706, %v5705
    %v5708 = vpop.permute.xlu0 %5707
    %vm5709 = vcmp.eq.s32.totalorder %v5708, 1
    %v5710 = vsel %vm5709, %v5702, %v5154
    %v5711 = vsel %vm5709, %v5703, %v5155
    %v5712 = vpack.c.bf16 %v5710, %v5710
    %v5713 = vpack.c.bf16 %v5711, %v5711
    %v5714 = vpack.c.bf16 %v5526, %v5526
    %v5715 = vpack.c.bf16 %v5527, %v5527
    %5716 = vmatprep.subr.bf16.mxu0 %v2425
    %5717 = vmatpush1.bf16.msra.mxu0 %v2424
    %5718 = vmatprep.subr.bf16.mxu0 %v2433
    %5719 = vmatpush1.bf16.msra.mxu0 %v2432
    %5720 = vmatprep.subr.bf16.mxu0 %v2441
    %5721 = vmatpush1.bf16.msra.mxu0 %v2440
    %5722 = vmatprep.subr.bf16.mxu0 %v2449
    %5723 = vmatpush1.bf16.msra.mxu0 %v2448
    %5724 = vmatprep.subr.bf16.mxu0 %v2457
    %5725 = vmatpush1.bf16.msra.mxu0 %v2456
    %5726 = vmatprep.subr.bf16.mxu0 %v2465
    %5727 = vmatpush1.bf16.msra.mxu0 %v2464
    %5728 = vmatprep.subr.bf16.mxu0 %v2473
    %5729 = vmatpush1.bf16.msra.mxu0 %v2472
    %5730 = vmatprep.subr.bf16.mxu0 %v2481
    %5731 = vmatpush1.bf16.msra.mxu0 %v2480
    %5732 = vmatprep.subr.bf16.mxu0 %v2489
    %5733 = vmatpush1.bf16.msra.mxu0 %v2488
    %5734 = vmatprep.subr.bf16.mxu0 %v2497
    %5735 = vmatpush1.bf16.msra.mxu0 %v2496
    %5736 = vmatprep.subr.bf16.mxu0 %v2505
    %5737 = vmatpush1.bf16.msra.mxu0 %v2504
    %5738 = vmatprep.subr.bf16.mxu0 %v2513
    %5739 = vmatpush1.bf16.msra.mxu0 %v2512
    %5740 = vmatprep.subr.bf16.mxu0 %v2521
    %5741 = vmatpush1.bf16.msra.mxu0 %v2520
    %5742 = vmatprep.subr.bf16.mxu0 %v2529
    %5743 = vmatpush1.bf16.msra.mxu0 %v2528
    %5744 = vmatprep.subr.bf16.mxu0 %v2537
    %5745 = vmatpush1.bf16.msra.mxu0 %v2536
    %5746 = vmatprep.subr.bf16.mxu0 %v2545
    %5747 = vmatpush1.bf16.msra.mxu0 %v2544
    %5748 = vmatprep.mubr.bf16.mxu0 %v5713
    %5749 = vmatmul.mubr.bf16.gmra.mrb[0].mxu0 %v5712
    %v5750 = vpop.f32.mrb[0].mxu0
    %v5751 = vadd.f32 %v1619, %v5750
    %v5752 = vpop.f32.mrb[0].mxu0
    %v5753 = vadd.f32 %v1623, %v5752
    %v5754 = vpop.f32.mrb[0].mxu0
    %v5755 = vpop.f32.mrb[0].mxu0
    %5756 = vdwg.mxu0
    %5757 = vmatprep.subr.bf16.mxu0 %v2553
    %5758 = vmatpush1.bf16.msra.mxu0 %v2552
    %5759 = vmatprep.subr.bf16.mxu0 %v2561
    %5760 = vmatpush1.bf16.msra.mxu0 %v2560
    %5761 = vmatprep.subr.bf16.mxu0 %v2569
    %5762 = vmatpush1.bf16.msra.mxu0 %v2568
    %5763 = vmatprep.subr.bf16.mxu0 %v2577
    %5764 = vmatpush1.bf16.msra.mxu0 %v2576
    %5765 = vmatprep.subr.bf16.mxu0 %v2585
    %5766 = vmatpush1.bf16.msra.mxu0 %v2584
    %5767 = vmatprep.subr.bf16.mxu0 %v2593
    %5768 = vmatpush1.bf16.msra.mxu0 %v2592
    %5769 = vmatprep.subr.bf16.mxu0 %v2601
    %5770 = vmatpush1.bf16.msra.mxu0 %v2600
    %5771 = vmatprep.subr.bf16.mxu0 %v2609
    %5772 = vmatpush1.bf16.msra.mxu0 %v2608
    %5773 = vmatprep.subr.bf16.mxu0 %v2617
    %5774 = vmatpush1.bf16.msra.mxu0 %v2616
    %5775 = vmatprep.subr.bf16.mxu0 %v2625
    %5776 = vmatpush1.bf16.msra.mxu0 %v2624
    %5777 = vmatprep.subr.bf16.mxu0 %v2633
    %5778 = vmatpush1.bf16.msra.mxu0 %v2632
    %5779 = vmatprep.subr.bf16.mxu0 %v2641
    %5780 = vmatpush1.bf16.msra.mxu0 %v2640
    %5781 = vmatprep.subr.bf16.mxu0 %v2649
    %5782 = vmatpush1.bf16.msra.mxu0 %v2648
    %5783 = vmatprep.subr.bf16.mxu0 %v2657
    %5784 = vmatpush1.bf16.msra.mxu0 %v2656
    %5785 = vmatprep.subr.bf16.mxu0 %v2665
    %5786 = vmatpush1.bf16.msra.mxu0 %v2664
    %5787 = vmatprep.subr.bf16.mxu0 %v2673
    %5788 = vmatpush1.bf16.msra.mxu0 %v2672
    %5789 = vmatprep.mubr.bf16.mxu0 %v5715
    %5790 = vmatmul.mubr.bf16.gmra.mrb[0].mxu0 %v5714
    %v5791 = vpop.f32.mrb[0].mxu0
    %v5792 = vadd.f32 %v5751, %v5791
    %v5793 = vpop.f32.mrb[0].mxu0
    %v5794 = vadd.f32 %v5753, %v5793
    %v5795 = vpop.f32.mrb[0].mxu0
    %v5796 = vpop.f32.mrb[0].mxu0
    %5797 = vdwg.mxu0
    %5798 = vmatprep.subr.bf16.mxu0 %v2427
    %5799 = vmatpush1.bf16.msra.mxu0 %v2426
    %5800 = vmatprep.subr.bf16.mxu0 %v2435
    %5801 = vmatpush1.bf16.msra.mxu0 %v2434
    %5802 = vmatprep.subr.bf16.mxu0 %v2443
    %5803 = vmatpush1.bf16.msra.mxu0 %v2442
    %5804 = vmatprep.subr.bf16.mxu0 %v2451
    %5805 = vmatpush1.bf16.msra.mxu0 %v2450
    %5806 = vmatprep.subr.bf16.mxu0 %v2459
    %5807 = vmatpush1.bf16.msra.mxu0 %v2458
    %5808 = vmatprep.subr.bf16.mxu0 %v2467
    %5809 = vmatpush1.bf16.msra.mxu0 %v2466
    %5810 = vmatprep.subr.bf16.mxu0 %v2475
    %5811 = vmatpush1.bf16.msra.mxu0 %v2474
    %5812 = vmatprep.subr.bf16.mxu0 %v2483
    %5813 = vmatpush1.bf16.msra.mxu0 %v2482
    %5814 = vmatprep.subr.bf16.mxu0 %v2491
    %5815 = vmatpush1.bf16.msra.mxu0 %v2490
    %5816 = vmatprep.subr.bf16.mxu0 %v2499
    %5817 = vmatpush1.bf16.msra.mxu0 %v2498
    %5818 = vmatprep.subr.bf16.mxu0 %v2507
    %5819 = vmatpush1.bf16.msra.mxu0 %v2506
    %5820 = vmatprep.subr.bf16.mxu0 %v2515
    %5821 = vmatpush1.bf16.msra.mxu0 %v2514
    %5822 = vmatprep.subr.bf16.mxu0 %v2523
    %5823 = vmatpush1.bf16.msra.mxu0 %v2522
    %5824 = vmatprep.subr.bf16.mxu0 %v2531
    %5825 = vmatpush1.bf16.msra.mxu0 %v2530
    %5826 = vmatprep.subr.bf16.mxu0 %v2539
    %5827 = vmatpush1.bf16.msra.mxu0 %v2538
    %5828 = vmatprep.subr.bf16.mxu0 %v2547
    %5829 = vmatpush1.bf16.msra.mxu0 %v2546
    %5830 = vmatprep.mubr.bf16.mxu0 %v5713
    %5831 = vmatmul.mubr.bf16.gmra.mrb[0].mxu0 %v5712
    %v5832 = vpop.f32.mrb[0].mxu0
    %v5833 = vadd.f32 %v1627, %v5832
    %v5834 = vpop.f32.mrb[0].mxu0
    %v5835 = vadd.f32 %v1631, %v5834
    %v5836 = vpop.f32.mrb[0].mxu0
    %v5837 = vpop.f32.mrb[0].mxu0
    %5838 = vdwg.mxu0
    %5839 = vmatprep.subr.bf16.mxu0 %v2555
    %5840 = vmatpush1.bf16.msra.mxu0 %v2554
    %5841 = vmatprep.subr.bf16.mxu0 %v2563
    %5842 = vmatpush1.bf16.msra.mxu0 %v2562
    %5843 = vmatprep.subr.bf16.mxu0 %v2571
    %5844 = vmatpush1.bf16.msra.mxu0 %v2570
    %5845 = vmatprep.subr.bf16.mxu0 %v2579
    %5846 = vmatpush1.bf16.msra.mxu0 %v2578
    %5847 = vmatprep.subr.bf16.mxu0 %v2587
    %5848 = vmatpush1.bf16.msra.mxu0 %v2586
    %5849 = vmatprep.subr.bf16.mxu0 %v2595
    %5850 = vmatpush1.bf16.msra.mxu0 %v2594
    %5851 = vmatprep.subr.bf16.mxu0 %v2603
    %5852 = vmatpush1.bf16.msra.mxu0 %v2602
    %5853 = vmatprep.subr.bf16.mxu0 %v2611
    %5854 = vmatpush1.bf16.msra.mxu0 %v2610
    %5855 = vmatprep.subr.bf16.mxu0 %v2619
    %5856 = vmatpush1.bf16.msra.mxu0 %v2618
    %5857 = vmatprep.subr.bf16.mxu0 %v2627
    %5858 = vmatpush1.bf16.msra.mxu0 %v2626
    %5859 = vmatprep.subr.bf16.mxu0 %v2635
    %5860 = vmatpush1.bf16.msra.mxu0 %v2634
    %5861 = vmatprep.subr.bf16.mxu0 %v2643
    %5862 = vmatpush1.bf16.msra.mxu0 %v2642
    %5863 = vmatprep.subr.bf16.mxu0 %v2651
    %5864 = vmatpush1.bf16.msra.mxu0 %v2650
    %5865 = vmatprep.subr.bf16.mxu0 %v2659
    %5866 = vmatpush1.bf16.msra.mxu0 %v2658
    %5867 = vmatprep.subr.bf16.mxu0 %v2667
    %5868 = vmatpush1.bf16.msra.mxu0 %v2666
    %5869 = vmatprep.subr.bf16.mxu0 %v2675
    %5870 = vmatpush1.bf16.msra.mxu0 %v2674
    %5871 = vmatprep.mubr.bf16.mxu0 %v5715
    %5872 = vmatmul.mubr.bf16.gmra.mrb[0].mxu0 %v5714
    %v5873 = vpop.f32.mrb[0].mxu0
    %v5874 = vadd.f32 %v5833, %v5873
    %v5875 = vpop.f32.mrb[0].mxu0
    %v5876 = vadd.f32 %v5835, %v5875
    %v5877 = vpop.f32.mrb[0].mxu0
    %v5878 = vpop.f32.mrb[0].mxu0
    %5879 = vdwg.mxu0
    %5880 = vmatprep.subr.bf16.mxu0 %v2429
    %5881 = vmatpush1.bf16.msra.mxu0 %v2428
    %5882 = vmatprep.subr.bf16.mxu0 %v2437
    %5883 = vmatpush1.bf16.msra.mxu0 %v2436
    %5884 = vmatprep.subr.bf16.mxu0 %v2445
    %5885 = vmatpush1.bf16.msra.mxu0 %v2444
    %5886 = vmatprep.subr.bf16.mxu0 %v2453
    %5887 = vmatpush1.bf16.msra.mxu0 %v2452
    %5888 = vmatprep.subr.bf16.mxu0 %v2461
    %5889 = vmatpush1.bf16.msra.mxu0 %v2460
    %5890 = vmatprep.subr.bf16.mxu0 %v2469
    %5891 = vmatpush1.bf16.msra.mxu0 %v2468
    %5892 = vmatprep.subr.bf16.mxu0 %v2477
    %5893 = vmatpush1.bf16.msra.mxu0 %v2476
    %5894 = vmatprep.subr.bf16.mxu0 %v2485
    %5895 = vmatpush1.bf16.msra.mxu0 %v2484
    %5896 = vmatprep.subr.bf16.mxu0 %v2493
    %5897 = vmatpush1.bf16.msra.mxu0 %v2492
    %5898 = vmatprep.subr.bf16.mxu0 %v2501
    %5899 = vmatpush1.bf16.msra.mxu0 %v2500
    %5900 = vmatprep.subr.bf16.mxu0 %v2509
    %5901 = vmatpush1.bf16.msra.mxu0 %v2508
    %5902 = vmatprep.subr.bf16.mxu0 %v2517
    %5903 = vmatpush1.bf16.msra.mxu0 %v2516
    %5904 = vmatprep.subr.bf16.mxu0 %v2525
    %5905 = vmatpush1.bf16.msra.mxu0 %v2524
    %5906 = vmatprep.subr.bf16.mxu0 %v2533
    %5907 = vmatpush1.bf16.msra.mxu0 %v2532
    %5908 = vmatprep.subr.bf16.mxu0 %v2541
    %5909 = vmatpush1.bf16.msra.mxu0 %v2540
    %5910 = vmatprep.subr.bf16.mxu0 %v2549
    %5911 = vmatpush1.bf16.msra.mxu0 %v2548
    %5912 = vmatprep.mubr.bf16.mxu0 %v5713
    %5913 = vmatmul.mubr.bf16.gmra.mrb[0].mxu0 %v5712
    %v5914 = vpop.f32.mrb[0].mxu0
    %v5915 = vadd.f32 %v1635, %v5914
    %v5916 = vpop.f32.mrb[0].mxu0
    %v5917 = vadd.f32 %v1639, %v5916
    %v5918 = vpop.f32.mrb[0].mxu0
    %v5919 = vpop.f32.mrb[0].mxu0
    %5920 = vdwg.mxu0
    %5921 = vmatprep.subr.bf16.mxu0 %v2557
    %5922 = vmatpush1.bf16.msra.mxu0 %v2556
    %5923 = vmatprep.subr.bf16.mxu0 %v2565
    %5924 = vmatpush1.bf16.msra.mxu0 %v2564
    %5925 = vmatprep.subr.bf16.mxu0 %v2573
    %5926 = vmatpush1.bf16.msra.mxu0 %v2572
    %5927 = vmatprep.subr.bf16.mxu0 %v2581
    %5928 = vmatpush1.bf16.msra.mxu0 %v2580
    %5929 = vmatprep.subr.bf16.mxu0 %v2589
    %5930 = vmatpush1.bf16.msra.mxu0 %v2588
    %5931 = vmatprep.subr.bf16.mxu0 %v2597
    %5932 = vmatpush1.bf16.msra.mxu0 %v2596
    %5933 = vmatprep.subr.bf16.mxu0 %v2605
    %5934 = vmatpush1.bf16.msra.mxu0 %v2604
    %5935 = vmatprep.subr.bf16.mxu0 %v2613
    %5936 = vmatpush1.bf16.msra.mxu0 %v2612
    %5937 = vmatprep.subr.bf16.mxu0 %v2621
    %5938 = vmatpush1.bf16.msra.mxu0 %v2620
    %5939 = vmatprep.subr.bf16.mxu0 %v2629
    %5940 = vmatpush1.bf16.msra.mxu0 %v2628
    %5941 = vmatprep.subr.bf16.mxu0 %v2637
    %5942 = vmatpush1.bf16.msra.mxu0 %v2636
    %5943 = vmatprep.subr.bf16.mxu0 %v2645
    %5944 = vmatpush1.bf16.msra.mxu0 %v2644
    %5945 = vmatprep.subr.bf16.mxu0 %v2653
    %5946 = vmatpush1.bf16.msra.mxu0 %v2652
    %5947 = vmatprep.subr.bf16.mxu0 %v2661
    %5948 = vmatpush1.bf16.msra.mxu0 %v2660
    %5949 = vmatprep.subr.bf16.mxu0 %v2669
    %5950 = vmatpush1.bf16.msra.mxu0 %v2668
    %5951 = vmatprep.subr.bf16.mxu0 %v2677
    %5952 = vmatpush1.bf16.msra.mxu0 %v2676
    %5953 = vmatprep.mubr.bf16.mxu0 %v5715
    %5954 = vmatmul.mubr.bf16.gmra.mrb[0].mxu0 %v5714
    %v5955 = vpop.f32.mrb[0].mxu0
    %v5956 = vadd.f32 %v5915, %v5955
    %v5957 = vpop.f32.mrb[0].mxu0
    %v5958 = vadd.f32 %v5917, %v5957
    %v5959 = vpop.f32.mrb[0].mxu0
    %v5960 = vpop.f32.mrb[0].mxu0
    %5961 = vdwg.mxu0
    %5962 = vmatprep.subr.bf16.mxu0 %v2431
    %5963 = vmatpush1.bf16.msra.mxu0 %v2430
    %5964 = vmatprep.subr.bf16.mxu0 %v2439
    %5965 = vmatpush1.bf16.msra.mxu0 %v2438
    %5966 = vmatprep.subr.bf16.mxu0 %v2447
    %5967 = vmatpush1.bf16.msra.mxu0 %v2446
    %5968 = vmatprep.subr.bf16.mxu0 %v2455
    %5969 = vmatpush1.bf16.msra.mxu0 %v2454
    %5970 = vmatprep.subr.bf16.mxu0 %v2463
    %5971 = vmatpush1.bf16.msra.mxu0 %v2462
    %5972 = vmatprep.subr.bf16.mxu0 %v2471
    %5973 = vmatpush1.bf16.msra.mxu0 %v2470
    %5974 = vmatprep.subr.bf16.mxu0 %v2479
    %5975 = vmatpush1.bf16.msra.mxu0 %v2478
    %5976 = vmatprep.subr.bf16.mxu0 %v2487
    %5977 = vmatpush1.bf16.msra.mxu0 %v2486
    %5978 = vmatprep.subr.bf16.mxu0 %v2495
    %5979 = vmatpush1.bf16.msra.mxu0 %v2494
    %5980 = vmatprep.subr.bf16.mxu0 %v2503
    %5981 = vmatpush1.bf16.msra.mxu0 %v2502
    %5982 = vmatprep.subr.bf16.mxu0 %v2511
    %5983 = vmatpush1.bf16.msra.mxu0 %v2510
    %5984 = vmatprep.subr.bf16.mxu0 %v2519
    %5985 = vmatpush1.bf16.msra.mxu0 %v2518
    %5986 = vmatprep.subr.bf16.mxu0 %v2527
    %5987 = vmatpush1.bf16.msra.mxu0 %v2526
    %5988 = vmatprep.subr.bf16.mxu0 %v2535
    %5989 = vmatpush1.bf16.msra.mxu0 %v2534
    %5990 = vmatprep.subr.bf16.mxu0 %v2543
    %5991 = vmatpush1.bf16.msra.mxu0 %v2542
    %5992 = vmatprep.subr.bf16.mxu0 %v2551
    %5993 = vmatpush1.bf16.msra.mxu0 %v2550
    %5994 = vmatprep.mubr.bf16.mxu0 %v5713
    %5995 = vmatmul.mubr.bf16.gmra.mrb[0].mxu0 %v5712
    %v5996 = vpop.f32.mrb[0].mxu0
    %v5997 = vadd.f32 %v1643, %v5996
    %v5998 = vpop.f32.mrb[0].mxu0
    %v5999 = vadd.f32 %v1647, %v5998
    %v6000 = vpop.f32.mrb[0].mxu0
    %v6001 = vpop.f32.mrb[0].mxu0
    %6002 = vdwg.mxu0
    %6003 = vmatprep.subr.bf16.mxu0 %v2559
    %6004 = vmatpush1.bf16.msra.mxu0 %v2558
    %6005 = vmatprep.subr.bf16.mxu0 %v2567
    %6006 = vmatpush1.bf16.msra.mxu0 %v2566
    %6007 = vmatprep.subr.bf16.mxu0 %v2575
    %6008 = vmatpush1.bf16.msra.mxu0 %v2574
    %6009 = vmatprep.subr.bf16.mxu0 %v2583
    %6010 = vmatpush1.bf16.msra.mxu0 %v2582
    %6011 = vmatprep.subr.bf16.mxu0 %v2591
    %6012 = vmatpush1.bf16.msra.mxu0 %v2590
    %6013 = vmatprep.subr.bf16.mxu0 %v2599
    %6014 = vmatpush1.bf16.msra.mxu0 %v2598
    %6015 = vmatprep.subr.bf16.mxu0 %v2607
    %6016 = vmatpush1.bf16.msra.mxu0 %v2606
    %6017 = vmatprep.subr.bf16.mxu0 %v2615
    %6018 = vmatpush1.bf16.msra.mxu0 %v2614
    %6019 = vmatprep.subr.bf16.mxu0 %v2623
    %6020 = vmatpush1.bf16.msra.mxu0 %v2622
    %6021 = vmatprep.subr.bf16.mxu0 %v2631
    %6022 = vmatpush1.bf16.msra.mxu0 %v2630
    %6023 = vmatprep.subr.bf16.mxu0 %v2639
    %6024 = vmatpush1.bf16.msra.mxu0 %v2638
    %6025 = vmatprep.subr.bf16.mxu0 %v2647
    %6026 = vmatpush1.bf16.msra.mxu0 %v2646
    %6027 = vmatprep.subr.bf16.mxu0 %v2655
    %6028 = vmatpush1.bf16.msra.mxu0 %v2654
    %6029 = vmatprep.subr.bf16.mxu0 %v2663
    %6030 = vmatpush1.bf16.msra.mxu0 %v2662
    %6031 = vmatprep.subr.bf16.mxu0 %v2671
    %6032 = vmatpush1.bf16.msra.mxu0 %v2670
    %6033 = vmatprep.subr.bf16.mxu0 %v2679
    %6034 = vmatpush1.bf16.msra.mxu0 %v2678
    %6035 = vmatprep.mubr.bf16.mxu0 %v5715
    %6036 = vmatmul.mubr.bf16.gmra.mrb[0].mxu0 %v5714
    %v6037 = vpop.f32.mrb[0].mxu0
    %v6038 = vadd.f32 %v5997, %v6037
    %v6039 = vpop.f32.mrb[0].mxu0
    %v6040 = vadd.f32 %v5999, %v6039
    %v6041 = vpop.f32.mrb[0].mxu0
    %v6042 = vpop.f32.mrb[0].mxu0
    %6043 = vdwg.mxu0
    %v6044 = vxor.u32 %v5792, 2147483648
    %v6045 = vxor.u32 %v5794, 2147483648
    %v6046 = vmul.f32 %v6044, 1.442695
    %v6047 = vpow.pop %v6046
    %v6048 = vmul.f32 %v6045, 1.442695
    %v6049 = vpow.pop %v6048
    %v6050 = vadd.f32 %v6047, 1.0
    %v6051 = vadd.f32 %v6049, 1.0
    %v6052 = vrcp.pop %v6050
    %v6053 = vmul.f32 1.0, %v6052
    %v6054 = vrcp.pop %v6051
    %v6055 = vmul.f32 1.0, %v6054
    %v6056 = vxor.u32 %v5874, 2147483648
    %v6057 = vxor.u32 %v5876, 2147483648
    %v6058 = vmul.f32 %v6056, 1.442695
    %v6059 = vpow.pop %v6058
    %v6060 = vmul.f32 %v6057, 1.442695
    %v6061 = vpow.pop %v6060
    %v6062 = vadd.f32 %v6059, 1.0
    %v6063 = vadd.f32 %v6061, 1.0
    %v6064 = vrcp.pop %v6062
    %v6065 = vmul.f32 1.0, %v6064
    %v6066 = vrcp.pop %v6063
    %v6067 = vmul.f32 1.0, %v6066
    %v6068 = vmul.f32 %v6053, %v6038
    %v6069 = vmul.f32 %v6055, %v6040
    %v6070 = vadd.f32 %v5956, %v6068
    %v6071 = vadd.f32 %v5958, %v6069
    %v6072 = vtanh.pop %v6070
    %v6073 = vtanh.pop %v6071
    %v6074 = vsub.f32 1.0, %v6065
    %v6075 = vsub.f32 1.0, %v6067
    %v6076 = vmul.f32 %v6074, %v6072
    %v6077 = vmul.f32 %v6075, %v6073
    %v6078 = vmul.f32 %v6065, %v5526
    %v6079 = vmul.f32 %v6067, %v5527
    %v6080 = vadd.f32 %v6076, %v6078
    %v6081 = vadd.f32 %v6077, %v6079
    %v6082 = vsel %vm5709, %v6080, %v5526
    %v6083 = vsel %vm5709, %v6081, %v5527
    %s6084 = smul.u32 6, 6
    %s6085 = smul.addr %s6084, 8
    %s6086 = scalar_lea.vmem [#allocation2], %s6085
    %v6087 = vld [vmem:[%s6086] sm:$0xff]
    %v6088 = vld [vmem:[%s6086 + $0x8] sm:$0xff]
    %v6089 = vld [vmem:[%s6086 + $0x10] sm:$0xff]
    %v6090 = vld [vmem:[%s6086 + $0x18] sm:$0xff]
    %v6091 = vld [vmem:[%s6086 + $0x20] sm:$0xff]
    %v6092 = vld [vmem:[%s6086 + $0x28] sm:$0xff]
    %s6093 = scalar_lea.vmem %s1, 48
    %v6094 = vld [vmem:[%s6093] sm:$0xff]
    %6095 = vmatprep.subr.bf16.mxu0 %v991
    %6096 = vmatpush1.bf16.msra.mxu0 %v990
    %6097 = vmatprep.subr.bf16.mxu0 %v997
    %6098 = vmatpush1.bf16.msra.mxu0 %v996
    %6099 = vmatprep.subr.bf16.mxu0 %v1003
    %6100 = vmatpush1.bf16.msra.mxu0 %v1002
    %6101 = vmatprep.subr.bf16.mxu0 %v1009
    %6102 = vmatpush1.bf16.msra.mxu0 %v1008
    %6103 = vmatprep.subr.bf16.mxu0 %v1015
    %6104 = vmatpush1.bf16.msra.mxu0 %v1014
    %6105 = vmatprep.subr.bf16.mxu0 %v1021
    %6106 = vmatpush1.bf16.msra.mxu0 %v1020
    %6107 = vmatprep.subr.bf16.mxu0 %v1027
    %6108 = vmatpush1.bf16.msra.mxu0 %v1026
    %6109 = vmatprep.subr.bf16.mxu0 %v1033
    %6110 = vmatpush1.bf16.msra.mxu0 %v1032
    %6111 = vmatprep.subr.bf16.mxu0 %v1039
    %6112 = vmatpush1.bf16.msra.mxu0 %v1038
    %6113 = vmatprep.subr.bf16.mxu0 %v1045
    %6114 = vmatpush1.bf16.msra.mxu0 %v1044
    %6115 = vmatprep.subr.bf16.mxu0 %v1051
    %6116 = vmatpush1.bf16.msra.mxu0 %v1050
    %6117 = vmatprep.subr.bf16.mxu0 %v1057
    %6118 = vmatpush1.bf16.msra.mxu0 %v1056
    %6119 = vmatprep.subr.bf16.mxu0 %v1063
    %6120 = vmatpush1.bf16.msra.mxu0 %v1062
    %6121 = vmatprep.subr.bf16.mxu0 %v1069
    %6122 = vmatpush1.bf16.msra.mxu0 %v1068
    %6123 = vmatprep.subr.bf16.mxu0 %v1075
    %6124 = vmatpush1.bf16.msra.mxu0 %v1074
    %6125 = vmatprep.subr.bf16.mxu0 %v1081
    %6126 = vmatpush1.bf16.msra.mxu0 %v1080
    %6127 = vmatprep.mubr.bf16.mxu0 %v5713
    %6128 = vmatmul.mubr.bf16.gmra.mrb[0].mxu0 %v5712
    %v6129 = vpop.f32.mrb[0].mxu0
    %v6130 = vadd.f32 %v675, %v6129
    %v6131 = vpop.f32.mrb[0].mxu0
    %v6132 = vadd.f32 %v679, %v6131
    %v6133 = vpop.f32.mrb[0].mxu0
    %v6134 = vpop.f32.mrb[0].mxu0
    %6135 = vdwg.mxu0
    %6136 = vmatprep.subr.bf16.mxu0 %v993
    %6137 = vmatpush1.bf16.msra.mxu0 %v992
    %6138 = vmatprep.subr.bf16.mxu0 %v999
    %6139 = vmatpush1.bf16.msra.mxu0 %v998
    %6140 = vmatprep.subr.bf16.mxu0 %v1005
    %6141 = vmatpush1.bf16.msra.mxu0 %v1004
    %6142 = vmatprep.subr.bf16.mxu0 %v1011
    %6143 = vmatpush1.bf16.msra.mxu0 %v1010
    %6144 = vmatprep.subr.bf16.mxu0 %v1017
    %6145 = vmatpush1.bf16.msra.mxu0 %v1016
    %6146 = vmatprep.subr.bf16.mxu0 %v1023
    %6147 = vmatpush1.bf16.msra.mxu0 %v1022
    %6148 = vmatprep.subr.bf16.mxu0 %v1029
    %6149 = vmatpush1.bf16.msra.mxu0 %v1028
    %6150 = vmatprep.subr.bf16.mxu0 %v1035
    %6151 = vmatpush1.bf16.msra.mxu0 %v1034
    %6152 = vmatprep.subr.bf16.mxu0 %v1041
    %6153 = vmatpush1.bf16.msra.mxu0 %v1040
    %6154 = vmatprep.subr.bf16.mxu0 %v1047
    %6155 = vmatpush1.bf16.msra.mxu0 %v1046
    %6156 = vmatprep.subr.bf16.mxu0 %v1053
    %6157 = vmatpush1.bf16.msra.mxu0 %v1052
    %6158 = vmatprep.subr.bf16.mxu0 %v1059
    %6159 = vmatpush1.bf16.msra.mxu0 %v1058
    %6160 = vmatprep.subr.bf16.mxu0 %v1065
    %6161 = vmatpush1.bf16.msra.mxu0 %v1064
    %6162 = vmatprep.subr.bf16.mxu0 %v1071
    %6163 = vmatpush1.bf16.msra.mxu0 %v1070
    %6164 = vmatprep.subr.bf16.mxu0 %v1077
    %6165 = vmatpush1.bf16.msra.mxu0 %v1076
    %6166 = vmatprep.subr.bf16.mxu0 %v1083
    %6167 = vmatpush1.bf16.msra.mxu0 %v1082
    %6168 = vmatprep.mubr.bf16.mxu0 %v5713
    %6169 = vmatmul.mubr.bf16.gmra.mrb[0].mxu0 %v5712
    %v6170 = vpop.f32.mrb[0].mxu0
    %v6171 = vadd.f32 %v683, %v6170
    %v6172 = vpop.f32.mrb[0].mxu0
    %v6173 = vadd.f32 %v687, %v6172
    %v6174 = vpop.f32.mrb[0].mxu0
    %v6175 = vpop.f32.mrb[0].mxu0
    %6176 = vdwg.mxu0
    %6177 = vmatprep.subr.bf16.mxu0 %v995
    %6178 = vmatpush1.bf16.msra.mxu0 %v994
    %6179 = vmatprep.subr.bf16.mxu0 %v1001
    %6180 = vmatpush1.bf16.msra.mxu0 %v1000
    %6181 = vmatprep.subr.bf16.mxu0 %v1007
    %6182 = vmatpush1.bf16.msra.mxu0 %v1006
    %6183 = vmatprep.subr.bf16.mxu0 %v1013
    %6184 = vmatpush1.bf16.msra.mxu0 %v1012
    %6185 = vmatprep.subr.bf16.mxu0 %v1019
    %6186 = vmatpush1.bf16.msra.mxu0 %v1018
    %6187 = vmatprep.subr.bf16.mxu0 %v1025
    %6188 = vmatpush1.bf16.msra.mxu0 %v1024
    %6189 = vmatprep.subr.bf16.mxu0 %v1031
    %6190 = vmatpush1.bf16.msra.mxu0 %v1030
    %6191 = vmatprep.subr.bf16.mxu0 %v1037
    %6192 = vmatpush1.bf16.msra.mxu0 %v1036
    %6193 = vmatprep.subr.bf16.mxu0 %v1043
    %6194 = vmatpush1.bf16.msra.mxu0 %v1042
    %6195 = vmatprep.subr.bf16.mxu0 %v1049
    %6196 = vmatpush1.bf16.msra.mxu0 %v1048
    %6197 = vmatprep.subr.bf16.mxu0 %v1055
    %6198 = vmatpush1.bf16.msra.mxu0 %v1054
    %6199 = vmatprep.subr.bf16.mxu0 %v1061
    %6200 = vmatpush1.bf16.msra.mxu0 %v1060
    %6201 = vmatprep.subr.bf16.mxu0 %v1067
    %6202 = vmatpush1.bf16.msra.mxu0 %v1066
    %6203 = vmatprep.subr.bf16.mxu0 %v1073
    %6204 = vmatpush1.bf16.msra.mxu0 %v1072
    %6205 = vmatprep.subr.bf16.mxu0 %v1079
    %6206 = vmatpush1.bf16.msra.mxu0 %v1078
    %6207 = vmatprep.subr.bf16.mxu0 %v1085
    %6208 = vmatpush1.bf16.msra.mxu0 %v1084
    %6209 = vmatprep.mubr.bf16.mxu0 %v5713
    %6210 = vmatmul.mubr.bf16.gmra.mrb[0].mxu0 %v5712
    %v6211 = vpop.f32.mrb[0].mxu0
    %v6212 = vadd.f32 %v691, %v6211
    %v6213 = vpop.f32.mrb[0].mxu0
    %v6214 = vadd.f32 %v695, %v6213
    %v6215 = vpop.f32.mrb[0].mxu0
    %v6216 = vpop.f32.mrb[0].mxu0
    %6217 = vdwg.mxu0
    %v6218 = vadd.f32 %v6087, %v6130
    %v6219 = vadd.f32 %v6088, %v6132
    %v6220 = vxor.u32 %v6218, 2147483648
    %v6221 = vxor.u32 %v6219, 2147483648
    %v6222 = vmul.f32 %v6220, 1.442695
    %v6223 = vpow.pop %v6222
    %v6224 = vmul.f32 %v6221, 1.442695
    %v6225 = vpow.pop %v6224
    %v6226 = vadd.f32 %v6223, 1.0
    %v6227 = vadd.f32 %v6225, 1.0
    %v6228 = vrcp.pop %v6226
    %v6229 = vmul.f32 1.0, %v6228
    %v6230 = vrcp.pop %v6227
    %v6231 = vmul.f32 1.0, %v6230
    %v6232 = vadd.f32 %v6089, %v6171
    %v6233 = vadd.f32 %v6090, %v6173
    %v6234 = vxor.u32 %v6232, 2147483648
    %v6235 = vxor.u32 %v6233, 2147483648
    %v6236 = vmul.f32 %v6234, 1.442695
    %v6237 = vpow.pop %v6236
    %v6238 = vmul.f32 %v6235, 1.442695
    %v6239 = vpow.pop %v6238
    %v6240 = vadd.f32 %v6237, 1.0
    %v6241 = vadd.f32 %v6239, 1.0
    %v6242 = vrcp.pop %v6240
    %v6243 = vmul.f32 1.0, %v6242
    %v6244 = vrcp.pop %v6241
    %v6245 = vmul.f32 1.0, %v6244
    %v6246 = vmul.f32 %v6229, %v6212
    %v6247 = vmul.f32 %v6231, %v6214
    %v6248 = vadd.f32 %v6091, %v6246
    %v6249 = vadd.f32 %v6092, %v6247
    %v6250 = vtanh.pop %v6248
    %v6251 = vtanh.pop %v6249
    %v6252 = vsub.f32 1.0, %v6243
    %v6253 = vsub.f32 1.0, %v6245
    %v6254 = vmul.f32 %v6252, %v6250
    %v6255 = vmul.f32 %v6253, %v6251
    %v6256 = vmul.f32 %v6243, %v5710
    %v6257 = vmul.f32 %v6245, %v5711
    %v6258 = vadd.f32 %v6254, %v6256
    %v6259 = vadd.f32 %v6255, %v6257
    %vm6260 = vcmp.gt.f32.partialorder %v6094, 0.0
    %v6261 = vsel %vm6260, 1, 0
    %6262 = vset.pattern.permute.xlu0 0
    %6263 = vperm.xlu0 %6262, %v6261
    %v6264 = vpop.permute.xlu0 %6263
    %vm6265 = vcmp.eq.s32.totalorder %v6264, 1
    %v6266 = vsel %vm6265, %v6258, %v5710
    %v6267 = vsel %vm6265, %v6259, %v5711
    %v6268 = vpack.c.bf16 %v6266, %v6266
    %v6269 = vpack.c.bf16 %v6267, %v6267
    %v6270 = vpack.c.bf16 %v6082, %v6082
    %v6271 = vpack.c.bf16 %v6083, %v6083
    %6272 = vmatprep.subr.bf16.mxu0 %v2425
    %6273 = vmatpush1.bf16.msra.mxu0 %v2424
    %6274 = vmatprep.subr.bf16.mxu0 %v2433
    %6275 = vmatpush1.bf16.msra.mxu0 %v2432
    %6276 = vmatprep.subr.bf16.mxu0 %v2441
    %6277 = vmatpush1.bf16.msra.mxu0 %v2440
    %6278 = vmatprep.subr.bf16.mxu0 %v2449
    %6279 = vmatpush1.bf16.msra.mxu0 %v2448
    %6280 = vmatprep.subr.bf16.mxu0 %v2457
    %6281 = vmatpush1.bf16.msra.mxu0 %v2456
    %6282 = vmatprep.subr.bf16.mxu0 %v2465
    %6283 = vmatpush1.bf16.msra.mxu0 %v2464
    %6284 = vmatprep.subr.bf16.mxu0 %v2473
    %6285 = vmatpush1.bf16.msra.mxu0 %v2472
    %6286 = vmatprep.subr.bf16.mxu0 %v2481
    %6287 = vmatpush1.bf16.msra.mxu0 %v2480
    %6288 = vmatprep.subr.bf16.mxu0 %v2489
    %6289 = vmatpush1.bf16.msra.mxu0 %v2488
    %6290 = vmatprep.subr.bf16.mxu0 %v2497
    %6291 = vmatpush1.bf16.msra.mxu0 %v2496
    %6292 = vmatprep.subr.bf16.mxu0 %v2505
    %6293 = vmatpush1.bf16.msra.mxu0 %v2504
    %6294 = vmatprep.subr.bf16.mxu0 %v2513
    %6295 = vmatpush1.bf16.msra.mxu0 %v2512
    %6296 = vmatprep.subr.bf16.mxu0 %v2521
    %6297 = vmatpush1.bf16.msra.mxu0 %v2520
    %6298 = vmatprep.subr.bf16.mxu0 %v2529
    %6299 = vmatpush1.bf16.msra.mxu0 %v2528
    %6300 = vmatprep.subr.bf16.mxu0 %v2537
    %6301 = vmatpush1.bf16.msra.mxu0 %v2536
    %6302 = vmatprep.subr.bf16.mxu0 %v2545
    %6303 = vmatpush1.bf16.msra.mxu0 %v2544
    %6304 = vmatprep.mubr.bf16.mxu0 %v6269
    %6305 = vmatmul.mubr.bf16.gmra.mrb[0].mxu0 %v6268
    %v6306 = vpop.f32.mrb[0].mxu0
    %v6307 = vadd.f32 %v1619, %v6306
    %v6308 = vpop.f32.mrb[0].mxu0
    %v6309 = vadd.f32 %v1623, %v6308
    %v6310 = vpop.f32.mrb[0].mxu0
    %v6311 = vpop.f32.mrb[0].mxu0
    %6312 = vdwg.mxu0
    %6313 = vmatprep.subr.bf16.mxu0 %v2553
    %6314 = vmatpush1.bf16.msra.mxu0 %v2552
    %6315 = vmatprep.subr.bf16.mxu0 %v2561
    %6316 = vmatpush1.bf16.msra.mxu0 %v2560
    %6317 = vmatprep.subr.bf16.mxu0 %v2569
    %6318 = vmatpush1.bf16.msra.mxu0 %v2568
    %6319 = vmatprep.subr.bf16.mxu0 %v2577
    %6320 = vmatpush1.bf16.msra.mxu0 %v2576
    %6321 = vmatprep.subr.bf16.mxu0 %v2585
    %6322 = vmatpush1.bf16.msra.mxu0 %v2584
    %6323 = vmatprep.subr.bf16.mxu0 %v2593
    %6324 = vmatpush1.bf16.msra.mxu0 %v2592
    %6325 = vmatprep.subr.bf16.mxu0 %v2601
    %6326 = vmatpush1.bf16.msra.mxu0 %v2600
    %6327 = vmatprep.subr.bf16.mxu0 %v2609
    %6328 = vmatpush1.bf16.msra.mxu0 %v2608
    %6329 = vmatprep.subr.bf16.mxu0 %v2617
    %6330 = vmatpush1.bf16.msra.mxu0 %v2616
    %6331 = vmatprep.subr.bf16.mxu0 %v2625
    %6332 = vmatpush1.bf16.msra.mxu0 %v2624
    %6333 = vmatprep.subr.bf16.mxu0 %v2633
    %6334 = vmatpush1.bf16.msra.mxu0 %v2632
    %6335 = vmatprep.subr.bf16.mxu0 %v2641
    %6336 = vmatpush1.bf16.msra.mxu0 %v2640
    %6337 = vmatprep.subr.bf16.mxu0 %v2649
    %6338 = vmatpush1.bf16.msra.mxu0 %v2648
    %6339 = vmatprep.subr.bf16.mxu0 %v2657
    %6340 = vmatpush1.bf16.msra.mxu0 %v2656
    %6341 = vmatprep.subr.bf16.mxu0 %v2665
    %6342 = vmatpush1.bf16.msra.mxu0 %v2664
    %6343 = vmatprep.subr.bf16.mxu0 %v2673
    %6344 = vmatpush1.bf16.msra.mxu0 %v2672
    %6345 = vmatprep.mubr.bf16.mxu0 %v6271
    %6346 = vmatmul.mubr.bf16.gmra.mrb[0].mxu0 %v6270
    %v6347 = vpop.f32.mrb[0].mxu0
    %v6348 = vadd.f32 %v6307, %v6347
    %v6349 = vpop.f32.mrb[0].mxu0
    %v6350 = vadd.f32 %v6309, %v6349
    %v6351 = vpop.f32.mrb[0].mxu0
    %v6352 = vpop.f32.mrb[0].mxu0
    %6353 = vdwg.mxu0
    %6354 = vmatprep.subr.bf16.mxu0 %v2427
    %6355 = vmatpush1.bf16.msra.mxu0 %v2426
    %6356 = vmatprep.subr.bf16.mxu0 %v2435
    %6357 = vmatpush1.bf16.msra.mxu0 %v2434
    %6358 = vmatprep.subr.bf16.mxu0 %v2443
    %6359 = vmatpush1.bf16.msra.mxu0 %v2442
    %6360 = vmatprep.subr.bf16.mxu0 %v2451
    %6361 = vmatpush1.bf16.msra.mxu0 %v2450
    %6362 = vmatprep.subr.bf16.mxu0 %v2459
    %6363 = vmatpush1.bf16.msra.mxu0 %v2458
    %6364 = vmatprep.subr.bf16.mxu0 %v2467
    %6365 = vmatpush1.bf16.msra.mxu0 %v2466
    %6366 = vmatprep.subr.bf16.mxu0 %v2475
    %6367 = vmatpush1.bf16.msra.mxu0 %v2474
    %6368 = vmatprep.subr.bf16.mxu0 %v2483
    %6369 = vmatpush1.bf16.msra.mxu0 %v2482
    %6370 = vmatprep.subr.bf16.mxu0 %v2491
    %6371 = vmatpush1.bf16.msra.mxu0 %v2490
    %6372 = vmatprep.subr.bf16.mxu0 %v2499
    %6373 = vmatpush1.bf16.msra.mxu0 %v2498
    %6374 = vmatprep.subr.bf16.mxu0 %v2507
    %6375 = vmatpush1.bf16.msra.mxu0 %v2506
    %6376 = vmatprep.subr.bf16.mxu0 %v2515
    %6377 = vmatpush1.bf16.msra.mxu0 %v2514
    %6378 = vmatprep.subr.bf16.mxu0 %v2523
    %6379 = vmatpush1.bf16.msra.mxu0 %v2522
    %6380 = vmatprep.subr.bf16.mxu0 %v2531
    %6381 = vmatpush1.bf16.msra.mxu0 %v2530
    %6382 = vmatprep.subr.bf16.mxu0 %v2539
    %6383 = vmatpush1.bf16.msra.mxu0 %v2538
    %6384 = vmatprep.subr.bf16.mxu0 %v2547
    %6385 = vmatpush1.bf16.msra.mxu0 %v2546
    %6386 = vmatprep.mubr.bf16.mxu0 %v6269
    %6387 = vmatmul.mubr.bf16.gmra.mrb[0].mxu0 %v6268
    %v6388 = vpop.f32.mrb[0].mxu0
    %v6389 = vadd.f32 %v1627, %v6388
    %v6390 = vpop.f32.mrb[0].mxu0
    %v6391 = vadd.f32 %v1631, %v6390
    %v6392 = vpop.f32.mrb[0].mxu0
    %v6393 = vpop.f32.mrb[0].mxu0
    %6394 = vdwg.mxu0
    %6395 = vmatprep.subr.bf16.mxu0 %v2555
    %6396 = vmatpush1.bf16.msra.mxu0 %v2554
    %6397 = vmatprep.subr.bf16.mxu0 %v2563
    %6398 = vmatpush1.bf16.msra.mxu0 %v2562
    %6399 = vmatprep.subr.bf16.mxu0 %v2571
    %6400 = vmatpush1.bf16.msra.mxu0 %v2570
    %6401 = vmatprep.subr.bf16.mxu0 %v2579
    %6402 = vmatpush1.bf16.msra.mxu0 %v2578
    %6403 = vmatprep.subr.bf16.mxu0 %v2587
    %6404 = vmatpush1.bf16.msra.mxu0 %v2586
    %6405 = vmatprep.subr.bf16.mxu0 %v2595
    %6406 = vmatpush1.bf16.msra.mxu0 %v2594
    %6407 = vmatprep.subr.bf16.mxu0 %v2603
    %6408 = vmatpush1.bf16.msra.mxu0 %v2602
    %6409 = vmatprep.subr.bf16.mxu0 %v2611
    %6410 = vmatpush1.bf16.msra.mxu0 %v2610
    %6411 = vmatprep.subr.bf16.mxu0 %v2619
    %6412 = vmatpush1.bf16.msra.mxu0 %v2618
    %6413 = vmatprep.subr.bf16.mxu0 %v2627
    %6414 = vmatpush1.bf16.msra.mxu0 %v2626
    %6415 = vmatprep.subr.bf16.mxu0 %v2635
    %6416 = vmatpush1.bf16.msra.mxu0 %v2634
    %6417 = vmatprep.subr.bf16.mxu0 %v2643
    %6418 = vmatpush1.bf16.msra.mxu0 %v2642
    %6419 = vmatprep.subr.bf16.mxu0 %v2651
    %6420 = vmatpush1.bf16.msra.mxu0 %v2650
    %6421 = vmatprep.subr.bf16.mxu0 %v2659
    %6422 = vmatpush1.bf16.msra.mxu0 %v2658
    %6423 = vmatprep.subr.bf16.mxu0 %v2667
    %6424 = vmatpush1.bf16.msra.mxu0 %v2666
    %6425 = vmatprep.subr.bf16.mxu0 %v2675
    %6426 = vmatpush1.bf16.msra.mxu0 %v2674
    %6427 = vmatprep.mubr.bf16.mxu0 %v6271
    %6428 = vmatmul.mubr.bf16.gmra.mrb[0].mxu0 %v6270
    %v6429 = vpop.f32.mrb[0].mxu0
    %v6430 = vadd.f32 %v6389, %v6429
    %v6431 = vpop.f32.mrb[0].mxu0
    %v6432 = vadd.f32 %v6391, %v6431
    %v6433 = vpop.f32.mrb[0].mxu0
    %v6434 = vpop.f32.mrb[0].mxu0
    %6435 = vdwg.mxu0
    %6436 = vmatprep.subr.bf16.mxu0 %v2429
    %6437 = vmatpush1.bf16.msra.mxu0 %v2428
    %6438 = vmatprep.subr.bf16.mxu0 %v2437
    %6439 = vmatpush1.bf16.msra.mxu0 %v2436
    %6440 = vmatprep.subr.bf16.mxu0 %v2445
    %6441 = vmatpush1.bf16.msra.mxu0 %v2444
    %6442 = vmatprep.subr.bf16.mxu0 %v2453
    %6443 = vmatpush1.bf16.msra.mxu0 %v2452
    %6444 = vmatprep.subr.bf16.mxu0 %v2461
    %6445 = vmatpush1.bf16.msra.mxu0 %v2460
    %6446 = vmatprep.subr.bf16.mxu0 %v2469
    %6447 = vmatpush1.bf16.msra.mxu0 %v2468
    %6448 = vmatprep.subr.bf16.mxu0 %v2477
    %6449 = vmatpush1.bf16.msra.mxu0 %v2476
    %6450 = vmatprep.subr.bf16.mxu0 %v2485
    %6451 = vmatpush1.bf16.msra.mxu0 %v2484
    %6452 = vmatprep.subr.bf16.mxu0 %v2493
    %6453 = vmatpush1.bf16.msra.mxu0 %v2492
    %6454 = vmatprep.subr.bf16.mxu0 %v2501
    %6455 = vmatpush1.bf16.msra.mxu0 %v2500
    %6456 = vmatprep.subr.bf16.mxu0 %v2509
    %6457 = vmatpush1.bf16.msra.mxu0 %v2508
    %6458 = vmatprep.subr.bf16.mxu0 %v2517
    %6459 = vmatpush1.bf16.msra.mxu0 %v2516
    %6460 = vmatprep.subr.bf16.mxu0 %v2525
    %6461 = vmatpush1.bf16.msra.mxu0 %v2524
    %6462 = vmatprep.subr.bf16.mxu0 %v2533
    %6463 = vmatpush1.bf16.msra.mxu0 %v2532
    %6464 = vmatprep.subr.bf16.mxu0 %v2541
    %6465 = vmatpush1.bf16.msra.mxu0 %v2540
    %6466 = vmatprep.subr.bf16.mxu0 %v2549
    %6467 = vmatpush1.bf16.msra.mxu0 %v2548
    %6468 = vmatprep.mubr.bf16.mxu0 %v6269
    %6469 = vmatmul.mubr.bf16.gmra.mrb[0].mxu0 %v6268
    %v6470 = vpop.f32.mrb[0].mxu0
    %v6471 = vadd.f32 %v1635, %v6470
    %v6472 = vpop.f32.mrb[0].mxu0
    %v6473 = vadd.f32 %v1639, %v6472
    %v6474 = vpop.f32.mrb[0].mxu0
    %v6475 = vpop.f32.mrb[0].mxu0
    %6476 = vdwg.mxu0
    %6477 = vmatprep.subr.bf16.mxu0 %v2557
    %6478 = vmatpush1.bf16.msra.mxu0 %v2556
    %6479 = vmatprep.subr.bf16.mxu0 %v2565
    %6480 = vmatpush1.bf16.msra.mxu0 %v2564
    %6481 = vmatprep.subr.bf16.mxu0 %v2573
    %6482 = vmatpush1.bf16.msra.mxu0 %v2572
    %6483 = vmatprep.subr.bf16.mxu0 %v2581
    %6484 = vmatpush1.bf16.msra.mxu0 %v2580
    %6485 = vmatprep.subr.bf16.mxu0 %v2589
    %6486 = vmatpush1.bf16.msra.mxu0 %v2588
    %6487 = vmatprep.subr.bf16.mxu0 %v2597
    %6488 = vmatpush1.bf16.msra.mxu0 %v2596
    %6489 = vmatprep.subr.bf16.mxu0 %v2605
    %6490 = vmatpush1.bf16.msra.mxu0 %v2604
    %6491 = vmatprep.subr.bf16.mxu0 %v2613
    %6492 = vmatpush1.bf16.msra.mxu0 %v2612
    %6493 = vmatprep.subr.bf16.mxu0 %v2621
    %6494 = vmatpush1.bf16.msra.mxu0 %v2620
    %6495 = vmatprep.subr.bf16.mxu0 %v2629
    %6496 = vmatpush1.bf16.msra.mxu0 %v2628
    %6497 = vmatprep.subr.bf16.mxu0 %v2637
    %6498 = vmatpush1.bf16.msra.mxu0 %v2636
    %6499 = vmatprep.subr.bf16.mxu0 %v2645
    %6500 = vmatpush1.bf16.msra.mxu0 %v2644
    %6501 = vmatprep.subr.bf16.mxu0 %v2653
    %6502 = vmatpush1.bf16.msra.mxu0 %v2652
    %6503 = vmatprep.subr.bf16.mxu0 %v2661
    %6504 = vmatpush1.bf16.msra.mxu0 %v2660
    %6505 = vmatprep.subr.bf16.mxu0 %v2669
    %6506 = vmatpush1.bf16.msra.mxu0 %v2668
    %6507 = vmatprep.subr.bf16.mxu0 %v2677
    %6508 = vmatpush1.bf16.msra.mxu0 %v2676
    %6509 = vmatprep.mubr.bf16.mxu0 %v6271
    %6510 = vmatmul.mubr.bf16.gmra.mrb[0].mxu0 %v6270
    %v6511 = vpop.f32.mrb[0].mxu0
    %v6512 = vadd.f32 %v6471, %v6511
    %v6513 = vpop.f32.mrb[0].mxu0
    %v6514 = vadd.f32 %v6473, %v6513
    %v6515 = vpop.f32.mrb[0].mxu0
    %v6516 = vpop.f32.mrb[0].mxu0
    %6517 = vdwg.mxu0
    %6518 = vmatprep.subr.bf16.mxu0 %v2431
    %6519 = vmatpush1.bf16.msra.mxu0 %v2430
    %6520 = vmatprep.subr.bf16.mxu0 %v2439
    %6521 = vmatpush1.bf16.msra.mxu0 %v2438
    %6522 = vmatprep.subr.bf16.mxu0 %v2447
    %6523 = vmatpush1.bf16.msra.mxu0 %v2446
    %6524 = vmatprep.subr.bf16.mxu0 %v2455
    %6525 = vmatpush1.bf16.msra.mxu0 %v2454
    %6526 = vmatprep.subr.bf16.mxu0 %v2463
    %6527 = vmatpush1.bf16.msra.mxu0 %v2462
    %6528 = vmatprep.subr.bf16.mxu0 %v2471
    %6529 = vmatpush1.bf16.msra.mxu0 %v2470
    %6530 = vmatprep.subr.bf16.mxu0 %v2479
    %6531 = vmatpush1.bf16.msra.mxu0 %v2478
    %6532 = vmatprep.subr.bf16.mxu0 %v2487
    %6533 = vmatpush1.bf16.msra.mxu0 %v2486
    %6534 = vmatprep.subr.bf16.mxu0 %v2495
    %6535 = vmatpush1.bf16.msra.mxu0 %v2494
    %6536 = vmatprep.subr.bf16.mxu0 %v2503
    %6537 = vmatpush1.bf16.msra.mxu0 %v2502
    %6538 = vmatprep.subr.bf16.mxu0 %v2511
    %6539 = vmatpush1.bf16.msra.mxu0 %v2510
    %6540 = vmatprep.subr.bf16.mxu0 %v2519
    %6541 = vmatpush1.bf16.msra.mxu0 %v2518
    %6542 = vmatprep.subr.bf16.mxu0 %v2527
    %6543 = vmatpush1.bf16.msra.mxu0 %v2526
    %6544 = vmatprep.subr.bf16.mxu0 %v2535
    %6545 = vmatpush1.bf16.msra.mxu0 %v2534
    %6546 = vmatprep.subr.bf16.mxu0 %v2543
    %6547 = vmatpush1.bf16.msra.mxu0 %v2542
    %6548 = vmatprep.subr.bf16.mxu0 %v2551
    %6549 = vmatpush1.bf16.msra.mxu0 %v2550
    %6550 = vmatprep.mubr.bf16.mxu0 %v6269
    %6551 = vmatmul.mubr.bf16.gmra.mrb[0].mxu0 %v6268
    %v6552 = vpop.f32.mrb[0].mxu0
    %v6553 = vadd.f32 %v1643, %v6552
    %v6554 = vpop.f32.mrb[0].mxu0
    %v6555 = vadd.f32 %v1647, %v6554
    %v6556 = vpop.f32.mrb[0].mxu0
    %v6557 = vpop.f32.mrb[0].mxu0
    %6558 = vdwg.mxu0
    %6559 = vmatprep.subr.bf16.mxu0 %v2559
    %6560 = vmatpush1.bf16.msra.mxu0 %v2558
    %6561 = vmatprep.subr.bf16.mxu0 %v2567
    %6562 = vmatpush1.bf16.msra.mxu0 %v2566
    %6563 = vmatprep.subr.bf16.mxu0 %v2575
    %6564 = vmatpush1.bf16.msra.mxu0 %v2574
    %6565 = vmatprep.subr.bf16.mxu0 %v2583
    %6566 = vmatpush1.bf16.msra.mxu0 %v2582
    %6567 = vmatprep.subr.bf16.mxu0 %v2591
    %6568 = vmatpush1.bf16.msra.mxu0 %v2590
    %6569 = vmatprep.subr.bf16.mxu0 %v2599
    %6570 = vmatpush1.bf16.msra.mxu0 %v2598
    %6571 = vmatprep.subr.bf16.mxu0 %v2607
    %6572 = vmatpush1.bf16.msra.mxu0 %v2606
    %6573 = vmatprep.subr.bf16.mxu0 %v2615
    %6574 = vmatpush1.bf16.msra.mxu0 %v2614
    %6575 = vmatprep.subr.bf16.mxu0 %v2623
    %6576 = vmatpush1.bf16.msra.mxu0 %v2622
    %6577 = vmatprep.subr.bf16.mxu0 %v2631
    %6578 = vmatpush1.bf16.msra.mxu0 %v2630
    %6579 = vmatprep.subr.bf16.mxu0 %v2639
    %6580 = vmatpush1.bf16.msra.mxu0 %v2638
    %6581 = vmatprep.subr.bf16.mxu0 %v2647
    %6582 = vmatpush1.bf16.msra.mxu0 %v2646
    %6583 = vmatprep.subr.bf16.mxu0 %v2655
    %6584 = vmatpush1.bf16.msra.mxu0 %v2654
    %6585 = vmatprep.subr.bf16.mxu0 %v2663
    %6586 = vmatpush1.bf16.msra.mxu0 %v2662
    %6587 = vmatprep.subr.bf16.mxu0 %v2671
    %6588 = vmatpush1.bf16.msra.mxu0 %v2670
    %6589 = vmatprep.subr.bf16.mxu0 %v2679
    %6590 = vmatpush1.bf16.msra.mxu0 %v2678
    %6591 = vmatprep.mubr.bf16.mxu0 %v6271
    %6592 = vmatmul.mubr.bf16.gmra.mrb[0].mxu0 %v6270
    %v6593 = vpop.f32.mrb[0].mxu0
    %v6594 = vadd.f32 %v6553, %v6593
    %v6595 = vpop.f32.mrb[0].mxu0
    %v6596 = vadd.f32 %v6555, %v6595
    %v6597 = vpop.f32.mrb[0].mxu0
    %v6598 = vpop.f32.mrb[0].mxu0
    %6599 = vdwg.mxu0
    %v6600 = vxor.u32 %v6348, 2147483648
    %v6601 = vxor.u32 %v6350, 2147483648
    %v6602 = vmul.f32 %v6600, 1.442695
    %v6603 = vpow.pop %v6602
    %v6604 = vmul.f32 %v6601, 1.442695
    %v6605 = vpow.pop %v6604
    %v6606 = vadd.f32 %v6603, 1.0
    %v6607 = vadd.f32 %v6605, 1.0
    %v6608 = vrcp.pop %v6606
    %v6609 = vmul.f32 1.0, %v6608
    %v6610 = vrcp.pop %v6607
    %v6611 = vmul.f32 1.0, %v6610
    %v6612 = vxor.u32 %v6430, 2147483648
    %v6613 = vxor.u32 %v6432, 2147483648
    %v6614 = vmul.f32 %v6612, 1.442695
    %v6615 = vpow.pop %v6614
    %v6616 = vmul.f32 %v6613, 1.442695
    %v6617 = vpow.pop %v6616
    %v6618 = vadd.f32 %v6615, 1.0
    %v6619 = vadd.f32 %v6617, 1.0
    %v6620 = vrcp.pop %v6618
    %v6621 = vmul.f32 1.0, %v6620
    %v6622 = vrcp.pop %v6619
    %v6623 = vmul.f32 1.0, %v6622
    %v6624 = vmul.f32 %v6609, %v6594
    %v6625 = vmul.f32 %v6611, %v6596
    %v6626 = vadd.f32 %v6512, %v6624
    %v6627 = vadd.f32 %v6514, %v6625
    %v6628 = vtanh.pop %v6626
    %v6629 = vtanh.pop %v6627
    %v6630 = vsub.f32 1.0, %v6621
    %v6631 = vsub.f32 1.0, %v6623
    %v6632 = vmul.f32 %v6630, %v6628
    %v6633 = vmul.f32 %v6631, %v6629
    %v6634 = vmul.f32 %v6621, %v6082
    %v6635 = vmul.f32 %v6623, %v6083
    %v6636 = vadd.f32 %v6632, %v6634
    %v6637 = vadd.f32 %v6633, %v6635
    %v6638 = vsel %vm6265, %v6636, %v6082
    %v6639 = vsel %vm6265, %v6637, %v6083
    %s6640 = smul.u32 7, 6
    %s6641 = smul.addr %s6640, 8
    %s6642 = scalar_lea.vmem [#allocation2], %s6641
    %v6643 = vld [vmem:[%s6642] sm:$0xff]
    %v6644 = vld [vmem:[%s6642 + $0x8] sm:$0xff]
    %v6645 = vld [vmem:[%s6642 + $0x10] sm:$0xff]
    %v6646 = vld [vmem:[%s6642 + $0x18] sm:$0xff]
    %v6647 = vld [vmem:[%s6642 + $0x20] sm:$0xff]
    %v6648 = vld [vmem:[%s6642 + $0x28] sm:$0xff]
    %s6649 = scalar_lea.vmem %s1, 56
    %v6650 = vld [vmem:[%s6649] sm:$0xff]
    %6651 = vmatprep.subr.bf16.mxu0 %v991
    %6652 = vmatpush1.bf16.msra.mxu0 %v990
    %6653 = vmatprep.subr.bf16.mxu0 %v997
    %6654 = vmatpush1.bf16.msra.mxu0 %v996
    %6655 = vmatprep.subr.bf16.mxu0 %v1003
    %6656 = vmatpush1.bf16.msra.mxu0 %v1002
    %6657 = vmatprep.subr.bf16.mxu0 %v1009
    %6658 = vmatpush1.bf16.msra.mxu0 %v1008
    %6659 = vmatprep.subr.bf16.mxu0 %v1015
    %6660 = vmatpush1.bf16.msra.mxu0 %v1014
    %6661 = vmatprep.subr.bf16.mxu0 %v1021
    %6662 = vmatpush1.bf16.msra.mxu0 %v1020
    %6663 = vmatprep.subr.bf16.mxu0 %v1027
    %6664 = vmatpush1.bf16.msra.mxu0 %v1026
    %6665 = vmatprep.subr.bf16.mxu0 %v1033
    %6666 = vmatpush1.bf16.msra.mxu0 %v1032
    %6667 = vmatprep.subr.bf16.mxu0 %v1039
    %6668 = vmatpush1.bf16.msra.mxu0 %v1038
    %6669 = vmatprep.subr.bf16.mxu0 %v1045
    %6670 = vmatpush1.bf16.msra.mxu0 %v1044
    %6671 = vmatprep.subr.bf16.mxu0 %v1051
    %6672 = vmatpush1.bf16.msra.mxu0 %v1050
    %6673 = vmatprep.subr.bf16.mxu0 %v1057
    %6674 = vmatpush1.bf16.msra.mxu0 %v1056
    %6675 = vmatprep.subr.bf16.mxu0 %v1063
    %6676 = vmatpush1.bf16.msra.mxu0 %v1062
    %6677 = vmatprep.subr.bf16.mxu0 %v1069
    %6678 = vmatpush1.bf16.msra.mxu0 %v1068
    %6679 = vmatprep.subr.bf16.mxu0 %v1075
    %6680 = vmatpush1.bf16.msra.mxu0 %v1074
    %6681 = vmatprep.subr.bf16.mxu0 %v1081
    %6682 = vmatpush1.bf16.msra.mxu0 %v1080
    %6683 = vmatprep.mubr.bf16.mxu0 %v6269
    %6684 = vmatmul.mubr.bf16.gmra.mrb[0].mxu0 %v6268
    %v6685 = vpop.f32.mrb[0].mxu0
    %v6686 = vadd.f32 %v675, %v6685
    %v6687 = vpop.f32.mrb[0].mxu0
    %v6688 = vadd.f32 %v679, %v6687
    %v6689 = vpop.f32.mrb[0].mxu0
    %v6690 = vpop.f32.mrb[0].mxu0
    %6691 = vdwg.mxu0
    %6692 = vmatprep.subr.bf16.mxu0 %v993
    %6693 = vmatpush1.bf16.msra.mxu0 %v992
    %6694 = vmatprep.subr.bf16.mxu0 %v999
    %6695 = vmatpush1.bf16.msra.mxu0 %v998
    %6696 = vmatprep.subr.bf16.mxu0 %v1005
    %6697 = vmatpush1.bf16.msra.mxu0 %v1004
    %6698 = vmatprep.subr.bf16.mxu0 %v1011
    %6699 = vmatpush1.bf16.msra.mxu0 %v1010
    %6700 = vmatprep.subr.bf16.mxu0 %v1017
    %6701 = vmatpush1.bf16.msra.mxu0 %v1016
    %6702 = vmatprep.subr.bf16.mxu0 %v1023
    %6703 = vmatpush1.bf16.msra.mxu0 %v1022
    %6704 = vmatprep.subr.bf16.mxu0 %v1029
    %6705 = vmatpush1.bf16.msra.mxu0 %v1028
    %6706 = vmatprep.subr.bf16.mxu0 %v1035
    %6707 = vmatpush1.bf16.msra.mxu0 %v1034
    %6708 = vmatprep.subr.bf16.mxu0 %v1041
    %6709 = vmatpush1.bf16.msra.mxu0 %v1040
    %6710 = vmatprep.subr.bf16.mxu0 %v1047
    %6711 = vmatpush1.bf16.msra.mxu0 %v1046
    %6712 = vmatprep.subr.bf16.mxu0 %v1053
    %6713 = vmatpush1.bf16.msra.mxu0 %v1052
    %6714 = vmatprep.subr.bf16.mxu0 %v1059
    %6715 = vmatpush1.bf16.msra.mxu0 %v1058
    %6716 = vmatprep.subr.bf16.mxu0 %v1065
    %6717 = vmatpush1.bf16.msra.mxu0 %v1064
    %6718 = vmatprep.subr.bf16.mxu0 %v1071
    %6719 = vmatpush1.bf16.msra.mxu0 %v1070
    %6720 = vmatprep.subr.bf16.mxu0 %v1077
    %6721 = vmatpush1.bf16.msra.mxu0 %v1076
    %6722 = vmatprep.subr.bf16.mxu0 %v1083
    %6723 = vmatpush1.bf16.msra.mxu0 %v1082
    %6724 = vmatprep.mubr.bf16.mxu0 %v6269
    %6725 = vmatmul.mubr.bf16.gmra.mrb[0].mxu0 %v6268
    %v6726 = vpop.f32.mrb[0].mxu0
    %v6727 = vadd.f32 %v683, %v6726
    %v6728 = vpop.f32.mrb[0].mxu0
    %v6729 = vadd.f32 %v687, %v6728
    %v6730 = vpop.f32.mrb[0].mxu0
    %v6731 = vpop.f32.mrb[0].mxu0
    %6732 = vdwg.mxu0
    %6733 = vmatprep.subr.bf16.mxu0 %v995
    %6734 = vmatpush1.bf16.msra.mxu0 %v994
    %6735 = vmatprep.subr.bf16.mxu0 %v1001
    %6736 = vmatpush1.bf16.msra.mxu0 %v1000
    %6737 = vmatprep.subr.bf16.mxu0 %v1007
    %6738 = vmatpush1.bf16.msra.mxu0 %v1006
    %6739 = vmatprep.subr.bf16.mxu0 %v1013
    %6740 = vmatpush1.bf16.msra.mxu0 %v1012
    %6741 = vmatprep.subr.bf16.mxu0 %v1019
    %6742 = vmatpush1.bf16.msra.mxu0 %v1018
    %6743 = vmatprep.subr.bf16.mxu0 %v1025
    %6744 = vmatpush1.bf16.msra.mxu0 %v1024
    %6745 = vmatprep.subr.bf16.mxu0 %v1031
    %6746 = vmatpush1.bf16.msra.mxu0 %v1030
    %6747 = vmatprep.subr.bf16.mxu0 %v1037
    %6748 = vmatpush1.bf16.msra.mxu0 %v1036
    %6749 = vmatprep.subr.bf16.mxu0 %v1043
    %6750 = vmatpush1.bf16.msra.mxu0 %v1042
    %6751 = vmatprep.subr.bf16.mxu0 %v1049
    %6752 = vmatpush1.bf16.msra.mxu0 %v1048
    %6753 = vmatprep.subr.bf16.mxu0 %v1055
    %6754 = vmatpush1.bf16.msra.mxu0 %v1054
    %6755 = vmatprep.subr.bf16.mxu0 %v1061
    %6756 = vmatpush1.bf16.msra.mxu0 %v1060
    %6757 = vmatprep.subr.bf16.mxu0 %v1067
    %6758 = vmatpush1.bf16.msra.mxu0 %v1066
    %6759 = vmatprep.subr.bf16.mxu0 %v1073
    %6760 = vmatpush1.bf16.msra.mxu0 %v1072
    %6761 = vmatprep.subr.bf16.mxu0 %v1079
    %6762 = vmatpush1.bf16.msra.mxu0 %v1078
    %6763 = vmatprep.subr.bf16.mxu0 %v1085
    %6764 = vmatpush1.bf16.msra.mxu0 %v1084
    %6765 = vmatprep.mubr.bf16.mxu0 %v6269
    %6766 = vmatmul.mubr.bf16.gmra.mrb[0].mxu0 %v6268
    %v6767 = vpop.f32.mrb[0].mxu0
    %v6768 = vadd.f32 %v691, %v6767
    %v6769 = vpop.f32.mrb[0].mxu0
    %v6770 = vadd.f32 %v695, %v6769
    %v6771 = vpop.f32.mrb[0].mxu0
    %v6772 = vpop.f32.mrb[0].mxu0
    %6773 = vdwg.mxu0
    %v6774 = vadd.f32 %v6643, %v6686
    %v6775 = vadd.f32 %v6644, %v6688
    %v6776 = vxor.u32 %v6774, 2147483648
    %v6777 = vxor.u32 %v6775, 2147483648
    %v6778 = vmul.f32 %v6776, 1.442695
    %v6779 = vpow.pop %v6778
    %v6780 = vmul.f32 %v6777, 1.442695
    %v6781 = vpow.pop %v6780
    %v6782 = vadd.f32 %v6779, 1.0
    %v6783 = vadd.f32 %v6781, 1.0
    %v6784 = vrcp.pop %v6782
    %v6785 = vmul.f32 1.0, %v6784
    %v6786 = vrcp.pop %v6783
    %v6787 = vmul.f32 1.0, %v6786
    %v6788 = vadd.f32 %v6645, %v6727
    %v6789 = vadd.f32 %v6646, %v6729
    %v6790 = vxor.u32 %v6788, 2147483648
    %v6791 = vxor.u32 %v6789, 2147483648
    %v6792 = vmul.f32 %v6790, 1.442695
    %v6793 = vpow.pop %v6792
    %v6794 = vmul.f32 %v6791, 1.442695
    %v6795 = vpow.pop %v6794
    %v6796 = vadd.f32 %v6793, 1.0
    %v6797 = vadd.f32 %v6795, 1.0
    %v6798 = vrcp.pop %v6796
    %v6799 = vmul.f32 1.0, %v6798
    %v6800 = vrcp.pop %v6797
    %v6801 = vmul.f32 1.0, %v6800
    %v6802 = vmul.f32 %v6785, %v6768
    %v6803 = vmul.f32 %v6787, %v6770
    %v6804 = vadd.f32 %v6647, %v6802
    %v6805 = vadd.f32 %v6648, %v6803
    %v6806 = vtanh.pop %v6804
    %v6807 = vtanh.pop %v6805
    %v6808 = vsub.f32 1.0, %v6799
    %v6809 = vsub.f32 1.0, %v6801
    %v6810 = vmul.f32 %v6808, %v6806
    %v6811 = vmul.f32 %v6809, %v6807
    %v6812 = vmul.f32 %v6799, %v6266
    %v6813 = vmul.f32 %v6801, %v6267
    %v6814 = vadd.f32 %v6810, %v6812
    %v6815 = vadd.f32 %v6811, %v6813
    %vm6816 = vcmp.gt.f32.partialorder %v6650, 0.0
    %v6817 = vsel %vm6816, 1, 0
    %6818 = vset.pattern.permute.xlu0 0
    %6819 = vperm.xlu0 %6818, %v6817
    %v6820 = vpop.permute.xlu0 %6819
    %vm6821 = vcmp.eq.s32.totalorder %v6820, 1
    %v6822 = vsel %vm6821, %v6814, %v6266
    %v6823 = vsel %vm6821, %v6815, %v6267
    %v6824 = vpack.c.bf16 %v6822, %v6822
    %v6825 = vpack.c.bf16 %v6823, %v6823
    %v6826 = vpack.c.bf16 %v6638, %v6638
    %v6827 = vpack.c.bf16 %v6639, %v6639
    %6828 = vmatprep.subr.bf16.mxu0 %v2425
    %6829 = vmatpush1.bf16.msra.mxu0 %v2424
    %6830 = vmatprep.subr.bf16.mxu0 %v2433
    %6831 = vmatpush1.bf16.msra.mxu0 %v2432
    %6832 = vmatprep.subr.bf16.mxu0 %v2441
    %6833 = vmatpush1.bf16.msra.mxu0 %v2440
    %6834 = vmatprep.subr.bf16.mxu0 %v2449
    %6835 = vmatpush1.bf16.msra.mxu0 %v2448
    %6836 = vmatprep.subr.bf16.mxu0 %v2457
    %6837 = vmatpush1.bf16.msra.mxu0 %v2456
    %6838 = vmatprep.subr.bf16.mxu0 %v2465
    %6839 = vmatpush1.bf16.msra.mxu0 %v2464
    %6840 = vmatprep.subr.bf16.mxu0 %v2473
    %6841 = vmatpush1.bf16.msra.mxu0 %v2472
    %6842 = vmatprep.subr.bf16.mxu0 %v2481
    %6843 = vmatpush1.bf16.msra.mxu0 %v2480
    %6844 = vmatprep.subr.bf16.mxu0 %v2489
    %6845 = vmatpush1.bf16.msra.mxu0 %v2488
    %6846 = vmatprep.subr.bf16.mxu0 %v2497
    %6847 = vmatpush1.bf16.msra.mxu0 %v2496
    %6848 = vmatprep.subr.bf16.mxu0 %v2505
    %6849 = vmatpush1.bf16.msra.mxu0 %v2504
    %6850 = vmatprep.subr.bf16.mxu0 %v2513
    %6851 = vmatpush1.bf16.msra.mxu0 %v2512
    %6852 = vmatprep.subr.bf16.mxu0 %v2521
    %6853 = vmatpush1.bf16.msra.mxu0 %v2520
    %6854 = vmatprep.subr.bf16.mxu0 %v2529
    %6855 = vmatpush1.bf16.msra.mxu0 %v2528
    %6856 = vmatprep.subr.bf16.mxu0 %v2537
    %6857 = vmatpush1.bf16.msra.mxu0 %v2536
    %6858 = vmatprep.subr.bf16.mxu0 %v2545
    %6859 = vmatpush1.bf16.msra.mxu0 %v2544
    %6860 = vmatprep.mubr.bf16.mxu0 %v6825
    %6861 = vmatmul.mubr.bf16.gmra.mrb[0].mxu0 %v6824
    %v6862 = vpop.f32.mrb[0].mxu0
    %v6863 = vadd.f32 %v1619, %v6862
    %v6864 = vpop.f32.mrb[0].mxu0
    %v6865 = vadd.f32 %v1623, %v6864
    %v6866 = vpop.f32.mrb[0].mxu0
    %v6867 = vpop.f32.mrb[0].mxu0
    %6868 = vdwg.mxu0
    %6869 = vmatprep.subr.bf16.mxu0 %v2553
    %6870 = vmatpush1.bf16.msra.mxu0 %v2552
    %6871 = vmatprep.subr.bf16.mxu0 %v2561
    %6872 = vmatpush1.bf16.msra.mxu0 %v2560
    %6873 = vmatprep.subr.bf16.mxu0 %v2569
    %6874 = vmatpush1.bf16.msra.mxu0 %v2568
    %6875 = vmatprep.subr.bf16.mxu0 %v2577
    %6876 = vmatpush1.bf16.msra.mxu0 %v2576
    %6877 = vmatprep.subr.bf16.mxu0 %v2585
    %6878 = vmatpush1.bf16.msra.mxu0 %v2584
    %6879 = vmatprep.subr.bf16.mxu0 %v2593
    %6880 = vmatpush1.bf16.msra.mxu0 %v2592
    %6881 = vmatprep.subr.bf16.mxu0 %v2601
    %6882 = vmatpush1.bf16.msra.mxu0 %v2600
    %6883 = vmatprep.subr.bf16.mxu0 %v2609
    %6884 = vmatpush1.bf16.msra.mxu0 %v2608
    %6885 = vmatprep.subr.bf16.mxu0 %v2617
    %6886 = vmatpush1.bf16.msra.mxu0 %v2616
    %6887 = vmatprep.subr.bf16.mxu0 %v2625
    %6888 = vmatpush1.bf16.msra.mxu0 %v2624
    %6889 = vmatprep.subr.bf16.mxu0 %v2633
    %6890 = vmatpush1.bf16.msra.mxu0 %v2632
    %6891 = vmatprep.subr.bf16.mxu0 %v2641
    %6892 = vmatpush1.bf16.msra.mxu0 %v2640
    %6893 = vmatprep.subr.bf16.mxu0 %v2649
    %6894 = vmatpush1.bf16.msra.mxu0 %v2648
    %6895 = vmatprep.subr.bf16.mxu0 %v2657
    %6896 = vmatpush1.bf16.msra.mxu0 %v2656
    %6897 = vmatprep.subr.bf16.mxu0 %v2665
    %6898 = vmatpush1.bf16.msra.mxu0 %v2664
    %6899 = vmatprep.subr.bf16.mxu0 %v2673
    %6900 = vmatpush1.bf16.msra.mxu0 %v2672
    %6901 = vmatprep.mubr.bf16.mxu0 %v6827
    %6902 = vmatmul.mubr.bf16.gmra.mrb[0].mxu0 %v6826
    %v6903 = vpop.f32.mrb[0].mxu0
    %v6904 = vadd.f32 %v6863, %v6903
    %v6905 = vpop.f32.mrb[0].mxu0
    %v6906 = vadd.f32 %v6865, %v6905
    %v6907 = vpop.f32.mrb[0].mxu0
    %v6908 = vpop.f32.mrb[0].mxu0
    %6909 = vdwg.mxu0
    %6910 = vmatprep.subr.bf16.mxu0 %v2427
    %6911 = vmatpush1.bf16.msra.mxu0 %v2426
    %6912 = vmatprep.subr.bf16.mxu0 %v2435
    %6913 = vmatpush1.bf16.msra.mxu0 %v2434
    %6914 = vmatprep.subr.bf16.mxu0 %v2443
    %6915 = vmatpush1.bf16.msra.mxu0 %v2442
    %6916 = vmatprep.subr.bf16.mxu0 %v2451
    %6917 = vmatpush1.bf16.msra.mxu0 %v2450
    %6918 = vmatprep.subr.bf16.mxu0 %v2459
    %6919 = vmatpush1.bf16.msra.mxu0 %v2458
    %6920 = vmatprep.subr.bf16.mxu0 %v2467
    %6921 = vmatpush1.bf16.msra.mxu0 %v2466
    %6922 = vmatprep.subr.bf16.mxu0 %v2475
    %6923 = vmatpush1.bf16.msra.mxu0 %v2474
    %6924 = vmatprep.subr.bf16.mxu0 %v2483
    %6925 = vmatpush1.bf16.msra.mxu0 %v2482
    %6926 = vmatprep.subr.bf16.mxu0 %v2491
    %6927 = vmatpush1.bf16.msra.mxu0 %v2490
    %6928 = vmatprep.subr.bf16.mxu0 %v2499
    %6929 = vmatpush1.bf16.msra.mxu0 %v2498
    %6930 = vmatprep.subr.bf16.mxu0 %v2507
    %6931 = vmatpush1.bf16.msra.mxu0 %v2506
    %6932 = vmatprep.subr.bf16.mxu0 %v2515
    %6933 = vmatpush1.bf16.msra.mxu0 %v2514
    %6934 = vmatprep.subr.bf16.mxu0 %v2523
    %6935 = vmatpush1.bf16.msra.mxu0 %v2522
    %6936 = vmatprep.subr.bf16.mxu0 %v2531
    %6937 = vmatpush1.bf16.msra.mxu0 %v2530
    %6938 = vmatprep.subr.bf16.mxu0 %v2539
    %6939 = vmatpush1.bf16.msra.mxu0 %v2538
    %6940 = vmatprep.subr.bf16.mxu0 %v2547
    %6941 = vmatpush1.bf16.msra.mxu0 %v2546
    %6942 = vmatprep.mubr.bf16.mxu0 %v6825
    %6943 = vmatmul.mubr.bf16.gmra.mrb[0].mxu0 %v6824
    %v6944 = vpop.f32.mrb[0].mxu0
    %v6945 = vadd.f32 %v1627, %v6944
    %v6946 = vpop.f32.mrb[0].mxu0
    %v6947 = vadd.f32 %v1631, %v6946
    %v6948 = vpop.f32.mrb[0].mxu0
    %v6949 = vpop.f32.mrb[0].mxu0
    %6950 = vdwg.mxu0
    %6951 = vmatprep.subr.bf16.mxu0 %v2555
    %6952 = vmatpush1.bf16.msra.mxu0 %v2554
    %6953 = vmatprep.subr.bf16.mxu0 %v2563
    %6954 = vmatpush1.bf16.msra.mxu0 %v2562
    %6955 = vmatprep.subr.bf16.mxu0 %v2571
    %6956 = vmatpush1.bf16.msra.mxu0 %v2570
    %6957 = vmatprep.subr.bf16.mxu0 %v2579
    %6958 = vmatpush1.bf16.msra.mxu0 %v2578
    %6959 = vmatprep.subr.bf16.mxu0 %v2587
    %6960 = vmatpush1.bf16.msra.mxu0 %v2586
    %6961 = vmatprep.subr.bf16.mxu0 %v2595
    %6962 = vmatpush1.bf16.msra.mxu0 %v2594
    %6963 = vmatprep.subr.bf16.mxu0 %v2603
    %6964 = vmatpush1.bf16.msra.mxu0 %v2602
    %6965 = vmatprep.subr.bf16.mxu0 %v2611
    %6966 = vmatpush1.bf16.msra.mxu0 %v2610
    %6967 = vmatprep.subr.bf16.mxu0 %v2619
    %6968 = vmatpush1.bf16.msra.mxu0 %v2618
    %6969 = vmatprep.subr.bf16.mxu0 %v2627
    %6970 = vmatpush1.bf16.msra.mxu0 %v2626
    %6971 = vmatprep.subr.bf16.mxu0 %v2635
    %6972 = vmatpush1.bf16.msra.mxu0 %v2634
    %6973 = vmatprep.subr.bf16.mxu0 %v2643
    %6974 = vmatpush1.bf16.msra.mxu0 %v2642
    %6975 = vmatprep.subr.bf16.mxu0 %v2651
    %6976 = vmatpush1.bf16.msra.mxu0 %v2650
    %6977 = vmatprep.subr.bf16.mxu0 %v2659
    %6978 = vmatpush1.bf16.msra.mxu0 %v2658
    %6979 = vmatprep.subr.bf16.mxu0 %v2667
    %6980 = vmatpush1.bf16.msra.mxu0 %v2666
    %6981 = vmatprep.subr.bf16.mxu0 %v2675
    %6982 = vmatpush1.bf16.msra.mxu0 %v2674
    %6983 = vmatprep.mubr.bf16.mxu0 %v6827
    %6984 = vmatmul.mubr.bf16.gmra.mrb[0].mxu0 %v6826
    %v6985 = vpop.f32.mrb[0].mxu0
    %v6986 = vadd.f32 %v6945, %v6985
    %v6987 = vpop.f32.mrb[0].mxu0
    %v6988 = vadd.f32 %v6947, %v6987
    %v6989 = vpop.f32.mrb[0].mxu0
    %v6990 = vpop.f32.mrb[0].mxu0
    %6991 = vdwg.mxu0
    %6992 = vmatprep.subr.bf16.mxu0 %v2429
    %6993 = vmatpush1.bf16.msra.mxu0 %v2428
    %6994 = vmatprep.subr.bf16.mxu0 %v2437
    %6995 = vmatpush1.bf16.msra.mxu0 %v2436
    %6996 = vmatprep.subr.bf16.mxu0 %v2445
    %6997 = vmatpush1.bf16.msra.mxu0 %v2444
    %6998 = vmatprep.subr.bf16.mxu0 %v2453
    %6999 = vmatpush1.bf16.msra.mxu0 %v2452
    %7000 = vmatprep.subr.bf16.mxu0 %v2461
    %7001 = vmatpush1.bf16.msra.mxu0 %v2460
    %7002 = vmatprep.subr.bf16.mxu0 %v2469
    %7003 = vmatpush1.bf16.msra.mxu0 %v2468
    %7004 = vmatprep.subr.bf16.mxu0 %v2477
    %7005 = vmatpush1.bf16.msra.mxu0 %v2476
    %7006 = vmatprep.subr.bf16.mxu0 %v2485
    %7007 = vmatpush1.bf16.msra.mxu0 %v2484
    %7008 = vmatprep.subr.bf16.mxu0 %v2493
    %7009 = vmatpush1.bf16.msra.mxu0 %v2492
    %7010 = vmatprep.subr.bf16.mxu0 %v2501
    %7011 = vmatpush1.bf16.msra.mxu0 %v2500
    %7012 = vmatprep.subr.bf16.mxu0 %v2509
    %7013 = vmatpush1.bf16.msra.mxu0 %v2508
    %7014 = vmatprep.subr.bf16.mxu0 %v2517
    %7015 = vmatpush1.bf16.msra.mxu0 %v2516
    %7016 = vmatprep.subr.bf16.mxu0 %v2525
    %7017 = vmatpush1.bf16.msra.mxu0 %v2524
    %7018 = vmatprep.subr.bf16.mxu0 %v2533
    %7019 = vmatpush1.bf16.msra.mxu0 %v2532
    %7020 = vmatprep.subr.bf16.mxu0 %v2541
    %7021 = vmatpush1.bf16.msra.mxu0 %v2540
    %7022 = vmatprep.subr.bf16.mxu0 %v2549
    %7023 = vmatpush1.bf16.msra.mxu0 %v2548
    %7024 = vmatprep.mubr.bf16.mxu0 %v6825
    %7025 = vmatmul.mubr.bf16.gmra.mrb[0].mxu0 %v6824
    %v7026 = vpop.f32.mrb[0].mxu0
    %v7027 = vadd.f32 %v1635, %v7026
    %v7028 = vpop.f32.mrb[0].mxu0
    %v7029 = vadd.f32 %v1639, %v7028
    %v7030 = vpop.f32.mrb[0].mxu0
    %v7031 = vpop.f32.mrb[0].mxu0
    %7032 = vdwg.mxu0
    %7033 = vmatprep.subr.bf16.mxu0 %v2557
    %7034 = vmatpush1.bf16.msra.mxu0 %v2556
    %7035 = vmatprep.subr.bf16.mxu0 %v2565
    %7036 = vmatpush1.bf16.msra.mxu0 %v2564
    %7037 = vmatprep.subr.bf16.mxu0 %v2573
    %7038 = vmatpush1.bf16.msra.mxu0 %v2572
    %7039 = vmatprep.subr.bf16.mxu0 %v2581
    %7040 = vmatpush1.bf16.msra.mxu0 %v2580
    %7041 = vmatprep.subr.bf16.mxu0 %v2589
    %7042 = vmatpush1.bf16.msra.mxu0 %v2588
    %7043 = vmatprep.subr.bf16.mxu0 %v2597
    %7044 = vmatpush1.bf16.msra.mxu0 %v2596
    %7045 = vmatprep.subr.bf16.mxu0 %v2605
    %7046 = vmatpush1.bf16.msra.mxu0 %v2604
    %7047 = vmatprep.subr.bf16.mxu0 %v2613
    %7048 = vmatpush1.bf16.msra.mxu0 %v2612
    %7049 = vmatprep.subr.bf16.mxu0 %v2621
    %7050 = vmatpush1.bf16.msra.mxu0 %v2620
    %7051 = vmatprep.subr.bf16.mxu0 %v2629
    %7052 = vmatpush1.bf16.msra.mxu0 %v2628
    %7053 = vmatprep.subr.bf16.mxu0 %v2637
    %7054 = vmatpush1.bf16.msra.mxu0 %v2636
    %7055 = vmatprep.subr.bf16.mxu0 %v2645
    %7056 = vmatpush1.bf16.msra.mxu0 %v2644
    %7057 = vmatprep.subr.bf16.mxu0 %v2653
    %7058 = vmatpush1.bf16.msra.mxu0 %v2652
    %7059 = vmatprep.subr.bf16.mxu0 %v2661
    %7060 = vmatpush1.bf16.msra.mxu0 %v2660
    %7061 = vmatprep.subr.bf16.mxu0 %v2669
    %7062 = vmatpush1.bf16.msra.mxu0 %v2668
    %7063 = vmatprep.subr.bf16.mxu0 %v2677
    %7064 = vmatpush1.bf16.msra.mxu0 %v2676
    %7065 = vmatprep.mubr.bf16.mxu0 %v6827
    %7066 = vmatmul.mubr.bf16.gmra.mrb[0].mxu0 %v6826
    %v7067 = vpop.f32.mrb[0].mxu0
    %v7068 = vadd.f32 %v7027, %v7067
    %v7069 = vpop.f32.mrb[0].mxu0
    %v7070 = vadd.f32 %v7029, %v7069
    %v7071 = vpop.f32.mrb[0].mxu0
    %v7072 = vpop.f32.mrb[0].mxu0
    %7073 = vdwg.mxu0
    %7074 = vmatprep.subr.bf16.mxu0 %v2431
    %7075 = vmatpush1.bf16.msra.mxu0 %v2430
    %7076 = vmatprep.subr.bf16.mxu0 %v2439
    %7077 = vmatpush1.bf16.msra.mxu0 %v2438
    %7078 = vmatprep.subr.bf16.mxu0 %v2447
    %7079 = vmatpush1.bf16.msra.mxu0 %v2446
    %7080 = vmatprep.subr.bf16.mxu0 %v2455
    %7081 = vmatpush1.bf16.msra.mxu0 %v2454
    %7082 = vmatprep.subr.bf16.mxu0 %v2463
    %7083 = vmatpush1.bf16.msra.mxu0 %v2462
    %7084 = vmatprep.subr.bf16.mxu0 %v2471
    %7085 = vmatpush1.bf16.msra.mxu0 %v2470
    %7086 = vmatprep.subr.bf16.mxu0 %v2479
    %7087 = vmatpush1.bf16.msra.mxu0 %v2478
    %7088 = vmatprep.subr.bf16.mxu0 %v2487
    %7089 = vmatpush1.bf16.msra.mxu0 %v2486
    %7090 = vmatprep.subr.bf16.mxu0 %v2495
    %7091 = vmatpush1.bf16.msra.mxu0 %v2494
    %7092 = vmatprep.subr.bf16.mxu0 %v2503
    %7093 = vmatpush1.bf16.msra.mxu0 %v2502
    %7094 = vmatprep.subr.bf16.mxu0 %v2511
    %7095 = vmatpush1.bf16.msra.mxu0 %v2510
    %7096 = vmatprep.subr.bf16.mxu0 %v2519
    %7097 = vmatpush1.bf16.msra.mxu0 %v2518
    %7098 = vmatprep.subr.bf16.mxu0 %v2527
    %7099 = vmatpush1.bf16.msra.mxu0 %v2526
    %7100 = vmatprep.subr.bf16.mxu0 %v2535
    %7101 = vmatpush1.bf16.msra.mxu0 %v2534
    %7102 = vmatprep.subr.bf16.mxu0 %v2543
    %7103 = vmatpush1.bf16.msra.mxu0 %v2542
    %7104 = vmatprep.subr.bf16.mxu0 %v2551
    %7105 = vmatpush1.bf16.msra.mxu0 %v2550
    %7106 = vmatprep.mubr.bf16.mxu0 %v6825
    %7107 = vmatmul.mubr.bf16.gmra.mrb[0].mxu0 %v6824
    %v7108 = vpop.f32.mrb[0].mxu0
    %v7109 = vadd.f32 %v1643, %v7108
    %v7110 = vpop.f32.mrb[0].mxu0
    %v7111 = vadd.f32 %v1647, %v7110
    %v7112 = vpop.f32.mrb[0].mxu0
    %v7113 = vpop.f32.mrb[0].mxu0
    %7114 = vdwg.mxu0
    %7115 = vmatprep.subr.bf16.mxu0 %v2559
    %7116 = vmatpush1.bf16.msra.mxu0 %v2558
    %7117 = vmatprep.subr.bf16.mxu0 %v2567
    %7118 = vmatpush1.bf16.msra.mxu0 %v2566
    %7119 = vmatprep.subr.bf16.mxu0 %v2575
    %7120 = vmatpush1.bf16.msra.mxu0 %v2574
    %7121 = vmatprep.subr.bf16.mxu0 %v2583
    %7122 = vmatpush1.bf16.msra.mxu0 %v2582
    %7123 = vmatprep.subr.bf16.mxu0 %v2591
    %7124 = vmatpush1.bf16.msra.mxu0 %v2590
    %7125 = vmatprep.subr.bf16.mxu0 %v2599
    %7126 = vmatpush1.bf16.msra.mxu0 %v2598
    %7127 = vmatprep.subr.bf16.mxu0 %v2607
    %7128 = vmatpush1.bf16.msra.mxu0 %v2606
    %7129 = vmatprep.subr.bf16.mxu0 %v2615
    %7130 = vmatpush1.bf16.msra.mxu0 %v2614
    %7131 = vmatprep.subr.bf16.mxu0 %v2623
    %7132 = vmatpush1.bf16.msra.mxu0 %v2622
    %7133 = vmatprep.subr.bf16.mxu0 %v2631
    %7134 = vmatpush1.bf16.msra.mxu0 %v2630
    %7135 = vmatprep.subr.bf16.mxu0 %v2639
    %7136 = vmatpush1.bf16.msra.mxu0 %v2638
    %7137 = vmatprep.subr.bf16.mxu0 %v2647
    %7138 = vmatpush1.bf16.msra.mxu0 %v2646
    %7139 = vmatprep.subr.bf16.mxu0 %v2655
    %7140 = vmatpush1.bf16.msra.mxu0 %v2654
    %7141 = vmatprep.subr.bf16.mxu0 %v2663
    %7142 = vmatpush1.bf16.msra.mxu0 %v2662
    %7143 = vmatprep.subr.bf16.mxu0 %v2671
    %7144 = vmatpush1.bf16.msra.mxu0 %v2670
    %7145 = vmatprep.subr.bf16.mxu0 %v2679
    %7146 = vmatpush1.bf16.msra.mxu0 %v2678
    %7147 = vmatprep.mubr.bf16.mxu0 %v6827
    %7148 = vmatmul.mubr.bf16.gmra.mrb[0].mxu0 %v6826
    %v7149 = vpop.f32.mrb[0].mxu0
    %v7150 = vadd.f32 %v7109, %v7149
    %v7151 = vpop.f32.mrb[0].mxu0
    %v7152 = vadd.f32 %v7111, %v7151
    %v7153 = vpop.f32.mrb[0].mxu0
    %v7154 = vpop.f32.mrb[0].mxu0
    %7155 = vdwg.mxu0
    %v7156 = vxor.u32 %v6904, 2147483648
    %v7157 = vxor.u32 %v6906, 2147483648
    %v7158 = vmul.f32 %v7156, 1.442695
    %v7159 = vpow.pop %v7158
    %v7160 = vmul.f32 %v7157, 1.442695
    %v7161 = vpow.pop %v7160
    %v7162 = vadd.f32 %v7159, 1.0
    %v7163 = vadd.f32 %v7161, 1.0
    %v7164 = vrcp.pop %v7162
    %v7165 = vmul.f32 1.0, %v7164
    %v7166 = vrcp.pop %v7163
    %v7167 = vmul.f32 1.0, %v7166
    %v7168 = vxor.u32 %v6986, 2147483648
    %v7169 = vxor.u32 %v6988, 2147483648
    %v7170 = vmul.f32 %v7168, 1.442695
    %v7171 = vpow.pop %v7170
    %v7172 = vmul.f32 %v7169, 1.442695
    %v7173 = vpow.pop %v7172
    %v7174 = vadd.f32 %v7171, 1.0
    %v7175 = vadd.f32 %v7173, 1.0
    %v7176 = vrcp.pop %v7174
    %v7177 = vmul.f32 1.0, %v7176
    %v7178 = vrcp.pop %v7175
    %v7179 = vmul.f32 1.0, %v7178
    %v7180 = vmul.f32 %v7165, %v7150
    %v7181 = vmul.f32 %v7167, %v7152
    %v7182 = vadd.f32 %v7068, %v7180
    %v7183 = vadd.f32 %v7070, %v7181
    %v7184 = vtanh.pop %v7182
    %v7185 = vtanh.pop %v7183
    %v7186 = vsub.f32 1.0, %v7177
    %v7187 = vsub.f32 1.0, %v7179
    %v7188 = vmul.f32 %v7186, %v7184
    %v7189 = vmul.f32 %v7187, %v7185
    %v7190 = vmul.f32 %v7177, %v6638
    %v7191 = vmul.f32 %v7179, %v6639
    %v7192 = vadd.f32 %v7188, %v7190
    %v7193 = vadd.f32 %v7189, %v7191
    %v7194 = vsel %vm6821, %v7192, %v6638
    %v7195 = vsel %vm6821, %v7193, %v6639
    %v7196 = vld [vmem:[%s2] sm:$0xff]
    %7198 = vset.pattern.permute.xlu0 0
    %7199 = vperm.xlu0 %7198, %v7196
    %v7200 = vpop.permute.xlu0 %7199
    %v7202 = vmul.f32 %v7194, %v7200
    %v7203 = vmul.f32 %v7195, %v7200
    %v7204 = vrot.slane %v7202, 4
    %v7205 = vadd.f32 %v7202, %v7204
    %v7206 = vrot.slane %v7205, 2
    %v7207 = vadd.f32 %v7205, %v7206
    %v7208 = vrot.slane %v7207, 1
    %v7209 = vadd.f32 %v7207, %v7208
    %v7210 = vrot.slane %v7203, 4
    %v7211 = vadd.f32 %v7203, %v7210
    %v7212 = vrot.slane %v7211, 2
    %v7213 = vadd.f32 %v7211, %v7212
    %v7214 = vrot.slane %v7213, 1
    %v7215 = vadd.f32 %v7213, %v7214
    %v7216 = vmul.f32 %v7209, 0.25
    %v7217 = vmul.f32 %v7215, 0.25
    %v7218 = vsub.f32 %v7194, %v7216
    %v7219 = vsub.f32 %v7195, %v7217
    %v7220 = vmul.f32 %v7218, %v7200
    %v7221 = vmul.f32 %v7219, %v7200
    %v7222 = vmul.f32 %v7220, %v7220
    %v7223 = vmul.f32 %v7221, %v7221
    %v7224 = vrot.slane %v7222, 4
    %v7225 = vadd.f32 %v7222, %v7224
    %v7226 = vrot.slane %v7225, 2
    %v7227 = vadd.f32 %v7225, %v7226
    %v7228 = vrot.slane %v7227, 1
    %v7229 = vadd.f32 %v7227, %v7228
    %v7230 = vrot.slane %v7223, 4
    %v7231 = vadd.f32 %v7223, %v7230
    %v7232 = vrot.slane %v7231, 2
    %v7233 = vadd.f32 %v7231, %v7232
    %v7234 = vrot.slane %v7233, 1
    %v7235 = vadd.f32 %v7233, %v7234
    %v7236 = vmul.f32 %v7229, 0.25
    %v7237 = vmul.f32 %v7235, 0.25
    %v7238 = vadd.f32 %v7236, 1e-05
    %v7239 = vadd.f32 %v7237, 1e-05
    %v7240 = vrsqrt.pop %v7238
    %v7241 = vrsqrt.pop %v7239
    %v7242 = vmul.f32 %v7218, %v7240
    %v7243 = vmul.f32 %v7219, %v7241
    %v7244 = vld [vmem:[%s9] sm:$0x3]
    %v7246 = vlaneseq
    %v7247 = vshrl.u32 %v7246, 7
    %v7248 = vsub.s32 0, %v7247
    %v7249 = vrot.slane %v7244, %v7248
    %v7250 = vlaneseq
    %v7251 = vshrl.u32 %v7250, 7
    %v7252 = vsub.s32 1, %v7251
    %v7253 = vrot.slane %v7244, %v7252
    %v7256 = vmul.f32 %v7242, %v7249
    %v7257 = vmul.f32 %v7243, %v7253
    %v7258 = vld [vmem:[%s10] sm:$0x3]
    %v7260 = vlaneseq
    %v7261 = vshrl.u32 %v7260, 7
    %v7262 = vsub.s32 0, %v7261
    %v7263 = vrot.slane %v7258, %v7262
    %v7264 = vlaneseq
    %v7265 = vshrl.u32 %v7264, 7
    %v7266 = vsub.s32 1, %v7265
    %v7267 = vrot.slane %v7258, %v7266
    %v7270 = vadd.f32 %v7256, %v7263
    %v7271 = vadd.f32 %v7257, %v7267
    %v7272 = vld [vmem:[#allocation8] sm:$0xff]
    %v7273 = vld [vmem:[#allocation8 + $0x8] sm:$0xff]
    %v7274 = vld [vmem:[#allocation8 + $0x10] sm:$0xff]
    %v7275 = vld [vmem:[#allocation8 + $0x18] sm:$0xff]
    %v7276 = vld [vmem:[#allocation8 + $0x20] sm:$0xff]
    %v7277 = vld [vmem:[#allocation8 + $0x28] sm:$0xff]
    %v7278 = vld [vmem:[#allocation8 + $0x30] sm:$0xff]
    %v7279 = vld [vmem:[#allocation8 + $0x38] sm:$0xff]
    %v7280 = vld [vmem:[#allocation8 + $0x40] sm:$0xff]
    %v7281 = vld [vmem:[#allocation8 + $0x48] sm:$0xff]
    %v7282 = vld [vmem:[#allocation8 + $0x50] sm:$0xff]
    %v7283 = vld [vmem:[#allocation8 + $0x58] sm:$0xff]
    %v7284 = vld [vmem:[#allocation8 + $0x60] sm:$0xff]
    %v7285 = vld [vmem:[#allocation8 + $0x68] sm:$0xff]
    %v7286 = vld [vmem:[#allocation8 + $0x70] sm:$0xff]
    %v7287 = vld [vmem:[#allocation8 + $0x78] sm:$0xff]
    %v7288 = vld [vmem:[#allocation8 + $0x80] sm:$0xff]
    %v7289 = vld [vmem:[#allocation8 + $0x88] sm:$0xff]
    %v7290 = vld [vmem:[#allocation8 + $0x90] sm:$0xff]
    %v7291 = vld [vmem:[#allocation8 + $0x98] sm:$0xff]
    %v7292 = vld [vmem:[#allocation8 + $0xa0] sm:$0xff]
    %v7293 = vld [vmem:[#allocation8 + $0xa8] sm:$0xff]
    %v7294 = vld [vmem:[#allocation8 + $0xb0] sm:$0xff]
    %v7295 = vld [vmem:[#allocation8 + $0xb8] sm:$0xff]
    %v7296 = vld [vmem:[#allocation8 + $0xc0] sm:$0xff]
    %v7297 = vld [vmem:[#allocation8 + $0xc8] sm:$0xff]
    %v7298 = vld [vmem:[#allocation8 + $0xd0] sm:$0xff]
    %v7299 = vld [vmem:[#allocation8 + $0xd8] sm:$0xff]
    %v7300 = vld [vmem:[#allocation8 + $0xe0] sm:$0xff]
    %v7301 = vld [vmem:[#allocation8 + $0xe8] sm:$0xff]
    %v7302 = vld [vmem:[#allocation8 + $0xf0] sm:$0xff]
    %v7303 = vld [vmem:[#allocation8 + $0xf8] sm:$0xff]
    %v7304 = vld [vmem:[%s12] sm:$0x1]
    %v7306 = vlaneseq
    %v7307 = vshrl.u32 %v7306, 7
    %v7308 = vsub.s32 0, %v7307
    %v7309 = vrot.slane %v7304, %v7308
    %7311 = vmatprep.subr.mxu0 0.0
    %7312 = vmatpush1.msra.mxu0 %v7272
    %7313 = vmatprep.subr.mxu0 0.0
    %7314 = vmatpush1.msra.mxu0 %v7273
    %7315 = vmatprep.subr.mxu0 0.0
    %7316 = vmatpush1.msra.mxu0 %v7274
    %7317 = vmatprep.subr.mxu0 0.0
    %7318 = vmatpush1.msra.mxu0 %v7275
    %7319 = vmatprep.subr.mxu0 0.0
    %7320 = vmatpush1.msra.mxu0 %v7276
    %7321 = vmatprep.subr.mxu0 0.0
    %7322 = vmatpush1.msra.mxu0 %v7277
    %7323 = vmatprep.subr.mxu0 0.0
    %7324 = vmatpush1.msra.mxu0 %v7278
    %7325 = vmatprep.subr.mxu0 0.0
    %7326 = vmatpush1.msra.mxu0 %v7279
    %7327 = vmatprep.subr.mxu0 0.0
    %7328 = vmatpush1.msra.mxu0 %v7280
    %7329 = vmatprep.subr.mxu0 0.0
    %7330 = vmatpush1.msra.mxu0 %v7281
    %7331 = vmatprep.subr.mxu0 0.0
    %7332 = vmatpush1.msra.mxu0 %v7282
    %7333 = vmatprep.subr.mxu0 0.0
    %7334 = vmatpush1.msra.mxu0 %v7283
    %7335 = vmatprep.subr.mxu0 0.0
    %7336 = vmatpush1.msra.mxu0 %v7284
    %7337 = vmatprep.subr.mxu0 0.0
    %7338 = vmatpush1.msra.mxu0 %v7285
    %7339 = vmatprep.subr.mxu0 0.0
    %7340 = vmatpush1.msra.mxu0 %v7286
    %7341 = vmatprep.subr.mxu0 0.0
    %7342 = vmatpush1.msra.mxu0 %v7287
    %7343 = vmatprep.subr.mxu0 0.0
    %7344 = vmatpush1.msra.mxu0 %v7288
    %7345 = vmatprep.subr.mxu0 0.0
    %7346 = vmatpush1.msra.mxu0 %v7289
    %7347 = vmatprep.subr.mxu0 0.0
    %7348 = vmatpush1.msra.mxu0 %v7290
    %7349 = vmatprep.subr.mxu0 0.0
    %7350 = vmatpush1.msra.mxu0 %v7291
    %7351 = vmatprep.subr.mxu0 0.0
    %7352 = vmatpush1.msra.mxu0 %v7292
    %7353 = vmatprep.subr.mxu0 0.0
    %7354 = vmatpush1.msra.mxu0 %v7293
    %7355 = vmatprep.subr.mxu0 0.0
    %7356 = vmatpush1.msra.mxu0 %v7294
    %7357 = vmatprep.subr.mxu0 0.0
    %7358 = vmatpush1.msra.mxu0 %v7295
    %7359 = vmatprep.subr.mxu0 0.0
    %7360 = vmatpush1.msra.mxu0 %v7296
    %7361 = vmatprep.subr.mxu0 0.0
    %7362 = vmatpush1.msra.mxu0 %v7297
    %7363 = vmatprep.subr.mxu0 0.0
    %7364 = vmatpush1.msra.mxu0 %v7298
    %7365 = vmatprep.subr.mxu0 0.0
    %7366 = vmatpush1.msra.mxu0 %v7299
    %7367 = vmatprep.subr.mxu0 0.0
    %7368 = vmatpush1.msra.mxu0 %v7300
    %7369 = vmatprep.subr.mxu0 0.0
    %7370 = vmatpush1.msra.mxu0 %v7301
    %7371 = vmatprep.subr.mxu0 0.0
    %7372 = vmatpush1.msra.mxu0 %v7302
    %7373 = vmatprep.subr.mxu0 0.0
    %7374 = vmatpush1.msra.mxu0 %v7303
    %7375 = vmatprep.mubr.f32.mxu0 %v7271
    %7376 = vmatmul.mubr.f32.gmra.mrb[0].mxu0 %v7270
    %v7377 = vpop.f32.mrb[0].mxu0
    %v7378 = vadd.f32 %v7309, %v7377
    %v7379 = vpop.f32.mrb[0].mxu0
    %7380 = vdwg.mxu0
    %7381 = vmax.xlane.f32.xlu0 %v7378
    %v7382 = vpop.xlane.xlu0 %7381
    %v7383 = vsub.f32 %v7378, %v7382
    %v7384 = vmul.f32 %v7383, 1.442695
    %v7385 = vpow.pop %v7384
    %7386 = vadd.xlane.f32.xlu0 %v7385
    %v7387 = vpop.xlane.xlu0 %7386
    %v7388 = vrcp.pop %v7387
    %v7389 = vmul.f32 %v7387, %v7388
    %v7390 = vsub.f32 2.0, %v7389
    %v7391 = vmul.f32 %v7388, %v7390
    %v7392 = vmul.f32 %v7385, %v7391
    %7393 = vst [vmem:[#allocation9] sm:$0xff] %v7392
    // Predicated region
    $region66: #{tpu_custom_call.1} parent=1 // pred_check
      _
    $region67: #{tpu_custom_call.1} parent=1 // pred_check_branch
      %7395 = sbr.rel (0) target = $region69
    $region68: #{tpu_custom_call.1} parent=1 // pred_region
      %s7397 = ssub.s32 128, 128
      %7398 = vsyncadd [#allocation5], %s7397
      %s7400 = sshll.u32 [#allocation9], 4
      %s7401 = int_to_ptr.vmem [resolvable:$true] %s7400
      %7403 = dma.vmem_to_hbm [thread:$0]  %s7401, 128, %s13, [#allocation5]
    $region69: #{tpu_custom_call.1} parent=1 // pred_fallthru
      _
    // Predicated region
    $region70: #{tpu_custom_call.1} parent=1 // pred_check
      _
    $region71: #{tpu_custom_call.1} parent=1 // pred_check_branch
      %7405 = sbr.rel (0) target = $region73
    $region72: #{tpu_custom_call.1} parent=1 // pred_region
      %7406 = dma.done [#allocation5], 128
    $region73: #{tpu_custom_call.1} parent=1 // pred_fallthru
      _
    %7407 = vsyncpa [#allocation4], 1
    %7408 = vsyncpa [#allocation7], 1
    %7409 = vsyncpa [#allocation5], 1

</llo_original>
